<compile_context>
chip_gen: v7x
topology: tpu7x:2x2x1
jax: 0.10.0
libtpu: 0.0.40
codegen_flags: <defaults>
</compile_context>

<pallas_src>
import functools

import jax
import jax.numpy as jnp
from jax.experimental import pallas as pl
from jax.experimental.pallas import tpu as pltpu


def _expand_norm_kernel(x_ref, w_ref, g_ref, b_ref, sm_ref, st_ref, o_ref, *,
                        eps, P):
    """One row-group grid step.

    x_ref : (TM, C)           TM = th * W tokens (th rows of (b, h))
    w_ref : (C, P*P*C)        transposed expand weight, columns in (p1,p2,c) order
    g_ref : (1, P*P*C)        gamma tiled over (p1, p2)
    b_ref : (1, P*P*C)        beta  tiled over (p1, p2)
    sm_ref: (P*P*C, P*P)      0 / (1/C) chunk-mean indicator
    st_ref: (P*P, P*P*C)      0 / 1    chunk-broadcast indicator
    o_ref : (th, P, W, P*C)   output block, already in final pixel-shuffled order
    """
    x = x_ref[...]
    # Single MXU matmul for the whole row group: (TM, C) @ (C, P^2*C).
    y = jnp.dot(x, w_ref[...], preferred_element_type=jnp.float32)

    # Per-C-chunk LayerNorm, kept lane-dense: segmented mean/var and the
    # broadcast back are indicator matmuls on the MXU.  HIGHEST precision
    # => exact f32 sums (matches a VPU reduction up to f32 rounding).
    hp = jax.lax.Precision.HIGHEST
    mean = jnp.dot(y, sm_ref[...], preferred_element_type=jnp.float32,
                   precision=hp)                                    # (TM, P*P)
    mean_f = jnp.dot(mean, st_ref[...], preferred_element_type=jnp.float32,
                     precision=hp)                                  # (TM, P*P*C)
    cen = y - mean_f
    var = jnp.dot(cen * cen, sm_ref[...], preferred_element_type=jnp.float32,
                  precision=hp)                                     # (TM, P*P)
    inv_f = jnp.dot(jax.lax.rsqrt(var + eps), st_ref[...],
                    preferred_element_type=jnp.float32, precision=hp)
    out = cen * inv_f * g_ref[...] + b_ref[...]                     # (TM, P*P*C)

    th, _, w_dim, pc = o_ref.shape
    for p1 in range(P):
        # Lane-aligned 128-wide static slice; the reshape only splits the
        # sublane dim (free when W % 8 == 0) and the store hits whole
        # (8,128) tiles of the contiguous output block.
        chunk = out[:, p1 * pc:(p1 + 1) * pc]
        o_ref[:, p1, :, :] = chunk.reshape(th, w_dim, pc).astype(o_ref.dtype)


def pack_final_patch_expanding_params(w_expand, gamma, beta, *, upscale_factor=4):
    """Repack parameters for the kernel.  Call ONCE at parameter-load time
    (hoisted out of the per-call jitted path).

    w_expand: (P^2*C, C) PyTorch nn.Linear weight (no bias); gamma/beta: (C,).
    """
    P = upscale_factor
    PPC, C = w_expand.shape
    assert PPC == P * P * C, "weight shape must be (P^2*C, C)"
    # y = x @ W^T; the (P1 P2 C) column order of nn.Linear output is already
    # the order the fused output layout wants -> just transpose.
    w_t = jnp.transpose(jnp.asarray(w_expand)).reshape(C, PPC)          # (C, P^2*C)
    g2 = jnp.tile(jnp.asarray(gamma, jnp.float32), (P * P,)).reshape(1, PPC)
    b2 = jnp.tile(jnp.asarray(beta, jnp.float32), (P * P,)).reshape(1, PPC)
    # Segmented-LayerNorm indicator matrices: one chunk per output pixel (p1,p2).
    seg = jnp.arange(PPC, dtype=jnp.int32) // C
    pid = jnp.arange(P * P, dtype=jnp.int32)
    sm = (seg[:, None] == pid[None, :]).astype(jnp.float32) / float(C)  # (PPC, P*P)
    st = (pid[:, None] == seg[None, :]).astype(jnp.float32)             # (P*P, PPC)
    return w_t, g2, b2, sm, st


def _choose_block_rows(BH, W, target_tokens, min_groups=2):
    """Rows of (b, h) per grid step: a divisor of B*H, aiming at
    ~target_tokens tokens, with (rows*W) % 8 == 0 (clean x-block tiling,
    unmasked stores) and >= min_groups grid steps (v7x megacore) when possible."""
    target_rows = max(1, target_tokens // max(W, 1))
    divisors = [d for d in range(1, BH + 1) if BH % d == 0]

    def pick(pred):
        cands = [d for d in divisors if pred(d)]
        return max(cands) if cands else None

    th = pick(lambda d: d <= target_rows and (d * W) % 8 == 0
              and BH // d >= min_groups)
    if th is None:
        th = pick(lambda d: d <= target_rows and (d * W) % 8 == 0)
    if th is None:
        # TODO(synk): pad B*H (cheap, input-side) instead of collapsing to a
        # single block for pathological shapes (prime B*H with odd W).
        th = BH
    return th


def _default_tile_config():
    """(tokens_per_step, vmem_limit_bytes) sized per TPU generation."""
    try:
        kind = jax.devices()[0].device_kind.lower()
    except Exception:
        kind = ""
    if any(t in kind for t in ("v5 lite", "v5e", "v6 lite", "v6e")):
        # 128 MiB physical VMEM, firmly HBM-write-bound: big lane-dense tiles
        # and an explicit scoped-VMEM limit well above the 16/32 MiB default.
        return 4096, 96 * 1024 * 1024
    # v7x (64 MiB physical VMEM, 2 TCs) and unknown chips: conservative.
    return 2048, 48 * 1024 * 1024


def final_patch_expanding(x, w_t, g2, b2, sm, st, *, upscale_factor=4,
                          eps=1e-5, tokens_per_step=None, vmem_limit_bytes=None):
    """x: (B, H, W, C); packed params from pack_final_patch_expanding_params.
    Returns (B, H*P, W*P, C) with the same dtype as x."""
    B, H, W, C = x.shape
    P = upscale_factor
    PC = P * C
    PPC = P * PC
    BH = B * H
    assert w_t.shape == (C, PPC)

    if tokens_per_step is None or vmem_limit_bytes is None:
        tdef, vdef = _default_tile_config()
        tokens_per_step = tokens_per_step or tdef
        vmem_limit_bytes = vmem_limit_bytes or vdef

    th = _choose_block_rows(BH, W, tokens_per_step)
    n_groups = BH // th
    tm = th * W
    # NB: the x block (tm, C=32) is lane-padded to 128 lanes in VMEM (4x
    # inflation) and feeds the MXU with K=32 only; accepted, since input
    # traffic is 1/16 of the output traffic that binds this kernel.
    # NB: W % 8 == 0 keeps the in-kernel reshape free and output stores
    # unmasked; other W values are still correct, just slower.

    x2 = x.reshape(BH * W, C)
    kernel = functools.partial(_expand_norm_kernel, eps=eps, P=P)

    out4 = pl.pallas_call(
        kernel,
        out_shape=jax.ShapeDtypeStruct((BH, P, W, PC), x.dtype),
        grid=(n_groups,),
        in_specs=[
            pl.BlockSpec((tm, C), lambda i: (i, 0)),
            pl.BlockSpec((C, PPC), lambda i: (0, 0)),        # resident across grid
            pl.BlockSpec((1, PPC), lambda i: (0, 0)),
            pl.BlockSpec((1, PPC), lambda i: (0, 0)),
            pl.BlockSpec((PPC, P * P), lambda i: (0, 0)),
            pl.BlockSpec((P * P, PPC), lambda i: (0, 0)),
        ],
        out_specs=pl.BlockSpec((th, P, W, PC), lambda i: (i, 0, 0, 0)),
        compiler_params=pltpu.CompilerParams(
            dimension_semantics=("parallel",),
            vmem_limit_bytes=vmem_limit_bytes),
    )(x2, w_t, g2, b2, sm, st)

    # Pure metadata reshape: (B*H, P, W, P*C) row-major == (B, H*P, W*P, C).
    return out4.reshape(B, H * P, W * P, C)


def _reference(x, w_expand, gamma, beta, upscale_factor=4, eps=1e-5):
    B, H, W, C = x.shape
    P = upscale_factor
    y = jnp.einsum("bhwc,oc->bhwo", x, w_expand)          # Linear, no bias
    y = y.reshape(B, H, W, P, P, C)
    y = jnp.transpose(y, (0, 1, 3, 2, 4, 5)).reshape(B, H * P, W * P, C)
    mean = jnp.mean(y, axis=-1, keepdims=True)
    var = jnp.mean(jnp.square(y - mean), axis=-1, keepdims=True)
    yn = (y - mean) / jnp.sqrt(var + eps)
    return yn * gamma + beta


if __name__ == "__main__":
    B, H, W, dim = 2, 8, 8, 32
    P = 4

    key = jax.random.PRNGKey(0)
    k_x, k_w, k_g, k_b = jax.random.split(key, 4)
    x = jax.random.normal(k_x, (B, H, W, dim), dtype=jnp.float32)
    # nn.Linear(dim, P^2*dim, bias=False): weight shape (P^2*dim, dim)
    w_expand = jax.random.normal(k_w, (P * P * dim, dim), dtype=jnp.float32) * 0.05
    # LayerNorm(dim) affine params (deterministic, non-trivial values)
    gamma = 1.0 + 0.1 * jax.random.normal(k_g, (dim,), dtype=jnp.float32)
    beta = 0.1 * jax.random.normal(k_b, (dim,), dtype=jnp.float32)

    # Pack once, at parameter-load time (outside the per-call jitted path).
    packed = pack_final_patch_expanding_params(w_expand, gamma, beta,
                                               upscale_factor=P)

    fn = jax.jit(functools.partial(final_patch_expanding, upscale_factor=P))
    out = jax.block_until_ready(fn(x, *packed))

    ref = _reference(x, w_expand, gamma, beta, upscale_factor=P)
    assert out.shape == (B, H * P, W * P, dim)
    assert jnp.allclose(out, ref, atol=1e-4, rtol=1e-4), "mismatch vs reference"

    print("KERNEL_OK")
</pallas_src>

<mosaic_0001>
module attributes {stable_mosaic.version = 11 : i64} {
  func.func @_expand_norm_kernel(%arg0: i32, %arg1: memref<64x32xf32, #tpu.memory_space<vmem>>, %arg2: memref<32x512xf32, #tpu.memory_space<vmem>>, %arg3: memref<1x512xf32, #tpu.memory_space<vmem>>, %arg4: memref<1x512xf32, #tpu.memory_space<vmem>>, %arg5: memref<512x16xf32, #tpu.memory_space<vmem>>, %arg6: memref<16x512xf32, #tpu.memory_space<vmem>>, %arg7: memref<8x4x8x128xf32, #tpu.memory_space<vmem>>) attributes {dimension_semantics = [#tpu.dimension_semantics<parallel>], iteration_bounds = array<i64: 2>, scalar_prefetch = 0 : i64, scratch_operands = 0 : i64, tpu.core_type = #tpu.core_type<tc>, window_params = [{transform_indices = @transform_0, window_bounds = array<i64: 64, 32>}, {pipeline_mode = #tpu.pipeline_mode<synchronous>, transform_indices = @transform_1, window_bounds = array<i64: 32, 512>}, {pipeline_mode = #tpu.pipeline_mode<synchronous>, transform_indices = @transform_2, window_bounds = array<i64: 1, 512>}, {pipeline_mode = #tpu.pipeline_mode<synchronous>, transform_indices = @transform_3, window_bounds = array<i64: 1, 512>}, {pipeline_mode = #tpu.pipeline_mode<synchronous>, transform_indices = @transform_4, window_bounds = array<i64: 512, 16>}, {pipeline_mode = #tpu.pipeline_mode<synchronous>, transform_indices = @transform_5, window_bounds = array<i64: 16, 512>}, {transform_indices = @transform_6, window_bounds = array<i64: 8, 4, 8, 128>}]} {
    %c0 = arith.constant 0 : index
    %c0_0 = arith.constant 0 : index
    %0 = vector.load %arg1[%c0, %c0_0] : memref<64x32xf32, #tpu.memory_space<vmem>>, vector<64x32xf32>
    %c0_1 = arith.constant 0 : index
    %c0_2 = arith.constant 0 : index
    %1 = vector.load %arg2[%c0_1, %c0_2] : memref<32x512xf32, #tpu.memory_space<vmem>>, vector<32x512xf32>
    %cst = arith.constant dense<0.000000e+00> : vector<64x512xf32>
    %2 = tpu.matmul %0, %1, %cst {dimension_numbers = #tpu.dot_dimension_numbers<[1], [0], [0], [1], [0, 0, 1, 1], [], []>} : vector<64x32xf32>, vector<32x512xf32>, vector<64x512xf32> -> vector<64x512xf32>
    %c0_3 = arith.constant 0 : index
    %c0_4 = arith.constant 0 : index
    %3 = vector.load %arg5[%c0_3, %c0_4] : memref<512x16xf32, #tpu.memory_space<vmem>>, vector<512x16xf32>
    %cst_5 = arith.constant dense<0.000000e+00> : vector<64x16xf32>
    %4 = tpu.matmul %2, %3, %cst_5 {dimension_numbers = #tpu.dot_dimension_numbers<[1], [0], [0], [1], [0, 0, 1, 1], [], []>, precision = #tpu.contract_precision<fp32>} : vector<64x512xf32>, vector<512x16xf32>, vector<64x16xf32> -> vector<64x16xf32>
    %c0_6 = arith.constant 0 : index
    %c0_7 = arith.constant 0 : index
    %5 = vector.load %arg6[%c0_6, %c0_7] : memref<16x512xf32, #tpu.memory_space<vmem>>, vector<16x512xf32>
    %cst_8 = arith.constant dense<0.000000e+00> : vector<64x512xf32>
    %6 = tpu.matmul %4, %5, %cst_8 {dimension_numbers = #tpu.dot_dimension_numbers<[1], [0], [0], [1], [0, 0, 1, 1], [], []>, precision = #tpu.contract_precision<fp32>} : vector<64x16xf32>, vector<16x512xf32>, vector<64x512xf32> -> vector<64x512xf32>
    %7 = arith.subf %2, %6 : vector<64x512xf32>
    %8 = arith.mulf %7, %7 : vector<64x512xf32>
    %c0_9 = arith.constant 0 : index
    %c0_10 = arith.constant 0 : index
    %9 = vector.load %arg5[%c0_9, %c0_10] : memref<512x16xf32, #tpu.memory_space<vmem>>, vector<512x16xf32>
    %cst_11 = arith.constant dense<0.000000e+00> : vector<64x16xf32>
    %10 = tpu.matmul %8, %9, %cst_11 {dimension_numbers = #tpu.dot_dimension_numbers<[1], [0], [0], [1], [0, 0, 1, 1], [], []>, precision = #tpu.contract_precision<fp32>} : vector<64x512xf32>, vector<512x16xf32>, vector<64x16xf32> -> vector<64x16xf32>
    %cst_12 = arith.constant 9.99999974E-6 : f32
    %11 = vector.broadcast %cst_12 : f32 to vector<64x16xf32>
    %12 = arith.addf %10, %11 : vector<64x16xf32>
    %13 = math.rsqrt %12 : vector<64x16xf32>
    %c0_13 = arith.constant 0 : index
    %c0_14 = arith.constant 0 : index
    %14 = vector.load %arg6[%c0_13, %c0_14] : memref<16x512xf32, #tpu.memory_space<vmem>>, vector<16x512xf32>
    %cst_15 = arith.constant dense<0.000000e+00> : vector<64x512xf32>
    %15 = tpu.matmul %13, %14, %cst_15 {dimension_numbers = #tpu.dot_dimension_numbers<[1], [0], [0], [1], [0, 0, 1, 1], [], []>, precision = #tpu.contract_precision<fp32>} : vector<64x16xf32>, vector<16x512xf32>, vector<64x512xf32> -> vector<64x512xf32>
    %16 = arith.mulf %7, %15 : vector<64x512xf32>
    %c0_16 = arith.constant 0 : index
    %c0_17 = arith.constant 0 : index
    %17 = vector.load %arg3[%c0_16, %c0_17] : memref<1x512xf32, #tpu.memory_space<vmem>>, vector<1x512xf32>
    %18 = vector.broadcast %17 : vector<1x512xf32> to vector<64x512xf32>
    %19 = arith.mulf %16, %18 : vector<64x512xf32>
    %c0_18 = arith.constant 0 : index
    %c0_19 = arith.constant 0 : index
    %20 = vector.load %arg4[%c0_18, %c0_19] : memref<1x512xf32, #tpu.memory_space<vmem>>, vector<1x512xf32>
    %21 = vector.broadcast %20 : vector<1x512xf32> to vector<64x512xf32>
    %22 = arith.addf %19, %21 : vector<64x512xf32>
    %23 = vector.extract_strided_slice %22 {offsets = [0, 0], sizes = [64, 128], strides = [1, 1]} : vector<64x512xf32> to vector<64x128xf32>
    %24 = vector.shape_cast %23 : vector<64x128xf32> to vector<8x8x128xf32>
    %c0_20 = arith.constant 0 : index
    %c0_21 = arith.constant 0 : index
    %c0_22 = arith.constant 0 : index
    %c0_23 = arith.constant 0 : index
    %25 = vector.load %arg7[%c0_20, %c0_21, %c0_22, %c0_23] : memref<8x4x8x128xf32, #tpu.memory_space<vmem>>, vector<8x1x8x128xf32>
    %26 = vector.shape_cast %25 : vector<8x1x8x128xf32> to vector<8x8x128xf32>
    %27 = vector.shape_cast %24 : vector<8x8x128xf32> to vector<8x1x8x128xf32>
    tpu.vector_store %arg7[%c0_20, %c0_21, %c0_22, %c0_23], %27 {strides = array<i32>} : memref<8x4x8x128xf32, #tpu.memory_space<vmem>>, vector<8x1x8x128xf32>,
    %28 = vector.extract_strided_slice %22 {offsets = [0, 128], sizes = [64, 128], strides = [1, 1]} : vector<64x512xf32> to vector<64x128xf32>
    %29 = vector.shape_cast %28 : vector<64x128xf32> to vector<8x8x128xf32>
    %c0_24 = arith.constant 0 : index
    %c1 = arith.constant 1 : index
    %c0_25 = arith.constant 0 : index
    %c0_26 = arith.constant 0 : index
    %30 = vector.load %arg7[%c0_24, %c1, %c0_25, %c0_26] : memref<8x4x8x128xf32, #tpu.memory_space<vmem>>, vector<8x1x8x128xf32>
    %31 = vector.shape_cast %30 : vector<8x1x8x128xf32> to vector<8x8x128xf32>
    %32 = vector.shape_cast %29 : vector<8x8x128xf32> to vector<8x1x8x128xf32>
    tpu.vector_store %arg7[%c0_24, %c1, %c0_25, %c0_26], %32 {strides = array<i32>} : memref<8x4x8x128xf32, #tpu.memory_space<vmem>>, vector<8x1x8x128xf32>,
    %33 = vector.extract_strided_slice %22 {offsets = [0, 256], sizes = [64, 128], strides = [1, 1]} : vector<64x512xf32> to vector<64x128xf32>
    %34 = vector.shape_cast %33 : vector<64x128xf32> to vector<8x8x128xf32>
    %c0_27 = arith.constant 0 : index
    %c2 = arith.constant 2 : index
    %c0_28 = arith.constant 0 : index
    %c0_29 = arith.constant 0 : index
    %35 = vector.load %arg7[%c0_27, %c2, %c0_28, %c0_29] : memref<8x4x8x128xf32, #tpu.memory_space<vmem>>, vector<8x1x8x128xf32>
    %36 = vector.shape_cast %35 : vector<8x1x8x128xf32> to vector<8x8x128xf32>
    %37 = vector.shape_cast %34 : vector<8x8x128xf32> to vector<8x1x8x128xf32>
    tpu.vector_store %arg7[%c0_27, %c2, %c0_28, %c0_29], %37 {strides = array<i32>} : memref<8x4x8x128xf32, #tpu.memory_space<vmem>>, vector<8x1x8x128xf32>,
    %38 = vector.extract_strided_slice %22 {offsets = [0, 384], sizes = [64, 128], strides = [1, 1]} : vector<64x512xf32> to vector<64x128xf32>
    %39 = vector.shape_cast %38 : vector<64x128xf32> to vector<8x8x128xf32>
    %c0_30 = arith.constant 0 : index
    %c3 = arith.constant 3 : index
    %c0_31 = arith.constant 0 : index
    %c0_32 = arith.constant 0 : index
    %40 = vector.load %arg7[%c0_30, %c3, %c0_31, %c0_32] : memref<8x4x8x128xf32, #tpu.memory_space<vmem>>, vector<8x1x8x128xf32>
    %41 = vector.shape_cast %40 : vector<8x1x8x128xf32> to vector<8x8x128xf32>
    %42 = vector.shape_cast %39 : vector<8x8x128xf32> to vector<8x1x8x128xf32>
    tpu.vector_store %arg7[%c0_30, %c3, %c0_31, %c0_32], %42 {strides = array<i32>} : memref<8x4x8x128xf32, #tpu.memory_space<vmem>>, vector<8x1x8x128xf32>,
    return
  }
  func.func @transform_0(%arg0: i32) -> (i32, i32) {
    %c0_i32 = arith.constant 0 : i32
    %c0_i32_0 = arith.constant 0 : i32
    return %arg0, %c0_i32 : i32, i32
  }
  func.func @transform_1(%arg0: i32) -> (i32, i32) {
    %c0_i32 = arith.constant 0 : i32
    %c0_i32_0 = arith.constant 0 : i32
    %c0_i32_1 = arith.constant 0 : i32
    return %c0_i32, %c0_i32_0 : i32, i32
  }
  func.func @transform_2(%arg0: i32) -> (i32, i32) {
    %c0_i32 = arith.constant 0 : i32
    %c0_i32_0 = arith.constant 0 : i32
    %c0_i32_1 = arith.constant 0 : i32
    return %c0_i32, %c0_i32_0 : i32, i32
  }
  func.func @transform_3(%arg0: i32) -> (i32, i32) {
    %c0_i32 = arith.constant 0 : i32
    %c0_i32_0 = arith.constant 0 : i32
    %c0_i32_1 = arith.constant 0 : i32
    return %c0_i32, %c0_i32_0 : i32, i32
  }
  func.func @transform_4(%arg0: i32) -> (i32, i32) {
    %c0_i32 = arith.constant 0 : i32
    %c0_i32_0 = arith.constant 0 : i32
    %c0_i32_1 = arith.constant 0 : i32
    return %c0_i32, %c0_i32_0 : i32, i32
  }
  func.func @transform_5(%arg0: i32) -> (i32, i32) {
    %c0_i32 = arith.constant 0 : i32
    %c0_i32_0 = arith.constant 0 : i32
    %c0_i32_1 = arith.constant 0 : i32
    return %c0_i32, %c0_i32_0 : i32, i32
  }
  func.func @transform_6(%arg0: i32) -> (i32, i32, i32, i32) {
    %c0_i32 = arith.constant 0 : i32
    %c0_i32_0 = arith.constant 0 : i32
    %c0_i32_1 = arith.constant 0 : i32
    %c0_i32_2 = arith.constant 0 : i32
    return %arg0, %c0_i32, %c0_i32_0, %c0_i32_1 : i32, i32, i32, i32
  }
}

</mosaic_0001>

<llo_original>
// kernel: final_patch_expanding.1
$region0: #{final_patch_expanding.1}
  #allocation0 [shape = 'u32[]', space=smem, size = 0x4, offset = 0x4, fixed_abs, tag = 'smem constant byte address 0x4 - core index']
  #allocation1 [shape = 'u32[144,128]{1,0:T(1,128)}', space=vmem, size = 0x12000, scoped, tag = 'internal scratch']
  %s0 = inlined_call_operand.vmem [shape: f32[128,32], index: 0, kind: input, shape index: {}]
  %s1 = inlined_call_operand.vmem [shape: f32[32,512], index: 1, kind: input, shape index: {}]
  %s2 = inlined_call_operand.vmem [shape: f32[1,512], index: 2, kind: input, shape index: {}]
  %s3 = inlined_call_operand.vmem [shape: f32[1,512], index: 3, kind: input, shape index: {}]
  %s4 = inlined_call_operand.vmem [shape: f32[512,16], index: 4, kind: input, shape index: {}]
  %s5 = inlined_call_operand.vmem [shape: f32[16,512], index: 5, kind: input, shape index: {}]
  %s6 = inlined_call_operand.vmem [shape: f32[16,4,8,128], index: 6, kind: output, shape index: {}]
  %s7 = sld [smem:[#allocation0]]
  $region57: #{final_patch_expanding.1} parent=0
    _
  %s9 = ssub.s32 1, %s7
  %s10 = scalar_select 0, %s9, %s7
  loop: start=0, step=1, limit=4
  $region2: #{final_patch_expanding.1} parent=0 // loop_pre_header
    _
  $region3: #{final_patch_expanding.1} parent=0 // loop_header
    %s12 = sphi 0, %s16
    %p13 = scmp.ge.s32.totalorder %s12, 4
    %s22 = sphi 0, %s24
    %s25 = sphi 0, %s22
    %s26 = sphi 0, %s25
    %s42 = sphi 0, %s26
    %s46 = sphi 0, %s46
    %s48 = sphi 0, %s46
    %s49 = sphi 0, %s48
    %s63 = sphi 0, %s49
    %s67 = sphi 0, %s67
    %s69 = sphi 0, %s67
    %s70 = sphi 0, %s69
    %s84 = sphi 0, %s70
    %s88 = sphi 0, %s88
    %s90 = sphi 0, %s88
    %s91 = sphi 0, %s90
    %s105 = sphi 0, %s91
    %s109 = sphi 0, %s109
    %s111 = sphi 0, %s109
    %s112 = sphi 0, %s111
    %s126 = sphi 0, %s112
    %s130 = sphi 0, %s130
    %s132 = sphi 0, %s130
    %s133 = sphi 0, %s132
    %s147 = sphi 0, %s133
    %s153 = sphi 0, %s155
    %s156 = sphi 0, %s153
    %s157 = sphi 0, %s156
    %s173 = sphi 0, %s157
  $region4: #{final_patch_expanding.1} parent=0 // loop_header_branch
    %15 = sbr.rel (%p13) target = $region8
  $region5: #{final_patch_expanding.1} parent=0 // loop_body
    %s17 = ssub.s32 %s12, 1
    %s18 = ssub.s32 %s12, 2
    %s19 = sadd.s32 %s12, 1
    %s20 = ssub.s32 %s12, %s19
    %p21 = scmp.eq.s32.totalorder %s20, 0
    %s23 = sadd.s32 %s22, 1
    %s24 = scalar_select %p21, %s22, %s23
    %p27 = pneg %p21
    %p28 = scmp.eq.s32.totalorder %s12, 1
    %p29 = por %p27, %p28
    %p30 = scmp.ne.s32.totalorder %s22, %s25
    %p31 = scmp.eq.s32.totalorder %s12, 0
    %p32 = por %p30, %p31
    %p33 = scmp.ne.s32.totalorder %s22, %s25
    %p34 = scmp.eq.s32.totalorder %s17, 1
    %p35 = por %p33, %p34
    %p36 = scmp.ne.s32.totalorder %s25, %s26
    %p37 = scmp.eq.s32.totalorder %s17, 0
    %p38 = por %p36, %p37
    %p39 = scmp.ne.s32.totalorder %s25, %s26
    %p40 = scmp.eq.s32.totalorder %s18, 1
    %p41 = por %p39, %p40
    %p43 = scmp.ne.s32.totalorder %s26, %s42
    %p44 = scmp.eq.s32.totalorder %s18, 0
    %p45 = por %p43, %p44
    %s47 = sadd.s32 %s46, 1
    %p50 = scmp.eq.s32.totalorder %s12, 1
    %p51 = scmp.ne.s32.totalorder %s46, %s48
    %p52 = scmp.eq.s32.totalorder %s12, 0
    %p53 = por %p51, %p52
    %p54 = scmp.ne.s32.totalorder %s46, %s48
    %p55 = scmp.eq.s32.totalorder %s17, 1
    %p56 = por %p54, %p55
    %p57 = scmp.ne.s32.totalorder %s48, %s49
    %p58 = scmp.eq.s32.totalorder %s17, 0
    %p59 = por %p57, %p58
    %p60 = scmp.ne.s32.totalorder %s48, %s49
    %p61 = scmp.eq.s32.totalorder %s18, 1
    %p62 = por %p60, %p61
    %p64 = scmp.ne.s32.totalorder %s49, %s63
    %p65 = scmp.eq.s32.totalorder %s18, 0
    %p66 = por %p64, %p65
    %s68 = sadd.s32 %s67, 1
    %p71 = scmp.eq.s32.totalorder %s12, 1
    %p72 = scmp.ne.s32.totalorder %s67, %s69
    %p73 = scmp.eq.s32.totalorder %s12, 0
    %p74 = por %p72, %p73
    %p75 = scmp.ne.s32.totalorder %s67, %s69
    %p76 = scmp.eq.s32.totalorder %s17, 1
    %p77 = por %p75, %p76
    %p78 = scmp.ne.s32.totalorder %s69, %s70
    %p79 = scmp.eq.s32.totalorder %s17, 0
    %p80 = por %p78, %p79
    %p81 = scmp.ne.s32.totalorder %s69, %s70
    %p82 = scmp.eq.s32.totalorder %s18, 1
    %p83 = por %p81, %p82
    %p85 = scmp.ne.s32.totalorder %s70, %s84
    %p86 = scmp.eq.s32.totalorder %s18, 0
    %p87 = por %p85, %p86
    %s89 = sadd.s32 %s88, 1
    %p92 = scmp.eq.s32.totalorder %s12, 1
    %p93 = scmp.ne.s32.totalorder %s88, %s90
    %p94 = scmp.eq.s32.totalorder %s12, 0
    %p95 = por %p93, %p94
    %p96 = scmp.ne.s32.totalorder %s88, %s90
    %p97 = scmp.eq.s32.totalorder %s17, 1
    %p98 = por %p96, %p97
    %p99 = scmp.ne.s32.totalorder %s90, %s91
    %p100 = scmp.eq.s32.totalorder %s17, 0
    %p101 = por %p99, %p100
    %p102 = scmp.ne.s32.totalorder %s90, %s91
    %p103 = scmp.eq.s32.totalorder %s18, 1
    %p104 = por %p102, %p103
    %p106 = scmp.ne.s32.totalorder %s91, %s105
    %p107 = scmp.eq.s32.totalorder %s18, 0
    %p108 = por %p106, %p107
    %s110 = sadd.s32 %s109, 1
    %p113 = scmp.eq.s32.totalorder %s12, 1
    %p114 = scmp.ne.s32.totalorder %s109, %s111
    %p115 = scmp.eq.s32.totalorder %s12, 0
    %p116 = por %p114, %p115
    %p117 = scmp.ne.s32.totalorder %s109, %s111
    %p118 = scmp.eq.s32.totalorder %s17, 1
    %p119 = por %p117, %p118
    %p120 = scmp.ne.s32.totalorder %s111, %s112
    %p121 = scmp.eq.s32.totalorder %s17, 0
    %p122 = por %p120, %p121
    %p123 = scmp.ne.s32.totalorder %s111, %s112
    %p124 = scmp.eq.s32.totalorder %s18, 1
    %p125 = por %p123, %p124
    %p127 = scmp.ne.s32.totalorder %s112, %s126
    %p128 = scmp.eq.s32.totalorder %s18, 0
    %p129 = por %p127, %p128
    %s131 = sadd.s32 %s130, 1
    %p134 = scmp.eq.s32.totalorder %s12, 1
    %p135 = scmp.ne.s32.totalorder %s130, %s132
    %p136 = scmp.eq.s32.totalorder %s12, 0
    %p137 = por %p135, %p136
    %p138 = scmp.ne.s32.totalorder %s130, %s132
    %p139 = scmp.eq.s32.totalorder %s17, 1
    %p140 = por %p138, %p139
    %p141 = scmp.ne.s32.totalorder %s132, %s133
    %p142 = scmp.eq.s32.totalorder %s17, 0
    %p143 = por %p141, %p142
    %p144 = scmp.ne.s32.totalorder %s132, %s133
    %p145 = scmp.eq.s32.totalorder %s18, 1
    %p146 = por %p144, %p145
    %p148 = scmp.ne.s32.totalorder %s133, %s147
    %p149 = scmp.eq.s32.totalorder %s18, 0
    %p150 = por %p148, %p149
    %s151 = ssub.s32 %s12, %s19
    %p152 = scmp.eq.s32.totalorder %s151, 0
    %s154 = sadd.s32 %s153, 1
    %s155 = scalar_select %p152, %s153, %s154
    %p158 = pneg %p152
    %p159 = scmp.eq.s32.totalorder %s12, 1
    %p160 = por %p158, %p159
    %p161 = scmp.ne.s32.totalorder %s153, %s156
    %p162 = scmp.eq.s32.totalorder %s12, 0
    %p163 = por %p161, %p162
    %p164 = scmp.ne.s32.totalorder %s153, %s156
    %p165 = scmp.eq.s32.totalorder %s17, 1
    %p166 = por %p164, %p165
    %p167 = scmp.ne.s32.totalorder %s156, %s157
    %p168 = scmp.eq.s32.totalorder %s17, 0
    %p169 = por %p167, %p168
    %p170 = scmp.ne.s32.totalorder %s156, %s157
    %p171 = scmp.eq.s32.totalorder %s18, 1
    %p172 = por %p170, %p171
    %p174 = scmp.ne.s32.totalorder %s157, %s173
    %p175 = scmp.eq.s32.totalorder %s18, 0
    %p176 = por %p174, %p175
    %p177 = scmp.le.s32.totalorder 1, %s12
    %p178 = scmp.lt.s32.totalorder %s12, 3
    %p179 = pnand %p177, %p178
    %p180 = pneg %p179
    // Predicated region
    $region9: #{final_patch_expanding.1} parent=5 // pred_check
      _
    $region10: #{final_patch_expanding.1} parent=5 // pred_check_branch
      %182 = sbr.rel (%p179) target = $region12
    $region11: #{final_patch_expanding.1} parent=5 // pred_region
      %s183 = ssub.s32 %s12, 1
      // Predicated region
      $region13: #{final_patch_expanding.1} parent=11 // pred_check
        %p184 = pneg %p59
      $region14: #{final_patch_expanding.1} parent=11 // pred_check_branch
        %186 = sbr.rel (%p184) target = $region16
      $region15: #{final_patch_expanding.1} parent=11 // pred_region
        _
      $region16: #{final_patch_expanding.1} parent=11 // pred_fallthru
        _
      // Predicated region
      $region17: #{final_patch_expanding.1} parent=11 // pred_check
        %p187 = pneg %p80
      $region18: #{final_patch_expanding.1} parent=11 // pred_check_branch
        %189 = sbr.rel (%p187) target = $region20
      $region19: #{final_patch_expanding.1} parent=11 // pred_region
        _
      $region20: #{final_patch_expanding.1} parent=11 // pred_fallthru
        _
      // Predicated region
      $region21: #{final_patch_expanding.1} parent=11 // pred_check
        %p190 = pneg %p101
      $region22: #{final_patch_expanding.1} parent=11 // pred_check_branch
        %192 = sbr.rel (%p190) target = $region24
      $region23: #{final_patch_expanding.1} parent=11 // pred_region
        _
      $region24: #{final_patch_expanding.1} parent=11 // pred_fallthru
        _
      // Predicated region
      $region25: #{final_patch_expanding.1} parent=11 // pred_check
        %p193 = pneg %p122
      $region26: #{final_patch_expanding.1} parent=11 // pred_check_branch
        %195 = sbr.rel (%p193) target = $region28
      $region27: #{final_patch_expanding.1} parent=11 // pred_region
        _
      $region28: #{final_patch_expanding.1} parent=11 // pred_fallthru
        _
      // Predicated region
      $region29: #{final_patch_expanding.1} parent=11 // pred_check
        %p196 = pneg %p143
      $region30: #{final_patch_expanding.1} parent=11 // pred_check_branch
        %198 = sbr.rel (%p196) target = $region32
      $region31: #{final_patch_expanding.1} parent=11 // pred_region
        _
      $region32: #{final_patch_expanding.1} parent=11 // pred_fallthru
        _
    $region12: #{final_patch_expanding.1} parent=5 // pred_fallthru
      _
    %p199 = scmp.lt.s32.totalorder %s12, 2
    // Predicated region
    $region33: #{final_patch_expanding.1} parent=5 // pred_check
      %p200 = pneg %p199
    $region34: #{final_patch_expanding.1} parent=5 // pred_check_branch
      %202 = sbr.rel (%p200) target = $region36
    $region35: #{final_patch_expanding.1} parent=5 // pred_region
      // Predicated region
      $region37: #{final_patch_expanding.1} parent=35 // pred_check
        %p203 = pneg %p32
      $region38: #{final_patch_expanding.1} parent=35 // pred_check_branch
        %205 = sbr.rel (%p203) target = $region40
      $region39: #{final_patch_expanding.1} parent=35 // pred_region
        %s206 = smul.u32 8, %s12
        %p207 = scmp.lt.s32.totalorder %s206, 15
        %s208 = scalar_select %p207, %s206, 15
        %s209 = smul.addr %s208, 8
        %s210 = scalar_lea.vmem %s0, %s209
        %s211 = smul.u32 8, %s12
      $region40: #{final_patch_expanding.1} parent=35 // pred_fallthru
        _
    $region36: #{final_patch_expanding.1} parent=5 // pred_fallthru
      _
    %p212 = scmp.le.s32.totalorder 1, %s12
    %p213 = scmp.lt.s32.totalorder %s12, 3
    %p214 = pnand %p212, %p213
    %p215 = pneg %p214
    // Predicated region
    $region41: #{final_patch_expanding.1} parent=5 // pred_check
      _
    $region42: #{final_patch_expanding.1} parent=5 // pred_check_branch
      %217 = sbr.rel (%p214) target = $region44
    $region43: #{final_patch_expanding.1} parent=5 // pred_region
      %s218 = ssub.s32 %s12, 1
      %s219 = smul.u32 8, %s17
      %p220 = scmp.lt.s32.totalorder %s219, 15
      %s221 = scalar_select %p220, %s219, 15
      %s222 = smul.addr %s221, 8
      %s223 = scalar_lea.vmem %s0, %s222
      %p224 = pneg %p38
      %p225 = pneg %p35
      %p226 = pneg %p59
      %p227 = pneg %p56
      %p228 = pneg %p80
      %p229 = pneg %p77
      %p230 = pneg %p101
      %p231 = pneg %p98
      %p232 = pneg %p122
      %p233 = pneg %p119
      %p234 = pneg %p143
      %p235 = pneg %p140
      %p236 = pneg %p169
      %p237 = pneg %p166
      %s238 = smul.u32 8, %s17
      %p239 = scmp.lt.s32.totalorder %s238, 15
      %s240 = scalar_select %p239, %s238, 15
      %s241 = smul.addr %s240, 4
      %s242 = smul.addr %s241, 8
      %s243 = scalar_lea.vmem %s6, %s242
      %s244 = smul.u32 8, %s17
      %p245 = scmp.lt.s32.totalorder %s244, 15
      %s246 = scalar_select %p245, %s244, 15
      %s247 = smul.addr %s246, 8
      %s248 = scalar_lea.vmem %s0, %s247
      %s249 = smul.u32 8, %s17
      %s250 = smul.u32 8, %s17
      %p251 = scmp.lt.s32.totalorder %s250, 15
      %s252 = scalar_select %p251, %s250, 15
      %s253 = smul.addr %s252, 4
      %s254 = smul.addr %s253, 8
      %s255 = scalar_lea.vmem %s6, %s254
      %s256 = smul.u32 8, %s17
      %v257 = vld [vmem:[%s248] sm:$0xff]
      %v258 = vld [vmem:[%s248 + $0x8] sm:$0xff]
      %v259 = vld [vmem:[%s248 + $0x10] sm:$0xff]
      %v260 = vld [vmem:[%s248 + $0x18] sm:$0xff]
      %v261 = vld [vmem:[%s248 + $0x20] sm:$0xff]
      %v262 = vld [vmem:[%s248 + $0x28] sm:$0xff]
      %v263 = vld [vmem:[%s248 + $0x30] sm:$0xff]
      %v264 = vld [vmem:[%s248 + $0x38] sm:$0xff]
      %v265 = vld [vmem:[%s1] sm:$0xff]
      %v266 = vld [vmem:[%s1 + $0x8] sm:$0xff]
      %v267 = vld [vmem:[%s1 + $0x10] sm:$0xff]
      %v268 = vld [vmem:[%s1 + $0x18] sm:$0xff]
      %v269 = vld [vmem:[%s1 + $0x20] sm:$0xff]
      %v270 = vld [vmem:[%s1 + $0x28] sm:$0xff]
      %v271 = vld [vmem:[%s1 + $0x30] sm:$0xff]
      %v272 = vld [vmem:[%s1 + $0x38] sm:$0xff]
      %v273 = vld [vmem:[%s1 + $0x40] sm:$0xff]
      %v274 = vld [vmem:[%s1 + $0x48] sm:$0xff]
      %v275 = vld [vmem:[%s1 + $0x50] sm:$0xff]
      %v276 = vld [vmem:[%s1 + $0x58] sm:$0xff]
      %v277 = vld [vmem:[%s1 + $0x60] sm:$0xff]
      %v278 = vld [vmem:[%s1 + $0x68] sm:$0xff]
      %v279 = vld [vmem:[%s1 + $0x70] sm:$0xff]
      %v280 = vld [vmem:[%s1 + $0x78] sm:$0xff]
      %vm281 = vcmask 261120
      %v283 = vsel %vm281, %v257, 0
      %v286 = vsel %vm281, %v258, 0
      %v289 = vsel %vm281, %v259, 0
      %v292 = vsel %vm281, %v260, 0
      %v295 = vsel %vm281, %v261, 0
      %v298 = vsel %vm281, %v262, 0
      %v301 = vsel %vm281, %v263, 0
      %v304 = vsel %vm281, %v264, 0
      %306 = vmatprep.subr.mxu0 %v266
      %307 = vmatpush1.msra.mxu0 %v265
      %308 = vmatprep.subr.mxu0 %v270
      %309 = vmatpush1.msra.mxu0 %v269
      %310 = vmatprep.subr.mxu0 %v274
      %311 = vmatpush1.msra.mxu0 %v273
      %312 = vmatprep.subr.mxu0 %v278
      %313 = vmatpush1.msra.mxu0 %v277
      %314 = vmatprep.subr.mxu0 0.0
      %315 = vmatpush1.msra.mxu0 0.0
      %316 = vmatprep.subr.mxu0 0.0
      %317 = vmatpush1.msra.mxu0 0.0
      %318 = vmatprep.subr.mxu0 0.0
      %319 = vmatpush1.msra.mxu0 0.0
      %320 = vmatprep.subr.mxu0 0.0
      %321 = vmatpush1.msra.mxu0 0.0
      %322 = vmatprep.subr.mxu0 0.0
      %323 = vmatpush1.msra.mxu0 0.0
      %324 = vmatprep.subr.mxu0 0.0
      %325 = vmatpush1.msra.mxu0 0.0
      %326 = vmatprep.subr.mxu0 0.0
      %327 = vmatpush1.msra.mxu0 0.0
      %328 = vmatprep.subr.mxu0 0.0
      %329 = vmatpush1.msra.mxu0 0.0
      %330 = vmatprep.subr.mxu0 0.0
      %331 = vmatpush1.msra.mxu0 0.0
      %332 = vmatprep.subr.mxu0 0.0
      %333 = vmatpush1.msra.mxu0 0.0
      %334 = vmatprep.subr.mxu0 0.0
      %335 = vmatpush1.msra.mxu0 0.0
      %336 = vmatprep.subr.mxu0 0.0
      %337 = vmatpush1.msra.mxu0 0.0
      %338 = vmatprep.subr.mxu0 0.0
      %339 = vmatpush1.msra.mxu0 0.0
      %340 = vmatprep.subr.mxu0 0.0
      %341 = vmatpush1.msra.mxu0 0.0
      %342 = vmatprep.subr.mxu0 0.0
      %343 = vmatpush1.msra.mxu0 0.0
      %344 = vmatprep.subr.mxu0 0.0
      %345 = vmatpush1.msra.mxu0 0.0
      %346 = vmatprep.subr.mxu0 0.0
      %347 = vmatpush1.msra.mxu0 0.0
      %348 = vmatprep.subr.mxu0 0.0
      %349 = vmatpush1.msra.mxu0 0.0
      %350 = vmatprep.subr.mxu0 0.0
      %351 = vmatpush1.msra.mxu0 0.0
      %352 = vmatprep.subr.mxu0 0.0
      %353 = vmatpush1.msra.mxu0 0.0
      %354 = vmatprep.subr.mxu0 0.0
      %355 = vmatpush1.msra.mxu0 0.0
      %356 = vmatprep.subr.mxu0 0.0
      %357 = vmatpush1.msra.mxu0 0.0
      %358 = vmatprep.subr.mxu0 0.0
      %359 = vmatpush1.msra.mxu0 0.0
      %360 = vmatprep.subr.mxu0 0.0
      %361 = vmatpush1.msra.mxu0 0.0
      %362 = vmatprep.subr.mxu0 0.0
      %363 = vmatpush1.msra.mxu0 0.0
      %364 = vmatprep.subr.mxu0 0.0
      %365 = vmatpush1.msra.mxu0 0.0
      %366 = vmatprep.subr.mxu0 0.0
      %367 = vmatpush1.msra.mxu0 0.0
      %368 = vmatprep.subr.mxu0 0.0
      %369 = vmatpush1.msra.mxu0 0.0
      %370 = vmatprep.mubr.f32.mxu0 0.0
      %371 = vmatmul.mubr.f32.gmra.mrb[0].mxu0 %v283
      %v372 = vpop.f32.mrb[0].mxu0
      %v373 = vadd.f32 0.0, %v372
      %v374 = vpop.f32.mrb[0].mxu0
      %v375 = vadd.f32 0.0, %v374
      %376 = vmatprep.mubr.f32.mxu0 0.0
      %377 = vmatmul.mubr.f32.gmra.mrb[0].mxu0 %v286
      %v378 = vpop.f32.mrb[0].mxu0
      %v379 = vadd.f32 0.0, %v378
      %v380 = vpop.f32.mrb[0].mxu0
      %v381 = vadd.f32 0.0, %v380
      %382 = vmatprep.mubr.f32.mxu0 0.0
      %383 = vmatmul.mubr.f32.gmra.mrb[0].mxu0 %v289
      %v384 = vpop.f32.mrb[0].mxu0
      %v385 = vadd.f32 0.0, %v384
      %v386 = vpop.f32.mrb[0].mxu0
      %v387 = vadd.f32 0.0, %v386
      %388 = vmatprep.mubr.f32.mxu0 0.0
      %389 = vmatmul.mubr.f32.gmra.mrb[0].mxu0 %v292
      %v390 = vpop.f32.mrb[0].mxu0
      %v391 = vadd.f32 0.0, %v390
      %v392 = vpop.f32.mrb[0].mxu0
      %v393 = vadd.f32 0.0, %v392
      %394 = vmatprep.mubr.f32.mxu0 0.0
      %395 = vmatmul.mubr.f32.gmra.mrb[0].mxu0 %v295
      %v396 = vpop.f32.mrb[0].mxu0
      %v397 = vadd.f32 0.0, %v396
      %v398 = vpop.f32.mrb[0].mxu0
      %v399 = vadd.f32 0.0, %v398
      %400 = vmatprep.mubr.f32.mxu0 0.0
      %401 = vmatmul.mubr.f32.gmra.mrb[0].mxu0 %v298
      %v402 = vpop.f32.mrb[0].mxu0
      %v403 = vadd.f32 0.0, %v402
      %v404 = vpop.f32.mrb[0].mxu0
      %v405 = vadd.f32 0.0, %v404
      %406 = vmatprep.mubr.f32.mxu0 0.0
      %407 = vmatmul.mubr.f32.gmra.mrb[0].mxu0 %v301
      %v408 = vpop.f32.mrb[0].mxu0
      %v409 = vadd.f32 0.0, %v408
      %v410 = vpop.f32.mrb[0].mxu0
      %v411 = vadd.f32 0.0, %v410
      %412 = vmatprep.mubr.f32.mxu0 0.0
      %413 = vmatmul.mubr.f32.gmra.mrb[0].mxu0 %v304
      %v414 = vpop.f32.mrb[0].mxu0
      %v415 = vadd.f32 0.0, %v414
      %v416 = vpop.f32.mrb[0].mxu0
      %v417 = vadd.f32 0.0, %v416
      %418 = vdwg.mxu0
      %419 = vmatprep.subr.mxu0 %v268
      %420 = vmatpush1.msra.mxu0 %v267
      %421 = vmatprep.subr.mxu0 %v272
      %422 = vmatpush1.msra.mxu0 %v271
      %423 = vmatprep.subr.mxu0 %v276
      %424 = vmatpush1.msra.mxu0 %v275
      %425 = vmatprep.subr.mxu0 %v280
      %426 = vmatpush1.msra.mxu0 %v279
      %427 = vmatprep.subr.mxu0 0.0
      %428 = vmatpush1.msra.mxu0 0.0
      %429 = vmatprep.subr.mxu0 0.0
      %430 = vmatpush1.msra.mxu0 0.0
      %431 = vmatprep.subr.mxu0 0.0
      %432 = vmatpush1.msra.mxu0 0.0
      %433 = vmatprep.subr.mxu0 0.0
      %434 = vmatpush1.msra.mxu0 0.0
      %435 = vmatprep.subr.mxu0 0.0
      %436 = vmatpush1.msra.mxu0 0.0
      %437 = vmatprep.subr.mxu0 0.0
      %438 = vmatpush1.msra.mxu0 0.0
      %439 = vmatprep.subr.mxu0 0.0
      %440 = vmatpush1.msra.mxu0 0.0
      %441 = vmatprep.subr.mxu0 0.0
      %442 = vmatpush1.msra.mxu0 0.0
      %443 = vmatprep.subr.mxu0 0.0
      %444 = vmatpush1.msra.mxu0 0.0
      %445 = vmatprep.subr.mxu0 0.0
      %446 = vmatpush1.msra.mxu0 0.0
      %447 = vmatprep.subr.mxu0 0.0
      %448 = vmatpush1.msra.mxu0 0.0
      %449 = vmatprep.subr.mxu0 0.0
      %450 = vmatpush1.msra.mxu0 0.0
      %451 = vmatprep.subr.mxu0 0.0
      %452 = vmatpush1.msra.mxu0 0.0
      %453 = vmatprep.subr.mxu0 0.0
      %454 = vmatpush1.msra.mxu0 0.0
      %455 = vmatprep.subr.mxu0 0.0
      %456 = vmatpush1.msra.mxu0 0.0
      %457 = vmatprep.subr.mxu0 0.0
      %458 = vmatpush1.msra.mxu0 0.0
      %459 = vmatprep.subr.mxu0 0.0
      %460 = vmatpush1.msra.mxu0 0.0
      %461 = vmatprep.subr.mxu0 0.0
      %462 = vmatpush1.msra.mxu0 0.0
      %463 = vmatprep.subr.mxu0 0.0
      %464 = vmatpush1.msra.mxu0 0.0
      %465 = vmatprep.subr.mxu0 0.0
      %466 = vmatpush1.msra.mxu0 0.0
      %467 = vmatprep.subr.mxu0 0.0
      %468 = vmatpush1.msra.mxu0 0.0
      %469 = vmatprep.subr.mxu0 0.0
      %470 = vmatpush1.msra.mxu0 0.0
      %471 = vmatprep.subr.mxu0 0.0
      %472 = vmatpush1.msra.mxu0 0.0
      %473 = vmatprep.subr.mxu0 0.0
      %474 = vmatpush1.msra.mxu0 0.0
      %475 = vmatprep.subr.mxu0 0.0
      %476 = vmatpush1.msra.mxu0 0.0
      %477 = vmatprep.subr.mxu0 0.0
      %478 = vmatpush1.msra.mxu0 0.0
      %479 = vmatprep.subr.mxu0 0.0
      %480 = vmatpush1.msra.mxu0 0.0
      %481 = vmatprep.subr.mxu0 0.0
      %482 = vmatpush1.msra.mxu0 0.0
      %483 = vmatprep.mubr.f32.mxu0 0.0
      %484 = vmatmul.mubr.f32.gmra.mrb[0].mxu0 %v283
      %v485 = vpop.f32.mrb[0].mxu0
      %v486 = vadd.f32 0.0, %v485
      %v487 = vpop.f32.mrb[0].mxu0
      %v488 = vadd.f32 0.0, %v487
      %489 = vmatprep.mubr.f32.mxu0 0.0
      %490 = vmatmul.mubr.f32.gmra.mrb[0].mxu0 %v286
      %v491 = vpop.f32.mrb[0].mxu0
      %v492 = vadd.f32 0.0, %v491
      %v493 = vpop.f32.mrb[0].mxu0
      %v494 = vadd.f32 0.0, %v493
      %495 = vmatprep.mubr.f32.mxu0 0.0
      %496 = vmatmul.mubr.f32.gmra.mrb[0].mxu0 %v289
      %v497 = vpop.f32.mrb[0].mxu0
      %v498 = vadd.f32 0.0, %v497
      %v499 = vpop.f32.mrb[0].mxu0
      %v500 = vadd.f32 0.0, %v499
      %501 = vmatprep.mubr.f32.mxu0 0.0
      %502 = vmatmul.mubr.f32.gmra.mrb[0].mxu0 %v292
      %v503 = vpop.f32.mrb[0].mxu0
      %v504 = vadd.f32 0.0, %v503
      %v505 = vpop.f32.mrb[0].mxu0
      %v506 = vadd.f32 0.0, %v505
      %507 = vmatprep.mubr.f32.mxu0 0.0
      %508 = vmatmul.mubr.f32.gmra.mrb[0].mxu0 %v295
      %v509 = vpop.f32.mrb[0].mxu0
      %v510 = vadd.f32 0.0, %v509
      %v511 = vpop.f32.mrb[0].mxu0
      %v512 = vadd.f32 0.0, %v511
      %513 = vmatprep.mubr.f32.mxu0 0.0
      %514 = vmatmul.mubr.f32.gmra.mrb[0].mxu0 %v298
      %v515 = vpop.f32.mrb[0].mxu0
      %v516 = vadd.f32 0.0, %v515
      %v517 = vpop.f32.mrb[0].mxu0
      %v518 = vadd.f32 0.0, %v517
      %519 = vmatprep.mubr.f32.mxu0 0.0
      %520 = vmatmul.mubr.f32.gmra.mrb[0].mxu0 %v301
      %v521 = vpop.f32.mrb[0].mxu0
      %v522 = vadd.f32 0.0, %v521
      %v523 = vpop.f32.mrb[0].mxu0
      %v524 = vadd.f32 0.0, %v523
      %525 = vmatprep.mubr.f32.mxu0 0.0
      %526 = vmatmul.mubr.f32.gmra.mrb[0].mxu0 %v304
      %v527 = vpop.f32.mrb[0].mxu0
      %v528 = vadd.f32 0.0, %v527
      %v529 = vpop.f32.mrb[0].mxu0
      %v530 = vadd.f32 0.0, %v529
      %531 = vdwg.mxu0
      %v532 = vld [vmem:[%s4] sm:$0xff]
      %v533 = vld [vmem:[%s4 + $0x8] sm:$0xff]
      %v534 = vld [vmem:[%s4 + $0x10] sm:$0xff]
      %v535 = vld [vmem:[%s4 + $0x18] sm:$0xff]
      %v536 = vld [vmem:[%s4 + $0x20] sm:$0xff]
      %v537 = vld [vmem:[%s4 + $0x28] sm:$0xff]
      %v538 = vld [vmem:[%s4 + $0x30] sm:$0xff]
      %v539 = vld [vmem:[%s4 + $0x38] sm:$0xff]
      %v540 = vld [vmem:[%s4 + $0x40] sm:$0xff]
      %v541 = vld [vmem:[%s4 + $0x48] sm:$0xff]
      %v542 = vld [vmem:[%s4 + $0x50] sm:$0xff]
      %v543 = vld [vmem:[%s4 + $0x58] sm:$0xff]
      %v544 = vld [vmem:[%s4 + $0x60] sm:$0xff]
      %v545 = vld [vmem:[%s4 + $0x68] sm:$0xff]
      %v546 = vld [vmem:[%s4 + $0x70] sm:$0xff]
      %v547 = vld [vmem:[%s4 + $0x78] sm:$0xff]
      %v548 = vld [vmem:[%s4 + $0x80] sm:$0xff]
      %v549 = vld [vmem:[%s4 + $0x88] sm:$0xff]
      %v550 = vld [vmem:[%s4 + $0x90] sm:$0xff]
      %v551 = vld [vmem:[%s4 + $0x98] sm:$0xff]
      %v552 = vld [vmem:[%s4 + $0xa0] sm:$0xff]
      %v553 = vld [vmem:[%s4 + $0xa8] sm:$0xff]
      %v554 = vld [vmem:[%s4 + $0xb0] sm:$0xff]
      %v555 = vld [vmem:[%s4 + $0xb8] sm:$0xff]
      %v556 = vld [vmem:[%s4 + $0xc0] sm:$0xff]
      %v557 = vld [vmem:[%s4 + $0xc8] sm:$0xff]
      %v558 = vld [vmem:[%s4 + $0xd0] sm:$0xff]
      %v559 = vld [vmem:[%s4 + $0xd8] sm:$0xff]
      %v560 = vld [vmem:[%s4 + $0xe0] sm:$0xff]
      %v561 = vld [vmem:[%s4 + $0xe8] sm:$0xff]
      %v562 = vld [vmem:[%s4 + $0xf0] sm:$0xff]
      %v563 = vld [vmem:[%s4 + $0xf8] sm:$0xff]
      %v564 = vld [vmem:[%s4 + $0x100] sm:$0xff]
      %v565 = vld [vmem:[%s4 + $0x108] sm:$0xff]
      %v566 = vld [vmem:[%s4 + $0x110] sm:$0xff]
      %v567 = vld [vmem:[%s4 + $0x118] sm:$0xff]
      %v568 = vld [vmem:[%s4 + $0x120] sm:$0xff]
      %v569 = vld [vmem:[%s4 + $0x128] sm:$0xff]
      %v570 = vld [vmem:[%s4 + $0x130] sm:$0xff]
      %v571 = vld [vmem:[%s4 + $0x138] sm:$0xff]
      %v572 = vld [vmem:[%s4 + $0x140] sm:$0xff]
      %v573 = vld [vmem:[%s4 + $0x148] sm:$0xff]
      %v574 = vld [vmem:[%s4 + $0x150] sm:$0xff]
      %v575 = vld [vmem:[%s4 + $0x158] sm:$0xff]
      %v576 = vld [vmem:[%s4 + $0x160] sm:$0xff]
      %v577 = vld [vmem:[%s4 + $0x168] sm:$0xff]
      %v578 = vld [vmem:[%s4 + $0x170] sm:$0xff]
      %v579 = vld [vmem:[%s4 + $0x178] sm:$0xff]
      %v580 = vld [vmem:[%s4 + $0x180] sm:$0xff]
      %v581 = vld [vmem:[%s4 + $0x188] sm:$0xff]
      %v582 = vld [vmem:[%s4 + $0x190] sm:$0xff]
      %v583 = vld [vmem:[%s4 + $0x198] sm:$0xff]
      %v584 = vld [vmem:[%s4 + $0x1a0] sm:$0xff]
      %v585 = vld [vmem:[%s4 + $0x1a8] sm:$0xff]
      %v586 = vld [vmem:[%s4 + $0x1b0] sm:$0xff]
      %v587 = vld [vmem:[%s4 + $0x1b8] sm:$0xff]
      %v588 = vld [vmem:[%s4 + $0x1c0] sm:$0xff]
      %v589 = vld [vmem:[%s4 + $0x1c8] sm:$0xff]
      %v590 = vld [vmem:[%s4 + $0x1d0] sm:$0xff]
      %v591 = vld [vmem:[%s4 + $0x1d8] sm:$0xff]
      %v592 = vld [vmem:[%s4 + $0x1e0] sm:$0xff]
      %v593 = vld [vmem:[%s4 + $0x1e8] sm:$0xff]
      %v594 = vld [vmem:[%s4 + $0x1f0] sm:$0xff]
      %v595 = vld [vmem:[%s4 + $0x1f8] sm:$0xff]
      %596 = vmatprep.subr.mxu0 0.0
      %v597 = vand.u32 %v532, 4294901760
      %598 = vmatpush1.msra.mxu0 %v597
      %599 = vmatprep.subr.mxu0 0.0
      %v600 = vand.u32 %v533, 4294901760
      %601 = vmatpush1.msra.mxu0 %v600
      %602 = vmatprep.subr.mxu0 0.0
      %v603 = vand.u32 %v534, 4294901760
      %604 = vmatpush1.msra.mxu0 %v603
      %605 = vmatprep.subr.mxu0 0.0
      %v606 = vand.u32 %v535, 4294901760
      %607 = vmatpush1.msra.mxu0 %v606
      %608 = vmatprep.subr.mxu0 0.0
      %v609 = vand.u32 %v536, 4294901760
      %610 = vmatpush1.msra.mxu0 %v609
      %611 = vmatprep.subr.mxu0 0.0
      %v612 = vand.u32 %v537, 4294901760
      %613 = vmatpush1.msra.mxu0 %v612
      %614 = vmatprep.subr.mxu0 0.0
      %v615 = vand.u32 %v538, 4294901760
      %616 = vmatpush1.msra.mxu0 %v615
      %617 = vmatprep.subr.mxu0 0.0
      %v618 = vand.u32 %v539, 4294901760
      %619 = vmatpush1.msra.mxu0 %v618
      %620 = vmatprep.subr.mxu0 0.0
      %v621 = vand.u32 %v540, 4294901760
      %622 = vmatpush1.msra.mxu0 %v621
      %623 = vmatprep.subr.mxu0 0.0
      %v624 = vand.u32 %v541, 4294901760
      %625 = vmatpush1.msra.mxu0 %v624
      %626 = vmatprep.subr.mxu0 0.0
      %v627 = vand.u32 %v542, 4294901760
      %628 = vmatpush1.msra.mxu0 %v627
      %629 = vmatprep.subr.mxu0 0.0
      %v630 = vand.u32 %v543, 4294901760
      %631 = vmatpush1.msra.mxu0 %v630
      %632 = vmatprep.subr.mxu0 0.0
      %v633 = vand.u32 %v544, 4294901760
      %634 = vmatpush1.msra.mxu0 %v633
      %635 = vmatprep.subr.mxu0 0.0
      %v636 = vand.u32 %v545, 4294901760
      %637 = vmatpush1.msra.mxu0 %v636
      %638 = vmatprep.subr.mxu0 0.0
      %v639 = vand.u32 %v546, 4294901760
      %640 = vmatpush1.msra.mxu0 %v639
      %641 = vmatprep.subr.mxu0 0.0
      %v642 = vand.u32 %v547, 4294901760
      %643 = vmatpush1.msra.mxu0 %v642
      %644 = vmatprep.subr.mxu0 0.0
      %v645 = vand.u32 %v548, 4294901760
      %646 = vmatpush1.msra.mxu0 %v645
      %647 = vmatprep.subr.mxu0 0.0
      %v648 = vand.u32 %v549, 4294901760
      %649 = vmatpush1.msra.mxu0 %v648
      %650 = vmatprep.subr.mxu0 0.0
      %v651 = vand.u32 %v550, 4294901760
      %652 = vmatpush1.msra.mxu0 %v651
      %653 = vmatprep.subr.mxu0 0.0
      %v654 = vand.u32 %v551, 4294901760
      %655 = vmatpush1.msra.mxu0 %v654
      %656 = vmatprep.subr.mxu0 0.0
      %v657 = vand.u32 %v552, 4294901760
      %658 = vmatpush1.msra.mxu0 %v657
      %659 = vmatprep.subr.mxu0 0.0
      %v660 = vand.u32 %v553, 4294901760
      %661 = vmatpush1.msra.mxu0 %v660
      %662 = vmatprep.subr.mxu0 0.0
      %v663 = vand.u32 %v554, 4294901760
      %664 = vmatpush1.msra.mxu0 %v663
      %665 = vmatprep.subr.mxu0 0.0
      %v666 = vand.u32 %v555, 4294901760
      %667 = vmatpush1.msra.mxu0 %v666
      %668 = vmatprep.subr.mxu0 0.0
      %v669 = vand.u32 %v556, 4294901760
      %670 = vmatpush1.msra.mxu0 %v669
      %671 = vmatprep.subr.mxu0 0.0
      %v672 = vand.u32 %v557, 4294901760
      %673 = vmatpush1.msra.mxu0 %v672
      %674 = vmatprep.subr.mxu0 0.0
      %v675 = vand.u32 %v558, 4294901760
      %676 = vmatpush1.msra.mxu0 %v675
      %677 = vmatprep.subr.mxu0 0.0
      %v678 = vand.u32 %v559, 4294901760
      %679 = vmatpush1.msra.mxu0 %v678
      %680 = vmatprep.subr.mxu0 0.0
      %v681 = vand.u32 %v560, 4294901760
      %682 = vmatpush1.msra.mxu0 %v681
      %683 = vmatprep.subr.mxu0 0.0
      %v684 = vand.u32 %v561, 4294901760
      %685 = vmatpush1.msra.mxu0 %v684
      %686 = vmatprep.subr.mxu0 0.0
      %v687 = vand.u32 %v562, 4294901760
      %688 = vmatpush1.msra.mxu0 %v687
      %689 = vmatprep.subr.mxu0 0.0
      %v690 = vand.u32 %v563, 4294901760
      %691 = vmatpush1.msra.mxu0 %v690
      %v692 = vand.u32 %v375, 4294901760
      %v693 = vsub.f32 %v375, %v692
      %v694 = vand.u32 %v693, 4294901760
      %v695 = vsub.f32 %v693, %v694
      %v696 = vand.u32 %v695, 4294901760
      %697 = vmatprep.mubr.f32.mxu0 %v696
      %v698 = vand.u32 %v373, 4294901760
      %v699 = vsub.f32 %v373, %v698
      %v700 = vand.u32 %v699, 4294901760
      %v701 = vsub.f32 %v699, %v700
      %v702 = vand.u32 %v701, 4294901760
      %703 = vmatmul.mubr.f32.gmra.mrb[0].mxu0 %v702
      %v704 = vpop.f32.mrb[0].mxu0
      %v705 = vadd.f32 0.0, %v704
      %v706 = vpop.f32.mrb[0].mxu0
      %v707 = vand.u32 %v381, 4294901760
      %v708 = vsub.f32 %v381, %v707
      %v709 = vand.u32 %v708, 4294901760
      %v710 = vsub.f32 %v708, %v709
      %v711 = vand.u32 %v710, 4294901760
      %712 = vmatprep.mubr.f32.mxu0 %v711
      %v713 = vand.u32 %v379, 4294901760
      %v714 = vsub.f32 %v379, %v713
      %v715 = vand.u32 %v714, 4294901760
      %v716 = vsub.f32 %v714, %v715
      %v717 = vand.u32 %v716, 4294901760
      %718 = vmatmul.mubr.f32.gmra.mrb[0].mxu0 %v717
      %v719 = vpop.f32.mrb[0].mxu0
      %v720 = vadd.f32 0.0, %v719
      %v721 = vpop.f32.mrb[0].mxu0
      %v722 = vand.u32 %v387, 4294901760
      %v723 = vsub.f32 %v387, %v722
      %v724 = vand.u32 %v723, 4294901760
      %v725 = vsub.f32 %v723, %v724
      %v726 = vand.u32 %v725, 4294901760
      %727 = vmatprep.mubr.f32.mxu0 %v726
      %v728 = vand.u32 %v385, 4294901760
      %v729 = vsub.f32 %v385, %v728
      %v730 = vand.u32 %v729, 4294901760
      %v731 = vsub.f32 %v729, %v730
      %v732 = vand.u32 %v731, 4294901760
      %733 = vmatmul.mubr.f32.gmra.mrb[0].mxu0 %v732
      %v734 = vpop.f32.mrb[0].mxu0
      %v735 = vadd.f32 0.0, %v734
      %v736 = vpop.f32.mrb[0].mxu0
      %v737 = vand.u32 %v393, 4294901760
      %v738 = vsub.f32 %v393, %v737
      %v739 = vand.u32 %v738, 4294901760
      %v740 = vsub.f32 %v738, %v739
      %v741 = vand.u32 %v740, 4294901760
      %742 = vmatprep.mubr.f32.mxu0 %v741
      %v743 = vand.u32 %v391, 4294901760
      %v744 = vsub.f32 %v391, %v743
      %v745 = vand.u32 %v744, 4294901760
      %v746 = vsub.f32 %v744, %v745
      %v747 = vand.u32 %v746, 4294901760
      %748 = vmatmul.mubr.f32.gmra.mrb[0].mxu0 %v747
      %v749 = vpop.f32.mrb[0].mxu0
      %v750 = vadd.f32 0.0, %v749
      %v751 = vpop.f32.mrb[0].mxu0
      %v752 = vand.u32 %v399, 4294901760
      %v753 = vsub.f32 %v399, %v752
      %v754 = vand.u32 %v753, 4294901760
      %v755 = vsub.f32 %v753, %v754
      %v756 = vand.u32 %v755, 4294901760
      %757 = vmatprep.mubr.f32.mxu0 %v756
      %v758 = vand.u32 %v397, 4294901760
      %v759 = vsub.f32 %v397, %v758
      %v760 = vand.u32 %v759, 4294901760
      %v761 = vsub.f32 %v759, %v760
      %v762 = vand.u32 %v761, 4294901760
      %763 = vmatmul.mubr.f32.gmra.mrb[0].mxu0 %v762
      %v764 = vpop.f32.mrb[0].mxu0
      %v765 = vadd.f32 0.0, %v764
      %v766 = vpop.f32.mrb[0].mxu0
      %v767 = vand.u32 %v405, 4294901760
      %v768 = vsub.f32 %v405, %v767
      %v769 = vand.u32 %v768, 4294901760
      %v770 = vsub.f32 %v768, %v769
      %v771 = vand.u32 %v770, 4294901760
      %772 = vmatprep.mubr.f32.mxu0 %v771
      %v773 = vand.u32 %v403, 4294901760
      %v774 = vsub.f32 %v403, %v773
      %v775 = vand.u32 %v774, 4294901760
      %v776 = vsub.f32 %v774, %v775
      %v777 = vand.u32 %v776, 4294901760
      %778 = vmatmul.mubr.f32.gmra.mrb[0].mxu0 %v777
      %v779 = vpop.f32.mrb[0].mxu0
      %v780 = vadd.f32 0.0, %v779
      %v781 = vpop.f32.mrb[0].mxu0
      %v782 = vand.u32 %v411, 4294901760
      %v783 = vsub.f32 %v411, %v782
      %v784 = vand.u32 %v783, 4294901760
      %v785 = vsub.f32 %v783, %v784
      %v786 = vand.u32 %v785, 4294901760
      %787 = vmatprep.mubr.f32.mxu0 %v786
      %v788 = vand.u32 %v409, 4294901760
      %v789 = vsub.f32 %v409, %v788
      %v790 = vand.u32 %v789, 4294901760
      %v791 = vsub.f32 %v789, %v790
      %v792 = vand.u32 %v791, 4294901760
      %793 = vmatmul.mubr.f32.gmra.mrb[0].mxu0 %v792
      %v794 = vpop.f32.mrb[0].mxu0
      %v795 = vadd.f32 0.0, %v794
      %v796 = vpop.f32.mrb[0].mxu0
      %v797 = vand.u32 %v417, 4294901760
      %v798 = vsub.f32 %v417, %v797
      %v799 = vand.u32 %v798, 4294901760
      %v800 = vsub.f32 %v798, %v799
      %v801 = vand.u32 %v800, 4294901760
      %802 = vmatprep.mubr.f32.mxu0 %v801
      %v803 = vand.u32 %v415, 4294901760
      %v804 = vsub.f32 %v415, %v803
      %v805 = vand.u32 %v804, 4294901760
      %v806 = vsub.f32 %v804, %v805
      %v807 = vand.u32 %v806, 4294901760
      %808 = vmatmul.mubr.f32.gmra.mrb[0].mxu0 %v807
      %v809 = vpop.f32.mrb[0].mxu0
      %v810 = vadd.f32 0.0, %v809
      %v811 = vpop.f32.mrb[0].mxu0
      %812 = vdwg.mxu0
      %813 = vmatprep.subr.mxu0 0.0
      %v814 = vand.u32 %v532, 4294901760
      %v815 = vsub.f32 %v532, %v814
      %v816 = vand.u32 %v815, 4294901760
      %v817 = vsub.f32 %v815, %v816
      %v818 = vand.u32 %v817, 4294901760
      %819 = vmatpush1.msra.mxu0 %v818
      %820 = vmatprep.subr.mxu0 0.0
      %v821 = vand.u32 %v533, 4294901760
      %v822 = vsub.f32 %v533, %v821
      %v823 = vand.u32 %v822, 4294901760
      %v824 = vsub.f32 %v822, %v823
      %v825 = vand.u32 %v824, 4294901760
      %826 = vmatpush1.msra.mxu0 %v825
      %827 = vmatprep.subr.mxu0 0.0
      %v828 = vand.u32 %v534, 4294901760
      %v829 = vsub.f32 %v534, %v828
      %v830 = vand.u32 %v829, 4294901760
      %v831 = vsub.f32 %v829, %v830
      %v832 = vand.u32 %v831, 4294901760
      %833 = vmatpush1.msra.mxu0 %v832
      %834 = vmatprep.subr.mxu0 0.0
      %v835 = vand.u32 %v535, 4294901760
      %v836 = vsub.f32 %v535, %v835
      %v837 = vand.u32 %v836, 4294901760
      %v838 = vsub.f32 %v836, %v837
      %v839 = vand.u32 %v838, 4294901760
      %840 = vmatpush1.msra.mxu0 %v839
      %841 = vmatprep.subr.mxu0 0.0
      %v842 = vand.u32 %v536, 4294901760
      %v843 = vsub.f32 %v536, %v842
      %v844 = vand.u32 %v843, 4294901760
      %v845 = vsub.f32 %v843, %v844
      %v846 = vand.u32 %v845, 4294901760
      %847 = vmatpush1.msra.mxu0 %v846
      %848 = vmatprep.subr.mxu0 0.0
      %v849 = vand.u32 %v537, 4294901760
      %v850 = vsub.f32 %v537, %v849
      %v851 = vand.u32 %v850, 4294901760
      %v852 = vsub.f32 %v850, %v851
      %v853 = vand.u32 %v852, 4294901760
      %854 = vmatpush1.msra.mxu0 %v853
      %855 = vmatprep.subr.mxu0 0.0
      %v856 = vand.u32 %v538, 4294901760
      %v857 = vsub.f32 %v538, %v856
      %v858 = vand.u32 %v857, 4294901760
      %v859 = vsub.f32 %v857, %v858
      %v860 = vand.u32 %v859, 4294901760
      %861 = vmatpush1.msra.mxu0 %v860
      %862 = vmatprep.subr.mxu0 0.0
      %v863 = vand.u32 %v539, 4294901760
      %v864 = vsub.f32 %v539, %v863
      %v865 = vand.u32 %v864, 4294901760
      %v866 = vsub.f32 %v864, %v865
      %v867 = vand.u32 %v866, 4294901760
      %868 = vmatpush1.msra.mxu0 %v867
      %869 = vmatprep.subr.mxu0 0.0
      %v870 = vand.u32 %v540, 4294901760
      %v871 = vsub.f32 %v540, %v870
      %v872 = vand.u32 %v871, 4294901760
      %v873 = vsub.f32 %v871, %v872
      %v874 = vand.u32 %v873, 4294901760
      %875 = vmatpush1.msra.mxu0 %v874
      %876 = vmatprep.subr.mxu0 0.0
      %v877 = vand.u32 %v541, 4294901760
      %v878 = vsub.f32 %v541, %v877
      %v879 = vand.u32 %v878, 4294901760
      %v880 = vsub.f32 %v878, %v879
      %v881 = vand.u32 %v880, 4294901760
      %882 = vmatpush1.msra.mxu0 %v881
      %883 = vmatprep.subr.mxu0 0.0
      %v884 = vand.u32 %v542, 4294901760
      %v885 = vsub.f32 %v542, %v884
      %v886 = vand.u32 %v885, 4294901760
      %v887 = vsub.f32 %v885, %v886
      %v888 = vand.u32 %v887, 4294901760
      %889 = vmatpush1.msra.mxu0 %v888
      %890 = vmatprep.subr.mxu0 0.0
      %v891 = vand.u32 %v543, 4294901760
      %v892 = vsub.f32 %v543, %v891
      %v893 = vand.u32 %v892, 4294901760
      %v894 = vsub.f32 %v892, %v893
      %v895 = vand.u32 %v894, 4294901760
      %896 = vmatpush1.msra.mxu0 %v895
      %897 = vmatprep.subr.mxu0 0.0
      %v898 = vand.u32 %v544, 4294901760
      %v899 = vsub.f32 %v544, %v898
      %v900 = vand.u32 %v899, 4294901760
      %v901 = vsub.f32 %v899, %v900
      %v902 = vand.u32 %v901, 4294901760
      %903 = vmatpush1.msra.mxu0 %v902
      %904 = vmatprep.subr.mxu0 0.0
      %v905 = vand.u32 %v545, 4294901760
      %v906 = vsub.f32 %v545, %v905
      %v907 = vand.u32 %v906, 4294901760
      %v908 = vsub.f32 %v906, %v907
      %v909 = vand.u32 %v908, 4294901760
      %910 = vmatpush1.msra.mxu0 %v909
      %911 = vmatprep.subr.mxu0 0.0
      %v912 = vand.u32 %v546, 4294901760
      %v913 = vsub.f32 %v546, %v912
      %v914 = vand.u32 %v913, 4294901760
      %v915 = vsub.f32 %v913, %v914
      %v916 = vand.u32 %v915, 4294901760
      %917 = vmatpush1.msra.mxu0 %v916
      %918 = vmatprep.subr.mxu0 0.0
      %v919 = vand.u32 %v547, 4294901760
      %v920 = vsub.f32 %v547, %v919
      %v921 = vand.u32 %v920, 4294901760
      %v922 = vsub.f32 %v920, %v921
      %v923 = vand.u32 %v922, 4294901760
      %924 = vmatpush1.msra.mxu0 %v923
      %925 = vmatprep.subr.mxu0 0.0
      %v926 = vand.u32 %v548, 4294901760
      %v927 = vsub.f32 %v548, %v926
      %v928 = vand.u32 %v927, 4294901760
      %v929 = vsub.f32 %v927, %v928
      %v930 = vand.u32 %v929, 4294901760
      %931 = vmatpush1.msra.mxu0 %v930
      %932 = vmatprep.subr.mxu0 0.0
      %v933 = vand.u32 %v549, 4294901760
      %v934 = vsub.f32 %v549, %v933
      %v935 = vand.u32 %v934, 4294901760
      %v936 = vsub.f32 %v934, %v935
      %v937 = vand.u32 %v936, 4294901760
      %938 = vmatpush1.msra.mxu0 %v937
      %939 = vmatprep.subr.mxu0 0.0
      %v940 = vand.u32 %v550, 4294901760
      %v941 = vsub.f32 %v550, %v940
      %v942 = vand.u32 %v941, 4294901760
      %v943 = vsub.f32 %v941, %v942
      %v944 = vand.u32 %v943, 4294901760
      %945 = vmatpush1.msra.mxu0 %v944
      %946 = vmatprep.subr.mxu0 0.0
      %v947 = vand.u32 %v551, 4294901760
      %v948 = vsub.f32 %v551, %v947
      %v949 = vand.u32 %v948, 4294901760
      %v950 = vsub.f32 %v948, %v949
      %v951 = vand.u32 %v950, 4294901760
      %952 = vmatpush1.msra.mxu0 %v951
      %953 = vmatprep.subr.mxu0 0.0
      %v954 = vand.u32 %v552, 4294901760
      %v955 = vsub.f32 %v552, %v954
      %v956 = vand.u32 %v955, 4294901760
      %v957 = vsub.f32 %v955, %v956
      %v958 = vand.u32 %v957, 4294901760
      %959 = vmatpush1.msra.mxu0 %v958
      %960 = vmatprep.subr.mxu0 0.0
      %v961 = vand.u32 %v553, 4294901760
      %v962 = vsub.f32 %v553, %v961
      %v963 = vand.u32 %v962, 4294901760
      %v964 = vsub.f32 %v962, %v963
      %v965 = vand.u32 %v964, 4294901760
      %966 = vmatpush1.msra.mxu0 %v965
      %967 = vmatprep.subr.mxu0 0.0
      %v968 = vand.u32 %v554, 4294901760
      %v969 = vsub.f32 %v554, %v968
      %v970 = vand.u32 %v969, 4294901760
      %v971 = vsub.f32 %v969, %v970
      %v972 = vand.u32 %v971, 4294901760
      %973 = vmatpush1.msra.mxu0 %v972
      %974 = vmatprep.subr.mxu0 0.0
      %v975 = vand.u32 %v555, 4294901760
      %v976 = vsub.f32 %v555, %v975
      %v977 = vand.u32 %v976, 4294901760
      %v978 = vsub.f32 %v976, %v977
      %v979 = vand.u32 %v978, 4294901760
      %980 = vmatpush1.msra.mxu0 %v979
      %981 = vmatprep.subr.mxu0 0.0
      %v982 = vand.u32 %v556, 4294901760
      %v983 = vsub.f32 %v556, %v982
      %v984 = vand.u32 %v983, 4294901760
      %v985 = vsub.f32 %v983, %v984
      %v986 = vand.u32 %v985, 4294901760
      %987 = vmatpush1.msra.mxu0 %v986
      %988 = vmatprep.subr.mxu0 0.0
      %v989 = vand.u32 %v557, 4294901760
      %v990 = vsub.f32 %v557, %v989
      %v991 = vand.u32 %v990, 4294901760
      %v992 = vsub.f32 %v990, %v991
      %v993 = vand.u32 %v992, 4294901760
      %994 = vmatpush1.msra.mxu0 %v993
      %995 = vmatprep.subr.mxu0 0.0
      %v996 = vand.u32 %v558, 4294901760
      %v997 = vsub.f32 %v558, %v996
      %v998 = vand.u32 %v997, 4294901760
      %v999 = vsub.f32 %v997, %v998
      %v1000 = vand.u32 %v999, 4294901760
      %1001 = vmatpush1.msra.mxu0 %v1000
      %1002 = vmatprep.subr.mxu0 0.0
      %v1003 = vand.u32 %v559, 4294901760
      %v1004 = vsub.f32 %v559, %v1003
      %v1005 = vand.u32 %v1004, 4294901760
      %v1006 = vsub.f32 %v1004, %v1005
      %v1007 = vand.u32 %v1006, 4294901760
      %1008 = vmatpush1.msra.mxu0 %v1007
      %1009 = vmatprep.subr.mxu0 0.0
      %v1010 = vand.u32 %v560, 4294901760
      %v1011 = vsub.f32 %v560, %v1010
      %v1012 = vand.u32 %v1011, 4294901760
      %v1013 = vsub.f32 %v1011, %v1012
      %v1014 = vand.u32 %v1013, 4294901760
      %1015 = vmatpush1.msra.mxu0 %v1014
      %1016 = vmatprep.subr.mxu0 0.0
      %v1017 = vand.u32 %v561, 4294901760
      %v1018 = vsub.f32 %v561, %v1017
      %v1019 = vand.u32 %v1018, 4294901760
      %v1020 = vsub.f32 %v1018, %v1019
      %v1021 = vand.u32 %v1020, 4294901760
      %1022 = vmatpush1.msra.mxu0 %v1021
      %1023 = vmatprep.subr.mxu0 0.0
      %v1024 = vand.u32 %v562, 4294901760
      %v1025 = vsub.f32 %v562, %v1024
      %v1026 = vand.u32 %v1025, 4294901760
      %v1027 = vsub.f32 %v1025, %v1026
      %v1028 = vand.u32 %v1027, 4294901760
      %1029 = vmatpush1.msra.mxu0 %v1028
      %1030 = vmatprep.subr.mxu0 0.0
      %v1031 = vand.u32 %v563, 4294901760
      %v1032 = vsub.f32 %v563, %v1031
      %v1033 = vand.u32 %v1032, 4294901760
      %v1034 = vsub.f32 %v1032, %v1033
      %v1035 = vand.u32 %v1034, 4294901760
      %1036 = vmatpush1.msra.mxu0 %v1035
      %v1037 = vand.u32 %v375, 4294901760
      %1038 = vmatprep.mubr.f32.mxu0 %v1037
      %v1039 = vand.u32 %v373, 4294901760
      %1040 = vmatmul.mubr.f32.gmra.mrb[0].mxu0 %v1039
      %v1041 = vpop.f32.mrb[0].mxu0
      %v1042 = vadd.f32 %v705, %v1041
      %v1043 = vpop.f32.mrb[0].mxu0
      %v1044 = vand.u32 %v381, 4294901760
      %1045 = vmatprep.mubr.f32.mxu0 %v1044
      %v1046 = vand.u32 %v379, 4294901760
      %1047 = vmatmul.mubr.f32.gmra.mrb[0].mxu0 %v1046
      %v1048 = vpop.f32.mrb[0].mxu0
      %v1049 = vadd.f32 %v720, %v1048
      %v1050 = vpop.f32.mrb[0].mxu0
      %v1051 = vand.u32 %v387, 4294901760
      %1052 = vmatprep.mubr.f32.mxu0 %v1051
      %v1053 = vand.u32 %v385, 4294901760
      %1054 = vmatmul.mubr.f32.gmra.mrb[0].mxu0 %v1053
      %v1055 = vpop.f32.mrb[0].mxu0
      %v1056 = vadd.f32 %v735, %v1055
      %v1057 = vpop.f32.mrb[0].mxu0
      %v1058 = vand.u32 %v393, 4294901760
      %1059 = vmatprep.mubr.f32.mxu0 %v1058
      %v1060 = vand.u32 %v391, 4294901760
      %1061 = vmatmul.mubr.f32.gmra.mrb[0].mxu0 %v1060
      %v1062 = vpop.f32.mrb[0].mxu0
      %v1063 = vadd.f32 %v750, %v1062
      %v1064 = vpop.f32.mrb[0].mxu0
      %v1065 = vand.u32 %v399, 4294901760
      %1066 = vmatprep.mubr.f32.mxu0 %v1065
      %v1067 = vand.u32 %v397, 4294901760
      %1068 = vmatmul.mubr.f32.gmra.mrb[0].mxu0 %v1067
      %v1069 = vpop.f32.mrb[0].mxu0
      %v1070 = vadd.f32 %v765, %v1069
      %v1071 = vpop.f32.mrb[0].mxu0
      %v1072 = vand.u32 %v405, 4294901760
      %1073 = vmatprep.mubr.f32.mxu0 %v1072
      %v1074 = vand.u32 %v403, 4294901760
      %1075 = vmatmul.mubr.f32.gmra.mrb[0].mxu0 %v1074
      %v1076 = vpop.f32.mrb[0].mxu0
      %v1077 = vadd.f32 %v780, %v1076
      %v1078 = vpop.f32.mrb[0].mxu0
      %v1079 = vand.u32 %v411, 4294901760
      %1080 = vmatprep.mubr.f32.mxu0 %v1079
      %v1081 = vand.u32 %v409, 4294901760
      %1082 = vmatmul.mubr.f32.gmra.mrb[0].mxu0 %v1081
      %v1083 = vpop.f32.mrb[0].mxu0
      %v1084 = vadd.f32 %v795, %v1083
      %v1085 = vpop.f32.mrb[0].mxu0
      %v1086 = vand.u32 %v417, 4294901760
      %1087 = vmatprep.mubr.f32.mxu0 %v1086
      %v1088 = vand.u32 %v415, 4294901760
      %1089 = vmatmul.mubr.f32.gmra.mrb[0].mxu0 %v1088
      %v1090 = vpop.f32.mrb[0].mxu0
      %v1091 = vadd.f32 %v810, %v1090
      %v1092 = vpop.f32.mrb[0].mxu0
      %1093 = vdwg.mxu0
      %1094 = vmatprep.subr.mxu0 0.0
      %v1095 = vand.u32 %v532, 4294901760
      %v1096 = vsub.f32 %v532, %v1095
      %1097 = vmatpush1.msra.mxu0 %v1096
      %1098 = vmatprep.subr.mxu0 0.0
      %v1099 = vand.u32 %v533, 4294901760
      %v1100 = vsub.f32 %v533, %v1099
      %1101 = vmatpush1.msra.mxu0 %v1100
      %1102 = vmatprep.subr.mxu0 0.0
      %v1103 = vand.u32 %v534, 4294901760
      %v1104 = vsub.f32 %v534, %v1103
      %1105 = vmatpush1.msra.mxu0 %v1104
      %1106 = vmatprep.subr.mxu0 0.0
      %v1107 = vand.u32 %v535, 4294901760
      %v1108 = vsub.f32 %v535, %v1107
      %1109 = vmatpush1.msra.mxu0 %v1108
      %1110 = vmatprep.subr.mxu0 0.0
      %v1111 = vand.u32 %v536, 4294901760
      %v1112 = vsub.f32 %v536, %v1111
      %1113 = vmatpush1.msra.mxu0 %v1112
      %1114 = vmatprep.subr.mxu0 0.0
      %v1115 = vand.u32 %v537, 4294901760
      %v1116 = vsub.f32 %v537, %v1115
      %1117 = vmatpush1.msra.mxu0 %v1116
      %1118 = vmatprep.subr.mxu0 0.0
      %v1119 = vand.u32 %v538, 4294901760
      %v1120 = vsub.f32 %v538, %v1119
      %1121 = vmatpush1.msra.mxu0 %v1120
      %1122 = vmatprep.subr.mxu0 0.0
      %v1123 = vand.u32 %v539, 4294901760
      %v1124 = vsub.f32 %v539, %v1123
      %1125 = vmatpush1.msra.mxu0 %v1124
      %1126 = vmatprep.subr.mxu0 0.0
      %v1127 = vand.u32 %v540, 4294901760
      %v1128 = vsub.f32 %v540, %v1127
      %1129 = vmatpush1.msra.mxu0 %v1128
      %1130 = vmatprep.subr.mxu0 0.0
      %v1131 = vand.u32 %v541, 4294901760
      %v1132 = vsub.f32 %v541, %v1131
      %1133 = vmatpush1.msra.mxu0 %v1132
      %1134 = vmatprep.subr.mxu0 0.0
      %v1135 = vand.u32 %v542, 4294901760
      %v1136 = vsub.f32 %v542, %v1135
      %1137 = vmatpush1.msra.mxu0 %v1136
      %1138 = vmatprep.subr.mxu0 0.0
      %v1139 = vand.u32 %v543, 4294901760
      %v1140 = vsub.f32 %v543, %v1139
      %1141 = vmatpush1.msra.mxu0 %v1140
      %1142 = vmatprep.subr.mxu0 0.0
      %v1143 = vand.u32 %v544, 4294901760
      %v1144 = vsub.f32 %v544, %v1143
      %1145 = vmatpush1.msra.mxu0 %v1144
      %1146 = vmatprep.subr.mxu0 0.0
      %v1147 = vand.u32 %v545, 4294901760
      %v1148 = vsub.f32 %v545, %v1147
      %1149 = vmatpush1.msra.mxu0 %v1148
      %1150 = vmatprep.subr.mxu0 0.0
      %v1151 = vand.u32 %v546, 4294901760
      %v1152 = vsub.f32 %v546, %v1151
      %1153 = vmatpush1.msra.mxu0 %v1152
      %1154 = vmatprep.subr.mxu0 0.0
      %v1155 = vand.u32 %v547, 4294901760
      %v1156 = vsub.f32 %v547, %v1155
      %1157 = vmatpush1.msra.mxu0 %v1156
      %1158 = vmatprep.subr.mxu0 0.0
      %v1159 = vand.u32 %v548, 4294901760
      %v1160 = vsub.f32 %v548, %v1159
      %1161 = vmatpush1.msra.mxu0 %v1160
      %1162 = vmatprep.subr.mxu0 0.0
      %v1163 = vand.u32 %v549, 4294901760
      %v1164 = vsub.f32 %v549, %v1163
      %1165 = vmatpush1.msra.mxu0 %v1164
      %1166 = vmatprep.subr.mxu0 0.0
      %v1167 = vand.u32 %v550, 4294901760
      %v1168 = vsub.f32 %v550, %v1167
      %1169 = vmatpush1.msra.mxu0 %v1168
      %1170 = vmatprep.subr.mxu0 0.0
      %v1171 = vand.u32 %v551, 4294901760
      %v1172 = vsub.f32 %v551, %v1171
      %1173 = vmatpush1.msra.mxu0 %v1172
      %1174 = vmatprep.subr.mxu0 0.0
      %v1175 = vand.u32 %v552, 4294901760
      %v1176 = vsub.f32 %v552, %v1175
      %1177 = vmatpush1.msra.mxu0 %v1176
      %1178 = vmatprep.subr.mxu0 0.0
      %v1179 = vand.u32 %v553, 4294901760
      %v1180 = vsub.f32 %v553, %v1179
      %1181 = vmatpush1.msra.mxu0 %v1180
      %1182 = vmatprep.subr.mxu0 0.0
      %v1183 = vand.u32 %v554, 4294901760
      %v1184 = vsub.f32 %v554, %v1183
      %1185 = vmatpush1.msra.mxu0 %v1184
      %1186 = vmatprep.subr.mxu0 0.0
      %v1187 = vand.u32 %v555, 4294901760
      %v1188 = vsub.f32 %v555, %v1187
      %1189 = vmatpush1.msra.mxu0 %v1188
      %1190 = vmatprep.subr.mxu0 0.0
      %v1191 = vand.u32 %v556, 4294901760
      %v1192 = vsub.f32 %v556, %v1191
      %1193 = vmatpush1.msra.mxu0 %v1192
      %1194 = vmatprep.subr.mxu0 0.0
      %v1195 = vand.u32 %v557, 4294901760
      %v1196 = vsub.f32 %v557, %v1195
      %1197 = vmatpush1.msra.mxu0 %v1196
      %1198 = vmatprep.subr.mxu0 0.0
      %v1199 = vand.u32 %v558, 4294901760
      %v1200 = vsub.f32 %v558, %v1199
      %1201 = vmatpush1.msra.mxu0 %v1200
      %1202 = vmatprep.subr.mxu0 0.0
      %v1203 = vand.u32 %v559, 4294901760
      %v1204 = vsub.f32 %v559, %v1203
      %1205 = vmatpush1.msra.mxu0 %v1204
      %1206 = vmatprep.subr.mxu0 0.0
      %v1207 = vand.u32 %v560, 4294901760
      %v1208 = vsub.f32 %v560, %v1207
      %1209 = vmatpush1.msra.mxu0 %v1208
      %1210 = vmatprep.subr.mxu0 0.0
      %v1211 = vand.u32 %v561, 4294901760
      %v1212 = vsub.f32 %v561, %v1211
      %1213 = vmatpush1.msra.mxu0 %v1212
      %1214 = vmatprep.subr.mxu0 0.0
      %v1215 = vand.u32 %v562, 4294901760
      %v1216 = vsub.f32 %v562, %v1215
      %1217 = vmatpush1.msra.mxu0 %v1216
      %1218 = vmatprep.subr.mxu0 0.0
      %v1219 = vand.u32 %v563, 4294901760
      %v1220 = vsub.f32 %v563, %v1219
      %1221 = vmatpush1.msra.mxu0 %v1220
      %v1222 = vand.u32 %v375, 4294901760
      %v1223 = vsub.f32 %v375, %v1222
      %1224 = vmatprep.mubr.f32.mxu0 %v1223
      %v1225 = vand.u32 %v373, 4294901760
      %v1226 = vsub.f32 %v373, %v1225
      %1227 = vmatmul.mubr.f32.gmra.mrb[0].mxu0 %v1226
      %v1228 = vpop.f32.mrb[0].mxu0
      %v1229 = vadd.f32 %v1042, %v1228
      %v1230 = vpop.f32.mrb[0].mxu0
      %v1231 = vand.u32 %v381, 4294901760
      %v1232 = vsub.f32 %v381, %v1231
      %1233 = vmatprep.mubr.f32.mxu0 %v1232
      %v1234 = vand.u32 %v379, 4294901760
      %v1235 = vsub.f32 %v379, %v1234
      %1236 = vmatmul.mubr.f32.gmra.mrb[0].mxu0 %v1235
      %v1237 = vpop.f32.mrb[0].mxu0
      %v1238 = vadd.f32 %v1049, %v1237
      %v1239 = vpop.f32.mrb[0].mxu0
      %v1240 = vand.u32 %v387, 4294901760
      %v1241 = vsub.f32 %v387, %v1240
      %1242 = vmatprep.mubr.f32.mxu0 %v1241
      %v1243 = vand.u32 %v385, 4294901760
      %v1244 = vsub.f32 %v385, %v1243
      %1245 = vmatmul.mubr.f32.gmra.mrb[0].mxu0 %v1244
      %v1246 = vpop.f32.mrb[0].mxu0
      %v1247 = vadd.f32 %v1056, %v1246
      %v1248 = vpop.f32.mrb[0].mxu0
      %v1249 = vand.u32 %v393, 4294901760
      %v1250 = vsub.f32 %v393, %v1249
      %1251 = vmatprep.mubr.f32.mxu0 %v1250
      %v1252 = vand.u32 %v391, 4294901760
      %v1253 = vsub.f32 %v391, %v1252
      %1254 = vmatmul.mubr.f32.gmra.mrb[0].mxu0 %v1253
      %v1255 = vpop.f32.mrb[0].mxu0
      %v1256 = vadd.f32 %v1063, %v1255
      %v1257 = vpop.f32.mrb[0].mxu0
      %v1258 = vand.u32 %v399, 4294901760
      %v1259 = vsub.f32 %v399, %v1258
      %1260 = vmatprep.mubr.f32.mxu0 %v1259
      %v1261 = vand.u32 %v397, 4294901760
      %v1262 = vsub.f32 %v397, %v1261
      %1263 = vmatmul.mubr.f32.gmra.mrb[0].mxu0 %v1262
      %v1264 = vpop.f32.mrb[0].mxu0
      %v1265 = vadd.f32 %v1070, %v1264
      %v1266 = vpop.f32.mrb[0].mxu0
      %v1267 = vand.u32 %v405, 4294901760
      %v1268 = vsub.f32 %v405, %v1267
      %1269 = vmatprep.mubr.f32.mxu0 %v1268
      %v1270 = vand.u32 %v403, 4294901760
      %v1271 = vsub.f32 %v403, %v1270
      %1272 = vmatmul.mubr.f32.gmra.mrb[0].mxu0 %v1271
      %v1273 = vpop.f32.mrb[0].mxu0
      %v1274 = vadd.f32 %v1077, %v1273
      %v1275 = vpop.f32.mrb[0].mxu0
      %v1276 = vand.u32 %v411, 4294901760
      %v1277 = vsub.f32 %v411, %v1276
      %1278 = vmatprep.mubr.f32.mxu0 %v1277
      %v1279 = vand.u32 %v409, 4294901760
      %v1280 = vsub.f32 %v409, %v1279
      %1281 = vmatmul.mubr.f32.gmra.mrb[0].mxu0 %v1280
      %v1282 = vpop.f32.mrb[0].mxu0
      %v1283 = vadd.f32 %v1084, %v1282
      %v1284 = vpop.f32.mrb[0].mxu0
      %v1285 = vand.u32 %v417, 4294901760
      %v1286 = vsub.f32 %v417, %v1285
      %1287 = vmatprep.mubr.f32.mxu0 %v1286
      %v1288 = vand.u32 %v415, 4294901760
      %v1289 = vsub.f32 %v415, %v1288
      %1290 = vmatmul.mubr.f32.gmra.mrb[0].mxu0 %v1289
      %v1291 = vpop.f32.mrb[0].mxu0
      %v1292 = vadd.f32 %v1091, %v1291
      %v1293 = vpop.f32.mrb[0].mxu0
      %1294 = vdwg.mxu0
      %1295 = vmatprep.subr.mxu0 0.0
      %v1296 = vand.u32 %v532, 4294901760
      %1297 = vmatpush1.msra.mxu0 %v1296
      %1298 = vmatprep.subr.mxu0 0.0
      %v1299 = vand.u32 %v533, 4294901760
      %1300 = vmatpush1.msra.mxu0 %v1299
      %1301 = vmatprep.subr.mxu0 0.0
      %v1302 = vand.u32 %v534, 4294901760
      %1303 = vmatpush1.msra.mxu0 %v1302
      %1304 = vmatprep.subr.mxu0 0.0
      %v1305 = vand.u32 %v535, 4294901760
      %1306 = vmatpush1.msra.mxu0 %v1305
      %1307 = vmatprep.subr.mxu0 0.0
      %v1308 = vand.u32 %v536, 4294901760
      %1309 = vmatpush1.msra.mxu0 %v1308
      %1310 = vmatprep.subr.mxu0 0.0
      %v1311 = vand.u32 %v537, 4294901760
      %1312 = vmatpush1.msra.mxu0 %v1311
      %1313 = vmatprep.subr.mxu0 0.0
      %v1314 = vand.u32 %v538, 4294901760
      %1315 = vmatpush1.msra.mxu0 %v1314
      %1316 = vmatprep.subr.mxu0 0.0
      %v1317 = vand.u32 %v539, 4294901760
      %1318 = vmatpush1.msra.mxu0 %v1317
      %1319 = vmatprep.subr.mxu0 0.0
      %v1320 = vand.u32 %v540, 4294901760
      %1321 = vmatpush1.msra.mxu0 %v1320
      %1322 = vmatprep.subr.mxu0 0.0
      %v1323 = vand.u32 %v541, 4294901760
      %1324 = vmatpush1.msra.mxu0 %v1323
      %1325 = vmatprep.subr.mxu0 0.0
      %v1326 = vand.u32 %v542, 4294901760
      %1327 = vmatpush1.msra.mxu0 %v1326
      %1328 = vmatprep.subr.mxu0 0.0
      %v1329 = vand.u32 %v543, 4294901760
      %1330 = vmatpush1.msra.mxu0 %v1329
      %1331 = vmatprep.subr.mxu0 0.0
      %v1332 = vand.u32 %v544, 4294901760
      %1333 = vmatpush1.msra.mxu0 %v1332
      %1334 = vmatprep.subr.mxu0 0.0
      %v1335 = vand.u32 %v545, 4294901760
      %1336 = vmatpush1.msra.mxu0 %v1335
      %1337 = vmatprep.subr.mxu0 0.0
      %v1338 = vand.u32 %v546, 4294901760
      %1339 = vmatpush1.msra.mxu0 %v1338
      %1340 = vmatprep.subr.mxu0 0.0
      %v1341 = vand.u32 %v547, 4294901760
      %1342 = vmatpush1.msra.mxu0 %v1341
      %1343 = vmatprep.subr.mxu0 0.0
      %v1344 = vand.u32 %v548, 4294901760
      %1345 = vmatpush1.msra.mxu0 %v1344
      %1346 = vmatprep.subr.mxu0 0.0
      %v1347 = vand.u32 %v549, 4294901760
      %1348 = vmatpush1.msra.mxu0 %v1347
      %1349 = vmatprep.subr.mxu0 0.0
      %v1350 = vand.u32 %v550, 4294901760
      %1351 = vmatpush1.msra.mxu0 %v1350
      %1352 = vmatprep.subr.mxu0 0.0
      %v1353 = vand.u32 %v551, 4294901760
      %1354 = vmatpush1.msra.mxu0 %v1353
      %1355 = vmatprep.subr.mxu0 0.0
      %v1356 = vand.u32 %v552, 4294901760
      %1357 = vmatpush1.msra.mxu0 %v1356
      %1358 = vmatprep.subr.mxu0 0.0
      %v1359 = vand.u32 %v553, 4294901760
      %1360 = vmatpush1.msra.mxu0 %v1359
      %1361 = vmatprep.subr.mxu0 0.0
      %v1362 = vand.u32 %v554, 4294901760
      %1363 = vmatpush1.msra.mxu0 %v1362
      %1364 = vmatprep.subr.mxu0 0.0
      %v1365 = vand.u32 %v555, 4294901760
      %1366 = vmatpush1.msra.mxu0 %v1365
      %1367 = vmatprep.subr.mxu0 0.0
      %v1368 = vand.u32 %v556, 4294901760
      %1369 = vmatpush1.msra.mxu0 %v1368
      %1370 = vmatprep.subr.mxu0 0.0
      %v1371 = vand.u32 %v557, 4294901760
      %1372 = vmatpush1.msra.mxu0 %v1371
      %1373 = vmatprep.subr.mxu0 0.0
      %v1374 = vand.u32 %v558, 4294901760
      %1375 = vmatpush1.msra.mxu0 %v1374
      %1376 = vmatprep.subr.mxu0 0.0
      %v1377 = vand.u32 %v559, 4294901760
      %1378 = vmatpush1.msra.mxu0 %v1377
      %1379 = vmatprep.subr.mxu0 0.0
      %v1380 = vand.u32 %v560, 4294901760
      %1381 = vmatpush1.msra.mxu0 %v1380
      %1382 = vmatprep.subr.mxu0 0.0
      %v1383 = vand.u32 %v561, 4294901760
      %1384 = vmatpush1.msra.mxu0 %v1383
      %1385 = vmatprep.subr.mxu0 0.0
      %v1386 = vand.u32 %v562, 4294901760
      %1387 = vmatpush1.msra.mxu0 %v1386
      %1388 = vmatprep.subr.mxu0 0.0
      %v1389 = vand.u32 %v563, 4294901760
      %1390 = vmatpush1.msra.mxu0 %v1389
      %v1391 = vand.u32 %v375, 4294901760
      %v1392 = vsub.f32 %v375, %v1391
      %v1393 = vand.u32 %v1392, 4294901760
      %1394 = vmatprep.mubr.f32.mxu0 %v1393
      %v1395 = vand.u32 %v373, 4294901760
      %v1396 = vsub.f32 %v373, %v1395
      %v1397 = vand.u32 %v1396, 4294901760
      %1398 = vmatmul.mubr.f32.gmra.mrb[0].mxu0 %v1397
      %v1399 = vpop.f32.mrb[0].mxu0
      %v1400 = vadd.f32 %v1229, %v1399
      %v1401 = vpop.f32.mrb[0].mxu0
      %v1402 = vand.u32 %v381, 4294901760
      %v1403 = vsub.f32 %v381, %v1402
      %v1404 = vand.u32 %v1403, 4294901760
      %1405 = vmatprep.mubr.f32.mxu0 %v1404
      %v1406 = vand.u32 %v379, 4294901760
      %v1407 = vsub.f32 %v379, %v1406
      %v1408 = vand.u32 %v1407, 4294901760
      %1409 = vmatmul.mubr.f32.gmra.mrb[0].mxu0 %v1408
      %v1410 = vpop.f32.mrb[0].mxu0
      %v1411 = vadd.f32 %v1238, %v1410
      %v1412 = vpop.f32.mrb[0].mxu0
      %v1413 = vand.u32 %v387, 4294901760
      %v1414 = vsub.f32 %v387, %v1413
      %v1415 = vand.u32 %v1414, 4294901760
      %1416 = vmatprep.mubr.f32.mxu0 %v1415
      %v1417 = vand.u32 %v385, 4294901760
      %v1418 = vsub.f32 %v385, %v1417
      %v1419 = vand.u32 %v1418, 4294901760
      %1420 = vmatmul.mubr.f32.gmra.mrb[0].mxu0 %v1419
      %v1421 = vpop.f32.mrb[0].mxu0
      %v1422 = vadd.f32 %v1247, %v1421
      %v1423 = vpop.f32.mrb[0].mxu0
      %v1424 = vand.u32 %v393, 4294901760
      %v1425 = vsub.f32 %v393, %v1424
      %v1426 = vand.u32 %v1425, 4294901760
      %1427 = vmatprep.mubr.f32.mxu0 %v1426
      %v1428 = vand.u32 %v391, 4294901760
      %v1429 = vsub.f32 %v391, %v1428
      %v1430 = vand.u32 %v1429, 4294901760
      %1431 = vmatmul.mubr.f32.gmra.mrb[0].mxu0 %v1430
      %v1432 = vpop.f32.mrb[0].mxu0
      %v1433 = vadd.f32 %v1256, %v1432
      %v1434 = vpop.f32.mrb[0].mxu0
      %v1435 = vand.u32 %v399, 4294901760
      %v1436 = vsub.f32 %v399, %v1435
      %v1437 = vand.u32 %v1436, 4294901760
      %1438 = vmatprep.mubr.f32.mxu0 %v1437
      %v1439 = vand.u32 %v397, 4294901760
      %v1440 = vsub.f32 %v397, %v1439
      %v1441 = vand.u32 %v1440, 4294901760
      %1442 = vmatmul.mubr.f32.gmra.mrb[0].mxu0 %v1441
      %v1443 = vpop.f32.mrb[0].mxu0
      %v1444 = vadd.f32 %v1265, %v1443
      %v1445 = vpop.f32.mrb[0].mxu0
      %v1446 = vand.u32 %v405, 4294901760
      %v1447 = vsub.f32 %v405, %v1446
      %v1448 = vand.u32 %v1447, 4294901760
      %1449 = vmatprep.mubr.f32.mxu0 %v1448
      %v1450 = vand.u32 %v403, 4294901760
      %v1451 = vsub.f32 %v403, %v1450
      %v1452 = vand.u32 %v1451, 4294901760
      %1453 = vmatmul.mubr.f32.gmra.mrb[0].mxu0 %v1452
      %v1454 = vpop.f32.mrb[0].mxu0
      %v1455 = vadd.f32 %v1274, %v1454
      %v1456 = vpop.f32.mrb[0].mxu0
      %v1457 = vand.u32 %v411, 4294901760
      %v1458 = vsub.f32 %v411, %v1457
      %v1459 = vand.u32 %v1458, 4294901760
      %1460 = vmatprep.mubr.f32.mxu0 %v1459
      %v1461 = vand.u32 %v409, 4294901760
      %v1462 = vsub.f32 %v409, %v1461
      %v1463 = vand.u32 %v1462, 4294901760
      %1464 = vmatmul.mubr.f32.gmra.mrb[0].mxu0 %v1463
      %v1465 = vpop.f32.mrb[0].mxu0
      %v1466 = vadd.f32 %v1283, %v1465
      %v1467 = vpop.f32.mrb[0].mxu0
      %v1468 = vand.u32 %v417, 4294901760
      %v1469 = vsub.f32 %v417, %v1468
      %v1470 = vand.u32 %v1469, 4294901760
      %1471 = vmatprep.mubr.f32.mxu0 %v1470
      %v1472 = vand.u32 %v415, 4294901760
      %v1473 = vsub.f32 %v415, %v1472
      %v1474 = vand.u32 %v1473, 4294901760
      %1475 = vmatmul.mubr.f32.gmra.mrb[0].mxu0 %v1474
      %v1476 = vpop.f32.mrb[0].mxu0
      %v1477 = vadd.f32 %v1292, %v1476
      %v1478 = vpop.f32.mrb[0].mxu0
      %1479 = vdwg.mxu0
      %1480 = vmatprep.subr.mxu0 0.0
      %v1481 = vand.u32 %v532, 4294901760
      %v1482 = vsub.f32 %v532, %v1481
      %v1483 = vand.u32 %v1482, 4294901760
      %1484 = vmatpush1.msra.mxu0 %v1483
      %1485 = vmatprep.subr.mxu0 0.0
      %v1486 = vand.u32 %v533, 4294901760
      %v1487 = vsub.f32 %v533, %v1486
      %v1488 = vand.u32 %v1487, 4294901760
      %1489 = vmatpush1.msra.mxu0 %v1488
      %1490 = vmatprep.subr.mxu0 0.0
      %v1491 = vand.u32 %v534, 4294901760
      %v1492 = vsub.f32 %v534, %v1491
      %v1493 = vand.u32 %v1492, 4294901760
      %1494 = vmatpush1.msra.mxu0 %v1493
      %1495 = vmatprep.subr.mxu0 0.0
      %v1496 = vand.u32 %v535, 4294901760
      %v1497 = vsub.f32 %v535, %v1496
      %v1498 = vand.u32 %v1497, 4294901760
      %1499 = vmatpush1.msra.mxu0 %v1498
      %1500 = vmatprep.subr.mxu0 0.0
      %v1501 = vand.u32 %v536, 4294901760
      %v1502 = vsub.f32 %v536, %v1501
      %v1503 = vand.u32 %v1502, 4294901760
      %1504 = vmatpush1.msra.mxu0 %v1503
      %1505 = vmatprep.subr.mxu0 0.0
      %v1506 = vand.u32 %v537, 4294901760
      %v1507 = vsub.f32 %v537, %v1506
      %v1508 = vand.u32 %v1507, 4294901760
      %1509 = vmatpush1.msra.mxu0 %v1508
      %1510 = vmatprep.subr.mxu0 0.0
      %v1511 = vand.u32 %v538, 4294901760
      %v1512 = vsub.f32 %v538, %v1511
      %v1513 = vand.u32 %v1512, 4294901760
      %1514 = vmatpush1.msra.mxu0 %v1513
      %1515 = vmatprep.subr.mxu0 0.0
      %v1516 = vand.u32 %v539, 4294901760
      %v1517 = vsub.f32 %v539, %v1516
      %v1518 = vand.u32 %v1517, 4294901760
      %1519 = vmatpush1.msra.mxu0 %v1518
      %1520 = vmatprep.subr.mxu0 0.0
      %v1521 = vand.u32 %v540, 4294901760
      %v1522 = vsub.f32 %v540, %v1521
      %v1523 = vand.u32 %v1522, 4294901760
      %1524 = vmatpush1.msra.mxu0 %v1523
      %1525 = vmatprep.subr.mxu0 0.0
      %v1526 = vand.u32 %v541, 4294901760
      %v1527 = vsub.f32 %v541, %v1526
      %v1528 = vand.u32 %v1527, 4294901760
      %1529 = vmatpush1.msra.mxu0 %v1528
      %1530 = vmatprep.subr.mxu0 0.0
      %v1531 = vand.u32 %v542, 4294901760
      %v1532 = vsub.f32 %v542, %v1531
      %v1533 = vand.u32 %v1532, 4294901760
      %1534 = vmatpush1.msra.mxu0 %v1533
      %1535 = vmatprep.subr.mxu0 0.0
      %v1536 = vand.u32 %v543, 4294901760
      %v1537 = vsub.f32 %v543, %v1536
      %v1538 = vand.u32 %v1537, 4294901760
      %1539 = vmatpush1.msra.mxu0 %v1538
      %1540 = vmatprep.subr.mxu0 0.0
      %v1541 = vand.u32 %v544, 4294901760
      %v1542 = vsub.f32 %v544, %v1541
      %v1543 = vand.u32 %v1542, 4294901760
      %1544 = vmatpush1.msra.mxu0 %v1543
      %1545 = vmatprep.subr.mxu0 0.0
      %v1546 = vand.u32 %v545, 4294901760
      %v1547 = vsub.f32 %v545, %v1546
      %v1548 = vand.u32 %v1547, 4294901760
      %1549 = vmatpush1.msra.mxu0 %v1548
      %1550 = vmatprep.subr.mxu0 0.0
      %v1551 = vand.u32 %v546, 4294901760
      %v1552 = vsub.f32 %v546, %v1551
      %v1553 = vand.u32 %v1552, 4294901760
      %1554 = vmatpush1.msra.mxu0 %v1553
      %1555 = vmatprep.subr.mxu0 0.0
      %v1556 = vand.u32 %v547, 4294901760
      %v1557 = vsub.f32 %v547, %v1556
      %v1558 = vand.u32 %v1557, 4294901760
      %1559 = vmatpush1.msra.mxu0 %v1558
      %1560 = vmatprep.subr.mxu0 0.0
      %v1561 = vand.u32 %v548, 4294901760
      %v1562 = vsub.f32 %v548, %v1561
      %v1563 = vand.u32 %v1562, 4294901760
      %1564 = vmatpush1.msra.mxu0 %v1563
      %1565 = vmatprep.subr.mxu0 0.0
      %v1566 = vand.u32 %v549, 4294901760
      %v1567 = vsub.f32 %v549, %v1566
      %v1568 = vand.u32 %v1567, 4294901760
      %1569 = vmatpush1.msra.mxu0 %v1568
      %1570 = vmatprep.subr.mxu0 0.0
      %v1571 = vand.u32 %v550, 4294901760
      %v1572 = vsub.f32 %v550, %v1571
      %v1573 = vand.u32 %v1572, 4294901760
      %1574 = vmatpush1.msra.mxu0 %v1573
      %1575 = vmatprep.subr.mxu0 0.0
      %v1576 = vand.u32 %v551, 4294901760
      %v1577 = vsub.f32 %v551, %v1576
      %v1578 = vand.u32 %v1577, 4294901760
      %1579 = vmatpush1.msra.mxu0 %v1578
      %1580 = vmatprep.subr.mxu0 0.0
      %v1581 = vand.u32 %v552, 4294901760
      %v1582 = vsub.f32 %v552, %v1581
      %v1583 = vand.u32 %v1582, 4294901760
      %1584 = vmatpush1.msra.mxu0 %v1583
      %1585 = vmatprep.subr.mxu0 0.0
      %v1586 = vand.u32 %v553, 4294901760
      %v1587 = vsub.f32 %v553, %v1586
      %v1588 = vand.u32 %v1587, 4294901760
      %1589 = vmatpush1.msra.mxu0 %v1588
      %1590 = vmatprep.subr.mxu0 0.0
      %v1591 = vand.u32 %v554, 4294901760
      %v1592 = vsub.f32 %v554, %v1591
      %v1593 = vand.u32 %v1592, 4294901760
      %1594 = vmatpush1.msra.mxu0 %v1593
      %1595 = vmatprep.subr.mxu0 0.0
      %v1596 = vand.u32 %v555, 4294901760
      %v1597 = vsub.f32 %v555, %v1596
      %v1598 = vand.u32 %v1597, 4294901760
      %1599 = vmatpush1.msra.mxu0 %v1598
      %1600 = vmatprep.subr.mxu0 0.0
      %v1601 = vand.u32 %v556, 4294901760
      %v1602 = vsub.f32 %v556, %v1601
      %v1603 = vand.u32 %v1602, 4294901760
      %1604 = vmatpush1.msra.mxu0 %v1603
      %1605 = vmatprep.subr.mxu0 0.0
      %v1606 = vand.u32 %v557, 4294901760
      %v1607 = vsub.f32 %v557, %v1606
      %v1608 = vand.u32 %v1607, 4294901760
      %1609 = vmatpush1.msra.mxu0 %v1608
      %1610 = vmatprep.subr.mxu0 0.0
      %v1611 = vand.u32 %v558, 4294901760
      %v1612 = vsub.f32 %v558, %v1611
      %v1613 = vand.u32 %v1612, 4294901760
      %1614 = vmatpush1.msra.mxu0 %v1613
      %1615 = vmatprep.subr.mxu0 0.0
      %v1616 = vand.u32 %v559, 4294901760
      %v1617 = vsub.f32 %v559, %v1616
      %v1618 = vand.u32 %v1617, 4294901760
      %1619 = vmatpush1.msra.mxu0 %v1618
      %1620 = vmatprep.subr.mxu0 0.0
      %v1621 = vand.u32 %v560, 4294901760
      %v1622 = vsub.f32 %v560, %v1621
      %v1623 = vand.u32 %v1622, 4294901760
      %1624 = vmatpush1.msra.mxu0 %v1623
      %1625 = vmatprep.subr.mxu0 0.0
      %v1626 = vand.u32 %v561, 4294901760
      %v1627 = vsub.f32 %v561, %v1626
      %v1628 = vand.u32 %v1627, 4294901760
      %1629 = vmatpush1.msra.mxu0 %v1628
      %1630 = vmatprep.subr.mxu0 0.0
      %v1631 = vand.u32 %v562, 4294901760
      %v1632 = vsub.f32 %v562, %v1631
      %v1633 = vand.u32 %v1632, 4294901760
      %1634 = vmatpush1.msra.mxu0 %v1633
      %1635 = vmatprep.subr.mxu0 0.0
      %v1636 = vand.u32 %v563, 4294901760
      %v1637 = vsub.f32 %v563, %v1636
      %v1638 = vand.u32 %v1637, 4294901760
      %1639 = vmatpush1.msra.mxu0 %v1638
      %v1640 = vand.u32 %v375, 4294901760
      %1641 = vmatprep.mubr.f32.mxu0 %v1640
      %v1642 = vand.u32 %v373, 4294901760
      %1643 = vmatmul.mubr.f32.gmra.mrb[0].mxu0 %v1642
      %v1644 = vpop.f32.mrb[0].mxu0
      %v1645 = vadd.f32 %v1400, %v1644
      %v1646 = vpop.f32.mrb[0].mxu0
      %v1647 = vand.u32 %v381, 4294901760
      %1648 = vmatprep.mubr.f32.mxu0 %v1647
      %v1649 = vand.u32 %v379, 4294901760
      %1650 = vmatmul.mubr.f32.gmra.mrb[0].mxu0 %v1649
      %v1651 = vpop.f32.mrb[0].mxu0
      %v1652 = vadd.f32 %v1411, %v1651
      %v1653 = vpop.f32.mrb[0].mxu0
      %v1654 = vand.u32 %v387, 4294901760
      %1655 = vmatprep.mubr.f32.mxu0 %v1654
      %v1656 = vand.u32 %v385, 4294901760
      %1657 = vmatmul.mubr.f32.gmra.mrb[0].mxu0 %v1656
      %v1658 = vpop.f32.mrb[0].mxu0
      %v1659 = vadd.f32 %v1422, %v1658
      %v1660 = vpop.f32.mrb[0].mxu0
      %v1661 = vand.u32 %v393, 4294901760
      %1662 = vmatprep.mubr.f32.mxu0 %v1661
      %v1663 = vand.u32 %v391, 4294901760
      %1664 = vmatmul.mubr.f32.gmra.mrb[0].mxu0 %v1663
      %v1665 = vpop.f32.mrb[0].mxu0
      %v1666 = vadd.f32 %v1433, %v1665
      %v1667 = vpop.f32.mrb[0].mxu0
      %v1668 = vand.u32 %v399, 4294901760
      %1669 = vmatprep.mubr.f32.mxu0 %v1668
      %v1670 = vand.u32 %v397, 4294901760
      %1671 = vmatmul.mubr.f32.gmra.mrb[0].mxu0 %v1670
      %v1672 = vpop.f32.mrb[0].mxu0
      %v1673 = vadd.f32 %v1444, %v1672
      %v1674 = vpop.f32.mrb[0].mxu0
      %v1675 = vand.u32 %v405, 4294901760
      %1676 = vmatprep.mubr.f32.mxu0 %v1675
      %v1677 = vand.u32 %v403, 4294901760
      %1678 = vmatmul.mubr.f32.gmra.mrb[0].mxu0 %v1677
      %v1679 = vpop.f32.mrb[0].mxu0
      %v1680 = vadd.f32 %v1455, %v1679
      %v1681 = vpop.f32.mrb[0].mxu0
      %v1682 = vand.u32 %v411, 4294901760
      %1683 = vmatprep.mubr.f32.mxu0 %v1682
      %v1684 = vand.u32 %v409, 4294901760
      %1685 = vmatmul.mubr.f32.gmra.mrb[0].mxu0 %v1684
      %v1686 = vpop.f32.mrb[0].mxu0
      %v1687 = vadd.f32 %v1466, %v1686
      %v1688 = vpop.f32.mrb[0].mxu0
      %v1689 = vand.u32 %v417, 4294901760
      %1690 = vmatprep.mubr.f32.mxu0 %v1689
      %v1691 = vand.u32 %v415, 4294901760
      %1692 = vmatmul.mubr.f32.gmra.mrb[0].mxu0 %v1691
      %v1693 = vpop.f32.mrb[0].mxu0
      %v1694 = vadd.f32 %v1477, %v1693
      %v1695 = vpop.f32.mrb[0].mxu0
      %1696 = vdwg.mxu0
      %1697 = vmatprep.subr.mxu0 0.0
      %v1698 = vand.u32 %v532, 4294901760
      %1699 = vmatpush1.msra.mxu0 %v1698
      %1700 = vmatprep.subr.mxu0 0.0
      %v1701 = vand.u32 %v533, 4294901760
      %1702 = vmatpush1.msra.mxu0 %v1701
      %1703 = vmatprep.subr.mxu0 0.0
      %v1704 = vand.u32 %v534, 4294901760
      %1705 = vmatpush1.msra.mxu0 %v1704
      %1706 = vmatprep.subr.mxu0 0.0
      %v1707 = vand.u32 %v535, 4294901760
      %1708 = vmatpush1.msra.mxu0 %v1707
      %1709 = vmatprep.subr.mxu0 0.0
      %v1710 = vand.u32 %v536, 4294901760
      %1711 = vmatpush1.msra.mxu0 %v1710
      %1712 = vmatprep.subr.mxu0 0.0
      %v1713 = vand.u32 %v537, 4294901760
      %1714 = vmatpush1.msra.mxu0 %v1713
      %1715 = vmatprep.subr.mxu0 0.0
      %v1716 = vand.u32 %v538, 4294901760
      %1717 = vmatpush1.msra.mxu0 %v1716
      %1718 = vmatprep.subr.mxu0 0.0
      %v1719 = vand.u32 %v539, 4294901760
      %1720 = vmatpush1.msra.mxu0 %v1719
      %1721 = vmatprep.subr.mxu0 0.0
      %v1722 = vand.u32 %v540, 4294901760
      %1723 = vmatpush1.msra.mxu0 %v1722
      %1724 = vmatprep.subr.mxu0 0.0
      %v1725 = vand.u32 %v541, 4294901760
      %1726 = vmatpush1.msra.mxu0 %v1725
      %1727 = vmatprep.subr.mxu0 0.0
      %v1728 = vand.u32 %v542, 4294901760
      %1729 = vmatpush1.msra.mxu0 %v1728
      %1730 = vmatprep.subr.mxu0 0.0
      %v1731 = vand.u32 %v543, 4294901760
      %1732 = vmatpush1.msra.mxu0 %v1731
      %1733 = vmatprep.subr.mxu0 0.0
      %v1734 = vand.u32 %v544, 4294901760
      %1735 = vmatpush1.msra.mxu0 %v1734
      %1736 = vmatprep.subr.mxu0 0.0
      %v1737 = vand.u32 %v545, 4294901760
      %1738 = vmatpush1.msra.mxu0 %v1737
      %1739 = vmatprep.subr.mxu0 0.0
      %v1740 = vand.u32 %v546, 4294901760
      %1741 = vmatpush1.msra.mxu0 %v1740
      %1742 = vmatprep.subr.mxu0 0.0
      %v1743 = vand.u32 %v547, 4294901760
      %1744 = vmatpush1.msra.mxu0 %v1743
      %1745 = vmatprep.subr.mxu0 0.0
      %v1746 = vand.u32 %v548, 4294901760
      %1747 = vmatpush1.msra.mxu0 %v1746
      %1748 = vmatprep.subr.mxu0 0.0
      %v1749 = vand.u32 %v549, 4294901760
      %1750 = vmatpush1.msra.mxu0 %v1749
      %1751 = vmatprep.subr.mxu0 0.0
      %v1752 = vand.u32 %v550, 4294901760
      %1753 = vmatpush1.msra.mxu0 %v1752
      %1754 = vmatprep.subr.mxu0 0.0
      %v1755 = vand.u32 %v551, 4294901760
      %1756 = vmatpush1.msra.mxu0 %v1755
      %1757 = vmatprep.subr.mxu0 0.0
      %v1758 = vand.u32 %v552, 4294901760
      %1759 = vmatpush1.msra.mxu0 %v1758
      %1760 = vmatprep.subr.mxu0 0.0
      %v1761 = vand.u32 %v553, 4294901760
      %1762 = vmatpush1.msra.mxu0 %v1761
      %1763 = vmatprep.subr.mxu0 0.0
      %v1764 = vand.u32 %v554, 4294901760
      %1765 = vmatpush1.msra.mxu0 %v1764
      %1766 = vmatprep.subr.mxu0 0.0
      %v1767 = vand.u32 %v555, 4294901760
      %1768 = vmatpush1.msra.mxu0 %v1767
      %1769 = vmatprep.subr.mxu0 0.0
      %v1770 = vand.u32 %v556, 4294901760
      %1771 = vmatpush1.msra.mxu0 %v1770
      %1772 = vmatprep.subr.mxu0 0.0
      %v1773 = vand.u32 %v557, 4294901760
      %1774 = vmatpush1.msra.mxu0 %v1773
      %1775 = vmatprep.subr.mxu0 0.0
      %v1776 = vand.u32 %v558, 4294901760
      %1777 = vmatpush1.msra.mxu0 %v1776
      %1778 = vmatprep.subr.mxu0 0.0
      %v1779 = vand.u32 %v559, 4294901760
      %1780 = vmatpush1.msra.mxu0 %v1779
      %1781 = vmatprep.subr.mxu0 0.0
      %v1782 = vand.u32 %v560, 4294901760
      %1783 = vmatpush1.msra.mxu0 %v1782
      %1784 = vmatprep.subr.mxu0 0.0
      %v1785 = vand.u32 %v561, 4294901760
      %1786 = vmatpush1.msra.mxu0 %v1785
      %1787 = vmatprep.subr.mxu0 0.0
      %v1788 = vand.u32 %v562, 4294901760
      %1789 = vmatpush1.msra.mxu0 %v1788
      %1790 = vmatprep.subr.mxu0 0.0
      %v1791 = vand.u32 %v563, 4294901760
      %1792 = vmatpush1.msra.mxu0 %v1791
      %v1793 = vand.u32 %v375, 4294901760
      %1794 = vmatprep.mubr.f32.mxu0 %v1793
      %v1795 = vand.u32 %v373, 4294901760
      %1796 = vmatmul.mubr.f32.gmra.mrb[0].mxu0 %v1795
      %v1797 = vpop.f32.mrb[0].mxu0
      %v1798 = vadd.f32 %v1645, %v1797
      %v1799 = vpop.f32.mrb[0].mxu0
      %v1800 = vand.u32 %v381, 4294901760
      %1801 = vmatprep.mubr.f32.mxu0 %v1800
      %v1802 = vand.u32 %v379, 4294901760
      %1803 = vmatmul.mubr.f32.gmra.mrb[0].mxu0 %v1802
      %v1804 = vpop.f32.mrb[0].mxu0
      %v1805 = vadd.f32 %v1652, %v1804
      %v1806 = vpop.f32.mrb[0].mxu0
      %v1807 = vand.u32 %v387, 4294901760
      %1808 = vmatprep.mubr.f32.mxu0 %v1807
      %v1809 = vand.u32 %v385, 4294901760
      %1810 = vmatmul.mubr.f32.gmra.mrb[0].mxu0 %v1809
      %v1811 = vpop.f32.mrb[0].mxu0
      %v1812 = vadd.f32 %v1659, %v1811
      %v1813 = vpop.f32.mrb[0].mxu0
      %v1814 = vand.u32 %v393, 4294901760
      %1815 = vmatprep.mubr.f32.mxu0 %v1814
      %v1816 = vand.u32 %v391, 4294901760
      %1817 = vmatmul.mubr.f32.gmra.mrb[0].mxu0 %v1816
      %v1818 = vpop.f32.mrb[0].mxu0
      %v1819 = vadd.f32 %v1666, %v1818
      %v1820 = vpop.f32.mrb[0].mxu0
      %v1821 = vand.u32 %v399, 4294901760
      %1822 = vmatprep.mubr.f32.mxu0 %v1821
      %v1823 = vand.u32 %v397, 4294901760
      %1824 = vmatmul.mubr.f32.gmra.mrb[0].mxu0 %v1823
      %v1825 = vpop.f32.mrb[0].mxu0
      %v1826 = vadd.f32 %v1673, %v1825
      %v1827 = vpop.f32.mrb[0].mxu0
      %v1828 = vand.u32 %v405, 4294901760
      %1829 = vmatprep.mubr.f32.mxu0 %v1828
      %v1830 = vand.u32 %v403, 4294901760
      %1831 = vmatmul.mubr.f32.gmra.mrb[0].mxu0 %v1830
      %v1832 = vpop.f32.mrb[0].mxu0
      %v1833 = vadd.f32 %v1680, %v1832
      %v1834 = vpop.f32.mrb[0].mxu0
      %v1835 = vand.u32 %v411, 4294901760
      %1836 = vmatprep.mubr.f32.mxu0 %v1835
      %v1837 = vand.u32 %v409, 4294901760
      %1838 = vmatmul.mubr.f32.gmra.mrb[0].mxu0 %v1837
      %v1839 = vpop.f32.mrb[0].mxu0
      %v1840 = vadd.f32 %v1687, %v1839
      %v1841 = vpop.f32.mrb[0].mxu0
      %v1842 = vand.u32 %v417, 4294901760
      %1843 = vmatprep.mubr.f32.mxu0 %v1842
      %v1844 = vand.u32 %v415, 4294901760
      %1845 = vmatmul.mubr.f32.gmra.mrb[0].mxu0 %v1844
      %v1846 = vpop.f32.mrb[0].mxu0
      %v1847 = vadd.f32 %v1694, %v1846
      %v1848 = vpop.f32.mrb[0].mxu0
      %1849 = vdwg.mxu0
      %1850 = vmatprep.subr.mxu0 0.0
      %v1851 = vand.u32 %v564, 4294901760
      %1852 = vmatpush1.msra.mxu0 %v1851
      %1853 = vmatprep.subr.mxu0 0.0
      %v1854 = vand.u32 %v565, 4294901760
      %1855 = vmatpush1.msra.mxu0 %v1854
      %1856 = vmatprep.subr.mxu0 0.0
      %v1857 = vand.u32 %v566, 4294901760
      %1858 = vmatpush1.msra.mxu0 %v1857
      %1859 = vmatprep.subr.mxu0 0.0
      %v1860 = vand.u32 %v567, 4294901760
      %1861 = vmatpush1.msra.mxu0 %v1860
      %1862 = vmatprep.subr.mxu0 0.0
      %v1863 = vand.u32 %v568, 4294901760
      %1864 = vmatpush1.msra.mxu0 %v1863
      %1865 = vmatprep.subr.mxu0 0.0
      %v1866 = vand.u32 %v569, 4294901760
      %1867 = vmatpush1.msra.mxu0 %v1866
      %1868 = vmatprep.subr.mxu0 0.0
      %v1869 = vand.u32 %v570, 4294901760
      %1870 = vmatpush1.msra.mxu0 %v1869
      %1871 = vmatprep.subr.mxu0 0.0
      %v1872 = vand.u32 %v571, 4294901760
      %1873 = vmatpush1.msra.mxu0 %v1872
      %1874 = vmatprep.subr.mxu0 0.0
      %v1875 = vand.u32 %v572, 4294901760
      %1876 = vmatpush1.msra.mxu0 %v1875
      %1877 = vmatprep.subr.mxu0 0.0
      %v1878 = vand.u32 %v573, 4294901760
      %1879 = vmatpush1.msra.mxu0 %v1878
      %1880 = vmatprep.subr.mxu0 0.0
      %v1881 = vand.u32 %v574, 4294901760
      %1882 = vmatpush1.msra.mxu0 %v1881
      %1883 = vmatprep.subr.mxu0 0.0
      %v1884 = vand.u32 %v575, 4294901760
      %1885 = vmatpush1.msra.mxu0 %v1884
      %1886 = vmatprep.subr.mxu0 0.0
      %v1887 = vand.u32 %v576, 4294901760
      %1888 = vmatpush1.msra.mxu0 %v1887
      %1889 = vmatprep.subr.mxu0 0.0
      %v1890 = vand.u32 %v577, 4294901760
      %1891 = vmatpush1.msra.mxu0 %v1890
      %1892 = vmatprep.subr.mxu0 0.0
      %v1893 = vand.u32 %v578, 4294901760
      %1894 = vmatpush1.msra.mxu0 %v1893
      %1895 = vmatprep.subr.mxu0 0.0
      %v1896 = vand.u32 %v579, 4294901760
      %1897 = vmatpush1.msra.mxu0 %v1896
      %1898 = vmatprep.subr.mxu0 0.0
      %v1899 = vand.u32 %v580, 4294901760
      %1900 = vmatpush1.msra.mxu0 %v1899
      %1901 = vmatprep.subr.mxu0 0.0
      %v1902 = vand.u32 %v581, 4294901760
      %1903 = vmatpush1.msra.mxu0 %v1902
      %1904 = vmatprep.subr.mxu0 0.0
      %v1905 = vand.u32 %v582, 4294901760
      %1906 = vmatpush1.msra.mxu0 %v1905
      %1907 = vmatprep.subr.mxu0 0.0
      %v1908 = vand.u32 %v583, 4294901760
      %1909 = vmatpush1.msra.mxu0 %v1908
      %1910 = vmatprep.subr.mxu0 0.0
      %v1911 = vand.u32 %v584, 4294901760
      %1912 = vmatpush1.msra.mxu0 %v1911
      %1913 = vmatprep.subr.mxu0 0.0
      %v1914 = vand.u32 %v585, 4294901760
      %1915 = vmatpush1.msra.mxu0 %v1914
      %1916 = vmatprep.subr.mxu0 0.0
      %v1917 = vand.u32 %v586, 4294901760
      %1918 = vmatpush1.msra.mxu0 %v1917
      %1919 = vmatprep.subr.mxu0 0.0
      %v1920 = vand.u32 %v587, 4294901760
      %1921 = vmatpush1.msra.mxu0 %v1920
      %1922 = vmatprep.subr.mxu0 0.0
      %v1923 = vand.u32 %v588, 4294901760
      %1924 = vmatpush1.msra.mxu0 %v1923
      %1925 = vmatprep.subr.mxu0 0.0
      %v1926 = vand.u32 %v589, 4294901760
      %1927 = vmatpush1.msra.mxu0 %v1926
      %1928 = vmatprep.subr.mxu0 0.0
      %v1929 = vand.u32 %v590, 4294901760
      %1930 = vmatpush1.msra.mxu0 %v1929
      %1931 = vmatprep.subr.mxu0 0.0
      %v1932 = vand.u32 %v591, 4294901760
      %1933 = vmatpush1.msra.mxu0 %v1932
      %1934 = vmatprep.subr.mxu0 0.0
      %v1935 = vand.u32 %v592, 4294901760
      %1936 = vmatpush1.msra.mxu0 %v1935
      %1937 = vmatprep.subr.mxu0 0.0
      %v1938 = vand.u32 %v593, 4294901760
      %1939 = vmatpush1.msra.mxu0 %v1938
      %1940 = vmatprep.subr.mxu0 0.0
      %v1941 = vand.u32 %v594, 4294901760
      %1942 = vmatpush1.msra.mxu0 %v1941
      %1943 = vmatprep.subr.mxu0 0.0
      %v1944 = vand.u32 %v595, 4294901760
      %1945 = vmatpush1.msra.mxu0 %v1944
      %v1946 = vand.u32 %v488, 4294901760
      %v1947 = vsub.f32 %v488, %v1946
      %v1948 = vand.u32 %v1947, 4294901760
      %v1949 = vsub.f32 %v1947, %v1948
      %v1950 = vand.u32 %v1949, 4294901760
      %1951 = vmatprep.mubr.f32.mxu0 %v1950
      %v1952 = vand.u32 %v486, 4294901760
      %v1953 = vsub.f32 %v486, %v1952
      %v1954 = vand.u32 %v1953, 4294901760
      %v1955 = vsub.f32 %v1953, %v1954
      %v1956 = vand.u32 %v1955, 4294901760
      %1957 = vmatmul.mubr.f32.gmra.mrb[0].mxu0 %v1956
      %v1958 = vpop.f32.mrb[0].mxu0
      %v1959 = vadd.f32 %v1798, %v1958
      %v1960 = vpop.f32.mrb[0].mxu0
      %v1961 = vand.u32 %v494, 4294901760
      %v1962 = vsub.f32 %v494, %v1961
      %v1963 = vand.u32 %v1962, 4294901760
      %v1964 = vsub.f32 %v1962, %v1963
      %v1965 = vand.u32 %v1964, 4294901760
      %1966 = vmatprep.mubr.f32.mxu0 %v1965
      %v1967 = vand.u32 %v492, 4294901760
      %v1968 = vsub.f32 %v492, %v1967
      %v1969 = vand.u32 %v1968, 4294901760
      %v1970 = vsub.f32 %v1968, %v1969
      %v1971 = vand.u32 %v1970, 4294901760
      %1972 = vmatmul.mubr.f32.gmra.mrb[0].mxu0 %v1971
      %v1973 = vpop.f32.mrb[0].mxu0
      %v1974 = vadd.f32 %v1805, %v1973
      %v1975 = vpop.f32.mrb[0].mxu0
      %v1976 = vand.u32 %v500, 4294901760
      %v1977 = vsub.f32 %v500, %v1976
      %v1978 = vand.u32 %v1977, 4294901760
      %v1979 = vsub.f32 %v1977, %v1978
      %v1980 = vand.u32 %v1979, 4294901760
      %1981 = vmatprep.mubr.f32.mxu0 %v1980
      %v1982 = vand.u32 %v498, 4294901760
      %v1983 = vsub.f32 %v498, %v1982
      %v1984 = vand.u32 %v1983, 4294901760
      %v1985 = vsub.f32 %v1983, %v1984
      %v1986 = vand.u32 %v1985, 4294901760
      %1987 = vmatmul.mubr.f32.gmra.mrb[0].mxu0 %v1986
      %v1988 = vpop.f32.mrb[0].mxu0
      %v1989 = vadd.f32 %v1812, %v1988
      %v1990 = vpop.f32.mrb[0].mxu0
      %v1991 = vand.u32 %v506, 4294901760
      %v1992 = vsub.f32 %v506, %v1991
      %v1993 = vand.u32 %v1992, 4294901760
      %v1994 = vsub.f32 %v1992, %v1993
      %v1995 = vand.u32 %v1994, 4294901760
      %1996 = vmatprep.mubr.f32.mxu0 %v1995
      %v1997 = vand.u32 %v504, 4294901760
      %v1998 = vsub.f32 %v504, %v1997
      %v1999 = vand.u32 %v1998, 4294901760
      %v2000 = vsub.f32 %v1998, %v1999
      %v2001 = vand.u32 %v2000, 4294901760
      %2002 = vmatmul.mubr.f32.gmra.mrb[0].mxu0 %v2001
      %v2003 = vpop.f32.mrb[0].mxu0
      %v2004 = vadd.f32 %v1819, %v2003
      %v2005 = vpop.f32.mrb[0].mxu0
      %v2006 = vand.u32 %v512, 4294901760
      %v2007 = vsub.f32 %v512, %v2006
      %v2008 = vand.u32 %v2007, 4294901760
      %v2009 = vsub.f32 %v2007, %v2008
      %v2010 = vand.u32 %v2009, 4294901760
      %2011 = vmatprep.mubr.f32.mxu0 %v2010
      %v2012 = vand.u32 %v510, 4294901760
      %v2013 = vsub.f32 %v510, %v2012
      %v2014 = vand.u32 %v2013, 4294901760
      %v2015 = vsub.f32 %v2013, %v2014
      %v2016 = vand.u32 %v2015, 4294901760
      %2017 = vmatmul.mubr.f32.gmra.mrb[0].mxu0 %v2016
      %v2018 = vpop.f32.mrb[0].mxu0
      %v2019 = vadd.f32 %v1826, %v2018
      %v2020 = vpop.f32.mrb[0].mxu0
      %v2021 = vand.u32 %v518, 4294901760
      %v2022 = vsub.f32 %v518, %v2021
      %v2023 = vand.u32 %v2022, 4294901760
      %v2024 = vsub.f32 %v2022, %v2023
      %v2025 = vand.u32 %v2024, 4294901760
      %2026 = vmatprep.mubr.f32.mxu0 %v2025
      %v2027 = vand.u32 %v516, 4294901760
      %v2028 = vsub.f32 %v516, %v2027
      %v2029 = vand.u32 %v2028, 4294901760
      %v2030 = vsub.f32 %v2028, %v2029
      %v2031 = vand.u32 %v2030, 4294901760
      %2032 = vmatmul.mubr.f32.gmra.mrb[0].mxu0 %v2031
      %v2033 = vpop.f32.mrb[0].mxu0
      %v2034 = vadd.f32 %v1833, %v2033
      %v2035 = vpop.f32.mrb[0].mxu0
      %v2036 = vand.u32 %v524, 4294901760
      %v2037 = vsub.f32 %v524, %v2036
      %v2038 = vand.u32 %v2037, 4294901760
      %v2039 = vsub.f32 %v2037, %v2038
      %v2040 = vand.u32 %v2039, 4294901760
      %2041 = vmatprep.mubr.f32.mxu0 %v2040
      %v2042 = vand.u32 %v522, 4294901760
      %v2043 = vsub.f32 %v522, %v2042
      %v2044 = vand.u32 %v2043, 4294901760
      %v2045 = vsub.f32 %v2043, %v2044
      %v2046 = vand.u32 %v2045, 4294901760
      %2047 = vmatmul.mubr.f32.gmra.mrb[0].mxu0 %v2046
      %v2048 = vpop.f32.mrb[0].mxu0
      %v2049 = vadd.f32 %v1840, %v2048
      %v2050 = vpop.f32.mrb[0].mxu0
      %v2051 = vand.u32 %v530, 4294901760
      %v2052 = vsub.f32 %v530, %v2051
      %v2053 = vand.u32 %v2052, 4294901760
      %v2054 = vsub.f32 %v2052, %v2053
      %v2055 = vand.u32 %v2054, 4294901760
      %2056 = vmatprep.mubr.f32.mxu0 %v2055
      %v2057 = vand.u32 %v528, 4294901760
      %v2058 = vsub.f32 %v528, %v2057
      %v2059 = vand.u32 %v2058, 4294901760
      %v2060 = vsub.f32 %v2058, %v2059
      %v2061 = vand.u32 %v2060, 4294901760
      %2062 = vmatmul.mubr.f32.gmra.mrb[0].mxu0 %v2061
      %v2063 = vpop.f32.mrb[0].mxu0
      %v2064 = vadd.f32 %v1847, %v2063
      %v2065 = vpop.f32.mrb[0].mxu0
      %2066 = vdwg.mxu0
      %2067 = vmatprep.subr.mxu0 0.0
      %v2068 = vand.u32 %v564, 4294901760
      %v2069 = vsub.f32 %v564, %v2068
      %v2070 = vand.u32 %v2069, 4294901760
      %v2071 = vsub.f32 %v2069, %v2070
      %v2072 = vand.u32 %v2071, 4294901760
      %2073 = vmatpush1.msra.mxu0 %v2072
      %2074 = vmatprep.subr.mxu0 0.0
      %v2075 = vand.u32 %v565, 4294901760
      %v2076 = vsub.f32 %v565, %v2075
      %v2077 = vand.u32 %v2076, 4294901760
      %v2078 = vsub.f32 %v2076, %v2077
      %v2079 = vand.u32 %v2078, 4294901760
      %2080 = vmatpush1.msra.mxu0 %v2079
      %2081 = vmatprep.subr.mxu0 0.0
      %v2082 = vand.u32 %v566, 4294901760
      %v2083 = vsub.f32 %v566, %v2082
      %v2084 = vand.u32 %v2083, 4294901760
      %v2085 = vsub.f32 %v2083, %v2084
      %v2086 = vand.u32 %v2085, 4294901760
      %2087 = vmatpush1.msra.mxu0 %v2086
      %2088 = vmatprep.subr.mxu0 0.0
      %v2089 = vand.u32 %v567, 4294901760
      %v2090 = vsub.f32 %v567, %v2089
      %v2091 = vand.u32 %v2090, 4294901760
      %v2092 = vsub.f32 %v2090, %v2091
      %v2093 = vand.u32 %v2092, 4294901760
      %2094 = vmatpush1.msra.mxu0 %v2093
      %2095 = vmatprep.subr.mxu0 0.0
      %v2096 = vand.u32 %v568, 4294901760
      %v2097 = vsub.f32 %v568, %v2096
      %v2098 = vand.u32 %v2097, 4294901760
      %v2099 = vsub.f32 %v2097, %v2098
      %v2100 = vand.u32 %v2099, 4294901760
      %2101 = vmatpush1.msra.mxu0 %v2100
      %2102 = vmatprep.subr.mxu0 0.0
      %v2103 = vand.u32 %v569, 4294901760
      %v2104 = vsub.f32 %v569, %v2103
      %v2105 = vand.u32 %v2104, 4294901760
      %v2106 = vsub.f32 %v2104, %v2105
      %v2107 = vand.u32 %v2106, 4294901760
      %2108 = vmatpush1.msra.mxu0 %v2107
      %2109 = vmatprep.subr.mxu0 0.0
      %v2110 = vand.u32 %v570, 4294901760
      %v2111 = vsub.f32 %v570, %v2110
      %v2112 = vand.u32 %v2111, 4294901760
      %v2113 = vsub.f32 %v2111, %v2112
      %v2114 = vand.u32 %v2113, 4294901760
      %2115 = vmatpush1.msra.mxu0 %v2114
      %2116 = vmatprep.subr.mxu0 0.0
      %v2117 = vand.u32 %v571, 4294901760
      %v2118 = vsub.f32 %v571, %v2117
      %v2119 = vand.u32 %v2118, 4294901760
      %v2120 = vsub.f32 %v2118, %v2119
      %v2121 = vand.u32 %v2120, 4294901760
      %2122 = vmatpush1.msra.mxu0 %v2121
      %2123 = vmatprep.subr.mxu0 0.0
      %v2124 = vand.u32 %v572, 4294901760
      %v2125 = vsub.f32 %v572, %v2124
      %v2126 = vand.u32 %v2125, 4294901760
      %v2127 = vsub.f32 %v2125, %v2126
      %v2128 = vand.u32 %v2127, 4294901760
      %2129 = vmatpush1.msra.mxu0 %v2128
      %2130 = vmatprep.subr.mxu0 0.0
      %v2131 = vand.u32 %v573, 4294901760
      %v2132 = vsub.f32 %v573, %v2131
      %v2133 = vand.u32 %v2132, 4294901760
      %v2134 = vsub.f32 %v2132, %v2133
      %v2135 = vand.u32 %v2134, 4294901760
      %2136 = vmatpush1.msra.mxu0 %v2135
      %2137 = vmatprep.subr.mxu0 0.0
      %v2138 = vand.u32 %v574, 4294901760
      %v2139 = vsub.f32 %v574, %v2138
      %v2140 = vand.u32 %v2139, 4294901760
      %v2141 = vsub.f32 %v2139, %v2140
      %v2142 = vand.u32 %v2141, 4294901760
      %2143 = vmatpush1.msra.mxu0 %v2142
      %2144 = vmatprep.subr.mxu0 0.0
      %v2145 = vand.u32 %v575, 4294901760
      %v2146 = vsub.f32 %v575, %v2145
      %v2147 = vand.u32 %v2146, 4294901760
      %v2148 = vsub.f32 %v2146, %v2147
      %v2149 = vand.u32 %v2148, 4294901760
      %2150 = vmatpush1.msra.mxu0 %v2149
      %2151 = vmatprep.subr.mxu0 0.0
      %v2152 = vand.u32 %v576, 4294901760
      %v2153 = vsub.f32 %v576, %v2152
      %v2154 = vand.u32 %v2153, 4294901760
      %v2155 = vsub.f32 %v2153, %v2154
      %v2156 = vand.u32 %v2155, 4294901760
      %2157 = vmatpush1.msra.mxu0 %v2156
      %2158 = vmatprep.subr.mxu0 0.0
      %v2159 = vand.u32 %v577, 4294901760
      %v2160 = vsub.f32 %v577, %v2159
      %v2161 = vand.u32 %v2160, 4294901760
      %v2162 = vsub.f32 %v2160, %v2161
      %v2163 = vand.u32 %v2162, 4294901760
      %2164 = vmatpush1.msra.mxu0 %v2163
      %2165 = vmatprep.subr.mxu0 0.0
      %v2166 = vand.u32 %v578, 4294901760
      %v2167 = vsub.f32 %v578, %v2166
      %v2168 = vand.u32 %v2167, 4294901760
      %v2169 = vsub.f32 %v2167, %v2168
      %v2170 = vand.u32 %v2169, 4294901760
      %2171 = vmatpush1.msra.mxu0 %v2170
      %2172 = vmatprep.subr.mxu0 0.0
      %v2173 = vand.u32 %v579, 4294901760
      %v2174 = vsub.f32 %v579, %v2173
      %v2175 = vand.u32 %v2174, 4294901760
      %v2176 = vsub.f32 %v2174, %v2175
      %v2177 = vand.u32 %v2176, 4294901760
      %2178 = vmatpush1.msra.mxu0 %v2177
      %2179 = vmatprep.subr.mxu0 0.0
      %v2180 = vand.u32 %v580, 4294901760
      %v2181 = vsub.f32 %v580, %v2180
      %v2182 = vand.u32 %v2181, 4294901760
      %v2183 = vsub.f32 %v2181, %v2182
      %v2184 = vand.u32 %v2183, 4294901760
      %2185 = vmatpush1.msra.mxu0 %v2184
      %2186 = vmatprep.subr.mxu0 0.0
      %v2187 = vand.u32 %v581, 4294901760
      %v2188 = vsub.f32 %v581, %v2187
      %v2189 = vand.u32 %v2188, 4294901760
      %v2190 = vsub.f32 %v2188, %v2189
      %v2191 = vand.u32 %v2190, 4294901760
      %2192 = vmatpush1.msra.mxu0 %v2191
      %2193 = vmatprep.subr.mxu0 0.0
      %v2194 = vand.u32 %v582, 4294901760
      %v2195 = vsub.f32 %v582, %v2194
      %v2196 = vand.u32 %v2195, 4294901760
      %v2197 = vsub.f32 %v2195, %v2196
      %v2198 = vand.u32 %v2197, 4294901760
      %2199 = vmatpush1.msra.mxu0 %v2198
      %2200 = vmatprep.subr.mxu0 0.0
      %v2201 = vand.u32 %v583, 4294901760
      %v2202 = vsub.f32 %v583, %v2201
      %v2203 = vand.u32 %v2202, 4294901760
      %v2204 = vsub.f32 %v2202, %v2203
      %v2205 = vand.u32 %v2204, 4294901760
      %2206 = vmatpush1.msra.mxu0 %v2205
      %2207 = vmatprep.subr.mxu0 0.0
      %v2208 = vand.u32 %v584, 4294901760
      %v2209 = vsub.f32 %v584, %v2208
      %v2210 = vand.u32 %v2209, 4294901760
      %v2211 = vsub.f32 %v2209, %v2210
      %v2212 = vand.u32 %v2211, 4294901760
      %2213 = vmatpush1.msra.mxu0 %v2212
      %2214 = vmatprep.subr.mxu0 0.0
      %v2215 = vand.u32 %v585, 4294901760
      %v2216 = vsub.f32 %v585, %v2215
      %v2217 = vand.u32 %v2216, 4294901760
      %v2218 = vsub.f32 %v2216, %v2217
      %v2219 = vand.u32 %v2218, 4294901760
      %2220 = vmatpush1.msra.mxu0 %v2219
      %2221 = vmatprep.subr.mxu0 0.0
      %v2222 = vand.u32 %v586, 4294901760
      %v2223 = vsub.f32 %v586, %v2222
      %v2224 = vand.u32 %v2223, 4294901760
      %v2225 = vsub.f32 %v2223, %v2224
      %v2226 = vand.u32 %v2225, 4294901760
      %2227 = vmatpush1.msra.mxu0 %v2226
      %2228 = vmatprep.subr.mxu0 0.0
      %v2229 = vand.u32 %v587, 4294901760
      %v2230 = vsub.f32 %v587, %v2229
      %v2231 = vand.u32 %v2230, 4294901760
      %v2232 = vsub.f32 %v2230, %v2231
      %v2233 = vand.u32 %v2232, 4294901760
      %2234 = vmatpush1.msra.mxu0 %v2233
      %2235 = vmatprep.subr.mxu0 0.0
      %v2236 = vand.u32 %v588, 4294901760
      %v2237 = vsub.f32 %v588, %v2236
      %v2238 = vand.u32 %v2237, 4294901760
      %v2239 = vsub.f32 %v2237, %v2238
      %v2240 = vand.u32 %v2239, 4294901760
      %2241 = vmatpush1.msra.mxu0 %v2240
      %2242 = vmatprep.subr.mxu0 0.0
      %v2243 = vand.u32 %v589, 4294901760
      %v2244 = vsub.f32 %v589, %v2243
      %v2245 = vand.u32 %v2244, 4294901760
      %v2246 = vsub.f32 %v2244, %v2245
      %v2247 = vand.u32 %v2246, 4294901760
      %2248 = vmatpush1.msra.mxu0 %v2247
      %2249 = vmatprep.subr.mxu0 0.0
      %v2250 = vand.u32 %v590, 4294901760
      %v2251 = vsub.f32 %v590, %v2250
      %v2252 = vand.u32 %v2251, 4294901760
      %v2253 = vsub.f32 %v2251, %v2252
      %v2254 = vand.u32 %v2253, 4294901760
      %2255 = vmatpush1.msra.mxu0 %v2254
      %2256 = vmatprep.subr.mxu0 0.0
      %v2257 = vand.u32 %v591, 4294901760
      %v2258 = vsub.f32 %v591, %v2257
      %v2259 = vand.u32 %v2258, 4294901760
      %v2260 = vsub.f32 %v2258, %v2259
      %v2261 = vand.u32 %v2260, 4294901760
      %2262 = vmatpush1.msra.mxu0 %v2261
      %2263 = vmatprep.subr.mxu0 0.0
      %v2264 = vand.u32 %v592, 4294901760
      %v2265 = vsub.f32 %v592, %v2264
      %v2266 = vand.u32 %v2265, 4294901760
      %v2267 = vsub.f32 %v2265, %v2266
      %v2268 = vand.u32 %v2267, 4294901760
      %2269 = vmatpush1.msra.mxu0 %v2268
      %2270 = vmatprep.subr.mxu0 0.0
      %v2271 = vand.u32 %v593, 4294901760
      %v2272 = vsub.f32 %v593, %v2271
      %v2273 = vand.u32 %v2272, 4294901760
      %v2274 = vsub.f32 %v2272, %v2273
      %v2275 = vand.u32 %v2274, 4294901760
      %2276 = vmatpush1.msra.mxu0 %v2275
      %2277 = vmatprep.subr.mxu0 0.0
      %v2278 = vand.u32 %v594, 4294901760
      %v2279 = vsub.f32 %v594, %v2278
      %v2280 = vand.u32 %v2279, 4294901760
      %v2281 = vsub.f32 %v2279, %v2280
      %v2282 = vand.u32 %v2281, 4294901760
      %2283 = vmatpush1.msra.mxu0 %v2282
      %2284 = vmatprep.subr.mxu0 0.0
      %v2285 = vand.u32 %v595, 4294901760
      %v2286 = vsub.f32 %v595, %v2285
      %v2287 = vand.u32 %v2286, 4294901760
      %v2288 = vsub.f32 %v2286, %v2287
      %v2289 = vand.u32 %v2288, 4294901760
      %2290 = vmatpush1.msra.mxu0 %v2289
      %v2291 = vand.u32 %v488, 4294901760
      %2292 = vmatprep.mubr.f32.mxu0 %v2291
      %v2293 = vand.u32 %v486, 4294901760
      %2294 = vmatmul.mubr.f32.gmra.mrb[0].mxu0 %v2293
      %v2295 = vpop.f32.mrb[0].mxu0
      %v2296 = vadd.f32 %v1959, %v2295
      %v2297 = vpop.f32.mrb[0].mxu0
      %v2298 = vand.u32 %v494, 4294901760
      %2299 = vmatprep.mubr.f32.mxu0 %v2298
      %v2300 = vand.u32 %v492, 4294901760
      %2301 = vmatmul.mubr.f32.gmra.mrb[0].mxu0 %v2300
      %v2302 = vpop.f32.mrb[0].mxu0
      %v2303 = vadd.f32 %v1974, %v2302
      %v2304 = vpop.f32.mrb[0].mxu0
      %v2305 = vand.u32 %v500, 4294901760
      %2306 = vmatprep.mubr.f32.mxu0 %v2305
      %v2307 = vand.u32 %v498, 4294901760
      %2308 = vmatmul.mubr.f32.gmra.mrb[0].mxu0 %v2307
      %v2309 = vpop.f32.mrb[0].mxu0
      %v2310 = vadd.f32 %v1989, %v2309
      %v2311 = vpop.f32.mrb[0].mxu0
      %v2312 = vand.u32 %v506, 4294901760
      %2313 = vmatprep.mubr.f32.mxu0 %v2312
      %v2314 = vand.u32 %v504, 4294901760
      %2315 = vmatmul.mubr.f32.gmra.mrb[0].mxu0 %v2314
      %v2316 = vpop.f32.mrb[0].mxu0
      %v2317 = vadd.f32 %v2004, %v2316
      %v2318 = vpop.f32.mrb[0].mxu0
      %v2319 = vand.u32 %v512, 4294901760
      %2320 = vmatprep.mubr.f32.mxu0 %v2319
      %v2321 = vand.u32 %v510, 4294901760
      %2322 = vmatmul.mubr.f32.gmra.mrb[0].mxu0 %v2321
      %v2323 = vpop.f32.mrb[0].mxu0
      %v2324 = vadd.f32 %v2019, %v2323
      %v2325 = vpop.f32.mrb[0].mxu0
      %v2326 = vand.u32 %v518, 4294901760
      %2327 = vmatprep.mubr.f32.mxu0 %v2326
      %v2328 = vand.u32 %v516, 4294901760
      %2329 = vmatmul.mubr.f32.gmra.mrb[0].mxu0 %v2328
      %v2330 = vpop.f32.mrb[0].mxu0
      %v2331 = vadd.f32 %v2034, %v2330
      %v2332 = vpop.f32.mrb[0].mxu0
      %v2333 = vand.u32 %v524, 4294901760
      %2334 = vmatprep.mubr.f32.mxu0 %v2333
      %v2335 = vand.u32 %v522, 4294901760
      %2336 = vmatmul.mubr.f32.gmra.mrb[0].mxu0 %v2335
      %v2337 = vpop.f32.mrb[0].mxu0
      %v2338 = vadd.f32 %v2049, %v2337
      %v2339 = vpop.f32.mrb[0].mxu0
      %v2340 = vand.u32 %v530, 4294901760
      %2341 = vmatprep.mubr.f32.mxu0 %v2340
      %v2342 = vand.u32 %v528, 4294901760
      %2343 = vmatmul.mubr.f32.gmra.mrb[0].mxu0 %v2342
      %v2344 = vpop.f32.mrb[0].mxu0
      %v2345 = vadd.f32 %v2064, %v2344
      %v2346 = vpop.f32.mrb[0].mxu0
      %2347 = vdwg.mxu0
      %2348 = vmatprep.subr.mxu0 0.0
      %v2349 = vand.u32 %v564, 4294901760
      %v2350 = vsub.f32 %v564, %v2349
      %2351 = vmatpush1.msra.mxu0 %v2350
      %2352 = vmatprep.subr.mxu0 0.0
      %v2353 = vand.u32 %v565, 4294901760
      %v2354 = vsub.f32 %v565, %v2353
      %2355 = vmatpush1.msra.mxu0 %v2354
      %2356 = vmatprep.subr.mxu0 0.0
      %v2357 = vand.u32 %v566, 4294901760
      %v2358 = vsub.f32 %v566, %v2357
      %2359 = vmatpush1.msra.mxu0 %v2358
      %2360 = vmatprep.subr.mxu0 0.0
      %v2361 = vand.u32 %v567, 4294901760
      %v2362 = vsub.f32 %v567, %v2361
      %2363 = vmatpush1.msra.mxu0 %v2362
      %2364 = vmatprep.subr.mxu0 0.0
      %v2365 = vand.u32 %v568, 4294901760
      %v2366 = vsub.f32 %v568, %v2365
      %2367 = vmatpush1.msra.mxu0 %v2366
      %2368 = vmatprep.subr.mxu0 0.0
      %v2369 = vand.u32 %v569, 4294901760
      %v2370 = vsub.f32 %v569, %v2369
      %2371 = vmatpush1.msra.mxu0 %v2370
      %2372 = vmatprep.subr.mxu0 0.0
      %v2373 = vand.u32 %v570, 4294901760
      %v2374 = vsub.f32 %v570, %v2373
      %2375 = vmatpush1.msra.mxu0 %v2374
      %2376 = vmatprep.subr.mxu0 0.0
      %v2377 = vand.u32 %v571, 4294901760
      %v2378 = vsub.f32 %v571, %v2377
      %2379 = vmatpush1.msra.mxu0 %v2378
      %2380 = vmatprep.subr.mxu0 0.0
      %v2381 = vand.u32 %v572, 4294901760
      %v2382 = vsub.f32 %v572, %v2381
      %2383 = vmatpush1.msra.mxu0 %v2382
      %2384 = vmatprep.subr.mxu0 0.0
      %v2385 = vand.u32 %v573, 4294901760
      %v2386 = vsub.f32 %v573, %v2385
      %2387 = vmatpush1.msra.mxu0 %v2386
      %2388 = vmatprep.subr.mxu0 0.0
      %v2389 = vand.u32 %v574, 4294901760
      %v2390 = vsub.f32 %v574, %v2389
      %2391 = vmatpush1.msra.mxu0 %v2390
      %2392 = vmatprep.subr.mxu0 0.0
      %v2393 = vand.u32 %v575, 4294901760
      %v2394 = vsub.f32 %v575, %v2393
      %2395 = vmatpush1.msra.mxu0 %v2394
      %2396 = vmatprep.subr.mxu0 0.0
      %v2397 = vand.u32 %v576, 4294901760
      %v2398 = vsub.f32 %v576, %v2397
      %2399 = vmatpush1.msra.mxu0 %v2398
      %2400 = vmatprep.subr.mxu0 0.0
      %v2401 = vand.u32 %v577, 4294901760
      %v2402 = vsub.f32 %v577, %v2401
      %2403 = vmatpush1.msra.mxu0 %v2402
      %2404 = vmatprep.subr.mxu0 0.0
      %v2405 = vand.u32 %v578, 4294901760
      %v2406 = vsub.f32 %v578, %v2405
      %2407 = vmatpush1.msra.mxu0 %v2406
      %2408 = vmatprep.subr.mxu0 0.0
      %v2409 = vand.u32 %v579, 4294901760
      %v2410 = vsub.f32 %v579, %v2409
      %2411 = vmatpush1.msra.mxu0 %v2410
      %2412 = vmatprep.subr.mxu0 0.0
      %v2413 = vand.u32 %v580, 4294901760
      %v2414 = vsub.f32 %v580, %v2413
      %2415 = vmatpush1.msra.mxu0 %v2414
      %2416 = vmatprep.subr.mxu0 0.0
      %v2417 = vand.u32 %v581, 4294901760
      %v2418 = vsub.f32 %v581, %v2417
      %2419 = vmatpush1.msra.mxu0 %v2418
      %2420 = vmatprep.subr.mxu0 0.0
      %v2421 = vand.u32 %v582, 4294901760
      %v2422 = vsub.f32 %v582, %v2421
      %2423 = vmatpush1.msra.mxu0 %v2422
      %2424 = vmatprep.subr.mxu0 0.0
      %v2425 = vand.u32 %v583, 4294901760
      %v2426 = vsub.f32 %v583, %v2425
      %2427 = vmatpush1.msra.mxu0 %v2426
      %2428 = vmatprep.subr.mxu0 0.0
      %v2429 = vand.u32 %v584, 4294901760
      %v2430 = vsub.f32 %v584, %v2429
      %2431 = vmatpush1.msra.mxu0 %v2430
      %2432 = vmatprep.subr.mxu0 0.0
      %v2433 = vand.u32 %v585, 4294901760
      %v2434 = vsub.f32 %v585, %v2433
      %2435 = vmatpush1.msra.mxu0 %v2434
      %2436 = vmatprep.subr.mxu0 0.0
      %v2437 = vand.u32 %v586, 4294901760
      %v2438 = vsub.f32 %v586, %v2437
      %2439 = vmatpush1.msra.mxu0 %v2438
      %2440 = vmatprep.subr.mxu0 0.0
      %v2441 = vand.u32 %v587, 4294901760
      %v2442 = vsub.f32 %v587, %v2441
      %2443 = vmatpush1.msra.mxu0 %v2442
      %2444 = vmatprep.subr.mxu0 0.0
      %v2445 = vand.u32 %v588, 4294901760
      %v2446 = vsub.f32 %v588, %v2445
      %2447 = vmatpush1.msra.mxu0 %v2446
      %2448 = vmatprep.subr.mxu0 0.0
      %v2449 = vand.u32 %v589, 4294901760
      %v2450 = vsub.f32 %v589, %v2449
      %2451 = vmatpush1.msra.mxu0 %v2450
      %2452 = vmatprep.subr.mxu0 0.0
      %v2453 = vand.u32 %v590, 4294901760
      %v2454 = vsub.f32 %v590, %v2453
      %2455 = vmatpush1.msra.mxu0 %v2454
      %2456 = vmatprep.subr.mxu0 0.0
      %v2457 = vand.u32 %v591, 4294901760
      %v2458 = vsub.f32 %v591, %v2457
      %2459 = vmatpush1.msra.mxu0 %v2458
      %2460 = vmatprep.subr.mxu0 0.0
      %v2461 = vand.u32 %v592, 4294901760
      %v2462 = vsub.f32 %v592, %v2461
      %2463 = vmatpush1.msra.mxu0 %v2462
      %2464 = vmatprep.subr.mxu0 0.0
      %v2465 = vand.u32 %v593, 4294901760
      %v2466 = vsub.f32 %v593, %v2465
      %2467 = vmatpush1.msra.mxu0 %v2466
      %2468 = vmatprep.subr.mxu0 0.0
      %v2469 = vand.u32 %v594, 4294901760
      %v2470 = vsub.f32 %v594, %v2469
      %2471 = vmatpush1.msra.mxu0 %v2470
      %2472 = vmatprep.subr.mxu0 0.0
      %v2473 = vand.u32 %v595, 4294901760
      %v2474 = vsub.f32 %v595, %v2473
      %2475 = vmatpush1.msra.mxu0 %v2474
      %v2476 = vand.u32 %v488, 4294901760
      %v2477 = vsub.f32 %v488, %v2476
      %2478 = vmatprep.mubr.f32.mxu0 %v2477
      %v2479 = vand.u32 %v486, 4294901760
      %v2480 = vsub.f32 %v486, %v2479
      %2481 = vmatmul.mubr.f32.gmra.mrb[0].mxu0 %v2480
      %v2482 = vpop.f32.mrb[0].mxu0
      %v2483 = vadd.f32 %v2296, %v2482
      %v2484 = vpop.f32.mrb[0].mxu0
      %v2485 = vand.u32 %v494, 4294901760
      %v2486 = vsub.f32 %v494, %v2485
      %2487 = vmatprep.mubr.f32.mxu0 %v2486
      %v2488 = vand.u32 %v492, 4294901760
      %v2489 = vsub.f32 %v492, %v2488
      %2490 = vmatmul.mubr.f32.gmra.mrb[0].mxu0 %v2489
      %v2491 = vpop.f32.mrb[0].mxu0
      %v2492 = vadd.f32 %v2303, %v2491
      %v2493 = vpop.f32.mrb[0].mxu0
      %v2494 = vand.u32 %v500, 4294901760
      %v2495 = vsub.f32 %v500, %v2494
      %2496 = vmatprep.mubr.f32.mxu0 %v2495
      %v2497 = vand.u32 %v498, 4294901760
      %v2498 = vsub.f32 %v498, %v2497
      %2499 = vmatmul.mubr.f32.gmra.mrb[0].mxu0 %v2498
      %v2500 = vpop.f32.mrb[0].mxu0
      %v2501 = vadd.f32 %v2310, %v2500
      %v2502 = vpop.f32.mrb[0].mxu0
      %v2503 = vand.u32 %v506, 4294901760
      %v2504 = vsub.f32 %v506, %v2503
      %2505 = vmatprep.mubr.f32.mxu0 %v2504
      %v2506 = vand.u32 %v504, 4294901760
      %v2507 = vsub.f32 %v504, %v2506
      %2508 = vmatmul.mubr.f32.gmra.mrb[0].mxu0 %v2507
      %v2509 = vpop.f32.mrb[0].mxu0
      %v2510 = vadd.f32 %v2317, %v2509
      %v2511 = vpop.f32.mrb[0].mxu0
      %v2512 = vand.u32 %v512, 4294901760
      %v2513 = vsub.f32 %v512, %v2512
      %2514 = vmatprep.mubr.f32.mxu0 %v2513
      %v2515 = vand.u32 %v510, 4294901760
      %v2516 = vsub.f32 %v510, %v2515
      %2517 = vmatmul.mubr.f32.gmra.mrb[0].mxu0 %v2516
      %v2518 = vpop.f32.mrb[0].mxu0
      %v2519 = vadd.f32 %v2324, %v2518
      %v2520 = vpop.f32.mrb[0].mxu0
      %v2521 = vand.u32 %v518, 4294901760
      %v2522 = vsub.f32 %v518, %v2521
      %2523 = vmatprep.mubr.f32.mxu0 %v2522
      %v2524 = vand.u32 %v516, 4294901760
      %v2525 = vsub.f32 %v516, %v2524
      %2526 = vmatmul.mubr.f32.gmra.mrb[0].mxu0 %v2525
      %v2527 = vpop.f32.mrb[0].mxu0
      %v2528 = vadd.f32 %v2331, %v2527
      %v2529 = vpop.f32.mrb[0].mxu0
      %v2530 = vand.u32 %v524, 4294901760
      %v2531 = vsub.f32 %v524, %v2530
      %2532 = vmatprep.mubr.f32.mxu0 %v2531
      %v2533 = vand.u32 %v522, 4294901760
      %v2534 = vsub.f32 %v522, %v2533
      %2535 = vmatmul.mubr.f32.gmra.mrb[0].mxu0 %v2534
      %v2536 = vpop.f32.mrb[0].mxu0
      %v2537 = vadd.f32 %v2338, %v2536
      %v2538 = vpop.f32.mrb[0].mxu0
      %v2539 = vand.u32 %v530, 4294901760
      %v2540 = vsub.f32 %v530, %v2539
      %2541 = vmatprep.mubr.f32.mxu0 %v2540
      %v2542 = vand.u32 %v528, 4294901760
      %v2543 = vsub.f32 %v528, %v2542
      %2544 = vmatmul.mubr.f32.gmra.mrb[0].mxu0 %v2543
      %v2545 = vpop.f32.mrb[0].mxu0
      %v2546 = vadd.f32 %v2345, %v2545
      %v2547 = vpop.f32.mrb[0].mxu0
      %2548 = vdwg.mxu0
      %2549 = vmatprep.subr.mxu0 0.0
      %v2550 = vand.u32 %v564, 4294901760
      %2551 = vmatpush1.msra.mxu0 %v2550
      %2552 = vmatprep.subr.mxu0 0.0
      %v2553 = vand.u32 %v565, 4294901760
      %2554 = vmatpush1.msra.mxu0 %v2553
      %2555 = vmatprep.subr.mxu0 0.0
      %v2556 = vand.u32 %v566, 4294901760
      %2557 = vmatpush1.msra.mxu0 %v2556
      %2558 = vmatprep.subr.mxu0 0.0
      %v2559 = vand.u32 %v567, 4294901760
      %2560 = vmatpush1.msra.mxu0 %v2559
      %2561 = vmatprep.subr.mxu0 0.0
      %v2562 = vand.u32 %v568, 4294901760
      %2563 = vmatpush1.msra.mxu0 %v2562
      %2564 = vmatprep.subr.mxu0 0.0
      %v2565 = vand.u32 %v569, 4294901760
      %2566 = vmatpush1.msra.mxu0 %v2565
      %2567 = vmatprep.subr.mxu0 0.0
      %v2568 = vand.u32 %v570, 4294901760
      %2569 = vmatpush1.msra.mxu0 %v2568
      %2570 = vmatprep.subr.mxu0 0.0
      %v2571 = vand.u32 %v571, 4294901760
      %2572 = vmatpush1.msra.mxu0 %v2571
      %2573 = vmatprep.subr.mxu0 0.0
      %v2574 = vand.u32 %v572, 4294901760
      %2575 = vmatpush1.msra.mxu0 %v2574
      %2576 = vmatprep.subr.mxu0 0.0
      %v2577 = vand.u32 %v573, 4294901760
      %2578 = vmatpush1.msra.mxu0 %v2577
      %2579 = vmatprep.subr.mxu0 0.0
      %v2580 = vand.u32 %v574, 4294901760
      %2581 = vmatpush1.msra.mxu0 %v2580
      %2582 = vmatprep.subr.mxu0 0.0
      %v2583 = vand.u32 %v575, 4294901760
      %2584 = vmatpush1.msra.mxu0 %v2583
      %2585 = vmatprep.subr.mxu0 0.0
      %v2586 = vand.u32 %v576, 4294901760
      %2587 = vmatpush1.msra.mxu0 %v2586
      %2588 = vmatprep.subr.mxu0 0.0
      %v2589 = vand.u32 %v577, 4294901760
      %2590 = vmatpush1.msra.mxu0 %v2589
      %2591 = vmatprep.subr.mxu0 0.0
      %v2592 = vand.u32 %v578, 4294901760
      %2593 = vmatpush1.msra.mxu0 %v2592
      %2594 = vmatprep.subr.mxu0 0.0
      %v2595 = vand.u32 %v579, 4294901760
      %2596 = vmatpush1.msra.mxu0 %v2595
      %2597 = vmatprep.subr.mxu0 0.0
      %v2598 = vand.u32 %v580, 4294901760
      %2599 = vmatpush1.msra.mxu0 %v2598
      %2600 = vmatprep.subr.mxu0 0.0
      %v2601 = vand.u32 %v581, 4294901760
      %2602 = vmatpush1.msra.mxu0 %v2601
      %2603 = vmatprep.subr.mxu0 0.0
      %v2604 = vand.u32 %v582, 4294901760
      %2605 = vmatpush1.msra.mxu0 %v2604
      %2606 = vmatprep.subr.mxu0 0.0
      %v2607 = vand.u32 %v583, 4294901760
      %2608 = vmatpush1.msra.mxu0 %v2607
      %2609 = vmatprep.subr.mxu0 0.0
      %v2610 = vand.u32 %v584, 4294901760
      %2611 = vmatpush1.msra.mxu0 %v2610
      %2612 = vmatprep.subr.mxu0 0.0
      %v2613 = vand.u32 %v585, 4294901760
      %2614 = vmatpush1.msra.mxu0 %v2613
      %2615 = vmatprep.subr.mxu0 0.0
      %v2616 = vand.u32 %v586, 4294901760
      %2617 = vmatpush1.msra.mxu0 %v2616
      %2618 = vmatprep.subr.mxu0 0.0
      %v2619 = vand.u32 %v587, 4294901760
      %2620 = vmatpush1.msra.mxu0 %v2619
      %2621 = vmatprep.subr.mxu0 0.0
      %v2622 = vand.u32 %v588, 4294901760
      %2623 = vmatpush1.msra.mxu0 %v2622
      %2624 = vmatprep.subr.mxu0 0.0
      %v2625 = vand.u32 %v589, 4294901760
      %2626 = vmatpush1.msra.mxu0 %v2625
      %2627 = vmatprep.subr.mxu0 0.0
      %v2628 = vand.u32 %v590, 4294901760
      %2629 = vmatpush1.msra.mxu0 %v2628
      %2630 = vmatprep.subr.mxu0 0.0
      %v2631 = vand.u32 %v591, 4294901760
      %2632 = vmatpush1.msra.mxu0 %v2631
      %2633 = vmatprep.subr.mxu0 0.0
      %v2634 = vand.u32 %v592, 4294901760
      %2635 = vmatpush1.msra.mxu0 %v2634
      %2636 = vmatprep.subr.mxu0 0.0
      %v2637 = vand.u32 %v593, 4294901760
      %2638 = vmatpush1.msra.mxu0 %v2637
      %2639 = vmatprep.subr.mxu0 0.0
      %v2640 = vand.u32 %v594, 4294901760
      %2641 = vmatpush1.msra.mxu0 %v2640
      %2642 = vmatprep.subr.mxu0 0.0
      %v2643 = vand.u32 %v595, 4294901760
      %2644 = vmatpush1.msra.mxu0 %v2643
      %v2645 = vand.u32 %v488, 4294901760
      %v2646 = vsub.f32 %v488, %v2645
      %v2647 = vand.u32 %v2646, 4294901760
      %2648 = vmatprep.mubr.f32.mxu0 %v2647
      %v2649 = vand.u32 %v486, 4294901760
      %v2650 = vsub.f32 %v486, %v2649
      %v2651 = vand.u32 %v2650, 4294901760
      %2652 = vmatmul.mubr.f32.gmra.mrb[0].mxu0 %v2651
      %v2653 = vpop.f32.mrb[0].mxu0
      %v2654 = vadd.f32 %v2483, %v2653
      %v2655 = vpop.f32.mrb[0].mxu0
      %v2656 = vand.u32 %v494, 4294901760
      %v2657 = vsub.f32 %v494, %v2656
      %v2658 = vand.u32 %v2657, 4294901760
      %2659 = vmatprep.mubr.f32.mxu0 %v2658
      %v2660 = vand.u32 %v492, 4294901760
      %v2661 = vsub.f32 %v492, %v2660
      %v2662 = vand.u32 %v2661, 4294901760
      %2663 = vmatmul.mubr.f32.gmra.mrb[0].mxu0 %v2662
      %v2664 = vpop.f32.mrb[0].mxu0
      %v2665 = vadd.f32 %v2492, %v2664
      %v2666 = vpop.f32.mrb[0].mxu0
      %v2667 = vand.u32 %v500, 4294901760
      %v2668 = vsub.f32 %v500, %v2667
      %v2669 = vand.u32 %v2668, 4294901760
      %2670 = vmatprep.mubr.f32.mxu0 %v2669
      %v2671 = vand.u32 %v498, 4294901760
      %v2672 = vsub.f32 %v498, %v2671
      %v2673 = vand.u32 %v2672, 4294901760
      %2674 = vmatmul.mubr.f32.gmra.mrb[0].mxu0 %v2673
      %v2675 = vpop.f32.mrb[0].mxu0
      %v2676 = vadd.f32 %v2501, %v2675
      %v2677 = vpop.f32.mrb[0].mxu0
      %v2678 = vand.u32 %v506, 4294901760
      %v2679 = vsub.f32 %v506, %v2678
      %v2680 = vand.u32 %v2679, 4294901760
      %2681 = vmatprep.mubr.f32.mxu0 %v2680
      %v2682 = vand.u32 %v504, 4294901760
      %v2683 = vsub.f32 %v504, %v2682
      %v2684 = vand.u32 %v2683, 4294901760
      %2685 = vmatmul.mubr.f32.gmra.mrb[0].mxu0 %v2684
      %v2686 = vpop.f32.mrb[0].mxu0
      %v2687 = vadd.f32 %v2510, %v2686
      %v2688 = vpop.f32.mrb[0].mxu0
      %v2689 = vand.u32 %v512, 4294901760
      %v2690 = vsub.f32 %v512, %v2689
      %v2691 = vand.u32 %v2690, 4294901760
      %2692 = vmatprep.mubr.f32.mxu0 %v2691
      %v2693 = vand.u32 %v510, 4294901760
      %v2694 = vsub.f32 %v510, %v2693
      %v2695 = vand.u32 %v2694, 4294901760
      %2696 = vmatmul.mubr.f32.gmra.mrb[0].mxu0 %v2695
      %v2697 = vpop.f32.mrb[0].mxu0
      %v2698 = vadd.f32 %v2519, %v2697
      %v2699 = vpop.f32.mrb[0].mxu0
      %v2700 = vand.u32 %v518, 4294901760
      %v2701 = vsub.f32 %v518, %v2700
      %v2702 = vand.u32 %v2701, 4294901760
      %2703 = vmatprep.mubr.f32.mxu0 %v2702
      %v2704 = vand.u32 %v516, 4294901760
      %v2705 = vsub.f32 %v516, %v2704
      %v2706 = vand.u32 %v2705, 4294901760
      %2707 = vmatmul.mubr.f32.gmra.mrb[0].mxu0 %v2706
      %v2708 = vpop.f32.mrb[0].mxu0
      %v2709 = vadd.f32 %v2528, %v2708
      %v2710 = vpop.f32.mrb[0].mxu0
      %v2711 = vand.u32 %v524, 4294901760
      %v2712 = vsub.f32 %v524, %v2711
      %v2713 = vand.u32 %v2712, 4294901760
      %2714 = vmatprep.mubr.f32.mxu0 %v2713
      %v2715 = vand.u32 %v522, 4294901760
      %v2716 = vsub.f32 %v522, %v2715
      %v2717 = vand.u32 %v2716, 4294901760
      %2718 = vmatmul.mubr.f32.gmra.mrb[0].mxu0 %v2717
      %v2719 = vpop.f32.mrb[0].mxu0
      %v2720 = vadd.f32 %v2537, %v2719
      %v2721 = vpop.f32.mrb[0].mxu0
      %v2722 = vand.u32 %v530, 4294901760
      %v2723 = vsub.f32 %v530, %v2722
      %v2724 = vand.u32 %v2723, 4294901760
      %2725 = vmatprep.mubr.f32.mxu0 %v2724
      %v2726 = vand.u32 %v528, 4294901760
      %v2727 = vsub.f32 %v528, %v2726
      %v2728 = vand.u32 %v2727, 4294901760
      %2729 = vmatmul.mubr.f32.gmra.mrb[0].mxu0 %v2728
      %v2730 = vpop.f32.mrb[0].mxu0
      %v2731 = vadd.f32 %v2546, %v2730
      %v2732 = vpop.f32.mrb[0].mxu0
      %2733 = vdwg.mxu0
      %2734 = vmatprep.subr.mxu0 0.0
      %v2735 = vand.u32 %v564, 4294901760
      %v2736 = vsub.f32 %v564, %v2735
      %v2737 = vand.u32 %v2736, 4294901760
      %2738 = vmatpush1.msra.mxu0 %v2737
      %2739 = vmatprep.subr.mxu0 0.0
      %v2740 = vand.u32 %v565, 4294901760
      %v2741 = vsub.f32 %v565, %v2740
      %v2742 = vand.u32 %v2741, 4294901760
      %2743 = vmatpush1.msra.mxu0 %v2742
      %2744 = vmatprep.subr.mxu0 0.0
      %v2745 = vand.u32 %v566, 4294901760
      %v2746 = vsub.f32 %v566, %v2745
      %v2747 = vand.u32 %v2746, 4294901760
      %2748 = vmatpush1.msra.mxu0 %v2747
      %2749 = vmatprep.subr.mxu0 0.0
      %v2750 = vand.u32 %v567, 4294901760
      %v2751 = vsub.f32 %v567, %v2750
      %v2752 = vand.u32 %v2751, 4294901760
      %2753 = vmatpush1.msra.mxu0 %v2752
      %2754 = vmatprep.subr.mxu0 0.0
      %v2755 = vand.u32 %v568, 4294901760
      %v2756 = vsub.f32 %v568, %v2755
      %v2757 = vand.u32 %v2756, 4294901760
      %2758 = vmatpush1.msra.mxu0 %v2757
      %2759 = vmatprep.subr.mxu0 0.0
      %v2760 = vand.u32 %v569, 4294901760
      %v2761 = vsub.f32 %v569, %v2760
      %v2762 = vand.u32 %v2761, 4294901760
      %2763 = vmatpush1.msra.mxu0 %v2762
      %2764 = vmatprep.subr.mxu0 0.0
      %v2765 = vand.u32 %v570, 4294901760
      %v2766 = vsub.f32 %v570, %v2765
      %v2767 = vand.u32 %v2766, 4294901760
      %2768 = vmatpush1.msra.mxu0 %v2767
      %2769 = vmatprep.subr.mxu0 0.0
      %v2770 = vand.u32 %v571, 4294901760
      %v2771 = vsub.f32 %v571, %v2770
      %v2772 = vand.u32 %v2771, 4294901760
      %2773 = vmatpush1.msra.mxu0 %v2772
      %2774 = vmatprep.subr.mxu0 0.0
      %v2775 = vand.u32 %v572, 4294901760
      %v2776 = vsub.f32 %v572, %v2775
      %v2777 = vand.u32 %v2776, 4294901760
      %2778 = vmatpush1.msra.mxu0 %v2777
      %2779 = vmatprep.subr.mxu0 0.0
      %v2780 = vand.u32 %v573, 4294901760
      %v2781 = vsub.f32 %v573, %v2780
      %v2782 = vand.u32 %v2781, 4294901760
      %2783 = vmatpush1.msra.mxu0 %v2782
      %2784 = vmatprep.subr.mxu0 0.0
      %v2785 = vand.u32 %v574, 4294901760
      %v2786 = vsub.f32 %v574, %v2785
      %v2787 = vand.u32 %v2786, 4294901760
      %2788 = vmatpush1.msra.mxu0 %v2787
      %2789 = vmatprep.subr.mxu0 0.0
      %v2790 = vand.u32 %v575, 4294901760
      %v2791 = vsub.f32 %v575, %v2790
      %v2792 = vand.u32 %v2791, 4294901760
      %2793 = vmatpush1.msra.mxu0 %v2792
      %2794 = vmatprep.subr.mxu0 0.0
      %v2795 = vand.u32 %v576, 4294901760
      %v2796 = vsub.f32 %v576, %v2795
      %v2797 = vand.u32 %v2796, 4294901760
      %2798 = vmatpush1.msra.mxu0 %v2797
      %2799 = vmatprep.subr.mxu0 0.0
      %v2800 = vand.u32 %v577, 4294901760
      %v2801 = vsub.f32 %v577, %v2800
      %v2802 = vand.u32 %v2801, 4294901760
      %2803 = vmatpush1.msra.mxu0 %v2802
      %2804 = vmatprep.subr.mxu0 0.0
      %v2805 = vand.u32 %v578, 4294901760
      %v2806 = vsub.f32 %v578, %v2805
      %v2807 = vand.u32 %v2806, 4294901760
      %2808 = vmatpush1.msra.mxu0 %v2807
      %2809 = vmatprep.subr.mxu0 0.0
      %v2810 = vand.u32 %v579, 4294901760
      %v2811 = vsub.f32 %v579, %v2810
      %v2812 = vand.u32 %v2811, 4294901760
      %2813 = vmatpush1.msra.mxu0 %v2812
      %2814 = vmatprep.subr.mxu0 0.0
      %v2815 = vand.u32 %v580, 4294901760
      %v2816 = vsub.f32 %v580, %v2815
      %v2817 = vand.u32 %v2816, 4294901760
      %2818 = vmatpush1.msra.mxu0 %v2817
      %2819 = vmatprep.subr.mxu0 0.0
      %v2820 = vand.u32 %v581, 4294901760
      %v2821 = vsub.f32 %v581, %v2820
      %v2822 = vand.u32 %v2821, 4294901760
      %2823 = vmatpush1.msra.mxu0 %v2822
      %2824 = vmatprep.subr.mxu0 0.0
      %v2825 = vand.u32 %v582, 4294901760
      %v2826 = vsub.f32 %v582, %v2825
      %v2827 = vand.u32 %v2826, 4294901760
      %2828 = vmatpush1.msra.mxu0 %v2827
      %2829 = vmatprep.subr.mxu0 0.0
      %v2830 = vand.u32 %v583, 4294901760
      %v2831 = vsub.f32 %v583, %v2830
      %v2832 = vand.u32 %v2831, 4294901760
      %2833 = vmatpush1.msra.mxu0 %v2832
      %2834 = vmatprep.subr.mxu0 0.0
      %v2835 = vand.u32 %v584, 4294901760
      %v2836 = vsub.f32 %v584, %v2835
      %v2837 = vand.u32 %v2836, 4294901760
      %2838 = vmatpush1.msra.mxu0 %v2837
      %2839 = vmatprep.subr.mxu0 0.0
      %v2840 = vand.u32 %v585, 4294901760
      %v2841 = vsub.f32 %v585, %v2840
      %v2842 = vand.u32 %v2841, 4294901760
      %2843 = vmatpush1.msra.mxu0 %v2842
      %2844 = vmatprep.subr.mxu0 0.0
      %v2845 = vand.u32 %v586, 4294901760
      %v2846 = vsub.f32 %v586, %v2845
      %v2847 = vand.u32 %v2846, 4294901760
      %2848 = vmatpush1.msra.mxu0 %v2847
      %2849 = vmatprep.subr.mxu0 0.0
      %v2850 = vand.u32 %v587, 4294901760
      %v2851 = vsub.f32 %v587, %v2850
      %v2852 = vand.u32 %v2851, 4294901760
      %2853 = vmatpush1.msra.mxu0 %v2852
      %2854 = vmatprep.subr.mxu0 0.0
      %v2855 = vand.u32 %v588, 4294901760
      %v2856 = vsub.f32 %v588, %v2855
      %v2857 = vand.u32 %v2856, 4294901760
      %2858 = vmatpush1.msra.mxu0 %v2857
      %2859 = vmatprep.subr.mxu0 0.0
      %v2860 = vand.u32 %v589, 4294901760
      %v2861 = vsub.f32 %v589, %v2860
      %v2862 = vand.u32 %v2861, 4294901760
      %2863 = vmatpush1.msra.mxu0 %v2862
      %2864 = vmatprep.subr.mxu0 0.0
      %v2865 = vand.u32 %v590, 4294901760
      %v2866 = vsub.f32 %v590, %v2865
      %v2867 = vand.u32 %v2866, 4294901760
      %2868 = vmatpush1.msra.mxu0 %v2867
      %2869 = vmatprep.subr.mxu0 0.0
      %v2870 = vand.u32 %v591, 4294901760
      %v2871 = vsub.f32 %v591, %v2870
      %v2872 = vand.u32 %v2871, 4294901760
      %2873 = vmatpush1.msra.mxu0 %v2872
      %2874 = vmatprep.subr.mxu0 0.0
      %v2875 = vand.u32 %v592, 4294901760
      %v2876 = vsub.f32 %v592, %v2875
      %v2877 = vand.u32 %v2876, 4294901760
      %2878 = vmatpush1.msra.mxu0 %v2877
      %2879 = vmatprep.subr.mxu0 0.0
      %v2880 = vand.u32 %v593, 4294901760
      %v2881 = vsub.f32 %v593, %v2880
      %v2882 = vand.u32 %v2881, 4294901760
      %2883 = vmatpush1.msra.mxu0 %v2882
      %2884 = vmatprep.subr.mxu0 0.0
      %v2885 = vand.u32 %v594, 4294901760
      %v2886 = vsub.f32 %v594, %v2885
      %v2887 = vand.u32 %v2886, 4294901760
      %2888 = vmatpush1.msra.mxu0 %v2887
      %2889 = vmatprep.subr.mxu0 0.0
      %v2890 = vand.u32 %v595, 4294901760
      %v2891 = vsub.f32 %v595, %v2890
      %v2892 = vand.u32 %v2891, 4294901760
      %2893 = vmatpush1.msra.mxu0 %v2892
      %v2894 = vand.u32 %v488, 4294901760
      %2895 = vmatprep.mubr.f32.mxu0 %v2894
      %v2896 = vand.u32 %v486, 4294901760
      %2897 = vmatmul.mubr.f32.gmra.mrb[0].mxu0 %v2896
      %v2898 = vpop.f32.mrb[0].mxu0
      %v2899 = vadd.f32 %v2654, %v2898
      %v2900 = vpop.f32.mrb[0].mxu0
      %v2901 = vand.u32 %v494, 4294901760
      %2902 = vmatprep.mubr.f32.mxu0 %v2901
      %v2903 = vand.u32 %v492, 4294901760
      %2904 = vmatmul.mubr.f32.gmra.mrb[0].mxu0 %v2903
      %v2905 = vpop.f32.mrb[0].mxu0
      %v2906 = vadd.f32 %v2665, %v2905
      %v2907 = vpop.f32.mrb[0].mxu0
      %v2908 = vand.u32 %v500, 4294901760
      %2909 = vmatprep.mubr.f32.mxu0 %v2908
      %v2910 = vand.u32 %v498, 4294901760
      %2911 = vmatmul.mubr.f32.gmra.mrb[0].mxu0 %v2910
      %v2912 = vpop.f32.mrb[0].mxu0
      %v2913 = vadd.f32 %v2676, %v2912
      %v2914 = vpop.f32.mrb[0].mxu0
      %v2915 = vand.u32 %v506, 4294901760
      %2916 = vmatprep.mubr.f32.mxu0 %v2915
      %v2917 = vand.u32 %v504, 4294901760
      %2918 = vmatmul.mubr.f32.gmra.mrb[0].mxu0 %v2917
      %v2919 = vpop.f32.mrb[0].mxu0
      %v2920 = vadd.f32 %v2687, %v2919
      %v2921 = vpop.f32.mrb[0].mxu0
      %v2922 = vand.u32 %v512, 4294901760
      %2923 = vmatprep.mubr.f32.mxu0 %v2922
      %v2924 = vand.u32 %v510, 4294901760
      %2925 = vmatmul.mubr.f32.gmra.mrb[0].mxu0 %v2924
      %v2926 = vpop.f32.mrb[0].mxu0
      %v2927 = vadd.f32 %v2698, %v2926
      %v2928 = vpop.f32.mrb[0].mxu0
      %v2929 = vand.u32 %v518, 4294901760
      %2930 = vmatprep.mubr.f32.mxu0 %v2929
      %v2931 = vand.u32 %v516, 4294901760
      %2932 = vmatmul.mubr.f32.gmra.mrb[0].mxu0 %v2931
      %v2933 = vpop.f32.mrb[0].mxu0
      %v2934 = vadd.f32 %v2709, %v2933
      %v2935 = vpop.f32.mrb[0].mxu0
      %v2936 = vand.u32 %v524, 4294901760
      %2937 = vmatprep.mubr.f32.mxu0 %v2936
      %v2938 = vand.u32 %v522, 4294901760
      %2939 = vmatmul.mubr.f32.gmra.mrb[0].mxu0 %v2938
      %v2940 = vpop.f32.mrb[0].mxu0
      %v2941 = vadd.f32 %v2720, %v2940
      %v2942 = vpop.f32.mrb[0].mxu0
      %v2943 = vand.u32 %v530, 4294901760
      %2944 = vmatprep.mubr.f32.mxu0 %v2943
      %v2945 = vand.u32 %v528, 4294901760
      %2946 = vmatmul.mubr.f32.gmra.mrb[0].mxu0 %v2945
      %v2947 = vpop.f32.mrb[0].mxu0
      %v2948 = vadd.f32 %v2731, %v2947
      %v2949 = vpop.f32.mrb[0].mxu0
      %2950 = vdwg.mxu0
      %2951 = vmatprep.subr.mxu0 0.0
      %v2952 = vand.u32 %v564, 4294901760
      %2953 = vmatpush1.msra.mxu0 %v2952
      %2954 = vmatprep.subr.mxu0 0.0
      %v2955 = vand.u32 %v565, 4294901760
      %2956 = vmatpush1.msra.mxu0 %v2955
      %2957 = vmatprep.subr.mxu0 0.0
      %v2958 = vand.u32 %v566, 4294901760
      %2959 = vmatpush1.msra.mxu0 %v2958
      %2960 = vmatprep.subr.mxu0 0.0
      %v2961 = vand.u32 %v567, 4294901760
      %2962 = vmatpush1.msra.mxu0 %v2961
      %2963 = vmatprep.subr.mxu0 0.0
      %v2964 = vand.u32 %v568, 4294901760
      %2965 = vmatpush1.msra.mxu0 %v2964
      %2966 = vmatprep.subr.mxu0 0.0
      %v2967 = vand.u32 %v569, 4294901760
      %2968 = vmatpush1.msra.mxu0 %v2967
      %2969 = vmatprep.subr.mxu0 0.0
      %v2970 = vand.u32 %v570, 4294901760
      %2971 = vmatpush1.msra.mxu0 %v2970
      %2972 = vmatprep.subr.mxu0 0.0
      %v2973 = vand.u32 %v571, 4294901760
      %2974 = vmatpush1.msra.mxu0 %v2973
      %2975 = vmatprep.subr.mxu0 0.0
      %v2976 = vand.u32 %v572, 4294901760
      %2977 = vmatpush1.msra.mxu0 %v2976
      %2978 = vmatprep.subr.mxu0 0.0
      %v2979 = vand.u32 %v573, 4294901760
      %2980 = vmatpush1.msra.mxu0 %v2979
      %2981 = vmatprep.subr.mxu0 0.0
      %v2982 = vand.u32 %v574, 4294901760
      %2983 = vmatpush1.msra.mxu0 %v2982
      %2984 = vmatprep.subr.mxu0 0.0
      %v2985 = vand.u32 %v575, 4294901760
      %2986 = vmatpush1.msra.mxu0 %v2985
      %2987 = vmatprep.subr.mxu0 0.0
      %v2988 = vand.u32 %v576, 4294901760
      %2989 = vmatpush1.msra.mxu0 %v2988
      %2990 = vmatprep.subr.mxu0 0.0
      %v2991 = vand.u32 %v577, 4294901760
      %2992 = vmatpush1.msra.mxu0 %v2991
      %2993 = vmatprep.subr.mxu0 0.0
      %v2994 = vand.u32 %v578, 4294901760
      %2995 = vmatpush1.msra.mxu0 %v2994
      %2996 = vmatprep.subr.mxu0 0.0
      %v2997 = vand.u32 %v579, 4294901760
      %2998 = vmatpush1.msra.mxu0 %v2997
      %2999 = vmatprep.subr.mxu0 0.0
      %v3000 = vand.u32 %v580, 4294901760
      %3001 = vmatpush1.msra.mxu0 %v3000
      %3002 = vmatprep.subr.mxu0 0.0
      %v3003 = vand.u32 %v581, 4294901760
      %3004 = vmatpush1.msra.mxu0 %v3003
      %3005 = vmatprep.subr.mxu0 0.0
      %v3006 = vand.u32 %v582, 4294901760
      %3007 = vmatpush1.msra.mxu0 %v3006
      %3008 = vmatprep.subr.mxu0 0.0
      %v3009 = vand.u32 %v583, 4294901760
      %3010 = vmatpush1.msra.mxu0 %v3009
      %3011 = vmatprep.subr.mxu0 0.0
      %v3012 = vand.u32 %v584, 4294901760
      %3013 = vmatpush1.msra.mxu0 %v3012
      %3014 = vmatprep.subr.mxu0 0.0
      %v3015 = vand.u32 %v585, 4294901760
      %3016 = vmatpush1.msra.mxu0 %v3015
      %3017 = vmatprep.subr.mxu0 0.0
      %v3018 = vand.u32 %v586, 4294901760
      %3019 = vmatpush1.msra.mxu0 %v3018
      %3020 = vmatprep.subr.mxu0 0.0
      %v3021 = vand.u32 %v587, 4294901760
      %3022 = vmatpush1.msra.mxu0 %v3021
      %3023 = vmatprep.subr.mxu0 0.0
      %v3024 = vand.u32 %v588, 4294901760
      %3025 = vmatpush1.msra.mxu0 %v3024
      %3026 = vmatprep.subr.mxu0 0.0
      %v3027 = vand.u32 %v589, 4294901760
      %3028 = vmatpush1.msra.mxu0 %v3027
      %3029 = vmatprep.subr.mxu0 0.0
      %v3030 = vand.u32 %v590, 4294901760
      %3031 = vmatpush1.msra.mxu0 %v3030
      %3032 = vmatprep.subr.mxu0 0.0
      %v3033 = vand.u32 %v591, 4294901760
      %3034 = vmatpush1.msra.mxu0 %v3033
      %3035 = vmatprep.subr.mxu0 0.0
      %v3036 = vand.u32 %v592, 4294901760
      %3037 = vmatpush1.msra.mxu0 %v3036
      %3038 = vmatprep.subr.mxu0 0.0
      %v3039 = vand.u32 %v593, 4294901760
      %3040 = vmatpush1.msra.mxu0 %v3039
      %3041 = vmatprep.subr.mxu0 0.0
      %v3042 = vand.u32 %v594, 4294901760
      %3043 = vmatpush1.msra.mxu0 %v3042
      %3044 = vmatprep.subr.mxu0 0.0
      %v3045 = vand.u32 %v595, 4294901760
      %3046 = vmatpush1.msra.mxu0 %v3045
      %v3047 = vand.u32 %v488, 4294901760
      %3048 = vmatprep.mubr.f32.mxu0 %v3047
      %v3049 = vand.u32 %v486, 4294901760
      %3050 = vmatmul.mubr.f32.gmra.mrb[0].mxu0 %v3049
      %v3051 = vpop.f32.mrb[0].mxu0
      %v3052 = vadd.f32 %v2899, %v3051
      %v3053 = vpop.f32.mrb[0].mxu0
      %v3054 = vand.u32 %v494, 4294901760
      %3055 = vmatprep.mubr.f32.mxu0 %v3054
      %v3056 = vand.u32 %v492, 4294901760
      %3057 = vmatmul.mubr.f32.gmra.mrb[0].mxu0 %v3056
      %v3058 = vpop.f32.mrb[0].mxu0
      %v3059 = vadd.f32 %v2906, %v3058
      %v3060 = vpop.f32.mrb[0].mxu0
      %v3061 = vand.u32 %v500, 4294901760
      %3062 = vmatprep.mubr.f32.mxu0 %v3061
      %v3063 = vand.u32 %v498, 4294901760
      %3064 = vmatmul.mubr.f32.gmra.mrb[0].mxu0 %v3063
      %v3065 = vpop.f32.mrb[0].mxu0
      %v3066 = vadd.f32 %v2913, %v3065
      %v3067 = vpop.f32.mrb[0].mxu0
      %v3068 = vand.u32 %v506, 4294901760
      %3069 = vmatprep.mubr.f32.mxu0 %v3068
      %v3070 = vand.u32 %v504, 4294901760
      %3071 = vmatmul.mubr.f32.gmra.mrb[0].mxu0 %v3070
      %v3072 = vpop.f32.mrb[0].mxu0
      %v3073 = vadd.f32 %v2920, %v3072
      %v3074 = vpop.f32.mrb[0].mxu0
      %v3075 = vand.u32 %v512, 4294901760
      %3076 = vmatprep.mubr.f32.mxu0 %v3075
      %v3077 = vand.u32 %v510, 4294901760
      %3078 = vmatmul.mubr.f32.gmra.mrb[0].mxu0 %v3077
      %v3079 = vpop.f32.mrb[0].mxu0
      %v3080 = vadd.f32 %v2927, %v3079
      %v3081 = vpop.f32.mrb[0].mxu0
      %v3082 = vand.u32 %v518, 4294901760
      %3083 = vmatprep.mubr.f32.mxu0 %v3082
      %v3084 = vand.u32 %v516, 4294901760
      %3085 = vmatmul.mubr.f32.gmra.mrb[0].mxu0 %v3084
      %v3086 = vpop.f32.mrb[0].mxu0
      %v3087 = vadd.f32 %v2934, %v3086
      %v3088 = vpop.f32.mrb[0].mxu0
      %v3089 = vand.u32 %v524, 4294901760
      %3090 = vmatprep.mubr.f32.mxu0 %v3089
      %v3091 = vand.u32 %v522, 4294901760
      %3092 = vmatmul.mubr.f32.gmra.mrb[0].mxu0 %v3091
      %v3093 = vpop.f32.mrb[0].mxu0
      %v3094 = vadd.f32 %v2941, %v3093
      %v3095 = vpop.f32.mrb[0].mxu0
      %v3096 = vand.u32 %v530, 4294901760
      %3097 = vmatprep.mubr.f32.mxu0 %v3096
      %v3098 = vand.u32 %v528, 4294901760
      %3099 = vmatmul.mubr.f32.gmra.mrb[0].mxu0 %v3098
      %v3100 = vpop.f32.mrb[0].mxu0
      %v3101 = vadd.f32 %v2948, %v3100
      %v3102 = vpop.f32.mrb[0].mxu0
      %3103 = vdwg.mxu0
      %v3104 = vld [vmem:[%s5] sm:$0xff]
      %v3105 = vld [vmem:[%s5 + $0x8] sm:$0xff]
      %v3106 = vld [vmem:[%s5 + $0x10] sm:$0xff]
      %v3107 = vld [vmem:[%s5 + $0x18] sm:$0xff]
      %v3108 = vld [vmem:[%s5 + $0x20] sm:$0xff]
      %v3109 = vld [vmem:[%s5 + $0x28] sm:$0xff]
      %v3110 = vld [vmem:[%s5 + $0x30] sm:$0xff]
      %v3111 = vld [vmem:[%s5 + $0x38] sm:$0xff]
      %vm3112 = vcmask 130048
      %v3114 = vsel %vm3112, %v3052, 0
      %v3117 = vsel %vm3112, %v3059, 0
      %v3120 = vsel %vm3112, %v3066, 0
      %v3123 = vsel %vm3112, %v3073, 0
      %v3126 = vsel %vm3112, %v3080, 0
      %v3129 = vsel %vm3112, %v3087, 0
      %v3132 = vsel %vm3112, %v3094, 0
      %v3135 = vsel %vm3112, %v3101, 0
      %v3137 = vand.u32 %v3105, 4294901760
      %3138 = vmatprep.subr.mxu0 %v3137
      %v3139 = vand.u32 %v3104, 4294901760
      %3140 = vmatpush1.msra.mxu0 %v3139
      %v3141 = vand.u32 %v3109, 4294901760
      %3142 = vmatprep.subr.mxu0 %v3141
      %v3143 = vand.u32 %v3108, 4294901760
      %3144 = vmatpush1.msra.mxu0 %v3143
      %3145 = vmatprep.subr.mxu0 0.0
      %3146 = vmatpush1.msra.mxu0 0.0
      %3147 = vmatprep.subr.mxu0 0.0
      %3148 = vmatpush1.msra.mxu0 0.0
      %3149 = vmatprep.subr.mxu0 0.0
      %3150 = vmatpush1.msra.mxu0 0.0
      %3151 = vmatprep.subr.mxu0 0.0
      %3152 = vmatpush1.msra.mxu0 0.0
      %3153 = vmatprep.subr.mxu0 0.0
      %3154 = vmatpush1.msra.mxu0 0.0
      %3155 = vmatprep.subr.mxu0 0.0
      %3156 = vmatpush1.msra.mxu0 0.0
      %3157 = vmatprep.subr.mxu0 0.0
      %3158 = vmatpush1.msra.mxu0 0.0
      %3159 = vmatprep.subr.mxu0 0.0
      %3160 = vmatpush1.msra.mxu0 0.0
      %3161 = vmatprep.subr.mxu0 0.0
      %3162 = vmatpush1.msra.mxu0 0.0
      %3163 = vmatprep.subr.mxu0 0.0
      %3164 = vmatpush1.msra.mxu0 0.0
      %3165 = vmatprep.subr.mxu0 0.0
      %3166 = vmatpush1.msra.mxu0 0.0
      %3167 = vmatprep.subr.mxu0 0.0
      %3168 = vmatpush1.msra.mxu0 0.0
      %3169 = vmatprep.subr.mxu0 0.0
      %3170 = vmatpush1.msra.mxu0 0.0
      %3171 = vmatprep.subr.mxu0 0.0
      %3172 = vmatpush1.msra.mxu0 0.0
      %3173 = vmatprep.subr.mxu0 0.0
      %3174 = vmatpush1.msra.mxu0 0.0
      %3175 = vmatprep.subr.mxu0 0.0
      %3176 = vmatpush1.msra.mxu0 0.0
      %3177 = vmatprep.subr.mxu0 0.0
      %3178 = vmatpush1.msra.mxu0 0.0
      %3179 = vmatprep.subr.mxu0 0.0
      %3180 = vmatpush1.msra.mxu0 0.0
      %3181 = vmatprep.subr.mxu0 0.0
      %3182 = vmatpush1.msra.mxu0 0.0
      %3183 = vmatprep.subr.mxu0 0.0
      %3184 = vmatpush1.msra.mxu0 0.0
      %3185 = vmatprep.subr.mxu0 0.0
      %3186 = vmatpush1.msra.mxu0 0.0
      %3187 = vmatprep.subr.mxu0 0.0
      %3188 = vmatpush1.msra.mxu0 0.0
      %3189 = vmatprep.subr.mxu0 0.0
      %3190 = vmatpush1.msra.mxu0 0.0
      %3191 = vmatprep.subr.mxu0 0.0
      %3192 = vmatpush1.msra.mxu0 0.0
      %3193 = vmatprep.subr.mxu0 0.0
      %3194 = vmatpush1.msra.mxu0 0.0
      %3195 = vmatprep.subr.mxu0 0.0
      %3196 = vmatpush1.msra.mxu0 0.0
      %3197 = vmatprep.subr.mxu0 0.0
      %3198 = vmatpush1.msra.mxu0 0.0
      %3199 = vmatprep.subr.mxu0 0.0
      %3200 = vmatpush1.msra.mxu0 0.0
      %3201 = vmatprep.subr.mxu0 0.0
      %3202 = vmatpush1.msra.mxu0 0.0
      %3203 = vmatprep.subr.mxu0 0.0
      %3204 = vmatpush1.msra.mxu0 0.0
      %3205 = vmatprep.mubr.f32.mxu0 0.0
      %v3206 = vand.u32 %v3114, 4294901760
      %v3207 = vsub.f32 %v3114, %v3206
      %v3208 = vand.u32 %v3207, 4294901760
      %v3209 = vsub.f32 %v3207, %v3208
      %v3210 = vand.u32 %v3209, 4294901760
      %3211 = vmatmul.mubr.f32.gmra.mrb[0].mxu0 %v3210
      %v3212 = vpop.f32.mrb[0].mxu0
      %v3213 = vadd.f32 0.0, %v3212
      %v3214 = vpop.f32.mrb[0].mxu0
      %v3215 = vadd.f32 0.0, %v3214
      %3216 = vmatprep.mubr.f32.mxu0 0.0
      %v3217 = vand.u32 %v3117, 4294901760
      %v3218 = vsub.f32 %v3117, %v3217
      %v3219 = vand.u32 %v3218, 4294901760
      %v3220 = vsub.f32 %v3218, %v3219
      %v3221 = vand.u32 %v3220, 4294901760
      %3222 = vmatmul.mubr.f32.gmra.mrb[0].mxu0 %v3221
      %v3223 = vpop.f32.mrb[0].mxu0
      %v3224 = vadd.f32 0.0, %v3223
      %v3225 = vpop.f32.mrb[0].mxu0
      %v3226 = vadd.f32 0.0, %v3225
      %3227 = vmatprep.mubr.f32.mxu0 0.0
      %v3228 = vand.u32 %v3120, 4294901760
      %v3229 = vsub.f32 %v3120, %v3228
      %v3230 = vand.u32 %v3229, 4294901760
      %v3231 = vsub.f32 %v3229, %v3230
      %v3232 = vand.u32 %v3231, 4294901760
      %3233 = vmatmul.mubr.f32.gmra.mrb[0].mxu0 %v3232
      %v3234 = vpop.f32.mrb[0].mxu0
      %v3235 = vadd.f32 0.0, %v3234
      %v3236 = vpop.f32.mrb[0].mxu0
      %v3237 = vadd.f32 0.0, %v3236
      %3238 = vmatprep.mubr.f32.mxu0 0.0
      %v3239 = vand.u32 %v3123, 4294901760
      %v3240 = vsub.f32 %v3123, %v3239
      %v3241 = vand.u32 %v3240, 4294901760
      %v3242 = vsub.f32 %v3240, %v3241
      %v3243 = vand.u32 %v3242, 4294901760
      %3244 = vmatmul.mubr.f32.gmra.mrb[0].mxu0 %v3243
      %v3245 = vpop.f32.mrb[0].mxu0
      %v3246 = vadd.f32 0.0, %v3245
      %v3247 = vpop.f32.mrb[0].mxu0
      %v3248 = vadd.f32 0.0, %v3247
      %3249 = vmatprep.mubr.f32.mxu0 0.0
      %v3250 = vand.u32 %v3126, 4294901760
      %v3251 = vsub.f32 %v3126, %v3250
      %v3252 = vand.u32 %v3251, 4294901760
      %v3253 = vsub.f32 %v3251, %v3252
      %v3254 = vand.u32 %v3253, 4294901760
      %3255 = vmatmul.mubr.f32.gmra.mrb[0].mxu0 %v3254
      %v3256 = vpop.f32.mrb[0].mxu0
      %v3257 = vadd.f32 0.0, %v3256
      %v3258 = vpop.f32.mrb[0].mxu0
      %v3259 = vadd.f32 0.0, %v3258
      %3260 = vmatprep.mubr.f32.mxu0 0.0
      %v3261 = vand.u32 %v3129, 4294901760
      %v3262 = vsub.f32 %v3129, %v3261
      %v3263 = vand.u32 %v3262, 4294901760
      %v3264 = vsub.f32 %v3262, %v3263
      %v3265 = vand.u32 %v3264, 4294901760
      %3266 = vmatmul.mubr.f32.gmra.mrb[0].mxu0 %v3265
      %v3267 = vpop.f32.mrb[0].mxu0
      %v3268 = vadd.f32 0.0, %v3267
      %v3269 = vpop.f32.mrb[0].mxu0
      %v3270 = vadd.f32 0.0, %v3269
      %3271 = vmatprep.mubr.f32.mxu0 0.0
      %v3272 = vand.u32 %v3132, 4294901760
      %v3273 = vsub.f32 %v3132, %v3272
      %v3274 = vand.u32 %v3273, 4294901760
      %v3275 = vsub.f32 %v3273, %v3274
      %v3276 = vand.u32 %v3275, 4294901760
      %3277 = vmatmul.mubr.f32.gmra.mrb[0].mxu0 %v3276
      %v3278 = vpop.f32.mrb[0].mxu0
      %v3279 = vadd.f32 0.0, %v3278
      %v3280 = vpop.f32.mrb[0].mxu0
      %v3281 = vadd.f32 0.0, %v3280
      %3282 = vmatprep.mubr.f32.mxu0 0.0
      %v3283 = vand.u32 %v3135, 4294901760
      %v3284 = vsub.f32 %v3135, %v3283
      %v3285 = vand.u32 %v3284, 4294901760
      %v3286 = vsub.f32 %v3284, %v3285
      %v3287 = vand.u32 %v3286, 4294901760
      %3288 = vmatmul.mubr.f32.gmra.mrb[0].mxu0 %v3287
      %v3289 = vpop.f32.mrb[0].mxu0
      %v3290 = vadd.f32 0.0, %v3289
      %v3291 = vpop.f32.mrb[0].mxu0
      %v3292 = vadd.f32 0.0, %v3291
      %3293 = vdwg.mxu0
      %v3294 = vand.u32 %v3105, 4294901760
      %v3295 = vsub.f32 %v3105, %v3294
      %v3296 = vand.u32 %v3295, 4294901760
      %v3297 = vsub.f32 %v3295, %v3296
      %v3298 = vand.u32 %v3297, 4294901760
      %3299 = vmatprep.subr.mxu0 %v3298
      %v3300 = vand.u32 %v3104, 4294901760
      %v3301 = vsub.f32 %v3104, %v3300
      %v3302 = vand.u32 %v3301, 4294901760
      %v3303 = vsub.f32 %v3301, %v3302
      %v3304 = vand.u32 %v3303, 4294901760
      %3305 = vmatpush1.msra.mxu0 %v3304
      %v3306 = vand.u32 %v3109, 4294901760
      %v3307 = vsub.f32 %v3109, %v3306
      %v3308 = vand.u32 %v3307, 4294901760
      %v3309 = vsub.f32 %v3307, %v3308
      %v3310 = vand.u32 %v3309, 4294901760
      %3311 = vmatprep.subr.mxu0 %v3310
      %v3312 = vand.u32 %v3108, 4294901760
      %v3313 = vsub.f32 %v3108, %v3312
      %v3314 = vand.u32 %v3313, 4294901760
      %v3315 = vsub.f32 %v3313, %v3314
      %v3316 = vand.u32 %v3315, 4294901760
      %3317 = vmatpush1.msra.mxu0 %v3316
      %3318 = vmatprep.subr.mxu0 0.0
      %3319 = vmatpush1.msra.mxu0 0.0
      %3320 = vmatprep.subr.mxu0 0.0
      %3321 = vmatpush1.msra.mxu0 0.0
      %3322 = vmatprep.subr.mxu0 0.0
      %3323 = vmatpush1.msra.mxu0 0.0
      %3324 = vmatprep.subr.mxu0 0.0
      %3325 = vmatpush1.msra.mxu0 0.0
      %3326 = vmatprep.subr.mxu0 0.0
      %3327 = vmatpush1.msra.mxu0 0.0
      %3328 = vmatprep.subr.mxu0 0.0
      %3329 = vmatpush1.msra.mxu0 0.0
      %3330 = vmatprep.subr.mxu0 0.0
      %3331 = vmatpush1.msra.mxu0 0.0
      %3332 = vmatprep.subr.mxu0 0.0
      %3333 = vmatpush1.msra.mxu0 0.0
      %3334 = vmatprep.subr.mxu0 0.0
      %3335 = vmatpush1.msra.mxu0 0.0
      %3336 = vmatprep.subr.mxu0 0.0
      %3337 = vmatpush1.msra.mxu0 0.0
      %3338 = vmatprep.subr.mxu0 0.0
      %3339 = vmatpush1.msra.mxu0 0.0
      %3340 = vmatprep.subr.mxu0 0.0
      %3341 = vmatpush1.msra.mxu0 0.0
      %3342 = vmatprep.subr.mxu0 0.0
      %3343 = vmatpush1.msra.mxu0 0.0
      %3344 = vmatprep.subr.mxu0 0.0
      %3345 = vmatpush1.msra.mxu0 0.0
      %3346 = vmatprep.subr.mxu0 0.0
      %3347 = vmatpush1.msra.mxu0 0.0
      %3348 = vmatprep.subr.mxu0 0.0
      %3349 = vmatpush1.msra.mxu0 0.0
      %3350 = vmatprep.subr.mxu0 0.0
      %3351 = vmatpush1.msra.mxu0 0.0
      %3352 = vmatprep.subr.mxu0 0.0
      %3353 = vmatpush1.msra.mxu0 0.0
      %3354 = vmatprep.subr.mxu0 0.0
      %3355 = vmatpush1.msra.mxu0 0.0
      %3356 = vmatprep.subr.mxu0 0.0
      %3357 = vmatpush1.msra.mxu0 0.0
      %3358 = vmatprep.subr.mxu0 0.0
      %3359 = vmatpush1.msra.mxu0 0.0
      %3360 = vmatprep.subr.mxu0 0.0
      %3361 = vmatpush1.msra.mxu0 0.0
      %3362 = vmatprep.subr.mxu0 0.0
      %3363 = vmatpush1.msra.mxu0 0.0
      %3364 = vmatprep.subr.mxu0 0.0
      %3365 = vmatpush1.msra.mxu0 0.0
      %3366 = vmatprep.subr.mxu0 0.0
      %3367 = vmatpush1.msra.mxu0 0.0
      %3368 = vmatprep.subr.mxu0 0.0
      %3369 = vmatpush1.msra.mxu0 0.0
      %3370 = vmatprep.subr.mxu0 0.0
      %3371 = vmatpush1.msra.mxu0 0.0
      %3372 = vmatprep.subr.mxu0 0.0
      %3373 = vmatpush1.msra.mxu0 0.0
      %3374 = vmatprep.subr.mxu0 0.0
      %3375 = vmatpush1.msra.mxu0 0.0
      %3376 = vmatprep.subr.mxu0 0.0
      %3377 = vmatpush1.msra.mxu0 0.0
      %3378 = vmatprep.mubr.f32.mxu0 0.0
      %v3379 = vand.u32 %v3114, 4294901760
      %3380 = vmatmul.mubr.f32.gmra.mrb[0].mxu0 %v3379
      %v3381 = vpop.f32.mrb[0].mxu0
      %v3382 = vadd.f32 %v3213, %v3381
      %v3383 = vpop.f32.mrb[0].mxu0
      %v3384 = vadd.f32 %v3215, %v3383
      %3385 = vmatprep.mubr.f32.mxu0 0.0
      %v3386 = vand.u32 %v3117, 4294901760
      %3387 = vmatmul.mubr.f32.gmra.mrb[0].mxu0 %v3386
      %v3388 = vpop.f32.mrb[0].mxu0
      %v3389 = vadd.f32 %v3224, %v3388
      %v3390 = vpop.f32.mrb[0].mxu0
      %v3391 = vadd.f32 %v3226, %v3390
      %3392 = vmatprep.mubr.f32.mxu0 0.0
      %v3393 = vand.u32 %v3120, 4294901760
      %3394 = vmatmul.mubr.f32.gmra.mrb[0].mxu0 %v3393
      %v3395 = vpop.f32.mrb[0].mxu0
      %v3396 = vadd.f32 %v3235, %v3395
      %v3397 = vpop.f32.mrb[0].mxu0
      %v3398 = vadd.f32 %v3237, %v3397
      %3399 = vmatprep.mubr.f32.mxu0 0.0
      %v3400 = vand.u32 %v3123, 4294901760
      %3401 = vmatmul.mubr.f32.gmra.mrb[0].mxu0 %v3400
      %v3402 = vpop.f32.mrb[0].mxu0
      %v3403 = vadd.f32 %v3246, %v3402
      %v3404 = vpop.f32.mrb[0].mxu0
      %v3405 = vadd.f32 %v3248, %v3404
      %3406 = vmatprep.mubr.f32.mxu0 0.0
      %v3407 = vand.u32 %v3126, 4294901760
      %3408 = vmatmul.mubr.f32.gmra.mrb[0].mxu0 %v3407
      %v3409 = vpop.f32.mrb[0].mxu0
      %v3410 = vadd.f32 %v3257, %v3409
      %v3411 = vpop.f32.mrb[0].mxu0
      %v3412 = vadd.f32 %v3259, %v3411
      %3413 = vmatprep.mubr.f32.mxu0 0.0
      %v3414 = vand.u32 %v3129, 4294901760
      %3415 = vmatmul.mubr.f32.gmra.mrb[0].mxu0 %v3414
      %v3416 = vpop.f32.mrb[0].mxu0
      %v3417 = vadd.f32 %v3268, %v3416
      %v3418 = vpop.f32.mrb[0].mxu0
      %v3419 = vadd.f32 %v3270, %v3418
      %3420 = vmatprep.mubr.f32.mxu0 0.0
      %v3421 = vand.u32 %v3132, 4294901760
      %3422 = vmatmul.mubr.f32.gmra.mrb[0].mxu0 %v3421
      %v3423 = vpop.f32.mrb[0].mxu0
      %v3424 = vadd.f32 %v3279, %v3423
      %v3425 = vpop.f32.mrb[0].mxu0
      %v3426 = vadd.f32 %v3281, %v3425
      %3427 = vmatprep.mubr.f32.mxu0 0.0
      %v3428 = vand.u32 %v3135, 4294901760
      %3429 = vmatmul.mubr.f32.gmra.mrb[0].mxu0 %v3428
      %v3430 = vpop.f32.mrb[0].mxu0
      %v3431 = vadd.f32 %v3290, %v3430
      %v3432 = vpop.f32.mrb[0].mxu0
      %v3433 = vadd.f32 %v3292, %v3432
      %3434 = vdwg.mxu0
      %v3435 = vand.u32 %v3105, 4294901760
      %v3436 = vsub.f32 %v3105, %v3435
      %3437 = vmatprep.subr.mxu0 %v3436
      %v3438 = vand.u32 %v3104, 4294901760
      %v3439 = vsub.f32 %v3104, %v3438
      %3440 = vmatpush1.msra.mxu0 %v3439
      %v3441 = vand.u32 %v3109, 4294901760
      %v3442 = vsub.f32 %v3109, %v3441
      %3443 = vmatprep.subr.mxu0 %v3442
      %v3444 = vand.u32 %v3108, 4294901760
      %v3445 = vsub.f32 %v3108, %v3444
      %3446 = vmatpush1.msra.mxu0 %v3445
      %3447 = vmatprep.subr.mxu0 0.0
      %3448 = vmatpush1.msra.mxu0 0.0
      %3449 = vmatprep.subr.mxu0 0.0
      %3450 = vmatpush1.msra.mxu0 0.0
      %3451 = vmatprep.subr.mxu0 0.0
      %3452 = vmatpush1.msra.mxu0 0.0
      %3453 = vmatprep.subr.mxu0 0.0
      %3454 = vmatpush1.msra.mxu0 0.0
      %3455 = vmatprep.subr.mxu0 0.0
      %3456 = vmatpush1.msra.mxu0 0.0
      %3457 = vmatprep.subr.mxu0 0.0
      %3458 = vmatpush1.msra.mxu0 0.0
      %3459 = vmatprep.subr.mxu0 0.0
      %3460 = vmatpush1.msra.mxu0 0.0
      %3461 = vmatprep.subr.mxu0 0.0
      %3462 = vmatpush1.msra.mxu0 0.0
      %3463 = vmatprep.subr.mxu0 0.0
      %3464 = vmatpush1.msra.mxu0 0.0
      %3465 = vmatprep.subr.mxu0 0.0
      %3466 = vmatpush1.msra.mxu0 0.0
      %3467 = vmatprep.subr.mxu0 0.0
      %3468 = vmatpush1.msra.mxu0 0.0
      %3469 = vmatprep.subr.mxu0 0.0
      %3470 = vmatpush1.msra.mxu0 0.0
      %3471 = vmatprep.subr.mxu0 0.0
      %3472 = vmatpush1.msra.mxu0 0.0
      %3473 = vmatprep.subr.mxu0 0.0
      %3474 = vmatpush1.msra.mxu0 0.0
      %3475 = vmatprep.subr.mxu0 0.0
      %3476 = vmatpush1.msra.mxu0 0.0
      %3477 = vmatprep.subr.mxu0 0.0
      %3478 = vmatpush1.msra.mxu0 0.0
      %3479 = vmatprep.subr.mxu0 0.0
      %3480 = vmatpush1.msra.mxu0 0.0
      %3481 = vmatprep.subr.mxu0 0.0
      %3482 = vmatpush1.msra.mxu0 0.0
      %3483 = vmatprep.subr.mxu0 0.0
      %3484 = vmatpush1.msra.mxu0 0.0
      %3485 = vmatprep.subr.mxu0 0.0
      %3486 = vmatpush1.msra.mxu0 0.0
      %3487 = vmatprep.subr.mxu0 0.0
      %3488 = vmatpush1.msra.mxu0 0.0
      %3489 = vmatprep.subr.mxu0 0.0
      %3490 = vmatpush1.msra.mxu0 0.0
      %3491 = vmatprep.subr.mxu0 0.0
      %3492 = vmatpush1.msra.mxu0 0.0
      %3493 = vmatprep.subr.mxu0 0.0
      %3494 = vmatpush1.msra.mxu0 0.0
      %3495 = vmatprep.subr.mxu0 0.0
      %3496 = vmatpush1.msra.mxu0 0.0
      %3497 = vmatprep.subr.mxu0 0.0
      %3498 = vmatpush1.msra.mxu0 0.0
      %3499 = vmatprep.subr.mxu0 0.0
      %3500 = vmatpush1.msra.mxu0 0.0
      %3501 = vmatprep.subr.mxu0 0.0
      %3502 = vmatpush1.msra.mxu0 0.0
      %3503 = vmatprep.subr.mxu0 0.0
      %3504 = vmatpush1.msra.mxu0 0.0
      %3505 = vmatprep.subr.mxu0 0.0
      %3506 = vmatpush1.msra.mxu0 0.0
      %3507 = vmatprep.mubr.f32.mxu0 0.0
      %v3508 = vand.u32 %v3114, 4294901760
      %v3509 = vsub.f32 %v3114, %v3508
      %3510 = vmatmul.mubr.f32.gmra.mrb[0].mxu0 %v3509
      %v3511 = vpop.f32.mrb[0].mxu0
      %v3512 = vadd.f32 %v3382, %v3511
      %v3513 = vpop.f32.mrb[0].mxu0
      %v3514 = vadd.f32 %v3384, %v3513
      %3515 = vmatprep.mubr.f32.mxu0 0.0
      %v3516 = vand.u32 %v3117, 4294901760
      %v3517 = vsub.f32 %v3117, %v3516
      %3518 = vmatmul.mubr.f32.gmra.mrb[0].mxu0 %v3517
      %v3519 = vpop.f32.mrb[0].mxu0
      %v3520 = vadd.f32 %v3389, %v3519
      %v3521 = vpop.f32.mrb[0].mxu0
      %v3522 = vadd.f32 %v3391, %v3521
      %3523 = vmatprep.mubr.f32.mxu0 0.0
      %v3524 = vand.u32 %v3120, 4294901760
      %v3525 = vsub.f32 %v3120, %v3524
      %3526 = vmatmul.mubr.f32.gmra.mrb[0].mxu0 %v3525
      %v3527 = vpop.f32.mrb[0].mxu0
      %v3528 = vadd.f32 %v3396, %v3527
      %v3529 = vpop.f32.mrb[0].mxu0
      %v3530 = vadd.f32 %v3398, %v3529
      %3531 = vmatprep.mubr.f32.mxu0 0.0
      %v3532 = vand.u32 %v3123, 4294901760
      %v3533 = vsub.f32 %v3123, %v3532
      %3534 = vmatmul.mubr.f32.gmra.mrb[0].mxu0 %v3533
      %v3535 = vpop.f32.mrb[0].mxu0
      %v3536 = vadd.f32 %v3403, %v3535
      %v3537 = vpop.f32.mrb[0].mxu0
      %v3538 = vadd.f32 %v3405, %v3537
      %3539 = vmatprep.mubr.f32.mxu0 0.0
      %v3540 = vand.u32 %v3126, 4294901760
      %v3541 = vsub.f32 %v3126, %v3540
      %3542 = vmatmul.mubr.f32.gmra.mrb[0].mxu0 %v3541
      %v3543 = vpop.f32.mrb[0].mxu0
      %v3544 = vadd.f32 %v3410, %v3543
      %v3545 = vpop.f32.mrb[0].mxu0
      %v3546 = vadd.f32 %v3412, %v3545
      %3547 = vmatprep.mubr.f32.mxu0 0.0
      %v3548 = vand.u32 %v3129, 4294901760
      %v3549 = vsub.f32 %v3129, %v3548
      %3550 = vmatmul.mubr.f32.gmra.mrb[0].mxu0 %v3549
      %v3551 = vpop.f32.mrb[0].mxu0
      %v3552 = vadd.f32 %v3417, %v3551
      %v3553 = vpop.f32.mrb[0].mxu0
      %v3554 = vadd.f32 %v3419, %v3553
      %3555 = vmatprep.mubr.f32.mxu0 0.0
      %v3556 = vand.u32 %v3132, 4294901760
      %v3557 = vsub.f32 %v3132, %v3556
      %3558 = vmatmul.mubr.f32.gmra.mrb[0].mxu0 %v3557
      %v3559 = vpop.f32.mrb[0].mxu0
      %v3560 = vadd.f32 %v3424, %v3559
      %v3561 = vpop.f32.mrb[0].mxu0
      %v3562 = vadd.f32 %v3426, %v3561
      %3563 = vmatprep.mubr.f32.mxu0 0.0
      %v3564 = vand.u32 %v3135, 4294901760
      %v3565 = vsub.f32 %v3135, %v3564
      %3566 = vmatmul.mubr.f32.gmra.mrb[0].mxu0 %v3565
      %v3567 = vpop.f32.mrb[0].mxu0
      %v3568 = vadd.f32 %v3431, %v3567
      %v3569 = vpop.f32.mrb[0].mxu0
      %v3570 = vadd.f32 %v3433, %v3569
      %3571 = vdwg.mxu0
      %v3572 = vand.u32 %v3105, 4294901760
      %3573 = vmatprep.subr.mxu0 %v3572
      %v3574 = vand.u32 %v3104, 4294901760
      %3575 = vmatpush1.msra.mxu0 %v3574
      %v3576 = vand.u32 %v3109, 4294901760
      %3577 = vmatprep.subr.mxu0 %v3576
      %v3578 = vand.u32 %v3108, 4294901760
      %3579 = vmatpush1.msra.mxu0 %v3578
      %3580 = vmatprep.subr.mxu0 0.0
      %3581 = vmatpush1.msra.mxu0 0.0
      %3582 = vmatprep.subr.mxu0 0.0
      %3583 = vmatpush1.msra.mxu0 0.0
      %3584 = vmatprep.subr.mxu0 0.0
      %3585 = vmatpush1.msra.mxu0 0.0
      %3586 = vmatprep.subr.mxu0 0.0
      %3587 = vmatpush1.msra.mxu0 0.0
      %3588 = vmatprep.subr.mxu0 0.0
      %3589 = vmatpush1.msra.mxu0 0.0
      %3590 = vmatprep.subr.mxu0 0.0
      %3591 = vmatpush1.msra.mxu0 0.0
      %3592 = vmatprep.subr.mxu0 0.0
      %3593 = vmatpush1.msra.mxu0 0.0
      %3594 = vmatprep.subr.mxu0 0.0
      %3595 = vmatpush1.msra.mxu0 0.0
      %3596 = vmatprep.subr.mxu0 0.0
      %3597 = vmatpush1.msra.mxu0 0.0
      %3598 = vmatprep.subr.mxu0 0.0
      %3599 = vmatpush1.msra.mxu0 0.0
      %3600 = vmatprep.subr.mxu0 0.0
      %3601 = vmatpush1.msra.mxu0 0.0
      %3602 = vmatprep.subr.mxu0 0.0
      %3603 = vmatpush1.msra.mxu0 0.0
      %3604 = vmatprep.subr.mxu0 0.0
      %3605 = vmatpush1.msra.mxu0 0.0
      %3606 = vmatprep.subr.mxu0 0.0
      %3607 = vmatpush1.msra.mxu0 0.0
      %3608 = vmatprep.subr.mxu0 0.0
      %3609 = vmatpush1.msra.mxu0 0.0
      %3610 = vmatprep.subr.mxu0 0.0
      %3611 = vmatpush1.msra.mxu0 0.0
      %3612 = vmatprep.subr.mxu0 0.0
      %3613 = vmatpush1.msra.mxu0 0.0
      %3614 = vmatprep.subr.mxu0 0.0
      %3615 = vmatpush1.msra.mxu0 0.0
      %3616 = vmatprep.subr.mxu0 0.0
      %3617 = vmatpush1.msra.mxu0 0.0
      %3618 = vmatprep.subr.mxu0 0.0
      %3619 = vmatpush1.msra.mxu0 0.0
      %3620 = vmatprep.subr.mxu0 0.0
      %3621 = vmatpush1.msra.mxu0 0.0
      %3622 = vmatprep.subr.mxu0 0.0
      %3623 = vmatpush1.msra.mxu0 0.0
      %3624 = vmatprep.subr.mxu0 0.0
      %3625 = vmatpush1.msra.mxu0 0.0
      %3626 = vmatprep.subr.mxu0 0.0
      %3627 = vmatpush1.msra.mxu0 0.0
      %3628 = vmatprep.subr.mxu0 0.0
      %3629 = vmatpush1.msra.mxu0 0.0
      %3630 = vmatprep.subr.mxu0 0.0
      %3631 = vmatpush1.msra.mxu0 0.0
      %3632 = vmatprep.subr.mxu0 0.0
      %3633 = vmatpush1.msra.mxu0 0.0
      %3634 = vmatprep.subr.mxu0 0.0
      %3635 = vmatpush1.msra.mxu0 0.0
      %3636 = vmatprep.subr.mxu0 0.0
      %3637 = vmatpush1.msra.mxu0 0.0
      %3638 = vmatprep.subr.mxu0 0.0
      %3639 = vmatpush1.msra.mxu0 0.0
      %3640 = vmatprep.mubr.f32.mxu0 0.0
      %v3641 = vand.u32 %v3114, 4294901760
      %v3642 = vsub.f32 %v3114, %v3641
      %v3643 = vand.u32 %v3642, 4294901760
      %3644 = vmatmul.mubr.f32.gmra.mrb[0].mxu0 %v3643
      %v3645 = vpop.f32.mrb[0].mxu0
      %v3646 = vadd.f32 %v3512, %v3645
      %v3647 = vpop.f32.mrb[0].mxu0
      %v3648 = vadd.f32 %v3514, %v3647
      %3649 = vmatprep.mubr.f32.mxu0 0.0
      %v3650 = vand.u32 %v3117, 4294901760
      %v3651 = vsub.f32 %v3117, %v3650
      %v3652 = vand.u32 %v3651, 4294901760
      %3653 = vmatmul.mubr.f32.gmra.mrb[0].mxu0 %v3652
      %v3654 = vpop.f32.mrb[0].mxu0
      %v3655 = vadd.f32 %v3520, %v3654
      %v3656 = vpop.f32.mrb[0].mxu0
      %v3657 = vadd.f32 %v3522, %v3656
      %3658 = vmatprep.mubr.f32.mxu0 0.0
      %v3659 = vand.u32 %v3120, 4294901760
      %v3660 = vsub.f32 %v3120, %v3659
      %v3661 = vand.u32 %v3660, 4294901760
      %3662 = vmatmul.mubr.f32.gmra.mrb[0].mxu0 %v3661
      %v3663 = vpop.f32.mrb[0].mxu0
      %v3664 = vadd.f32 %v3528, %v3663
      %v3665 = vpop.f32.mrb[0].mxu0
      %v3666 = vadd.f32 %v3530, %v3665
      %3667 = vmatprep.mubr.f32.mxu0 0.0
      %v3668 = vand.u32 %v3123, 4294901760
      %v3669 = vsub.f32 %v3123, %v3668
      %v3670 = vand.u32 %v3669, 4294901760
      %3671 = vmatmul.mubr.f32.gmra.mrb[0].mxu0 %v3670
      %v3672 = vpop.f32.mrb[0].mxu0
      %v3673 = vadd.f32 %v3536, %v3672
      %v3674 = vpop.f32.mrb[0].mxu0
      %v3675 = vadd.f32 %v3538, %v3674
      %3676 = vmatprep.mubr.f32.mxu0 0.0
      %v3677 = vand.u32 %v3126, 4294901760
      %v3678 = vsub.f32 %v3126, %v3677
      %v3679 = vand.u32 %v3678, 4294901760
      %3680 = vmatmul.mubr.f32.gmra.mrb[0].mxu0 %v3679
      %v3681 = vpop.f32.mrb[0].mxu0
      %v3682 = vadd.f32 %v3544, %v3681
      %v3683 = vpop.f32.mrb[0].mxu0
      %v3684 = vadd.f32 %v3546, %v3683
      %3685 = vmatprep.mubr.f32.mxu0 0.0
      %v3686 = vand.u32 %v3129, 4294901760
      %v3687 = vsub.f32 %v3129, %v3686
      %v3688 = vand.u32 %v3687, 4294901760
      %3689 = vmatmul.mubr.f32.gmra.mrb[0].mxu0 %v3688
      %v3690 = vpop.f32.mrb[0].mxu0
      %v3691 = vadd.f32 %v3552, %v3690
      %v3692 = vpop.f32.mrb[0].mxu0
      %v3693 = vadd.f32 %v3554, %v3692
      %3694 = vmatprep.mubr.f32.mxu0 0.0
      %v3695 = vand.u32 %v3132, 4294901760
      %v3696 = vsub.f32 %v3132, %v3695
      %v3697 = vand.u32 %v3696, 4294901760
      %3698 = vmatmul.mubr.f32.gmra.mrb[0].mxu0 %v3697
      %v3699 = vpop.f32.mrb[0].mxu0
      %v3700 = vadd.f32 %v3560, %v3699
      %v3701 = vpop.f32.mrb[0].mxu0
      %v3702 = vadd.f32 %v3562, %v3701
      %3703 = vmatprep.mubr.f32.mxu0 0.0
      %v3704 = vand.u32 %v3135, 4294901760
      %v3705 = vsub.f32 %v3135, %v3704
      %v3706 = vand.u32 %v3705, 4294901760
      %3707 = vmatmul.mubr.f32.gmra.mrb[0].mxu0 %v3706
      %v3708 = vpop.f32.mrb[0].mxu0
      %v3709 = vadd.f32 %v3568, %v3708
      %v3710 = vpop.f32.mrb[0].mxu0
      %v3711 = vadd.f32 %v3570, %v3710
      %3712 = vdwg.mxu0
      %v3713 = vand.u32 %v3105, 4294901760
      %v3714 = vsub.f32 %v3105, %v3713
      %v3715 = vand.u32 %v3714, 4294901760
      %3716 = vmatprep.subr.mxu0 %v3715
      %v3717 = vand.u32 %v3104, 4294901760
      %v3718 = vsub.f32 %v3104, %v3717
      %v3719 = vand.u32 %v3718, 4294901760
      %3720 = vmatpush1.msra.mxu0 %v3719
      %v3721 = vand.u32 %v3109, 4294901760
      %v3722 = vsub.f32 %v3109, %v3721
      %v3723 = vand.u32 %v3722, 4294901760
      %3724 = vmatprep.subr.mxu0 %v3723
      %v3725 = vand.u32 %v3108, 4294901760
      %v3726 = vsub.f32 %v3108, %v3725
      %v3727 = vand.u32 %v3726, 4294901760
      %3728 = vmatpush1.msra.mxu0 %v3727
      %3729 = vmatprep.subr.mxu0 0.0
      %3730 = vmatpush1.msra.mxu0 0.0
      %3731 = vmatprep.subr.mxu0 0.0
      %3732 = vmatpush1.msra.mxu0 0.0
      %3733 = vmatprep.subr.mxu0 0.0
      %3734 = vmatpush1.msra.mxu0 0.0
      %3735 = vmatprep.subr.mxu0 0.0
      %3736 = vmatpush1.msra.mxu0 0.0
      %3737 = vmatprep.subr.mxu0 0.0
      %3738 = vmatpush1.msra.mxu0 0.0
      %3739 = vmatprep.subr.mxu0 0.0
      %3740 = vmatpush1.msra.mxu0 0.0
      %3741 = vmatprep.subr.mxu0 0.0
      %3742 = vmatpush1.msra.mxu0 0.0
      %3743 = vmatprep.subr.mxu0 0.0
      %3744 = vmatpush1.msra.mxu0 0.0
      %3745 = vmatprep.subr.mxu0 0.0
      %3746 = vmatpush1.msra.mxu0 0.0
      %3747 = vmatprep.subr.mxu0 0.0
      %3748 = vmatpush1.msra.mxu0 0.0
      %3749 = vmatprep.subr.mxu0 0.0
      %3750 = vmatpush1.msra.mxu0 0.0
      %3751 = vmatprep.subr.mxu0 0.0
      %3752 = vmatpush1.msra.mxu0 0.0
      %3753 = vmatprep.subr.mxu0 0.0
      %3754 = vmatpush1.msra.mxu0 0.0
      %3755 = vmatprep.subr.mxu0 0.0
      %3756 = vmatpush1.msra.mxu0 0.0
      %3757 = vmatprep.subr.mxu0 0.0
      %3758 = vmatpush1.msra.mxu0 0.0
      %3759 = vmatprep.subr.mxu0 0.0
      %3760 = vmatpush1.msra.mxu0 0.0
      %3761 = vmatprep.subr.mxu0 0.0
      %3762 = vmatpush1.msra.mxu0 0.0
      %3763 = vmatprep.subr.mxu0 0.0
      %3764 = vmatpush1.msra.mxu0 0.0
      %3765 = vmatprep.subr.mxu0 0.0
      %3766 = vmatpush1.msra.mxu0 0.0
      %3767 = vmatprep.subr.mxu0 0.0
      %3768 = vmatpush1.msra.mxu0 0.0
      %3769 = vmatprep.subr.mxu0 0.0
      %3770 = vmatpush1.msra.mxu0 0.0
      %3771 = vmatprep.subr.mxu0 0.0
      %3772 = vmatpush1.msra.mxu0 0.0
      %3773 = vmatprep.subr.mxu0 0.0
      %3774 = vmatpush1.msra.mxu0 0.0
      %3775 = vmatprep.subr.mxu0 0.0
      %3776 = vmatpush1.msra.mxu0 0.0
      %3777 = vmatprep.subr.mxu0 0.0
      %3778 = vmatpush1.msra.mxu0 0.0
      %3779 = vmatprep.subr.mxu0 0.0
      %3780 = vmatpush1.msra.mxu0 0.0
      %3781 = vmatprep.subr.mxu0 0.0
      %3782 = vmatpush1.msra.mxu0 0.0
      %3783 = vmatprep.subr.mxu0 0.0
      %3784 = vmatpush1.msra.mxu0 0.0
      %3785 = vmatprep.subr.mxu0 0.0
      %3786 = vmatpush1.msra.mxu0 0.0
      %3787 = vmatprep.subr.mxu0 0.0
      %3788 = vmatpush1.msra.mxu0 0.0
      %3789 = vmatprep.mubr.f32.mxu0 0.0
      %v3790 = vand.u32 %v3114, 4294901760
      %3791 = vmatmul.mubr.f32.gmra.mrb[0].mxu0 %v3790
      %v3792 = vpop.f32.mrb[0].mxu0
      %v3793 = vadd.f32 %v3646, %v3792
      %v3794 = vpop.f32.mrb[0].mxu0
      %v3795 = vadd.f32 %v3648, %v3794
      %3796 = vmatprep.mubr.f32.mxu0 0.0
      %v3797 = vand.u32 %v3117, 4294901760
      %3798 = vmatmul.mubr.f32.gmra.mrb[0].mxu0 %v3797
      %v3799 = vpop.f32.mrb[0].mxu0
      %v3800 = vadd.f32 %v3655, %v3799
      %v3801 = vpop.f32.mrb[0].mxu0
      %v3802 = vadd.f32 %v3657, %v3801
      %3803 = vmatprep.mubr.f32.mxu0 0.0
      %v3804 = vand.u32 %v3120, 4294901760
      %3805 = vmatmul.mubr.f32.gmra.mrb[0].mxu0 %v3804
      %v3806 = vpop.f32.mrb[0].mxu0
      %v3807 = vadd.f32 %v3664, %v3806
      %v3808 = vpop.f32.mrb[0].mxu0
      %v3809 = vadd.f32 %v3666, %v3808
      %3810 = vmatprep.mubr.f32.mxu0 0.0
      %v3811 = vand.u32 %v3123, 4294901760
      %3812 = vmatmul.mubr.f32.gmra.mrb[0].mxu0 %v3811
      %v3813 = vpop.f32.mrb[0].mxu0
      %v3814 = vadd.f32 %v3673, %v3813
      %v3815 = vpop.f32.mrb[0].mxu0
      %v3816 = vadd.f32 %v3675, %v3815
      %3817 = vmatprep.mubr.f32.mxu0 0.0
      %v3818 = vand.u32 %v3126, 4294901760
      %3819 = vmatmul.mubr.f32.gmra.mrb[0].mxu0 %v3818
      %v3820 = vpop.f32.mrb[0].mxu0
      %v3821 = vadd.f32 %v3682, %v3820
      %v3822 = vpop.f32.mrb[0].mxu0
      %v3823 = vadd.f32 %v3684, %v3822
      %3824 = vmatprep.mubr.f32.mxu0 0.0
      %v3825 = vand.u32 %v3129, 4294901760
      %3826 = vmatmul.mubr.f32.gmra.mrb[0].mxu0 %v3825
      %v3827 = vpop.f32.mrb[0].mxu0
      %v3828 = vadd.f32 %v3691, %v3827
      %v3829 = vpop.f32.mrb[0].mxu0
      %v3830 = vadd.f32 %v3693, %v3829
      %3831 = vmatprep.mubr.f32.mxu0 0.0
      %v3832 = vand.u32 %v3132, 4294901760
      %3833 = vmatmul.mubr.f32.gmra.mrb[0].mxu0 %v3832
      %v3834 = vpop.f32.mrb[0].mxu0
      %v3835 = vadd.f32 %v3700, %v3834
      %v3836 = vpop.f32.mrb[0].mxu0
      %v3837 = vadd.f32 %v3702, %v3836
      %3838 = vmatprep.mubr.f32.mxu0 0.0
      %v3839 = vand.u32 %v3135, 4294901760
      %3840 = vmatmul.mubr.f32.gmra.mrb[0].mxu0 %v3839
      %v3841 = vpop.f32.mrb[0].mxu0
      %v3842 = vadd.f32 %v3709, %v3841
      %v3843 = vpop.f32.mrb[0].mxu0
      %v3844 = vadd.f32 %v3711, %v3843
      %3845 = vdwg.mxu0
      %v3846 = vand.u32 %v3105, 4294901760
      %3847 = vmatprep.subr.mxu0 %v3846
      %v3848 = vand.u32 %v3104, 4294901760
      %3849 = vmatpush1.msra.mxu0 %v3848
      %v3850 = vand.u32 %v3109, 4294901760
      %3851 = vmatprep.subr.mxu0 %v3850
      %v3852 = vand.u32 %v3108, 4294901760
      %3853 = vmatpush1.msra.mxu0 %v3852
      %3854 = vmatprep.subr.mxu0 0.0
      %3855 = vmatpush1.msra.mxu0 0.0
      %3856 = vmatprep.subr.mxu0 0.0
      %3857 = vmatpush1.msra.mxu0 0.0
      %3858 = vmatprep.subr.mxu0 0.0
      %3859 = vmatpush1.msra.mxu0 0.0
      %3860 = vmatprep.subr.mxu0 0.0
      %3861 = vmatpush1.msra.mxu0 0.0
      %3862 = vmatprep.subr.mxu0 0.0
      %3863 = vmatpush1.msra.mxu0 0.0
      %3864 = vmatprep.subr.mxu0 0.0
      %3865 = vmatpush1.msra.mxu0 0.0
      %3866 = vmatprep.subr.mxu0 0.0
      %3867 = vmatpush1.msra.mxu0 0.0
      %3868 = vmatprep.subr.mxu0 0.0
      %3869 = vmatpush1.msra.mxu0 0.0
      %3870 = vmatprep.subr.mxu0 0.0
      %3871 = vmatpush1.msra.mxu0 0.0
      %3872 = vmatprep.subr.mxu0 0.0
      %3873 = vmatpush1.msra.mxu0 0.0
      %3874 = vmatprep.subr.mxu0 0.0
      %3875 = vmatpush1.msra.mxu0 0.0
      %3876 = vmatprep.subr.mxu0 0.0
      %3877 = vmatpush1.msra.mxu0 0.0
      %3878 = vmatprep.subr.mxu0 0.0
      %3879 = vmatpush1.msra.mxu0 0.0
      %3880 = vmatprep.subr.mxu0 0.0
      %3881 = vmatpush1.msra.mxu0 0.0
      %3882 = vmatprep.subr.mxu0 0.0
      %3883 = vmatpush1.msra.mxu0 0.0
      %3884 = vmatprep.subr.mxu0 0.0
      %3885 = vmatpush1.msra.mxu0 0.0
      %3886 = vmatprep.subr.mxu0 0.0
      %3887 = vmatpush1.msra.mxu0 0.0
      %3888 = vmatprep.subr.mxu0 0.0
      %3889 = vmatpush1.msra.mxu0 0.0
      %3890 = vmatprep.subr.mxu0 0.0
      %3891 = vmatpush1.msra.mxu0 0.0
      %3892 = vmatprep.subr.mxu0 0.0
      %3893 = vmatpush1.msra.mxu0 0.0
      %3894 = vmatprep.subr.mxu0 0.0
      %3895 = vmatpush1.msra.mxu0 0.0
      %3896 = vmatprep.subr.mxu0 0.0
      %3897 = vmatpush1.msra.mxu0 0.0
      %3898 = vmatprep.subr.mxu0 0.0
      %3899 = vmatpush1.msra.mxu0 0.0
      %3900 = vmatprep.subr.mxu0 0.0
      %3901 = vmatpush1.msra.mxu0 0.0
      %3902 = vmatprep.subr.mxu0 0.0
      %3903 = vmatpush1.msra.mxu0 0.0
      %3904 = vmatprep.subr.mxu0 0.0
      %3905 = vmatpush1.msra.mxu0 0.0
      %3906 = vmatprep.subr.mxu0 0.0
      %3907 = vmatpush1.msra.mxu0 0.0
      %3908 = vmatprep.subr.mxu0 0.0
      %3909 = vmatpush1.msra.mxu0 0.0
      %3910 = vmatprep.subr.mxu0 0.0
      %3911 = vmatpush1.msra.mxu0 0.0
      %3912 = vmatprep.subr.mxu0 0.0
      %3913 = vmatpush1.msra.mxu0 0.0
      %3914 = vmatprep.mubr.f32.mxu0 0.0
      %v3915 = vand.u32 %v3114, 4294901760
      %3916 = vmatmul.mubr.f32.gmra.mrb[0].mxu0 %v3915
      %v3917 = vpop.f32.mrb[0].mxu0
      %v3918 = vadd.f32 %v3793, %v3917
      %v3919 = vpop.f32.mrb[0].mxu0
      %v3920 = vadd.f32 %v3795, %v3919
      %3921 = vmatprep.mubr.f32.mxu0 0.0
      %v3922 = vand.u32 %v3117, 4294901760
      %3923 = vmatmul.mubr.f32.gmra.mrb[0].mxu0 %v3922
      %v3924 = vpop.f32.mrb[0].mxu0
      %v3925 = vadd.f32 %v3800, %v3924
      %v3926 = vpop.f32.mrb[0].mxu0
      %v3927 = vadd.f32 %v3802, %v3926
      %3928 = vmatprep.mubr.f32.mxu0 0.0
      %v3929 = vand.u32 %v3120, 4294901760
      %3930 = vmatmul.mubr.f32.gmra.mrb[0].mxu0 %v3929
      %v3931 = vpop.f32.mrb[0].mxu0
      %v3932 = vadd.f32 %v3807, %v3931
      %v3933 = vpop.f32.mrb[0].mxu0
      %v3934 = vadd.f32 %v3809, %v3933
      %3935 = vmatprep.mubr.f32.mxu0 0.0
      %v3936 = vand.u32 %v3123, 4294901760
      %3937 = vmatmul.mubr.f32.gmra.mrb[0].mxu0 %v3936
      %v3938 = vpop.f32.mrb[0].mxu0
      %v3939 = vadd.f32 %v3814, %v3938
      %v3940 = vpop.f32.mrb[0].mxu0
      %v3941 = vadd.f32 %v3816, %v3940
      %3942 = vmatprep.mubr.f32.mxu0 0.0
      %v3943 = vand.u32 %v3126, 4294901760
      %3944 = vmatmul.mubr.f32.gmra.mrb[0].mxu0 %v3943
      %v3945 = vpop.f32.mrb[0].mxu0
      %v3946 = vadd.f32 %v3821, %v3945
      %v3947 = vpop.f32.mrb[0].mxu0
      %v3948 = vadd.f32 %v3823, %v3947
      %3949 = vmatprep.mubr.f32.mxu0 0.0
      %v3950 = vand.u32 %v3129, 4294901760
      %3951 = vmatmul.mubr.f32.gmra.mrb[0].mxu0 %v3950
      %v3952 = vpop.f32.mrb[0].mxu0
      %v3953 = vadd.f32 %v3828, %v3952
      %v3954 = vpop.f32.mrb[0].mxu0
      %v3955 = vadd.f32 %v3830, %v3954
      %3956 = vmatprep.mubr.f32.mxu0 0.0
      %v3957 = vand.u32 %v3132, 4294901760
      %3958 = vmatmul.mubr.f32.gmra.mrb[0].mxu0 %v3957
      %v3959 = vpop.f32.mrb[0].mxu0
      %v3960 = vadd.f32 %v3835, %v3959
      %v3961 = vpop.f32.mrb[0].mxu0
      %v3962 = vadd.f32 %v3837, %v3961
      %3963 = vmatprep.mubr.f32.mxu0 0.0
      %v3964 = vand.u32 %v3135, 4294901760
      %3965 = vmatmul.mubr.f32.gmra.mrb[0].mxu0 %v3964
      %v3966 = vpop.f32.mrb[0].mxu0
      %v3967 = vadd.f32 %v3842, %v3966
      %v3968 = vpop.f32.mrb[0].mxu0
      %v3969 = vadd.f32 %v3844, %v3968
      %3970 = vdwg.mxu0
      %v3971 = vand.u32 %v3107, 4294901760
      %3972 = vmatprep.subr.mxu0 %v3971
      %v3973 = vand.u32 %v3106, 4294901760
      %3974 = vmatpush1.msra.mxu0 %v3973
      %v3975 = vand.u32 %v3111, 4294901760
      %3976 = vmatprep.subr.mxu0 %v3975
      %v3977 = vand.u32 %v3110, 4294901760
      %3978 = vmatpush1.msra.mxu0 %v3977
      %3979 = vmatprep.subr.mxu0 0.0
      %3980 = vmatpush1.msra.mxu0 0.0
      %3981 = vmatprep.subr.mxu0 0.0
      %3982 = vmatpush1.msra.mxu0 0.0
      %3983 = vmatprep.subr.mxu0 0.0
      %3984 = vmatpush1.msra.mxu0 0.0
      %3985 = vmatprep.subr.mxu0 0.0
      %3986 = vmatpush1.msra.mxu0 0.0
      %3987 = vmatprep.subr.mxu0 0.0
      %3988 = vmatpush1.msra.mxu0 0.0
      %3989 = vmatprep.subr.mxu0 0.0
      %3990 = vmatpush1.msra.mxu0 0.0
      %3991 = vmatprep.subr.mxu0 0.0
      %3992 = vmatpush1.msra.mxu0 0.0
      %3993 = vmatprep.subr.mxu0 0.0
      %3994 = vmatpush1.msra.mxu0 0.0
      %3995 = vmatprep.subr.mxu0 0.0
      %3996 = vmatpush1.msra.mxu0 0.0
      %3997 = vmatprep.subr.mxu0 0.0
      %3998 = vmatpush1.msra.mxu0 0.0
      %3999 = vmatprep.subr.mxu0 0.0
      %4000 = vmatpush1.msra.mxu0 0.0
      %4001 = vmatprep.subr.mxu0 0.0
      %4002 = vmatpush1.msra.mxu0 0.0
      %4003 = vmatprep.subr.mxu0 0.0
      %4004 = vmatpush1.msra.mxu0 0.0
      %4005 = vmatprep.subr.mxu0 0.0
      %4006 = vmatpush1.msra.mxu0 0.0
      %4007 = vmatprep.subr.mxu0 0.0
      %4008 = vmatpush1.msra.mxu0 0.0
      %4009 = vmatprep.subr.mxu0 0.0
      %4010 = vmatpush1.msra.mxu0 0.0
      %4011 = vmatprep.subr.mxu0 0.0
      %4012 = vmatpush1.msra.mxu0 0.0
      %4013 = vmatprep.subr.mxu0 0.0
      %4014 = vmatpush1.msra.mxu0 0.0
      %4015 = vmatprep.subr.mxu0 0.0
      %4016 = vmatpush1.msra.mxu0 0.0
      %4017 = vmatprep.subr.mxu0 0.0
      %4018 = vmatpush1.msra.mxu0 0.0
      %4019 = vmatprep.subr.mxu0 0.0
      %4020 = vmatpush1.msra.mxu0 0.0
      %4021 = vmatprep.subr.mxu0 0.0
      %4022 = vmatpush1.msra.mxu0 0.0
      %4023 = vmatprep.subr.mxu0 0.0
      %4024 = vmatpush1.msra.mxu0 0.0
      %4025 = vmatprep.subr.mxu0 0.0
      %4026 = vmatpush1.msra.mxu0 0.0
      %4027 = vmatprep.subr.mxu0 0.0
      %4028 = vmatpush1.msra.mxu0 0.0
      %4029 = vmatprep.subr.mxu0 0.0
      %4030 = vmatpush1.msra.mxu0 0.0
      %4031 = vmatprep.subr.mxu0 0.0
      %4032 = vmatpush1.msra.mxu0 0.0
      %4033 = vmatprep.subr.mxu0 0.0
      %4034 = vmatpush1.msra.mxu0 0.0
      %4035 = vmatprep.subr.mxu0 0.0
      %4036 = vmatpush1.msra.mxu0 0.0
      %4037 = vmatprep.subr.mxu0 0.0
      %4038 = vmatpush1.msra.mxu0 0.0
      %4039 = vmatprep.mubr.f32.mxu0 0.0
      %v4040 = vand.u32 %v3114, 4294901760
      %v4041 = vsub.f32 %v3114, %v4040
      %v4042 = vand.u32 %v4041, 4294901760
      %v4043 = vsub.f32 %v4041, %v4042
      %v4044 = vand.u32 %v4043, 4294901760
      %4045 = vmatmul.mubr.f32.gmra.mrb[0].mxu0 %v4044
      %v4046 = vpop.f32.mrb[0].mxu0
      %v4047 = vadd.f32 0.0, %v4046
      %v4048 = vpop.f32.mrb[0].mxu0
      %v4049 = vadd.f32 0.0, %v4048
      %4050 = vmatprep.mubr.f32.mxu0 0.0
      %v4051 = vand.u32 %v3117, 4294901760
      %v4052 = vsub.f32 %v3117, %v4051
      %v4053 = vand.u32 %v4052, 4294901760
      %v4054 = vsub.f32 %v4052, %v4053
      %v4055 = vand.u32 %v4054, 4294901760
      %4056 = vmatmul.mubr.f32.gmra.mrb[0].mxu0 %v4055
      %v4057 = vpop.f32.mrb[0].mxu0
      %v4058 = vadd.f32 0.0, %v4057
      %v4059 = vpop.f32.mrb[0].mxu0
      %v4060 = vadd.f32 0.0, %v4059
      %4061 = vmatprep.mubr.f32.mxu0 0.0
      %v4062 = vand.u32 %v3120, 4294901760
      %v4063 = vsub.f32 %v3120, %v4062
      %v4064 = vand.u32 %v4063, 4294901760
      %v4065 = vsub.f32 %v4063, %v4064
      %v4066 = vand.u32 %v4065, 4294901760
      %4067 = vmatmul.mubr.f32.gmra.mrb[0].mxu0 %v4066
      %v4068 = vpop.f32.mrb[0].mxu0
      %v4069 = vadd.f32 0.0, %v4068
      %v4070 = vpop.f32.mrb[0].mxu0
      %v4071 = vadd.f32 0.0, %v4070
      %4072 = vmatprep.mubr.f32.mxu0 0.0
      %v4073 = vand.u32 %v3123, 4294901760
      %v4074 = vsub.f32 %v3123, %v4073
      %v4075 = vand.u32 %v4074, 4294901760
      %v4076 = vsub.f32 %v4074, %v4075
      %v4077 = vand.u32 %v4076, 4294901760
      %4078 = vmatmul.mubr.f32.gmra.mrb[0].mxu0 %v4077
      %v4079 = vpop.f32.mrb[0].mxu0
      %v4080 = vadd.f32 0.0, %v4079
      %v4081 = vpop.f32.mrb[0].mxu0
      %v4082 = vadd.f32 0.0, %v4081
      %4083 = vmatprep.mubr.f32.mxu0 0.0
      %v4084 = vand.u32 %v3126, 4294901760
      %v4085 = vsub.f32 %v3126, %v4084
      %v4086 = vand.u32 %v4085, 4294901760
      %v4087 = vsub.f32 %v4085, %v4086
      %v4088 = vand.u32 %v4087, 4294901760
      %4089 = vmatmul.mubr.f32.gmra.mrb[0].mxu0 %v4088
      %v4090 = vpop.f32.mrb[0].mxu0
      %v4091 = vadd.f32 0.0, %v4090
      %v4092 = vpop.f32.mrb[0].mxu0
      %v4093 = vadd.f32 0.0, %v4092
      %4094 = vmatprep.mubr.f32.mxu0 0.0
      %v4095 = vand.u32 %v3129, 4294901760
      %v4096 = vsub.f32 %v3129, %v4095
      %v4097 = vand.u32 %v4096, 4294901760
      %v4098 = vsub.f32 %v4096, %v4097
      %v4099 = vand.u32 %v4098, 4294901760
      %4100 = vmatmul.mubr.f32.gmra.mrb[0].mxu0 %v4099
      %v4101 = vpop.f32.mrb[0].mxu0
      %v4102 = vadd.f32 0.0, %v4101
      %v4103 = vpop.f32.mrb[0].mxu0
      %v4104 = vadd.f32 0.0, %v4103
      %4105 = vmatprep.mubr.f32.mxu0 0.0
      %v4106 = vand.u32 %v3132, 4294901760
      %v4107 = vsub.f32 %v3132, %v4106
      %v4108 = vand.u32 %v4107, 4294901760
      %v4109 = vsub.f32 %v4107, %v4108
      %v4110 = vand.u32 %v4109, 4294901760
      %4111 = vmatmul.mubr.f32.gmra.mrb[0].mxu0 %v4110
      %v4112 = vpop.f32.mrb[0].mxu0
      %v4113 = vadd.f32 0.0, %v4112
      %v4114 = vpop.f32.mrb[0].mxu0
      %v4115 = vadd.f32 0.0, %v4114
      %4116 = vmatprep.mubr.f32.mxu0 0.0
      %v4117 = vand.u32 %v3135, 4294901760
      %v4118 = vsub.f32 %v3135, %v4117
      %v4119 = vand.u32 %v4118, 4294901760
      %v4120 = vsub.f32 %v4118, %v4119
      %v4121 = vand.u32 %v4120, 4294901760
      %4122 = vmatmul.mubr.f32.gmra.mrb[0].mxu0 %v4121
      %v4123 = vpop.f32.mrb[0].mxu0
      %v4124 = vadd.f32 0.0, %v4123
      %v4125 = vpop.f32.mrb[0].mxu0
      %v4126 = vadd.f32 0.0, %v4125
      %4127 = vdwg.mxu0
      %v4128 = vand.u32 %v3107, 4294901760
      %v4129 = vsub.f32 %v3107, %v4128
      %v4130 = vand.u32 %v4129, 4294901760
      %v4131 = vsub.f32 %v4129, %v4130
      %v4132 = vand.u32 %v4131, 4294901760
      %4133 = vmatprep.subr.mxu0 %v4132
      %v4134 = vand.u32 %v3106, 4294901760
      %v4135 = vsub.f32 %v3106, %v4134
      %v4136 = vand.u32 %v4135, 4294901760
      %v4137 = vsub.f32 %v4135, %v4136
      %v4138 = vand.u32 %v4137, 4294901760
      %4139 = vmatpush1.msra.mxu0 %v4138
      %v4140 = vand.u32 %v3111, 4294901760
      %v4141 = vsub.f32 %v3111, %v4140
      %v4142 = vand.u32 %v4141, 4294901760
      %v4143 = vsub.f32 %v4141, %v4142
      %v4144 = vand.u32 %v4143, 4294901760
      %4145 = vmatprep.subr.mxu0 %v4144
      %v4146 = vand.u32 %v3110, 4294901760
      %v4147 = vsub.f32 %v3110, %v4146
      %v4148 = vand.u32 %v4147, 4294901760
      %v4149 = vsub.f32 %v4147, %v4148
      %v4150 = vand.u32 %v4149, 4294901760
      %4151 = vmatpush1.msra.mxu0 %v4150
      %4152 = vmatprep.subr.mxu0 0.0
      %4153 = vmatpush1.msra.mxu0 0.0
      %4154 = vmatprep.subr.mxu0 0.0
      %4155 = vmatpush1.msra.mxu0 0.0
      %4156 = vmatprep.subr.mxu0 0.0
      %4157 = vmatpush1.msra.mxu0 0.0
      %4158 = vmatprep.subr.mxu0 0.0
      %4159 = vmatpush1.msra.mxu0 0.0
      %4160 = vmatprep.subr.mxu0 0.0
      %4161 = vmatpush1.msra.mxu0 0.0
      %4162 = vmatprep.subr.mxu0 0.0
      %4163 = vmatpush1.msra.mxu0 0.0
      %4164 = vmatprep.subr.mxu0 0.0
      %4165 = vmatpush1.msra.mxu0 0.0
      %4166 = vmatprep.subr.mxu0 0.0
      %4167 = vmatpush1.msra.mxu0 0.0
      %4168 = vmatprep.subr.mxu0 0.0
      %4169 = vmatpush1.msra.mxu0 0.0
      %4170 = vmatprep.subr.mxu0 0.0
      %4171 = vmatpush1.msra.mxu0 0.0
      %4172 = vmatprep.subr.mxu0 0.0
      %4173 = vmatpush1.msra.mxu0 0.0
      %4174 = vmatprep.subr.mxu0 0.0
      %4175 = vmatpush1.msra.mxu0 0.0
      %4176 = vmatprep.subr.mxu0 0.0
      %4177 = vmatpush1.msra.mxu0 0.0
      %4178 = vmatprep.subr.mxu0 0.0
      %4179 = vmatpush1.msra.mxu0 0.0
      %4180 = vmatprep.subr.mxu0 0.0
      %4181 = vmatpush1.msra.mxu0 0.0
      %4182 = vmatprep.subr.mxu0 0.0
      %4183 = vmatpush1.msra.mxu0 0.0
      %4184 = vmatprep.subr.mxu0 0.0
      %4185 = vmatpush1.msra.mxu0 0.0
      %4186 = vmatprep.subr.mxu0 0.0
      %4187 = vmatpush1.msra.mxu0 0.0
      %4188 = vmatprep.subr.mxu0 0.0
      %4189 = vmatpush1.msra.mxu0 0.0
      %4190 = vmatprep.subr.mxu0 0.0
      %4191 = vmatpush1.msra.mxu0 0.0
      %4192 = vmatprep.subr.mxu0 0.0
      %4193 = vmatpush1.msra.mxu0 0.0
      %4194 = vmatprep.subr.mxu0 0.0
      %4195 = vmatpush1.msra.mxu0 0.0
      %4196 = vmatprep.subr.mxu0 0.0
      %4197 = vmatpush1.msra.mxu0 0.0
      %4198 = vmatprep.subr.mxu0 0.0
      %4199 = vmatpush1.msra.mxu0 0.0
      %4200 = vmatprep.subr.mxu0 0.0
      %4201 = vmatpush1.msra.mxu0 0.0
      %4202 = vmatprep.subr.mxu0 0.0
      %4203 = vmatpush1.msra.mxu0 0.0
      %4204 = vmatprep.subr.mxu0 0.0
      %4205 = vmatpush1.msra.mxu0 0.0
      %4206 = vmatprep.subr.mxu0 0.0
      %4207 = vmatpush1.msra.mxu0 0.0
      %4208 = vmatprep.subr.mxu0 0.0
      %4209 = vmatpush1.msra.mxu0 0.0
      %4210 = vmatprep.subr.mxu0 0.0
      %4211 = vmatpush1.msra.mxu0 0.0
      %4212 = vmatprep.mubr.f32.mxu0 0.0
      %v4213 = vand.u32 %v3114, 4294901760
      %4214 = vmatmul.mubr.f32.gmra.mrb[0].mxu0 %v4213
      %v4215 = vpop.f32.mrb[0].mxu0
      %v4216 = vadd.f32 %v4047, %v4215
      %v4217 = vpop.f32.mrb[0].mxu0
      %v4218 = vadd.f32 %v4049, %v4217
      %4219 = vmatprep.mubr.f32.mxu0 0.0
      %v4220 = vand.u32 %v3117, 4294901760
      %4221 = vmatmul.mubr.f32.gmra.mrb[0].mxu0 %v4220
      %v4222 = vpop.f32.mrb[0].mxu0
      %v4223 = vadd.f32 %v4058, %v4222
      %v4224 = vpop.f32.mrb[0].mxu0
      %v4225 = vadd.f32 %v4060, %v4224
      %4226 = vmatprep.mubr.f32.mxu0 0.0
      %v4227 = vand.u32 %v3120, 4294901760
      %4228 = vmatmul.mubr.f32.gmra.mrb[0].mxu0 %v4227
      %v4229 = vpop.f32.mrb[0].mxu0
      %v4230 = vadd.f32 %v4069, %v4229
      %v4231 = vpop.f32.mrb[0].mxu0
      %v4232 = vadd.f32 %v4071, %v4231
      %4233 = vmatprep.mubr.f32.mxu0 0.0
      %v4234 = vand.u32 %v3123, 4294901760
      %4235 = vmatmul.mubr.f32.gmra.mrb[0].mxu0 %v4234
      %v4236 = vpop.f32.mrb[0].mxu0
      %v4237 = vadd.f32 %v4080, %v4236
      %v4238 = vpop.f32.mrb[0].mxu0
      %v4239 = vadd.f32 %v4082, %v4238
      %4240 = vmatprep.mubr.f32.mxu0 0.0
      %v4241 = vand.u32 %v3126, 4294901760
      %4242 = vmatmul.mubr.f32.gmra.mrb[0].mxu0 %v4241
      %v4243 = vpop.f32.mrb[0].mxu0
      %v4244 = vadd.f32 %v4091, %v4243
      %v4245 = vpop.f32.mrb[0].mxu0
      %v4246 = vadd.f32 %v4093, %v4245
      %4247 = vmatprep.mubr.f32.mxu0 0.0
      %v4248 = vand.u32 %v3129, 4294901760
      %4249 = vmatmul.mubr.f32.gmra.mrb[0].mxu0 %v4248
      %v4250 = vpop.f32.mrb[0].mxu0
      %v4251 = vadd.f32 %v4102, %v4250
      %v4252 = vpop.f32.mrb[0].mxu0
      %v4253 = vadd.f32 %v4104, %v4252
      %4254 = vmatprep.mubr.f32.mxu0 0.0
      %v4255 = vand.u32 %v3132, 4294901760
      %4256 = vmatmul.mubr.f32.gmra.mrb[0].mxu0 %v4255
      %v4257 = vpop.f32.mrb[0].mxu0
      %v4258 = vadd.f32 %v4113, %v4257
      %v4259 = vpop.f32.mrb[0].mxu0
      %v4260 = vadd.f32 %v4115, %v4259
      %4261 = vmatprep.mubr.f32.mxu0 0.0
      %v4262 = vand.u32 %v3135, 4294901760
      %4263 = vmatmul.mubr.f32.gmra.mrb[0].mxu0 %v4262
      %v4264 = vpop.f32.mrb[0].mxu0
      %v4265 = vadd.f32 %v4124, %v4264
      %v4266 = vpop.f32.mrb[0].mxu0
      %v4267 = vadd.f32 %v4126, %v4266
      %4268 = vdwg.mxu0
      %v4269 = vand.u32 %v3107, 4294901760
      %v4270 = vsub.f32 %v3107, %v4269
      %4271 = vmatprep.subr.mxu0 %v4270
      %v4272 = vand.u32 %v3106, 4294901760
      %v4273 = vsub.f32 %v3106, %v4272
      %4274 = vmatpush1.msra.mxu0 %v4273
      %v4275 = vand.u32 %v3111, 4294901760
      %v4276 = vsub.f32 %v3111, %v4275
      %4277 = vmatprep.subr.mxu0 %v4276
      %v4278 = vand.u32 %v3110, 4294901760
      %v4279 = vsub.f32 %v3110, %v4278
      %4280 = vmatpush1.msra.mxu0 %v4279
      %4281 = vmatprep.subr.mxu0 0.0
      %4282 = vmatpush1.msra.mxu0 0.0
      %4283 = vmatprep.subr.mxu0 0.0
      %4284 = vmatpush1.msra.mxu0 0.0
      %4285 = vmatprep.subr.mxu0 0.0
      %4286 = vmatpush1.msra.mxu0 0.0
      %4287 = vmatprep.subr.mxu0 0.0
      %4288 = vmatpush1.msra.mxu0 0.0
      %4289 = vmatprep.subr.mxu0 0.0
      %4290 = vmatpush1.msra.mxu0 0.0
      %4291 = vmatprep.subr.mxu0 0.0
      %4292 = vmatpush1.msra.mxu0 0.0
      %4293 = vmatprep.subr.mxu0 0.0
      %4294 = vmatpush1.msra.mxu0 0.0
      %4295 = vmatprep.subr.mxu0 0.0
      %4296 = vmatpush1.msra.mxu0 0.0
      %4297 = vmatprep.subr.mxu0 0.0
      %4298 = vmatpush1.msra.mxu0 0.0
      %4299 = vmatprep.subr.mxu0 0.0
      %4300 = vmatpush1.msra.mxu0 0.0
      %4301 = vmatprep.subr.mxu0 0.0
      %4302 = vmatpush1.msra.mxu0 0.0
      %4303 = vmatprep.subr.mxu0 0.0
      %4304 = vmatpush1.msra.mxu0 0.0
      %4305 = vmatprep.subr.mxu0 0.0
      %4306 = vmatpush1.msra.mxu0 0.0
      %4307 = vmatprep.subr.mxu0 0.0
      %4308 = vmatpush1.msra.mxu0 0.0
      %4309 = vmatprep.subr.mxu0 0.0
      %4310 = vmatpush1.msra.mxu0 0.0
      %4311 = vmatprep.subr.mxu0 0.0
      %4312 = vmatpush1.msra.mxu0 0.0
      %4313 = vmatprep.subr.mxu0 0.0
      %4314 = vmatpush1.msra.mxu0 0.0
      %4315 = vmatprep.subr.mxu0 0.0
      %4316 = vmatpush1.msra.mxu0 0.0
      %4317 = vmatprep.subr.mxu0 0.0
      %4318 = vmatpush1.msra.mxu0 0.0
      %4319 = vmatprep.subr.mxu0 0.0
      %4320 = vmatpush1.msra.mxu0 0.0
      %4321 = vmatprep.subr.mxu0 0.0
      %4322 = vmatpush1.msra.mxu0 0.0
      %4323 = vmatprep.subr.mxu0 0.0
      %4324 = vmatpush1.msra.mxu0 0.0
      %4325 = vmatprep.subr.mxu0 0.0
      %4326 = vmatpush1.msra.mxu0 0.0
      %4327 = vmatprep.subr.mxu0 0.0
      %4328 = vmatpush1.msra.mxu0 0.0
      %4329 = vmatprep.subr.mxu0 0.0
      %4330 = vmatpush1.msra.mxu0 0.0
      %4331 = vmatprep.subr.mxu0 0.0
      %4332 = vmatpush1.msra.mxu0 0.0
      %4333 = vmatprep.subr.mxu0 0.0
      %4334 = vmatpush1.msra.mxu0 0.0
      %4335 = vmatprep.subr.mxu0 0.0
      %4336 = vmatpush1.msra.mxu0 0.0
      %4337 = vmatprep.subr.mxu0 0.0
      %4338 = vmatpush1.msra.mxu0 0.0
      %4339 = vmatprep.subr.mxu0 0.0
      %4340 = vmatpush1.msra.mxu0 0.0
      %4341 = vmatprep.mubr.f32.mxu0 0.0
      %v4342 = vand.u32 %v3114, 4294901760
      %v4343 = vsub.f32 %v3114, %v4342
      %4344 = vmatmul.mubr.f32.gmra.mrb[0].mxu0 %v4343
      %v4345 = vpop.f32.mrb[0].mxu0
      %v4346 = vadd.f32 %v4216, %v4345
      %v4347 = vpop.f32.mrb[0].mxu0
      %v4348 = vadd.f32 %v4218, %v4347
      %4349 = vmatprep.mubr.f32.mxu0 0.0
      %v4350 = vand.u32 %v3117, 4294901760
      %v4351 = vsub.f32 %v3117, %v4350
      %4352 = vmatmul.mubr.f32.gmra.mrb[0].mxu0 %v4351
      %v4353 = vpop.f32.mrb[0].mxu0
      %v4354 = vadd.f32 %v4223, %v4353
      %v4355 = vpop.f32.mrb[0].mxu0
      %v4356 = vadd.f32 %v4225, %v4355
      %4357 = vmatprep.mubr.f32.mxu0 0.0
      %v4358 = vand.u32 %v3120, 4294901760
      %v4359 = vsub.f32 %v3120, %v4358
      %4360 = vmatmul.mubr.f32.gmra.mrb[0].mxu0 %v4359
      %v4361 = vpop.f32.mrb[0].mxu0
      %v4362 = vadd.f32 %v4230, %v4361
      %v4363 = vpop.f32.mrb[0].mxu0
      %v4364 = vadd.f32 %v4232, %v4363
      %4365 = vmatprep.mubr.f32.mxu0 0.0
      %v4366 = vand.u32 %v3123, 4294901760
      %v4367 = vsub.f32 %v3123, %v4366
      %4368 = vmatmul.mubr.f32.gmra.mrb[0].mxu0 %v4367
      %v4369 = vpop.f32.mrb[0].mxu0
      %v4370 = vadd.f32 %v4237, %v4369
      %v4371 = vpop.f32.mrb[0].mxu0
      %v4372 = vadd.f32 %v4239, %v4371
      %4373 = vmatprep.mubr.f32.mxu0 0.0
      %v4374 = vand.u32 %v3126, 4294901760
      %v4375 = vsub.f32 %v3126, %v4374
      %4376 = vmatmul.mubr.f32.gmra.mrb[0].mxu0 %v4375
      %v4377 = vpop.f32.mrb[0].mxu0
      %v4378 = vadd.f32 %v4244, %v4377
      %v4379 = vpop.f32.mrb[0].mxu0
      %v4380 = vadd.f32 %v4246, %v4379
      %4381 = vmatprep.mubr.f32.mxu0 0.0
      %v4382 = vand.u32 %v3129, 4294901760
      %v4383 = vsub.f32 %v3129, %v4382
      %4384 = vmatmul.mubr.f32.gmra.mrb[0].mxu0 %v4383
      %v4385 = vpop.f32.mrb[0].mxu0
      %v4386 = vadd.f32 %v4251, %v4385
      %v4387 = vpop.f32.mrb[0].mxu0
      %v4388 = vadd.f32 %v4253, %v4387
      %4389 = vmatprep.mubr.f32.mxu0 0.0
      %v4390 = vand.u32 %v3132, 4294901760
      %v4391 = vsub.f32 %v3132, %v4390
      %4392 = vmatmul.mubr.f32.gmra.mrb[0].mxu0 %v4391
      %v4393 = vpop.f32.mrb[0].mxu0
      %v4394 = vadd.f32 %v4258, %v4393
      %v4395 = vpop.f32.mrb[0].mxu0
      %v4396 = vadd.f32 %v4260, %v4395
      %4397 = vmatprep.mubr.f32.mxu0 0.0
      %v4398 = vand.u32 %v3135, 4294901760
      %v4399 = vsub.f32 %v3135, %v4398
      %4400 = vmatmul.mubr.f32.gmra.mrb[0].mxu0 %v4399
      %v4401 = vpop.f32.mrb[0].mxu0
      %v4402 = vadd.f32 %v4265, %v4401
      %v4403 = vpop.f32.mrb[0].mxu0
      %v4404 = vadd.f32 %v4267, %v4403
      %4405 = vdwg.mxu0
      %v4406 = vand.u32 %v3107, 4294901760
      %4407 = vmatprep.subr.mxu0 %v4406
      %v4408 = vand.u32 %v3106, 4294901760
      %4409 = vmatpush1.msra.mxu0 %v4408
      %v4410 = vand.u32 %v3111, 4294901760
      %4411 = vmatprep.subr.mxu0 %v4410
      %v4412 = vand.u32 %v3110, 4294901760
      %4413 = vmatpush1.msra.mxu0 %v4412
      %4414 = vmatprep.subr.mxu0 0.0
      %4415 = vmatpush1.msra.mxu0 0.0
      %4416 = vmatprep.subr.mxu0 0.0
      %4417 = vmatpush1.msra.mxu0 0.0
      %4418 = vmatprep.subr.mxu0 0.0
      %4419 = vmatpush1.msra.mxu0 0.0
      %4420 = vmatprep.subr.mxu0 0.0
      %4421 = vmatpush1.msra.mxu0 0.0
      %4422 = vmatprep.subr.mxu0 0.0
      %4423 = vmatpush1.msra.mxu0 0.0
      %4424 = vmatprep.subr.mxu0 0.0
      %4425 = vmatpush1.msra.mxu0 0.0
      %4426 = vmatprep.subr.mxu0 0.0
      %4427 = vmatpush1.msra.mxu0 0.0
      %4428 = vmatprep.subr.mxu0 0.0
      %4429 = vmatpush1.msra.mxu0 0.0
      %4430 = vmatprep.subr.mxu0 0.0
      %4431 = vmatpush1.msra.mxu0 0.0
      %4432 = vmatprep.subr.mxu0 0.0
      %4433 = vmatpush1.msra.mxu0 0.0
      %4434 = vmatprep.subr.mxu0 0.0
      %4435 = vmatpush1.msra.mxu0 0.0
      %4436 = vmatprep.subr.mxu0 0.0
      %4437 = vmatpush1.msra.mxu0 0.0
      %4438 = vmatprep.subr.mxu0 0.0
      %4439 = vmatpush1.msra.mxu0 0.0
      %4440 = vmatprep.subr.mxu0 0.0
      %4441 = vmatpush1.msra.mxu0 0.0
      %4442 = vmatprep.subr.mxu0 0.0
      %4443 = vmatpush1.msra.mxu0 0.0
      %4444 = vmatprep.subr.mxu0 0.0
      %4445 = vmatpush1.msra.mxu0 0.0
      %4446 = vmatprep.subr.mxu0 0.0
      %4447 = vmatpush1.msra.mxu0 0.0
      %4448 = vmatprep.subr.mxu0 0.0
      %4449 = vmatpush1.msra.mxu0 0.0
      %4450 = vmatprep.subr.mxu0 0.0
      %4451 = vmatpush1.msra.mxu0 0.0
      %4452 = vmatprep.subr.mxu0 0.0
      %4453 = vmatpush1.msra.mxu0 0.0
      %4454 = vmatprep.subr.mxu0 0.0
      %4455 = vmatpush1.msra.mxu0 0.0
      %4456 = vmatprep.subr.mxu0 0.0
      %4457 = vmatpush1.msra.mxu0 0.0
      %4458 = vmatprep.subr.mxu0 0.0
      %4459 = vmatpush1.msra.mxu0 0.0
      %4460 = vmatprep.subr.mxu0 0.0
      %4461 = vmatpush1.msra.mxu0 0.0
      %4462 = vmatprep.subr.mxu0 0.0
      %4463 = vmatpush1.msra.mxu0 0.0
      %4464 = vmatprep.subr.mxu0 0.0
      %4465 = vmatpush1.msra.mxu0 0.0
      %4466 = vmatprep.subr.mxu0 0.0
      %4467 = vmatpush1.msra.mxu0 0.0
      %4468 = vmatprep.subr.mxu0 0.0
      %4469 = vmatpush1.msra.mxu0 0.0
      %4470 = vmatprep.subr.mxu0 0.0
      %4471 = vmatpush1.msra.mxu0 0.0
      %4472 = vmatprep.subr.mxu0 0.0
      %4473 = vmatpush1.msra.mxu0 0.0
      %4474 = vmatprep.mubr.f32.mxu0 0.0
      %v4475 = vand.u32 %v3114, 4294901760
      %v4476 = vsub.f32 %v3114, %v4475
      %v4477 = vand.u32 %v4476, 4294901760
      %4478 = vmatmul.mubr.f32.gmra.mrb[0].mxu0 %v4477
      %v4479 = vpop.f32.mrb[0].mxu0
      %v4480 = vadd.f32 %v4346, %v4479
      %v4481 = vpop.f32.mrb[0].mxu0
      %v4482 = vadd.f32 %v4348, %v4481
      %4483 = vmatprep.mubr.f32.mxu0 0.0
      %v4484 = vand.u32 %v3117, 4294901760
      %v4485 = vsub.f32 %v3117, %v4484
      %v4486 = vand.u32 %v4485, 4294901760
      %4487 = vmatmul.mubr.f32.gmra.mrb[0].mxu0 %v4486
      %v4488 = vpop.f32.mrb[0].mxu0
      %v4489 = vadd.f32 %v4354, %v4488
      %v4490 = vpop.f32.mrb[0].mxu0
      %v4491 = vadd.f32 %v4356, %v4490
      %4492 = vmatprep.mubr.f32.mxu0 0.0
      %v4493 = vand.u32 %v3120, 4294901760
      %v4494 = vsub.f32 %v3120, %v4493
      %v4495 = vand.u32 %v4494, 4294901760
      %4496 = vmatmul.mubr.f32.gmra.mrb[0].mxu0 %v4495
      %v4497 = vpop.f32.mrb[0].mxu0
      %v4498 = vadd.f32 %v4362, %v4497
      %v4499 = vpop.f32.mrb[0].mxu0
      %v4500 = vadd.f32 %v4364, %v4499
      %4501 = vmatprep.mubr.f32.mxu0 0.0
      %v4502 = vand.u32 %v3123, 4294901760
      %v4503 = vsub.f32 %v3123, %v4502
      %v4504 = vand.u32 %v4503, 4294901760
      %4505 = vmatmul.mubr.f32.gmra.mrb[0].mxu0 %v4504
      %v4506 = vpop.f32.mrb[0].mxu0
      %v4507 = vadd.f32 %v4370, %v4506
      %v4508 = vpop.f32.mrb[0].mxu0
      %v4509 = vadd.f32 %v4372, %v4508
      %4510 = vmatprep.mubr.f32.mxu0 0.0
      %v4511 = vand.u32 %v3126, 4294901760
      %v4512 = vsub.f32 %v3126, %v4511
      %v4513 = vand.u32 %v4512, 4294901760
      %4514 = vmatmul.mubr.f32.gmra.mrb[0].mxu0 %v4513
      %v4515 = vpop.f32.mrb[0].mxu0
      %v4516 = vadd.f32 %v4378, %v4515
      %v4517 = vpop.f32.mrb[0].mxu0
      %v4518 = vadd.f32 %v4380, %v4517
      %4519 = vmatprep.mubr.f32.mxu0 0.0
      %v4520 = vand.u32 %v3129, 4294901760
      %v4521 = vsub.f32 %v3129, %v4520
      %v4522 = vand.u32 %v4521, 4294901760
      %4523 = vmatmul.mubr.f32.gmra.mrb[0].mxu0 %v4522
      %v4524 = vpop.f32.mrb[0].mxu0
      %v4525 = vadd.f32 %v4386, %v4524
      %v4526 = vpop.f32.mrb[0].mxu0
      %v4527 = vadd.f32 %v4388, %v4526
      %4528 = vmatprep.mubr.f32.mxu0 0.0
      %v4529 = vand.u32 %v3132, 4294901760
      %v4530 = vsub.f32 %v3132, %v4529
      %v4531 = vand.u32 %v4530, 4294901760
      %4532 = vmatmul.mubr.f32.gmra.mrb[0].mxu0 %v4531
      %v4533 = vpop.f32.mrb[0].mxu0
      %v4534 = vadd.f32 %v4394, %v4533
      %v4535 = vpop.f32.mrb[0].mxu0
      %v4536 = vadd.f32 %v4396, %v4535
      %4537 = vmatprep.mubr.f32.mxu0 0.0
      %v4538 = vand.u32 %v3135, 4294901760
      %v4539 = vsub.f32 %v3135, %v4538
      %v4540 = vand.u32 %v4539, 4294901760
      %4541 = vmatmul.mubr.f32.gmra.mrb[0].mxu0 %v4540
      %v4542 = vpop.f32.mrb[0].mxu0
      %v4543 = vadd.f32 %v4402, %v4542
      %v4544 = vpop.f32.mrb[0].mxu0
      %v4545 = vadd.f32 %v4404, %v4544
      %4546 = vdwg.mxu0
      %v4547 = vand.u32 %v3107, 4294901760
      %v4548 = vsub.f32 %v3107, %v4547
      %v4549 = vand.u32 %v4548, 4294901760
      %4550 = vmatprep.subr.mxu0 %v4549
      %v4551 = vand.u32 %v3106, 4294901760
      %v4552 = vsub.f32 %v3106, %v4551
      %v4553 = vand.u32 %v4552, 4294901760
      %4554 = vmatpush1.msra.mxu0 %v4553
      %v4555 = vand.u32 %v3111, 4294901760
      %v4556 = vsub.f32 %v3111, %v4555
      %v4557 = vand.u32 %v4556, 4294901760
      %4558 = vmatprep.subr.mxu0 %v4557
      %v4559 = vand.u32 %v3110, 4294901760
      %v4560 = vsub.f32 %v3110, %v4559
      %v4561 = vand.u32 %v4560, 4294901760
      %4562 = vmatpush1.msra.mxu0 %v4561
      %4563 = vmatprep.subr.mxu0 0.0
      %4564 = vmatpush1.msra.mxu0 0.0
      %4565 = vmatprep.subr.mxu0 0.0
      %4566 = vmatpush1.msra.mxu0 0.0
      %4567 = vmatprep.subr.mxu0 0.0
      %4568 = vmatpush1.msra.mxu0 0.0
      %4569 = vmatprep.subr.mxu0 0.0
      %4570 = vmatpush1.msra.mxu0 0.0
      %4571 = vmatprep.subr.mxu0 0.0
      %4572 = vmatpush1.msra.mxu0 0.0
      %4573 = vmatprep.subr.mxu0 0.0
      %4574 = vmatpush1.msra.mxu0 0.0
      %4575 = vmatprep.subr.mxu0 0.0
      %4576 = vmatpush1.msra.mxu0 0.0
      %4577 = vmatprep.subr.mxu0 0.0
      %4578 = vmatpush1.msra.mxu0 0.0
      %4579 = vmatprep.subr.mxu0 0.0
      %4580 = vmatpush1.msra.mxu0 0.0
      %4581 = vmatprep.subr.mxu0 0.0
      %4582 = vmatpush1.msra.mxu0 0.0
      %4583 = vmatprep.subr.mxu0 0.0
      %4584 = vmatpush1.msra.mxu0 0.0
      %4585 = vmatprep.subr.mxu0 0.0
      %4586 = vmatpush1.msra.mxu0 0.0
      %4587 = vmatprep.subr.mxu0 0.0
      %4588 = vmatpush1.msra.mxu0 0.0
      %4589 = vmatprep.subr.mxu0 0.0
      %4590 = vmatpush1.msra.mxu0 0.0
      %4591 = vmatprep.subr.mxu0 0.0
      %4592 = vmatpush1.msra.mxu0 0.0
      %4593 = vmatprep.subr.mxu0 0.0
      %4594 = vmatpush1.msra.mxu0 0.0
      %4595 = vmatprep.subr.mxu0 0.0
      %4596 = vmatpush1.msra.mxu0 0.0
      %4597 = vmatprep.subr.mxu0 0.0
      %4598 = vmatpush1.msra.mxu0 0.0
      %4599 = vmatprep.subr.mxu0 0.0
      %4600 = vmatpush1.msra.mxu0 0.0
      %4601 = vmatprep.subr.mxu0 0.0
      %4602 = vmatpush1.msra.mxu0 0.0
      %4603 = vmatprep.subr.mxu0 0.0
      %4604 = vmatpush1.msra.mxu0 0.0
      %4605 = vmatprep.subr.mxu0 0.0
      %4606 = vmatpush1.msra.mxu0 0.0
      %4607 = vmatprep.subr.mxu0 0.0
      %4608 = vmatpush1.msra.mxu0 0.0
      %4609 = vmatprep.subr.mxu0 0.0
      %4610 = vmatpush1.msra.mxu0 0.0
      %4611 = vmatprep.subr.mxu0 0.0
      %4612 = vmatpush1.msra.mxu0 0.0
      %4613 = vmatprep.subr.mxu0 0.0
      %4614 = vmatpush1.msra.mxu0 0.0
      %4615 = vmatprep.subr.mxu0 0.0
      %4616 = vmatpush1.msra.mxu0 0.0
      %4617 = vmatprep.subr.mxu0 0.0
      %4618 = vmatpush1.msra.mxu0 0.0
      %4619 = vmatprep.subr.mxu0 0.0
      %4620 = vmatpush1.msra.mxu0 0.0
      %4621 = vmatprep.subr.mxu0 0.0
      %4622 = vmatpush1.msra.mxu0 0.0
      %4623 = vmatprep.mubr.f32.mxu0 0.0
      %v4624 = vand.u32 %v3114, 4294901760
      %4625 = vmatmul.mubr.f32.gmra.mrb[0].mxu0 %v4624
      %v4626 = vpop.f32.mrb[0].mxu0
      %v4627 = vadd.f32 %v4480, %v4626
      %v4628 = vpop.f32.mrb[0].mxu0
      %v4629 = vadd.f32 %v4482, %v4628
      %4630 = vmatprep.mubr.f32.mxu0 0.0
      %v4631 = vand.u32 %v3117, 4294901760
      %4632 = vmatmul.mubr.f32.gmra.mrb[0].mxu0 %v4631
      %v4633 = vpop.f32.mrb[0].mxu0
      %v4634 = vadd.f32 %v4489, %v4633
      %v4635 = vpop.f32.mrb[0].mxu0
      %v4636 = vadd.f32 %v4491, %v4635
      %4637 = vmatprep.mubr.f32.mxu0 0.0
      %v4638 = vand.u32 %v3120, 4294901760
      %4639 = vmatmul.mubr.f32.gmra.mrb[0].mxu0 %v4638
      %v4640 = vpop.f32.mrb[0].mxu0
      %v4641 = vadd.f32 %v4498, %v4640
      %v4642 = vpop.f32.mrb[0].mxu0
      %v4643 = vadd.f32 %v4500, %v4642
      %4644 = vmatprep.mubr.f32.mxu0 0.0
      %v4645 = vand.u32 %v3123, 4294901760
      %4646 = vmatmul.mubr.f32.gmra.mrb[0].mxu0 %v4645
      %v4647 = vpop.f32.mrb[0].mxu0
      %v4648 = vadd.f32 %v4507, %v4647
      %v4649 = vpop.f32.mrb[0].mxu0
      %v4650 = vadd.f32 %v4509, %v4649
      %4651 = vmatprep.mubr.f32.mxu0 0.0
      %v4652 = vand.u32 %v3126, 4294901760
      %4653 = vmatmul.mubr.f32.gmra.mrb[0].mxu0 %v4652
      %v4654 = vpop.f32.mrb[0].mxu0
      %v4655 = vadd.f32 %v4516, %v4654
      %v4656 = vpop.f32.mrb[0].mxu0
      %v4657 = vadd.f32 %v4518, %v4656
      %4658 = vmatprep.mubr.f32.mxu0 0.0
      %v4659 = vand.u32 %v3129, 4294901760
      %4660 = vmatmul.mubr.f32.gmra.mrb[0].mxu0 %v4659
      %v4661 = vpop.f32.mrb[0].mxu0
      %v4662 = vadd.f32 %v4525, %v4661
      %v4663 = vpop.f32.mrb[0].mxu0
      %v4664 = vadd.f32 %v4527, %v4663
      %4665 = vmatprep.mubr.f32.mxu0 0.0
      %v4666 = vand.u32 %v3132, 4294901760
      %4667 = vmatmul.mubr.f32.gmra.mrb[0].mxu0 %v4666
      %v4668 = vpop.f32.mrb[0].mxu0
      %v4669 = vadd.f32 %v4534, %v4668
      %v4670 = vpop.f32.mrb[0].mxu0
      %v4671 = vadd.f32 %v4536, %v4670
      %4672 = vmatprep.mubr.f32.mxu0 0.0
      %v4673 = vand.u32 %v3135, 4294901760
      %4674 = vmatmul.mubr.f32.gmra.mrb[0].mxu0 %v4673
      %v4675 = vpop.f32.mrb[0].mxu0
      %v4676 = vadd.f32 %v4543, %v4675
      %v4677 = vpop.f32.mrb[0].mxu0
      %v4678 = vadd.f32 %v4545, %v4677
      %4679 = vdwg.mxu0
      %v4680 = vand.u32 %v3107, 4294901760
      %4681 = vmatprep.subr.mxu0 %v4680
      %v4682 = vand.u32 %v3106, 4294901760
      %4683 = vmatpush1.msra.mxu0 %v4682
      %v4684 = vand.u32 %v3111, 4294901760
      %4685 = vmatprep.subr.mxu0 %v4684
      %v4686 = vand.u32 %v3110, 4294901760
      %4687 = vmatpush1.msra.mxu0 %v4686
      %4688 = vmatprep.subr.mxu0 0.0
      %4689 = vmatpush1.msra.mxu0 0.0
      %4690 = vmatprep.subr.mxu0 0.0
      %4691 = vmatpush1.msra.mxu0 0.0
      %4692 = vmatprep.subr.mxu0 0.0
      %4693 = vmatpush1.msra.mxu0 0.0
      %4694 = vmatprep.subr.mxu0 0.0
      %4695 = vmatpush1.msra.mxu0 0.0
      %4696 = vmatprep.subr.mxu0 0.0
      %4697 = vmatpush1.msra.mxu0 0.0
      %4698 = vmatprep.subr.mxu0 0.0
      %4699 = vmatpush1.msra.mxu0 0.0
      %4700 = vmatprep.subr.mxu0 0.0
      %4701 = vmatpush1.msra.mxu0 0.0
      %4702 = vmatprep.subr.mxu0 0.0
      %4703 = vmatpush1.msra.mxu0 0.0
      %4704 = vmatprep.subr.mxu0 0.0
      %4705 = vmatpush1.msra.mxu0 0.0
      %4706 = vmatprep.subr.mxu0 0.0
      %4707 = vmatpush1.msra.mxu0 0.0
      %4708 = vmatprep.subr.mxu0 0.0
      %4709 = vmatpush1.msra.mxu0 0.0
      %4710 = vmatprep.subr.mxu0 0.0
      %4711 = vmatpush1.msra.mxu0 0.0
      %4712 = vmatprep.subr.mxu0 0.0
      %4713 = vmatpush1.msra.mxu0 0.0
      %4714 = vmatprep.subr.mxu0 0.0
      %4715 = vmatpush1.msra.mxu0 0.0
      %4716 = vmatprep.subr.mxu0 0.0
      %4717 = vmatpush1.msra.mxu0 0.0
      %4718 = vmatprep.subr.mxu0 0.0
      %4719 = vmatpush1.msra.mxu0 0.0
      %4720 = vmatprep.subr.mxu0 0.0
      %4721 = vmatpush1.msra.mxu0 0.0
      %4722 = vmatprep.subr.mxu0 0.0
      %4723 = vmatpush1.msra.mxu0 0.0
      %4724 = vmatprep.subr.mxu0 0.0
      %4725 = vmatpush1.msra.mxu0 0.0
      %4726 = vmatprep.subr.mxu0 0.0
      %4727 = vmatpush1.msra.mxu0 0.0
      %4728 = vmatprep.subr.mxu0 0.0
      %4729 = vmatpush1.msra.mxu0 0.0
      %4730 = vmatprep.subr.mxu0 0.0
      %4731 = vmatpush1.msra.mxu0 0.0
      %4732 = vmatprep.subr.mxu0 0.0
      %4733 = vmatpush1.msra.mxu0 0.0
      %4734 = vmatprep.subr.mxu0 0.0
      %4735 = vmatpush1.msra.mxu0 0.0
      %4736 = vmatprep.subr.mxu0 0.0
      %4737 = vmatpush1.msra.mxu0 0.0
      %4738 = vmatprep.subr.mxu0 0.0
      %4739 = vmatpush1.msra.mxu0 0.0
      %4740 = vmatprep.subr.mxu0 0.0
      %4741 = vmatpush1.msra.mxu0 0.0
      %4742 = vmatprep.subr.mxu0 0.0
      %4743 = vmatpush1.msra.mxu0 0.0
      %4744 = vmatprep.subr.mxu0 0.0
      %4745 = vmatpush1.msra.mxu0 0.0
      %4746 = vmatprep.subr.mxu0 0.0
      %4747 = vmatpush1.msra.mxu0 0.0
      %4748 = vmatprep.mubr.f32.mxu0 0.0
      %v4749 = vand.u32 %v3114, 4294901760
      %4750 = vmatmul.mubr.f32.gmra.mrb[0].mxu0 %v4749
      %v4751 = vpop.f32.mrb[0].mxu0
      %v4752 = vadd.f32 %v4627, %v4751
      %v4753 = vpop.f32.mrb[0].mxu0
      %v4754 = vadd.f32 %v4629, %v4753
      %4755 = vmatprep.mubr.f32.mxu0 0.0
      %v4756 = vand.u32 %v3117, 4294901760
      %4757 = vmatmul.mubr.f32.gmra.mrb[0].mxu0 %v4756
      %v4758 = vpop.f32.mrb[0].mxu0
      %v4759 = vadd.f32 %v4634, %v4758
      %v4760 = vpop.f32.mrb[0].mxu0
      %v4761 = vadd.f32 %v4636, %v4760
      %4762 = vmatprep.mubr.f32.mxu0 0.0
      %v4763 = vand.u32 %v3120, 4294901760
      %4764 = vmatmul.mubr.f32.gmra.mrb[0].mxu0 %v4763
      %v4765 = vpop.f32.mrb[0].mxu0
      %v4766 = vadd.f32 %v4641, %v4765
      %v4767 = vpop.f32.mrb[0].mxu0
      %v4768 = vadd.f32 %v4643, %v4767
      %4769 = vmatprep.mubr.f32.mxu0 0.0
      %v4770 = vand.u32 %v3123, 4294901760
      %4771 = vmatmul.mubr.f32.gmra.mrb[0].mxu0 %v4770
      %v4772 = vpop.f32.mrb[0].mxu0
      %v4773 = vadd.f32 %v4648, %v4772
      %v4774 = vpop.f32.mrb[0].mxu0
      %v4775 = vadd.f32 %v4650, %v4774
      %4776 = vmatprep.mubr.f32.mxu0 0.0
      %v4777 = vand.u32 %v3126, 4294901760
      %4778 = vmatmul.mubr.f32.gmra.mrb[0].mxu0 %v4777
      %v4779 = vpop.f32.mrb[0].mxu0
      %v4780 = vadd.f32 %v4655, %v4779
      %v4781 = vpop.f32.mrb[0].mxu0
      %v4782 = vadd.f32 %v4657, %v4781
      %4783 = vmatprep.mubr.f32.mxu0 0.0
      %v4784 = vand.u32 %v3129, 4294901760
      %4785 = vmatmul.mubr.f32.gmra.mrb[0].mxu0 %v4784
      %v4786 = vpop.f32.mrb[0].mxu0
      %v4787 = vadd.f32 %v4662, %v4786
      %v4788 = vpop.f32.mrb[0].mxu0
      %v4789 = vadd.f32 %v4664, %v4788
      %4790 = vmatprep.mubr.f32.mxu0 0.0
      %v4791 = vand.u32 %v3132, 4294901760
      %4792 = vmatmul.mubr.f32.gmra.mrb[0].mxu0 %v4791
      %v4793 = vpop.f32.mrb[0].mxu0
      %v4794 = vadd.f32 %v4669, %v4793
      %v4795 = vpop.f32.mrb[0].mxu0
      %v4796 = vadd.f32 %v4671, %v4795
      %4797 = vmatprep.mubr.f32.mxu0 0.0
      %v4798 = vand.u32 %v3135, 4294901760
      %4799 = vmatmul.mubr.f32.gmra.mrb[0].mxu0 %v4798
      %v4800 = vpop.f32.mrb[0].mxu0
      %v4801 = vadd.f32 %v4676, %v4800
      %v4802 = vpop.f32.mrb[0].mxu0
      %v4803 = vadd.f32 %v4678, %v4802
      %4804 = vdwg.mxu0
      %v4805 = vsub.f32 %v373, %v3918
      %v4806 = vsub.f32 %v375, %v3920
      %v4807 = vsub.f32 %v486, %v4752
      %v4808 = vsub.f32 %v488, %v4754
      %v4809 = vsub.f32 %v379, %v3925
      %v4810 = vsub.f32 %v381, %v3927
      %v4811 = vsub.f32 %v492, %v4759
      %v4812 = vsub.f32 %v494, %v4761
      %v4813 = vsub.f32 %v385, %v3932
      %v4814 = vsub.f32 %v387, %v3934
      %v4815 = vsub.f32 %v498, %v4766
      %v4816 = vsub.f32 %v500, %v4768
      %v4817 = vsub.f32 %v391, %v3939
      %v4818 = vsub.f32 %v393, %v3941
      %v4819 = vsub.f32 %v504, %v4773
      %v4820 = vsub.f32 %v506, %v4775
      %v4821 = vsub.f32 %v397, %v3946
      %v4822 = vsub.f32 %v399, %v3948
      %v4823 = vsub.f32 %v510, %v4780
      %v4824 = vsub.f32 %v512, %v4782
      %v4825 = vsub.f32 %v403, %v3953
      %v4826 = vsub.f32 %v405, %v3955
      %v4827 = vsub.f32 %v516, %v4787
      %v4828 = vsub.f32 %v518, %v4789
      %v4829 = vsub.f32 %v409, %v3960
      %v4830 = vsub.f32 %v411, %v3962
      %v4831 = vsub.f32 %v522, %v4794
      %v4832 = vsub.f32 %v524, %v4796
      %v4833 = vsub.f32 %v415, %v3967
      %v4834 = vsub.f32 %v417, %v3969
      %v4835 = vsub.f32 %v528, %v4801
      %v4836 = vsub.f32 %v530, %v4803
      %v4837 = vmul.f32 %v4805, %v4805
      %v4838 = vmul.f32 %v4806, %v4806
      %v4839 = vmul.f32 %v4807, %v4807
      %v4840 = vmul.f32 %v4808, %v4808
      %v4841 = vmul.f32 %v4809, %v4809
      %v4842 = vmul.f32 %v4810, %v4810
      %v4843 = vmul.f32 %v4811, %v4811
      %v4844 = vmul.f32 %v4812, %v4812
      %v4845 = vmul.f32 %v4813, %v4813
      %v4846 = vmul.f32 %v4814, %v4814
      %v4847 = vmul.f32 %v4815, %v4815
      %v4848 = vmul.f32 %v4816, %v4816
      %v4849 = vmul.f32 %v4817, %v4817
      %v4850 = vmul.f32 %v4818, %v4818
      %v4851 = vmul.f32 %v4819, %v4819
      %v4852 = vmul.f32 %v4820, %v4820
      %v4853 = vmul.f32 %v4821, %v4821
      %v4854 = vmul.f32 %v4822, %v4822
      %v4855 = vmul.f32 %v4823, %v4823
      %v4856 = vmul.f32 %v4824, %v4824
      %v4857 = vmul.f32 %v4825, %v4825
      %v4858 = vmul.f32 %v4826, %v4826
      %v4859 = vmul.f32 %v4827, %v4827
      %v4860 = vmul.f32 %v4828, %v4828
      %v4861 = vmul.f32 %v4829, %v4829
      %v4862 = vmul.f32 %v4830, %v4830
      %v4863 = vmul.f32 %v4831, %v4831
      %v4864 = vmul.f32 %v4832, %v4832
      %v4865 = vmul.f32 %v4833, %v4833
      %v4866 = vmul.f32 %v4834, %v4834
      %v4867 = vmul.f32 %v4835, %v4835
      %v4868 = vmul.f32 %v4836, %v4836
      %4869 = vmatprep.subr.mxu0 0.0
      %v4870 = vand.u32 %v532, 4294901760
      %4871 = vmatpush1.msra.mxu0 %v4870
      %4872 = vmatprep.subr.mxu0 0.0
      %v4873 = vand.u32 %v533, 4294901760
      %4874 = vmatpush1.msra.mxu0 %v4873
      %4875 = vmatprep.subr.mxu0 0.0
      %v4876 = vand.u32 %v534, 4294901760
      %4877 = vmatpush1.msra.mxu0 %v4876
      %4878 = vmatprep.subr.mxu0 0.0
      %v4879 = vand.u32 %v535, 4294901760
      %4880 = vmatpush1.msra.mxu0 %v4879
      %4881 = vmatprep.subr.mxu0 0.0
      %v4882 = vand.u32 %v536, 4294901760
      %4883 = vmatpush1.msra.mxu0 %v4882
      %4884 = vmatprep.subr.mxu0 0.0
      %v4885 = vand.u32 %v537, 4294901760
      %4886 = vmatpush1.msra.mxu0 %v4885
      %4887 = vmatprep.subr.mxu0 0.0
      %v4888 = vand.u32 %v538, 4294901760
      %4889 = vmatpush1.msra.mxu0 %v4888
      %4890 = vmatprep.subr.mxu0 0.0
      %v4891 = vand.u32 %v539, 4294901760
      %4892 = vmatpush1.msra.mxu0 %v4891
      %4893 = vmatprep.subr.mxu0 0.0
      %v4894 = vand.u32 %v540, 4294901760
      %4895 = vmatpush1.msra.mxu0 %v4894
      %4896 = vmatprep.subr.mxu0 0.0
      %v4897 = vand.u32 %v541, 4294901760
      %4898 = vmatpush1.msra.mxu0 %v4897
      %4899 = vmatprep.subr.mxu0 0.0
      %v4900 = vand.u32 %v542, 4294901760
      %4901 = vmatpush1.msra.mxu0 %v4900
      %4902 = vmatprep.subr.mxu0 0.0
      %v4903 = vand.u32 %v543, 4294901760
      %4904 = vmatpush1.msra.mxu0 %v4903
      %4905 = vmatprep.subr.mxu0 0.0
      %v4906 = vand.u32 %v544, 4294901760
      %4907 = vmatpush1.msra.mxu0 %v4906
      %4908 = vmatprep.subr.mxu0 0.0
      %v4909 = vand.u32 %v545, 4294901760
      %4910 = vmatpush1.msra.mxu0 %v4909
      %4911 = vmatprep.subr.mxu0 0.0
      %v4912 = vand.u32 %v546, 4294901760
      %4913 = vmatpush1.msra.mxu0 %v4912
      %4914 = vmatprep.subr.mxu0 0.0
      %v4915 = vand.u32 %v547, 4294901760
      %4916 = vmatpush1.msra.mxu0 %v4915
      %4917 = vmatprep.subr.mxu0 0.0
      %v4918 = vand.u32 %v548, 4294901760
      %4919 = vmatpush1.msra.mxu0 %v4918
      %4920 = vmatprep.subr.mxu0 0.0
      %v4921 = vand.u32 %v549, 4294901760
      %4922 = vmatpush1.msra.mxu0 %v4921
      %4923 = vmatprep.subr.mxu0 0.0
      %v4924 = vand.u32 %v550, 4294901760
      %4925 = vmatpush1.msra.mxu0 %v4924
      %4926 = vmatprep.subr.mxu0 0.0
      %v4927 = vand.u32 %v551, 4294901760
      %4928 = vmatpush1.msra.mxu0 %v4927
      %4929 = vmatprep.subr.mxu0 0.0
      %v4930 = vand.u32 %v552, 4294901760
      %4931 = vmatpush1.msra.mxu0 %v4930
      %4932 = vmatprep.subr.mxu0 0.0
      %v4933 = vand.u32 %v553, 4294901760
      %4934 = vmatpush1.msra.mxu0 %v4933
      %4935 = vmatprep.subr.mxu0 0.0
      %v4936 = vand.u32 %v554, 4294901760
      %4937 = vmatpush1.msra.mxu0 %v4936
      %4938 = vmatprep.subr.mxu0 0.0
      %v4939 = vand.u32 %v555, 4294901760
      %4940 = vmatpush1.msra.mxu0 %v4939
      %4941 = vmatprep.subr.mxu0 0.0
      %v4942 = vand.u32 %v556, 4294901760
      %4943 = vmatpush1.msra.mxu0 %v4942
      %4944 = vmatprep.subr.mxu0 0.0
      %v4945 = vand.u32 %v557, 4294901760
      %4946 = vmatpush1.msra.mxu0 %v4945
      %4947 = vmatprep.subr.mxu0 0.0
      %v4948 = vand.u32 %v558, 4294901760
      %4949 = vmatpush1.msra.mxu0 %v4948
      %4950 = vmatprep.subr.mxu0 0.0
      %v4951 = vand.u32 %v559, 4294901760
      %4952 = vmatpush1.msra.mxu0 %v4951
      %4953 = vmatprep.subr.mxu0 0.0
      %v4954 = vand.u32 %v560, 4294901760
      %4955 = vmatpush1.msra.mxu0 %v4954
      %4956 = vmatprep.subr.mxu0 0.0
      %v4957 = vand.u32 %v561, 4294901760
      %4958 = vmatpush1.msra.mxu0 %v4957
      %4959 = vmatprep.subr.mxu0 0.0
      %v4960 = vand.u32 %v562, 4294901760
      %4961 = vmatpush1.msra.mxu0 %v4960
      %4962 = vmatprep.subr.mxu0 0.0
      %v4963 = vand.u32 %v563, 4294901760
      %4964 = vmatpush1.msra.mxu0 %v4963
      %v4965 = vand.u32 %v4838, 4294901760
      %v4966 = vsub.f32 %v4838, %v4965
      %v4967 = vand.u32 %v4966, 4294901760
      %v4968 = vsub.f32 %v4966, %v4967
      %v4969 = vand.u32 %v4968, 4294901760
      %4970 = vmatprep.mubr.f32.mxu0 %v4969
      %v4971 = vand.u32 %v4837, 4294901760
      %v4972 = vsub.f32 %v4837, %v4971
      %v4973 = vand.u32 %v4972, 4294901760
      %v4974 = vsub.f32 %v4972, %v4973
      %v4975 = vand.u32 %v4974, 4294901760
      %4976 = vmatmul.mubr.f32.gmra.mrb[0].mxu0 %v4975
      %v4977 = vpop.f32.mrb[0].mxu0
      %v4978 = vadd.f32 1e-05, %v4977
      %v4979 = vpop.f32.mrb[0].mxu0
      %v4980 = vand.u32 %v4842, 4294901760
      %v4981 = vsub.f32 %v4842, %v4980
      %v4982 = vand.u32 %v4981, 4294901760
      %v4983 = vsub.f32 %v4981, %v4982
      %v4984 = vand.u32 %v4983, 4294901760
      %4985 = vmatprep.mubr.f32.mxu0 %v4984
      %v4986 = vand.u32 %v4841, 4294901760
      %v4987 = vsub.f32 %v4841, %v4986
      %v4988 = vand.u32 %v4987, 4294901760
      %v4989 = vsub.f32 %v4987, %v4988
      %v4990 = vand.u32 %v4989, 4294901760
      %4991 = vmatmul.mubr.f32.gmra.mrb[0].mxu0 %v4990
      %v4992 = vpop.f32.mrb[0].mxu0
      %v4993 = vadd.f32 1e-05, %v4992
      %v4994 = vpop.f32.mrb[0].mxu0
      %v4995 = vand.u32 %v4846, 4294901760
      %v4996 = vsub.f32 %v4846, %v4995
      %v4997 = vand.u32 %v4996, 4294901760
      %v4998 = vsub.f32 %v4996, %v4997
      %v4999 = vand.u32 %v4998, 4294901760
      %5000 = vmatprep.mubr.f32.mxu0 %v4999
      %v5001 = vand.u32 %v4845, 4294901760
      %v5002 = vsub.f32 %v4845, %v5001
      %v5003 = vand.u32 %v5002, 4294901760
      %v5004 = vsub.f32 %v5002, %v5003
      %v5005 = vand.u32 %v5004, 4294901760
      %5006 = vmatmul.mubr.f32.gmra.mrb[0].mxu0 %v5005
      %v5007 = vpop.f32.mrb[0].mxu0
      %v5008 = vadd.f32 1e-05, %v5007
      %v5009 = vpop.f32.mrb[0].mxu0
      %v5010 = vand.u32 %v4850, 4294901760
      %v5011 = vsub.f32 %v4850, %v5010
      %v5012 = vand.u32 %v5011, 4294901760
      %v5013 = vsub.f32 %v5011, %v5012
      %v5014 = vand.u32 %v5013, 4294901760
      %5015 = vmatprep.mubr.f32.mxu0 %v5014
      %v5016 = vand.u32 %v4849, 4294901760
      %v5017 = vsub.f32 %v4849, %v5016
      %v5018 = vand.u32 %v5017, 4294901760
      %v5019 = vsub.f32 %v5017, %v5018
      %v5020 = vand.u32 %v5019, 4294901760
      %5021 = vmatmul.mubr.f32.gmra.mrb[0].mxu0 %v5020
      %v5022 = vpop.f32.mrb[0].mxu0
      %v5023 = vadd.f32 1e-05, %v5022
      %v5024 = vpop.f32.mrb[0].mxu0
      %v5025 = vand.u32 %v4854, 4294901760
      %v5026 = vsub.f32 %v4854, %v5025
      %v5027 = vand.u32 %v5026, 4294901760
      %v5028 = vsub.f32 %v5026, %v5027
      %v5029 = vand.u32 %v5028, 4294901760
      %5030 = vmatprep.mubr.f32.mxu0 %v5029
      %v5031 = vand.u32 %v4853, 4294901760
      %v5032 = vsub.f32 %v4853, %v5031
      %v5033 = vand.u32 %v5032, 4294901760
      %v5034 = vsub.f32 %v5032, %v5033
      %v5035 = vand.u32 %v5034, 4294901760
      %5036 = vmatmul.mubr.f32.gmra.mrb[0].mxu0 %v5035
      %v5037 = vpop.f32.mrb[0].mxu0
      %v5038 = vadd.f32 1e-05, %v5037
      %v5039 = vpop.f32.mrb[0].mxu0
      %v5040 = vand.u32 %v4858, 4294901760
      %v5041 = vsub.f32 %v4858, %v5040
      %v5042 = vand.u32 %v5041, 4294901760
      %v5043 = vsub.f32 %v5041, %v5042
      %v5044 = vand.u32 %v5043, 4294901760
      %5045 = vmatprep.mubr.f32.mxu0 %v5044
      %v5046 = vand.u32 %v4857, 4294901760
      %v5047 = vsub.f32 %v4857, %v5046
      %v5048 = vand.u32 %v5047, 4294901760
      %v5049 = vsub.f32 %v5047, %v5048
      %v5050 = vand.u32 %v5049, 4294901760
      %5051 = vmatmul.mubr.f32.gmra.mrb[0].mxu0 %v5050
      %v5052 = vpop.f32.mrb[0].mxu0
      %v5053 = vadd.f32 1e-05, %v5052
      %v5054 = vpop.f32.mrb[0].mxu0
      %v5055 = vand.u32 %v4862, 4294901760
      %v5056 = vsub.f32 %v4862, %v5055
      %v5057 = vand.u32 %v5056, 4294901760
      %v5058 = vsub.f32 %v5056, %v5057
      %v5059 = vand.u32 %v5058, 4294901760
      %5060 = vmatprep.mubr.f32.mxu0 %v5059
      %v5061 = vand.u32 %v4861, 4294901760
      %v5062 = vsub.f32 %v4861, %v5061
      %v5063 = vand.u32 %v5062, 4294901760
      %v5064 = vsub.f32 %v5062, %v5063
      %v5065 = vand.u32 %v5064, 4294901760
      %5066 = vmatmul.mubr.f32.gmra.mrb[0].mxu0 %v5065
      %v5067 = vpop.f32.mrb[0].mxu0
      %v5068 = vadd.f32 1e-05, %v5067
      %v5069 = vpop.f32.mrb[0].mxu0
      %v5070 = vand.u32 %v4866, 4294901760
      %v5071 = vsub.f32 %v4866, %v5070
      %v5072 = vand.u32 %v5071, 4294901760
      %v5073 = vsub.f32 %v5071, %v5072
      %v5074 = vand.u32 %v5073, 4294901760
      %5075 = vmatprep.mubr.f32.mxu0 %v5074
      %v5076 = vand.u32 %v4865, 4294901760
      %v5077 = vsub.f32 %v4865, %v5076
      %v5078 = vand.u32 %v5077, 4294901760
      %v5079 = vsub.f32 %v5077, %v5078
      %v5080 = vand.u32 %v5079, 4294901760
      %5081 = vmatmul.mubr.f32.gmra.mrb[0].mxu0 %v5080
      %v5082 = vpop.f32.mrb[0].mxu0
      %v5083 = vadd.f32 1e-05, %v5082
      %v5084 = vpop.f32.mrb[0].mxu0
      %5085 = vdwg.mxu0
      %5086 = vmatprep.subr.mxu0 0.0
      %v5087 = vand.u32 %v532, 4294901760
      %v5088 = vsub.f32 %v532, %v5087
      %v5089 = vand.u32 %v5088, 4294901760
      %v5090 = vsub.f32 %v5088, %v5089
      %v5091 = vand.u32 %v5090, 4294901760
      %5092 = vmatpush1.msra.mxu0 %v5091
      %5093 = vmatprep.subr.mxu0 0.0
      %v5094 = vand.u32 %v533, 4294901760
      %v5095 = vsub.f32 %v533, %v5094
      %v5096 = vand.u32 %v5095, 4294901760
      %v5097 = vsub.f32 %v5095, %v5096
      %v5098 = vand.u32 %v5097, 4294901760
      %5099 = vmatpush1.msra.mxu0 %v5098
      %5100 = vmatprep.subr.mxu0 0.0
      %v5101 = vand.u32 %v534, 4294901760
      %v5102 = vsub.f32 %v534, %v5101
      %v5103 = vand.u32 %v5102, 4294901760
      %v5104 = vsub.f32 %v5102, %v5103
      %v5105 = vand.u32 %v5104, 4294901760
      %5106 = vmatpush1.msra.mxu0 %v5105
      %5107 = vmatprep.subr.mxu0 0.0
      %v5108 = vand.u32 %v535, 4294901760
      %v5109 = vsub.f32 %v535, %v5108
      %v5110 = vand.u32 %v5109, 4294901760
      %v5111 = vsub.f32 %v5109, %v5110
      %v5112 = vand.u32 %v5111, 4294901760
      %5113 = vmatpush1.msra.mxu0 %v5112
      %5114 = vmatprep.subr.mxu0 0.0
      %v5115 = vand.u32 %v536, 4294901760
      %v5116 = vsub.f32 %v536, %v5115
      %v5117 = vand.u32 %v5116, 4294901760
      %v5118 = vsub.f32 %v5116, %v5117
      %v5119 = vand.u32 %v5118, 4294901760
      %5120 = vmatpush1.msra.mxu0 %v5119
      %5121 = vmatprep.subr.mxu0 0.0
      %v5122 = vand.u32 %v537, 4294901760
      %v5123 = vsub.f32 %v537, %v5122
      %v5124 = vand.u32 %v5123, 4294901760
      %v5125 = vsub.f32 %v5123, %v5124
      %v5126 = vand.u32 %v5125, 4294901760
      %5127 = vmatpush1.msra.mxu0 %v5126
      %5128 = vmatprep.subr.mxu0 0.0
      %v5129 = vand.u32 %v538, 4294901760
      %v5130 = vsub.f32 %v538, %v5129
      %v5131 = vand.u32 %v5130, 4294901760
      %v5132 = vsub.f32 %v5130, %v5131
      %v5133 = vand.u32 %v5132, 4294901760
      %5134 = vmatpush1.msra.mxu0 %v5133
      %5135 = vmatprep.subr.mxu0 0.0
      %v5136 = vand.u32 %v539, 4294901760
      %v5137 = vsub.f32 %v539, %v5136
      %v5138 = vand.u32 %v5137, 4294901760
      %v5139 = vsub.f32 %v5137, %v5138
      %v5140 = vand.u32 %v5139, 4294901760
      %5141 = vmatpush1.msra.mxu0 %v5140
      %5142 = vmatprep.subr.mxu0 0.0
      %v5143 = vand.u32 %v540, 4294901760
      %v5144 = vsub.f32 %v540, %v5143
      %v5145 = vand.u32 %v5144, 4294901760
      %v5146 = vsub.f32 %v5144, %v5145
      %v5147 = vand.u32 %v5146, 4294901760
      %5148 = vmatpush1.msra.mxu0 %v5147
      %5149 = vmatprep.subr.mxu0 0.0
      %v5150 = vand.u32 %v541, 4294901760
      %v5151 = vsub.f32 %v541, %v5150
      %v5152 = vand.u32 %v5151, 4294901760
      %v5153 = vsub.f32 %v5151, %v5152
      %v5154 = vand.u32 %v5153, 4294901760
      %5155 = vmatpush1.msra.mxu0 %v5154
      %5156 = vmatprep.subr.mxu0 0.0
      %v5157 = vand.u32 %v542, 4294901760
      %v5158 = vsub.f32 %v542, %v5157
      %v5159 = vand.u32 %v5158, 4294901760
      %v5160 = vsub.f32 %v5158, %v5159
      %v5161 = vand.u32 %v5160, 4294901760
      %5162 = vmatpush1.msra.mxu0 %v5161
      %5163 = vmatprep.subr.mxu0 0.0
      %v5164 = vand.u32 %v543, 4294901760
      %v5165 = vsub.f32 %v543, %v5164
      %v5166 = vand.u32 %v5165, 4294901760
      %v5167 = vsub.f32 %v5165, %v5166
      %v5168 = vand.u32 %v5167, 4294901760
      %5169 = vmatpush1.msra.mxu0 %v5168
      %5170 = vmatprep.subr.mxu0 0.0
      %v5171 = vand.u32 %v544, 4294901760
      %v5172 = vsub.f32 %v544, %v5171
      %v5173 = vand.u32 %v5172, 4294901760
      %v5174 = vsub.f32 %v5172, %v5173
      %v5175 = vand.u32 %v5174, 4294901760
      %5176 = vmatpush1.msra.mxu0 %v5175
      %5177 = vmatprep.subr.mxu0 0.0
      %v5178 = vand.u32 %v545, 4294901760
      %v5179 = vsub.f32 %v545, %v5178
      %v5180 = vand.u32 %v5179, 4294901760
      %v5181 = vsub.f32 %v5179, %v5180
      %v5182 = vand.u32 %v5181, 4294901760
      %5183 = vmatpush1.msra.mxu0 %v5182
      %5184 = vmatprep.subr.mxu0 0.0
      %v5185 = vand.u32 %v546, 4294901760
      %v5186 = vsub.f32 %v546, %v5185
      %v5187 = vand.u32 %v5186, 4294901760
      %v5188 = vsub.f32 %v5186, %v5187
      %v5189 = vand.u32 %v5188, 4294901760
      %5190 = vmatpush1.msra.mxu0 %v5189
      %5191 = vmatprep.subr.mxu0 0.0
      %v5192 = vand.u32 %v547, 4294901760
      %v5193 = vsub.f32 %v547, %v5192
      %v5194 = vand.u32 %v5193, 4294901760
      %v5195 = vsub.f32 %v5193, %v5194
      %v5196 = vand.u32 %v5195, 4294901760
      %5197 = vmatpush1.msra.mxu0 %v5196
      %5198 = vmatprep.subr.mxu0 0.0
      %v5199 = vand.u32 %v548, 4294901760
      %v5200 = vsub.f32 %v548, %v5199
      %v5201 = vand.u32 %v5200, 4294901760
      %v5202 = vsub.f32 %v5200, %v5201
      %v5203 = vand.u32 %v5202, 4294901760
      %5204 = vmatpush1.msra.mxu0 %v5203
      %5205 = vmatprep.subr.mxu0 0.0
      %v5206 = vand.u32 %v549, 4294901760
      %v5207 = vsub.f32 %v549, %v5206
      %v5208 = vand.u32 %v5207, 4294901760
      %v5209 = vsub.f32 %v5207, %v5208
      %v5210 = vand.u32 %v5209, 4294901760
      %5211 = vmatpush1.msra.mxu0 %v5210
      %5212 = vmatprep.subr.mxu0 0.0
      %v5213 = vand.u32 %v550, 4294901760
      %v5214 = vsub.f32 %v550, %v5213
      %v5215 = vand.u32 %v5214, 4294901760
      %v5216 = vsub.f32 %v5214, %v5215
      %v5217 = vand.u32 %v5216, 4294901760
      %5218 = vmatpush1.msra.mxu0 %v5217
      %5219 = vmatprep.subr.mxu0 0.0
      %v5220 = vand.u32 %v551, 4294901760
      %v5221 = vsub.f32 %v551, %v5220
      %v5222 = vand.u32 %v5221, 4294901760
      %v5223 = vsub.f32 %v5221, %v5222
      %v5224 = vand.u32 %v5223, 4294901760
      %5225 = vmatpush1.msra.mxu0 %v5224
      %5226 = vmatprep.subr.mxu0 0.0
      %v5227 = vand.u32 %v552, 4294901760
      %v5228 = vsub.f32 %v552, %v5227
      %v5229 = vand.u32 %v5228, 4294901760
      %v5230 = vsub.f32 %v5228, %v5229
      %v5231 = vand.u32 %v5230, 4294901760
      %5232 = vmatpush1.msra.mxu0 %v5231
      %5233 = vmatprep.subr.mxu0 0.0
      %v5234 = vand.u32 %v553, 4294901760
      %v5235 = vsub.f32 %v553, %v5234
      %v5236 = vand.u32 %v5235, 4294901760
      %v5237 = vsub.f32 %v5235, %v5236
      %v5238 = vand.u32 %v5237, 4294901760
      %5239 = vmatpush1.msra.mxu0 %v5238
      %5240 = vmatprep.subr.mxu0 0.0
      %v5241 = vand.u32 %v554, 4294901760
      %v5242 = vsub.f32 %v554, %v5241
      %v5243 = vand.u32 %v5242, 4294901760
      %v5244 = vsub.f32 %v5242, %v5243
      %v5245 = vand.u32 %v5244, 4294901760
      %5246 = vmatpush1.msra.mxu0 %v5245
      %5247 = vmatprep.subr.mxu0 0.0
      %v5248 = vand.u32 %v555, 4294901760
      %v5249 = vsub.f32 %v555, %v5248
      %v5250 = vand.u32 %v5249, 4294901760
      %v5251 = vsub.f32 %v5249, %v5250
      %v5252 = vand.u32 %v5251, 4294901760
      %5253 = vmatpush1.msra.mxu0 %v5252
      %5254 = vmatprep.subr.mxu0 0.0
      %v5255 = vand.u32 %v556, 4294901760
      %v5256 = vsub.f32 %v556, %v5255
      %v5257 = vand.u32 %v5256, 4294901760
      %v5258 = vsub.f32 %v5256, %v5257
      %v5259 = vand.u32 %v5258, 4294901760
      %5260 = vmatpush1.msra.mxu0 %v5259
      %5261 = vmatprep.subr.mxu0 0.0
      %v5262 = vand.u32 %v557, 4294901760
      %v5263 = vsub.f32 %v557, %v5262
      %v5264 = vand.u32 %v5263, 4294901760
      %v5265 = vsub.f32 %v5263, %v5264
      %v5266 = vand.u32 %v5265, 4294901760
      %5267 = vmatpush1.msra.mxu0 %v5266
      %5268 = vmatprep.subr.mxu0 0.0
      %v5269 = vand.u32 %v558, 4294901760
      %v5270 = vsub.f32 %v558, %v5269
      %v5271 = vand.u32 %v5270, 4294901760
      %v5272 = vsub.f32 %v5270, %v5271
      %v5273 = vand.u32 %v5272, 4294901760
      %5274 = vmatpush1.msra.mxu0 %v5273
      %5275 = vmatprep.subr.mxu0 0.0
      %v5276 = vand.u32 %v559, 4294901760
      %v5277 = vsub.f32 %v559, %v5276
      %v5278 = vand.u32 %v5277, 4294901760
      %v5279 = vsub.f32 %v5277, %v5278
      %v5280 = vand.u32 %v5279, 4294901760
      %5281 = vmatpush1.msra.mxu0 %v5280
      %5282 = vmatprep.subr.mxu0 0.0
      %v5283 = vand.u32 %v560, 4294901760
      %v5284 = vsub.f32 %v560, %v5283
      %v5285 = vand.u32 %v5284, 4294901760
      %v5286 = vsub.f32 %v5284, %v5285
      %v5287 = vand.u32 %v5286, 4294901760
      %5288 = vmatpush1.msra.mxu0 %v5287
      %5289 = vmatprep.subr.mxu0 0.0
      %v5290 = vand.u32 %v561, 4294901760
      %v5291 = vsub.f32 %v561, %v5290
      %v5292 = vand.u32 %v5291, 4294901760
      %v5293 = vsub.f32 %v5291, %v5292
      %v5294 = vand.u32 %v5293, 4294901760
      %5295 = vmatpush1.msra.mxu0 %v5294
      %5296 = vmatprep.subr.mxu0 0.0
      %v5297 = vand.u32 %v562, 4294901760
      %v5298 = vsub.f32 %v562, %v5297
      %v5299 = vand.u32 %v5298, 4294901760
      %v5300 = vsub.f32 %v5298, %v5299
      %v5301 = vand.u32 %v5300, 4294901760
      %5302 = vmatpush1.msra.mxu0 %v5301
      %5303 = vmatprep.subr.mxu0 0.0
      %v5304 = vand.u32 %v563, 4294901760
      %v5305 = vsub.f32 %v563, %v5304
      %v5306 = vand.u32 %v5305, 4294901760
      %v5307 = vsub.f32 %v5305, %v5306
      %v5308 = vand.u32 %v5307, 4294901760
      %5309 = vmatpush1.msra.mxu0 %v5308
      %v5310 = vand.u32 %v4838, 4294901760
      %5311 = vmatprep.mubr.f32.mxu0 %v5310
      %v5312 = vand.u32 %v4837, 4294901760
      %5313 = vmatmul.mubr.f32.gmra.mrb[0].mxu0 %v5312
      %v5314 = vpop.f32.mrb[0].mxu0
      %v5315 = vadd.f32 %v4978, %v5314
      %v5316 = vpop.f32.mrb[0].mxu0
      %v5317 = vand.u32 %v4842, 4294901760
      %5318 = vmatprep.mubr.f32.mxu0 %v5317
      %v5319 = vand.u32 %v4841, 4294901760
      %5320 = vmatmul.mubr.f32.gmra.mrb[0].mxu0 %v5319
      %v5321 = vpop.f32.mrb[0].mxu0
      %v5322 = vadd.f32 %v4993, %v5321
      %v5323 = vpop.f32.mrb[0].mxu0
      %v5324 = vand.u32 %v4846, 4294901760
      %5325 = vmatprep.mubr.f32.mxu0 %v5324
      %v5326 = vand.u32 %v4845, 4294901760
      %5327 = vmatmul.mubr.f32.gmra.mrb[0].mxu0 %v5326
      %v5328 = vpop.f32.mrb[0].mxu0
      %v5329 = vadd.f32 %v5008, %v5328
      %v5330 = vpop.f32.mrb[0].mxu0
      %v5331 = vand.u32 %v4850, 4294901760
      %5332 = vmatprep.mubr.f32.mxu0 %v5331
      %v5333 = vand.u32 %v4849, 4294901760
      %5334 = vmatmul.mubr.f32.gmra.mrb[0].mxu0 %v5333
      %v5335 = vpop.f32.mrb[0].mxu0
      %v5336 = vadd.f32 %v5023, %v5335
      %v5337 = vpop.f32.mrb[0].mxu0
      %v5338 = vand.u32 %v4854, 4294901760
      %5339 = vmatprep.mubr.f32.mxu0 %v5338
      %v5340 = vand.u32 %v4853, 4294901760
      %5341 = vmatmul.mubr.f32.gmra.mrb[0].mxu0 %v5340
      %v5342 = vpop.f32.mrb[0].mxu0
      %v5343 = vadd.f32 %v5038, %v5342
      %v5344 = vpop.f32.mrb[0].mxu0
      %v5345 = vand.u32 %v4858, 4294901760
      %5346 = vmatprep.mubr.f32.mxu0 %v5345
      %v5347 = vand.u32 %v4857, 4294901760
      %5348 = vmatmul.mubr.f32.gmra.mrb[0].mxu0 %v5347
      %v5349 = vpop.f32.mrb[0].mxu0
      %v5350 = vadd.f32 %v5053, %v5349
      %v5351 = vpop.f32.mrb[0].mxu0
      %v5352 = vand.u32 %v4862, 4294901760
      %5353 = vmatprep.mubr.f32.mxu0 %v5352
      %v5354 = vand.u32 %v4861, 4294901760
      %5355 = vmatmul.mubr.f32.gmra.mrb[0].mxu0 %v5354
      %v5356 = vpop.f32.mrb[0].mxu0
      %v5357 = vadd.f32 %v5068, %v5356
      %v5358 = vpop.f32.mrb[0].mxu0
      %v5359 = vand.u32 %v4866, 4294901760
      %5360 = vmatprep.mubr.f32.mxu0 %v5359
      %v5361 = vand.u32 %v4865, 4294901760
      %5362 = vmatmul.mubr.f32.gmra.mrb[0].mxu0 %v5361
      %v5363 = vpop.f32.mrb[0].mxu0
      %v5364 = vadd.f32 %v5083, %v5363
      %v5365 = vpop.f32.mrb[0].mxu0
      %5366 = vdwg.mxu0
      %5367 = vmatprep.subr.mxu0 0.0
      %v5368 = vand.u32 %v532, 4294901760
      %v5369 = vsub.f32 %v532, %v5368
      %5370 = vmatpush1.msra.mxu0 %v5369
      %5371 = vmatprep.subr.mxu0 0.0
      %v5372 = vand.u32 %v533, 4294901760
      %v5373 = vsub.f32 %v533, %v5372
      %5374 = vmatpush1.msra.mxu0 %v5373
      %5375 = vmatprep.subr.mxu0 0.0
      %v5376 = vand.u32 %v534, 4294901760
      %v5377 = vsub.f32 %v534, %v5376
      %5378 = vmatpush1.msra.mxu0 %v5377
      %5379 = vmatprep.subr.mxu0 0.0
      %v5380 = vand.u32 %v535, 4294901760
      %v5381 = vsub.f32 %v535, %v5380
      %5382 = vmatpush1.msra.mxu0 %v5381
      %5383 = vmatprep.subr.mxu0 0.0
      %v5384 = vand.u32 %v536, 4294901760
      %v5385 = vsub.f32 %v536, %v5384
      %5386 = vmatpush1.msra.mxu0 %v5385
      %5387 = vmatprep.subr.mxu0 0.0
      %v5388 = vand.u32 %v537, 4294901760
      %v5389 = vsub.f32 %v537, %v5388
      %5390 = vmatpush1.msra.mxu0 %v5389
      %5391 = vmatprep.subr.mxu0 0.0
      %v5392 = vand.u32 %v538, 4294901760
      %v5393 = vsub.f32 %v538, %v5392
      %5394 = vmatpush1.msra.mxu0 %v5393
      %5395 = vmatprep.subr.mxu0 0.0
      %v5396 = vand.u32 %v539, 4294901760
      %v5397 = vsub.f32 %v539, %v5396
      %5398 = vmatpush1.msra.mxu0 %v5397
      %5399 = vmatprep.subr.mxu0 0.0
      %v5400 = vand.u32 %v540, 4294901760
      %v5401 = vsub.f32 %v540, %v5400
      %5402 = vmatpush1.msra.mxu0 %v5401
      %5403 = vmatprep.subr.mxu0 0.0
      %v5404 = vand.u32 %v541, 4294901760
      %v5405 = vsub.f32 %v541, %v5404
      %5406 = vmatpush1.msra.mxu0 %v5405
      %5407 = vmatprep.subr.mxu0 0.0
      %v5408 = vand.u32 %v542, 4294901760
      %v5409 = vsub.f32 %v542, %v5408
      %5410 = vmatpush1.msra.mxu0 %v5409
      %5411 = vmatprep.subr.mxu0 0.0
      %v5412 = vand.u32 %v543, 4294901760
      %v5413 = vsub.f32 %v543, %v5412
      %5414 = vmatpush1.msra.mxu0 %v5413
      %5415 = vmatprep.subr.mxu0 0.0
      %v5416 = vand.u32 %v544, 4294901760
      %v5417 = vsub.f32 %v544, %v5416
      %5418 = vmatpush1.msra.mxu0 %v5417
      %5419 = vmatprep.subr.mxu0 0.0
      %v5420 = vand.u32 %v545, 4294901760
      %v5421 = vsub.f32 %v545, %v5420
      %5422 = vmatpush1.msra.mxu0 %v5421
      %5423 = vmatprep.subr.mxu0 0.0
      %v5424 = vand.u32 %v546, 4294901760
      %v5425 = vsub.f32 %v546, %v5424
      %5426 = vmatpush1.msra.mxu0 %v5425
      %5427 = vmatprep.subr.mxu0 0.0
      %v5428 = vand.u32 %v547, 4294901760
      %v5429 = vsub.f32 %v547, %v5428
      %5430 = vmatpush1.msra.mxu0 %v5429
      %5431 = vmatprep.subr.mxu0 0.0
      %v5432 = vand.u32 %v548, 4294901760
      %v5433 = vsub.f32 %v548, %v5432
      %5434 = vmatpush1.msra.mxu0 %v5433
      %5435 = vmatprep.subr.mxu0 0.0
      %v5436 = vand.u32 %v549, 4294901760
      %v5437 = vsub.f32 %v549, %v5436
      %5438 = vmatpush1.msra.mxu0 %v5437
      %5439 = vmatprep.subr.mxu0 0.0
      %v5440 = vand.u32 %v550, 4294901760
      %v5441 = vsub.f32 %v550, %v5440
      %5442 = vmatpush1.msra.mxu0 %v5441
      %5443 = vmatprep.subr.mxu0 0.0
      %v5444 = vand.u32 %v551, 4294901760
      %v5445 = vsub.f32 %v551, %v5444
      %5446 = vmatpush1.msra.mxu0 %v5445
      %5447 = vmatprep.subr.mxu0 0.0
      %v5448 = vand.u32 %v552, 4294901760
      %v5449 = vsub.f32 %v552, %v5448
      %5450 = vmatpush1.msra.mxu0 %v5449
      %5451 = vmatprep.subr.mxu0 0.0
      %v5452 = vand.u32 %v553, 4294901760
      %v5453 = vsub.f32 %v553, %v5452
      %5454 = vmatpush1.msra.mxu0 %v5453
      %5455 = vmatprep.subr.mxu0 0.0
      %v5456 = vand.u32 %v554, 4294901760
      %v5457 = vsub.f32 %v554, %v5456
      %5458 = vmatpush1.msra.mxu0 %v5457
      %5459 = vmatprep.subr.mxu0 0.0
      %v5460 = vand.u32 %v555, 4294901760
      %v5461 = vsub.f32 %v555, %v5460
      %5462 = vmatpush1.msra.mxu0 %v5461
      %5463 = vmatprep.subr.mxu0 0.0
      %v5464 = vand.u32 %v556, 4294901760
      %v5465 = vsub.f32 %v556, %v5464
      %5466 = vmatpush1.msra.mxu0 %v5465
      %5467 = vmatprep.subr.mxu0 0.0
      %v5468 = vand.u32 %v557, 4294901760
      %v5469 = vsub.f32 %v557, %v5468
      %5470 = vmatpush1.msra.mxu0 %v5469
      %5471 = vmatprep.subr.mxu0 0.0
      %v5472 = vand.u32 %v558, 4294901760
      %v5473 = vsub.f32 %v558, %v5472
      %5474 = vmatpush1.msra.mxu0 %v5473
      %5475 = vmatprep.subr.mxu0 0.0
      %v5476 = vand.u32 %v559, 4294901760
      %v5477 = vsub.f32 %v559, %v5476
      %5478 = vmatpush1.msra.mxu0 %v5477
      %5479 = vmatprep.subr.mxu0 0.0
      %v5480 = vand.u32 %v560, 4294901760
      %v5481 = vsub.f32 %v560, %v5480
      %5482 = vmatpush1.msra.mxu0 %v5481
      %5483 = vmatprep.subr.mxu0 0.0
      %v5484 = vand.u32 %v561, 4294901760
      %v5485 = vsub.f32 %v561, %v5484
      %5486 = vmatpush1.msra.mxu0 %v5485
      %5487 = vmatprep.subr.mxu0 0.0
      %v5488 = vand.u32 %v562, 4294901760
      %v5489 = vsub.f32 %v562, %v5488
      %5490 = vmatpush1.msra.mxu0 %v5489
      %5491 = vmatprep.subr.mxu0 0.0
      %v5492 = vand.u32 %v563, 4294901760
      %v5493 = vsub.f32 %v563, %v5492
      %5494 = vmatpush1.msra.mxu0 %v5493
      %v5495 = vand.u32 %v4838, 4294901760
      %v5496 = vsub.f32 %v4838, %v5495
      %5497 = vmatprep.mubr.f32.mxu0 %v5496
      %v5498 = vand.u32 %v4837, 4294901760
      %v5499 = vsub.f32 %v4837, %v5498
      %5500 = vmatmul.mubr.f32.gmra.mrb[0].mxu0 %v5499
      %v5501 = vpop.f32.mrb[0].mxu0
      %v5502 = vadd.f32 %v5315, %v5501
      %v5503 = vpop.f32.mrb[0].mxu0
      %v5504 = vand.u32 %v4842, 4294901760
      %v5505 = vsub.f32 %v4842, %v5504
      %5506 = vmatprep.mubr.f32.mxu0 %v5505
      %v5507 = vand.u32 %v4841, 4294901760
      %v5508 = vsub.f32 %v4841, %v5507
      %5509 = vmatmul.mubr.f32.gmra.mrb[0].mxu0 %v5508
      %v5510 = vpop.f32.mrb[0].mxu0
      %v5511 = vadd.f32 %v5322, %v5510
      %v5512 = vpop.f32.mrb[0].mxu0
      %v5513 = vand.u32 %v4846, 4294901760
      %v5514 = vsub.f32 %v4846, %v5513
      %5515 = vmatprep.mubr.f32.mxu0 %v5514
      %v5516 = vand.u32 %v4845, 4294901760
      %v5517 = vsub.f32 %v4845, %v5516
      %5518 = vmatmul.mubr.f32.gmra.mrb[0].mxu0 %v5517
      %v5519 = vpop.f32.mrb[0].mxu0
      %v5520 = vadd.f32 %v5329, %v5519
      %v5521 = vpop.f32.mrb[0].mxu0
      %v5522 = vand.u32 %v4850, 4294901760
      %v5523 = vsub.f32 %v4850, %v5522
      %5524 = vmatprep.mubr.f32.mxu0 %v5523
      %v5525 = vand.u32 %v4849, 4294901760
      %v5526 = vsub.f32 %v4849, %v5525
      %5527 = vmatmul.mubr.f32.gmra.mrb[0].mxu0 %v5526
      %v5528 = vpop.f32.mrb[0].mxu0
      %v5529 = vadd.f32 %v5336, %v5528
      %v5530 = vpop.f32.mrb[0].mxu0
      %v5531 = vand.u32 %v4854, 4294901760
      %v5532 = vsub.f32 %v4854, %v5531
      %5533 = vmatprep.mubr.f32.mxu0 %v5532
      %v5534 = vand.u32 %v4853, 4294901760
      %v5535 = vsub.f32 %v4853, %v5534
      %5536 = vmatmul.mubr.f32.gmra.mrb[0].mxu0 %v5535
      %v5537 = vpop.f32.mrb[0].mxu0
      %v5538 = vadd.f32 %v5343, %v5537
      %v5539 = vpop.f32.mrb[0].mxu0
      %v5540 = vand.u32 %v4858, 4294901760
      %v5541 = vsub.f32 %v4858, %v5540
      %5542 = vmatprep.mubr.f32.mxu0 %v5541
      %v5543 = vand.u32 %v4857, 4294901760
      %v5544 = vsub.f32 %v4857, %v5543
      %5545 = vmatmul.mubr.f32.gmra.mrb[0].mxu0 %v5544
      %v5546 = vpop.f32.mrb[0].mxu0
      %v5547 = vadd.f32 %v5350, %v5546
      %v5548 = vpop.f32.mrb[0].mxu0
      %v5549 = vand.u32 %v4862, 4294901760
      %v5550 = vsub.f32 %v4862, %v5549
      %5551 = vmatprep.mubr.f32.mxu0 %v5550
      %v5552 = vand.u32 %v4861, 4294901760
      %v5553 = vsub.f32 %v4861, %v5552
      %5554 = vmatmul.mubr.f32.gmra.mrb[0].mxu0 %v5553
      %v5555 = vpop.f32.mrb[0].mxu0
      %v5556 = vadd.f32 %v5357, %v5555
      %v5557 = vpop.f32.mrb[0].mxu0
      %v5558 = vand.u32 %v4866, 4294901760
      %v5559 = vsub.f32 %v4866, %v5558
      %5560 = vmatprep.mubr.f32.mxu0 %v5559
      %v5561 = vand.u32 %v4865, 4294901760
      %v5562 = vsub.f32 %v4865, %v5561
      %5563 = vmatmul.mubr.f32.gmra.mrb[0].mxu0 %v5562
      %v5564 = vpop.f32.mrb[0].mxu0
      %v5565 = vadd.f32 %v5364, %v5564
      %v5566 = vpop.f32.mrb[0].mxu0
      %5567 = vdwg.mxu0
      %5568 = vmatprep.subr.mxu0 0.0
      %v5569 = vand.u32 %v532, 4294901760
      %5570 = vmatpush1.msra.mxu0 %v5569
      %5571 = vmatprep.subr.mxu0 0.0
      %v5572 = vand.u32 %v533, 4294901760
      %5573 = vmatpush1.msra.mxu0 %v5572
      %5574 = vmatprep.subr.mxu0 0.0
      %v5575 = vand.u32 %v534, 4294901760
      %5576 = vmatpush1.msra.mxu0 %v5575
      %5577 = vmatprep.subr.mxu0 0.0
      %v5578 = vand.u32 %v535, 4294901760
      %5579 = vmatpush1.msra.mxu0 %v5578
      %5580 = vmatprep.subr.mxu0 0.0
      %v5581 = vand.u32 %v536, 4294901760
      %5582 = vmatpush1.msra.mxu0 %v5581
      %5583 = vmatprep.subr.mxu0 0.0
      %v5584 = vand.u32 %v537, 4294901760
      %5585 = vmatpush1.msra.mxu0 %v5584
      %5586 = vmatprep.subr.mxu0 0.0
      %v5587 = vand.u32 %v538, 4294901760
      %5588 = vmatpush1.msra.mxu0 %v5587
      %5589 = vmatprep.subr.mxu0 0.0
      %v5590 = vand.u32 %v539, 4294901760
      %5591 = vmatpush1.msra.mxu0 %v5590
      %5592 = vmatprep.subr.mxu0 0.0
      %v5593 = vand.u32 %v540, 4294901760
      %5594 = vmatpush1.msra.mxu0 %v5593
      %5595 = vmatprep.subr.mxu0 0.0
      %v5596 = vand.u32 %v541, 4294901760
      %5597 = vmatpush1.msra.mxu0 %v5596
      %5598 = vmatprep.subr.mxu0 0.0
      %v5599 = vand.u32 %v542, 4294901760
      %5600 = vmatpush1.msra.mxu0 %v5599
      %5601 = vmatprep.subr.mxu0 0.0
      %v5602 = vand.u32 %v543, 4294901760
      %5603 = vmatpush1.msra.mxu0 %v5602
      %5604 = vmatprep.subr.mxu0 0.0
      %v5605 = vand.u32 %v544, 4294901760
      %5606 = vmatpush1.msra.mxu0 %v5605
      %5607 = vmatprep.subr.mxu0 0.0
      %v5608 = vand.u32 %v545, 4294901760
      %5609 = vmatpush1.msra.mxu0 %v5608
      %5610 = vmatprep.subr.mxu0 0.0
      %v5611 = vand.u32 %v546, 4294901760
      %5612 = vmatpush1.msra.mxu0 %v5611
      %5613 = vmatprep.subr.mxu0 0.0
      %v5614 = vand.u32 %v547, 4294901760
      %5615 = vmatpush1.msra.mxu0 %v5614
      %5616 = vmatprep.subr.mxu0 0.0
      %v5617 = vand.u32 %v548, 4294901760
      %5618 = vmatpush1.msra.mxu0 %v5617
      %5619 = vmatprep.subr.mxu0 0.0
      %v5620 = vand.u32 %v549, 4294901760
      %5621 = vmatpush1.msra.mxu0 %v5620
      %5622 = vmatprep.subr.mxu0 0.0
      %v5623 = vand.u32 %v550, 4294901760
      %5624 = vmatpush1.msra.mxu0 %v5623
      %5625 = vmatprep.subr.mxu0 0.0
      %v5626 = vand.u32 %v551, 4294901760
      %5627 = vmatpush1.msra.mxu0 %v5626
      %5628 = vmatprep.subr.mxu0 0.0
      %v5629 = vand.u32 %v552, 4294901760
      %5630 = vmatpush1.msra.mxu0 %v5629
      %5631 = vmatprep.subr.mxu0 0.0
      %v5632 = vand.u32 %v553, 4294901760
      %5633 = vmatpush1.msra.mxu0 %v5632
      %5634 = vmatprep.subr.mxu0 0.0
      %v5635 = vand.u32 %v554, 4294901760
      %5636 = vmatpush1.msra.mxu0 %v5635
      %5637 = vmatprep.subr.mxu0 0.0
      %v5638 = vand.u32 %v555, 4294901760
      %5639 = vmatpush1.msra.mxu0 %v5638
      %5640 = vmatprep.subr.mxu0 0.0
      %v5641 = vand.u32 %v556, 4294901760
      %5642 = vmatpush1.msra.mxu0 %v5641
      %5643 = vmatprep.subr.mxu0 0.0
      %v5644 = vand.u32 %v557, 4294901760
      %5645 = vmatpush1.msra.mxu0 %v5644
      %5646 = vmatprep.subr.mxu0 0.0
      %v5647 = vand.u32 %v558, 4294901760
      %5648 = vmatpush1.msra.mxu0 %v5647
      %5649 = vmatprep.subr.mxu0 0.0
      %v5650 = vand.u32 %v559, 4294901760
      %5651 = vmatpush1.msra.mxu0 %v5650
      %5652 = vmatprep.subr.mxu0 0.0
      %v5653 = vand.u32 %v560, 4294901760
      %5654 = vmatpush1.msra.mxu0 %v5653
      %5655 = vmatprep.subr.mxu0 0.0
      %v5656 = vand.u32 %v561, 4294901760
      %5657 = vmatpush1.msra.mxu0 %v5656
      %5658 = vmatprep.subr.mxu0 0.0
      %v5659 = vand.u32 %v562, 4294901760
      %5660 = vmatpush1.msra.mxu0 %v5659
      %5661 = vmatprep.subr.mxu0 0.0
      %v5662 = vand.u32 %v563, 4294901760
      %5663 = vmatpush1.msra.mxu0 %v5662
      %v5664 = vand.u32 %v4838, 4294901760
      %v5665 = vsub.f32 %v4838, %v5664
      %v5666 = vand.u32 %v5665, 4294901760
      %5667 = vmatprep.mubr.f32.mxu0 %v5666
      %v5668 = vand.u32 %v4837, 4294901760
      %v5669 = vsub.f32 %v4837, %v5668
      %v5670 = vand.u32 %v5669, 4294901760
      %5671 = vmatmul.mubr.f32.gmra.mrb[0].mxu0 %v5670
      %v5672 = vpop.f32.mrb[0].mxu0
      %v5673 = vadd.f32 %v5502, %v5672
      %v5674 = vpop.f32.mrb[0].mxu0
      %v5675 = vand.u32 %v4842, 4294901760
      %v5676 = vsub.f32 %v4842, %v5675
      %v5677 = vand.u32 %v5676, 4294901760
      %5678 = vmatprep.mubr.f32.mxu0 %v5677
      %v5679 = vand.u32 %v4841, 4294901760
      %v5680 = vsub.f32 %v4841, %v5679
      %v5681 = vand.u32 %v5680, 4294901760
      %5682 = vmatmul.mubr.f32.gmra.mrb[0].mxu0 %v5681
      %v5683 = vpop.f32.mrb[0].mxu0
      %v5684 = vadd.f32 %v5511, %v5683
      %v5685 = vpop.f32.mrb[0].mxu0
      %v5686 = vand.u32 %v4846, 4294901760
      %v5687 = vsub.f32 %v4846, %v5686
      %v5688 = vand.u32 %v5687, 4294901760
      %5689 = vmatprep.mubr.f32.mxu0 %v5688
      %v5690 = vand.u32 %v4845, 4294901760
      %v5691 = vsub.f32 %v4845, %v5690
      %v5692 = vand.u32 %v5691, 4294901760
      %5693 = vmatmul.mubr.f32.gmra.mrb[0].mxu0 %v5692
      %v5694 = vpop.f32.mrb[0].mxu0
      %v5695 = vadd.f32 %v5520, %v5694
      %v5696 = vpop.f32.mrb[0].mxu0
      %v5697 = vand.u32 %v4850, 4294901760
      %v5698 = vsub.f32 %v4850, %v5697
      %v5699 = vand.u32 %v5698, 4294901760
      %5700 = vmatprep.mubr.f32.mxu0 %v5699
      %v5701 = vand.u32 %v4849, 4294901760
      %v5702 = vsub.f32 %v4849, %v5701
      %v5703 = vand.u32 %v5702, 4294901760
      %5704 = vmatmul.mubr.f32.gmra.mrb[0].mxu0 %v5703
      %v5705 = vpop.f32.mrb[0].mxu0
      %v5706 = vadd.f32 %v5529, %v5705
      %v5707 = vpop.f32.mrb[0].mxu0
      %v5708 = vand.u32 %v4854, 4294901760
      %v5709 = vsub.f32 %v4854, %v5708
      %v5710 = vand.u32 %v5709, 4294901760
      %5711 = vmatprep.mubr.f32.mxu0 %v5710
      %v5712 = vand.u32 %v4853, 4294901760
      %v5713 = vsub.f32 %v4853, %v5712
      %v5714 = vand.u32 %v5713, 4294901760
      %5715 = vmatmul.mubr.f32.gmra.mrb[0].mxu0 %v5714
      %v5716 = vpop.f32.mrb[0].mxu0
      %v5717 = vadd.f32 %v5538, %v5716
      %v5718 = vpop.f32.mrb[0].mxu0
      %v5719 = vand.u32 %v4858, 4294901760
      %v5720 = vsub.f32 %v4858, %v5719
      %v5721 = vand.u32 %v5720, 4294901760
      %5722 = vmatprep.mubr.f32.mxu0 %v5721
      %v5723 = vand.u32 %v4857, 4294901760
      %v5724 = vsub.f32 %v4857, %v5723
      %v5725 = vand.u32 %v5724, 4294901760
      %5726 = vmatmul.mubr.f32.gmra.mrb[0].mxu0 %v5725
      %v5727 = vpop.f32.mrb[0].mxu0
      %v5728 = vadd.f32 %v5547, %v5727
      %v5729 = vpop.f32.mrb[0].mxu0
      %v5730 = vand.u32 %v4862, 4294901760
      %v5731 = vsub.f32 %v4862, %v5730
      %v5732 = vand.u32 %v5731, 4294901760
      %5733 = vmatprep.mubr.f32.mxu0 %v5732
      %v5734 = vand.u32 %v4861, 4294901760
      %v5735 = vsub.f32 %v4861, %v5734
      %v5736 = vand.u32 %v5735, 4294901760
      %5737 = vmatmul.mubr.f32.gmra.mrb[0].mxu0 %v5736
      %v5738 = vpop.f32.mrb[0].mxu0
      %v5739 = vadd.f32 %v5556, %v5738
      %v5740 = vpop.f32.mrb[0].mxu0
      %v5741 = vand.u32 %v4866, 4294901760
      %v5742 = vsub.f32 %v4866, %v5741
      %v5743 = vand.u32 %v5742, 4294901760
      %5744 = vmatprep.mubr.f32.mxu0 %v5743
      %v5745 = vand.u32 %v4865, 4294901760
      %v5746 = vsub.f32 %v4865, %v5745
      %v5747 = vand.u32 %v5746, 4294901760
      %5748 = vmatmul.mubr.f32.gmra.mrb[0].mxu0 %v5747
      %v5749 = vpop.f32.mrb[0].mxu0
      %v5750 = vadd.f32 %v5565, %v5749
      %v5751 = vpop.f32.mrb[0].mxu0
      %5752 = vdwg.mxu0
      %5753 = vmatprep.subr.mxu0 0.0
      %v5754 = vand.u32 %v532, 4294901760
      %v5755 = vsub.f32 %v532, %v5754
      %v5756 = vand.u32 %v5755, 4294901760
      %5757 = vmatpush1.msra.mxu0 %v5756
      %5758 = vmatprep.subr.mxu0 0.0
      %v5759 = vand.u32 %v533, 4294901760
      %v5760 = vsub.f32 %v533, %v5759
      %v5761 = vand.u32 %v5760, 4294901760
      %5762 = vmatpush1.msra.mxu0 %v5761
      %5763 = vmatprep.subr.mxu0 0.0
      %v5764 = vand.u32 %v534, 4294901760
      %v5765 = vsub.f32 %v534, %v5764
      %v5766 = vand.u32 %v5765, 4294901760
      %5767 = vmatpush1.msra.mxu0 %v5766
      %5768 = vmatprep.subr.mxu0 0.0
      %v5769 = vand.u32 %v535, 4294901760
      %v5770 = vsub.f32 %v535, %v5769
      %v5771 = vand.u32 %v5770, 4294901760
      %5772 = vmatpush1.msra.mxu0 %v5771
      %5773 = vmatprep.subr.mxu0 0.0
      %v5774 = vand.u32 %v536, 4294901760
      %v5775 = vsub.f32 %v536, %v5774
      %v5776 = vand.u32 %v5775, 4294901760
      %5777 = vmatpush1.msra.mxu0 %v5776
      %5778 = vmatprep.subr.mxu0 0.0
      %v5779 = vand.u32 %v537, 4294901760
      %v5780 = vsub.f32 %v537, %v5779
      %v5781 = vand.u32 %v5780, 4294901760
      %5782 = vmatpush1.msra.mxu0 %v5781
      %5783 = vmatprep.subr.mxu0 0.0
      %v5784 = vand.u32 %v538, 4294901760
      %v5785 = vsub.f32 %v538, %v5784
      %v5786 = vand.u32 %v5785, 4294901760
      %5787 = vmatpush1.msra.mxu0 %v5786
      %5788 = vmatprep.subr.mxu0 0.0
      %v5789 = vand.u32 %v539, 4294901760
      %v5790 = vsub.f32 %v539, %v5789
      %v5791 = vand.u32 %v5790, 4294901760
      %5792 = vmatpush1.msra.mxu0 %v5791
      %5793 = vmatprep.subr.mxu0 0.0
      %v5794 = vand.u32 %v540, 4294901760
      %v5795 = vsub.f32 %v540, %v5794
      %v5796 = vand.u32 %v5795, 4294901760
      %5797 = vmatpush1.msra.mxu0 %v5796
      %5798 = vmatprep.subr.mxu0 0.0
      %v5799 = vand.u32 %v541, 4294901760
      %v5800 = vsub.f32 %v541, %v5799
      %v5801 = vand.u32 %v5800, 4294901760
      %5802 = vmatpush1.msra.mxu0 %v5801
      %5803 = vmatprep.subr.mxu0 0.0
      %v5804 = vand.u32 %v542, 4294901760
      %v5805 = vsub.f32 %v542, %v5804
      %v5806 = vand.u32 %v5805, 4294901760
      %5807 = vmatpush1.msra.mxu0 %v5806
      %5808 = vmatprep.subr.mxu0 0.0
      %v5809 = vand.u32 %v543, 4294901760
      %v5810 = vsub.f32 %v543, %v5809
      %v5811 = vand.u32 %v5810, 4294901760
      %5812 = vmatpush1.msra.mxu0 %v5811
      %5813 = vmatprep.subr.mxu0 0.0
      %v5814 = vand.u32 %v544, 4294901760
      %v5815 = vsub.f32 %v544, %v5814
      %v5816 = vand.u32 %v5815, 4294901760
      %5817 = vmatpush1.msra.mxu0 %v5816
      %5818 = vmatprep.subr.mxu0 0.0
      %v5819 = vand.u32 %v545, 4294901760
      %v5820 = vsub.f32 %v545, %v5819
      %v5821 = vand.u32 %v5820, 4294901760
      %5822 = vmatpush1.msra.mxu0 %v5821
      %5823 = vmatprep.subr.mxu0 0.0
      %v5824 = vand.u32 %v546, 4294901760
      %v5825 = vsub.f32 %v546, %v5824
      %v5826 = vand.u32 %v5825, 4294901760
      %5827 = vmatpush1.msra.mxu0 %v5826
      %5828 = vmatprep.subr.mxu0 0.0
      %v5829 = vand.u32 %v547, 4294901760
      %v5830 = vsub.f32 %v547, %v5829
      %v5831 = vand.u32 %v5830, 4294901760
      %5832 = vmatpush1.msra.mxu0 %v5831
      %5833 = vmatprep.subr.mxu0 0.0
      %v5834 = vand.u32 %v548, 4294901760
      %v5835 = vsub.f32 %v548, %v5834
      %v5836 = vand.u32 %v5835, 4294901760
      %5837 = vmatpush1.msra.mxu0 %v5836
      %5838 = vmatprep.subr.mxu0 0.0
      %v5839 = vand.u32 %v549, 4294901760
      %v5840 = vsub.f32 %v549, %v5839
      %v5841 = vand.u32 %v5840, 4294901760
      %5842 = vmatpush1.msra.mxu0 %v5841
      %5843 = vmatprep.subr.mxu0 0.0
      %v5844 = vand.u32 %v550, 4294901760
      %v5845 = vsub.f32 %v550, %v5844
      %v5846 = vand.u32 %v5845, 4294901760
      %5847 = vmatpush1.msra.mxu0 %v5846
      %5848 = vmatprep.subr.mxu0 0.0
      %v5849 = vand.u32 %v551, 4294901760
      %v5850 = vsub.f32 %v551, %v5849
      %v5851 = vand.u32 %v5850, 4294901760
      %5852 = vmatpush1.msra.mxu0 %v5851
      %5853 = vmatprep.subr.mxu0 0.0
      %v5854 = vand.u32 %v552, 4294901760
      %v5855 = vsub.f32 %v552, %v5854
      %v5856 = vand.u32 %v5855, 4294901760
      %5857 = vmatpush1.msra.mxu0 %v5856
      %5858 = vmatprep.subr.mxu0 0.0
      %v5859 = vand.u32 %v553, 4294901760
      %v5860 = vsub.f32 %v553, %v5859
      %v5861 = vand.u32 %v5860, 4294901760
      %5862 = vmatpush1.msra.mxu0 %v5861
      %5863 = vmatprep.subr.mxu0 0.0
      %v5864 = vand.u32 %v554, 4294901760
      %v5865 = vsub.f32 %v554, %v5864
      %v5866 = vand.u32 %v5865, 4294901760
      %5867 = vmatpush1.msra.mxu0 %v5866
      %5868 = vmatprep.subr.mxu0 0.0
      %v5869 = vand.u32 %v555, 4294901760
      %v5870 = vsub.f32 %v555, %v5869
      %v5871 = vand.u32 %v5870, 4294901760
      %5872 = vmatpush1.msra.mxu0 %v5871
      %5873 = vmatprep.subr.mxu0 0.0
      %v5874 = vand.u32 %v556, 4294901760
      %v5875 = vsub.f32 %v556, %v5874
      %v5876 = vand.u32 %v5875, 4294901760
      %5877 = vmatpush1.msra.mxu0 %v5876
      %5878 = vmatprep.subr.mxu0 0.0
      %v5879 = vand.u32 %v557, 4294901760
      %v5880 = vsub.f32 %v557, %v5879
      %v5881 = vand.u32 %v5880, 4294901760
      %5882 = vmatpush1.msra.mxu0 %v5881
      %5883 = vmatprep.subr.mxu0 0.0
      %v5884 = vand.u32 %v558, 4294901760
      %v5885 = vsub.f32 %v558, %v5884
      %v5886 = vand.u32 %v5885, 4294901760
      %5887 = vmatpush1.msra.mxu0 %v5886
      %5888 = vmatprep.subr.mxu0 0.0
      %v5889 = vand.u32 %v559, 4294901760
      %v5890 = vsub.f32 %v559, %v5889
      %v5891 = vand.u32 %v5890, 4294901760
      %5892 = vmatpush1.msra.mxu0 %v5891
      %5893 = vmatprep.subr.mxu0 0.0
      %v5894 = vand.u32 %v560, 4294901760
      %v5895 = vsub.f32 %v560, %v5894
      %v5896 = vand.u32 %v5895, 4294901760
      %5897 = vmatpush1.msra.mxu0 %v5896
      %5898 = vmatprep.subr.mxu0 0.0
      %v5899 = vand.u32 %v561, 4294901760
      %v5900 = vsub.f32 %v561, %v5899
      %v5901 = vand.u32 %v5900, 4294901760
      %5902 = vmatpush1.msra.mxu0 %v5901
      %5903 = vmatprep.subr.mxu0 0.0
      %v5904 = vand.u32 %v562, 4294901760
      %v5905 = vsub.f32 %v562, %v5904
      %v5906 = vand.u32 %v5905, 4294901760
      %5907 = vmatpush1.msra.mxu0 %v5906
      %5908 = vmatprep.subr.mxu0 0.0
      %v5909 = vand.u32 %v563, 4294901760
      %v5910 = vsub.f32 %v563, %v5909
      %v5911 = vand.u32 %v5910, 4294901760
      %5912 = vmatpush1.msra.mxu0 %v5911
      %v5913 = vand.u32 %v4838, 4294901760
      %5914 = vmatprep.mubr.f32.mxu0 %v5913
      %v5915 = vand.u32 %v4837, 4294901760
      %5916 = vmatmul.mubr.f32.gmra.mrb[0].mxu0 %v5915
      %v5917 = vpop.f32.mrb[0].mxu0
      %v5918 = vadd.f32 %v5673, %v5917
      %v5919 = vpop.f32.mrb[0].mxu0
      %v5920 = vand.u32 %v4842, 4294901760
      %5921 = vmatprep.mubr.f32.mxu0 %v5920
      %v5922 = vand.u32 %v4841, 4294901760
      %5923 = vmatmul.mubr.f32.gmra.mrb[0].mxu0 %v5922
      %v5924 = vpop.f32.mrb[0].mxu0
      %v5925 = vadd.f32 %v5684, %v5924
      %v5926 = vpop.f32.mrb[0].mxu0
      %v5927 = vand.u32 %v4846, 4294901760
      %5928 = vmatprep.mubr.f32.mxu0 %v5927
      %v5929 = vand.u32 %v4845, 4294901760
      %5930 = vmatmul.mubr.f32.gmra.mrb[0].mxu0 %v5929
      %v5931 = vpop.f32.mrb[0].mxu0
      %v5932 = vadd.f32 %v5695, %v5931
      %v5933 = vpop.f32.mrb[0].mxu0
      %v5934 = vand.u32 %v4850, 4294901760
      %5935 = vmatprep.mubr.f32.mxu0 %v5934
      %v5936 = vand.u32 %v4849, 4294901760
      %5937 = vmatmul.mubr.f32.gmra.mrb[0].mxu0 %v5936
      %v5938 = vpop.f32.mrb[0].mxu0
      %v5939 = vadd.f32 %v5706, %v5938
      %v5940 = vpop.f32.mrb[0].mxu0
      %v5941 = vand.u32 %v4854, 4294901760
      %5942 = vmatprep.mubr.f32.mxu0 %v5941
      %v5943 = vand.u32 %v4853, 4294901760
      %5944 = vmatmul.mubr.f32.gmra.mrb[0].mxu0 %v5943
      %v5945 = vpop.f32.mrb[0].mxu0
      %v5946 = vadd.f32 %v5717, %v5945
      %v5947 = vpop.f32.mrb[0].mxu0
      %v5948 = vand.u32 %v4858, 4294901760
      %5949 = vmatprep.mubr.f32.mxu0 %v5948
      %v5950 = vand.u32 %v4857, 4294901760
      %5951 = vmatmul.mubr.f32.gmra.mrb[0].mxu0 %v5950
      %v5952 = vpop.f32.mrb[0].mxu0
      %v5953 = vadd.f32 %v5728, %v5952
      %v5954 = vpop.f32.mrb[0].mxu0
      %v5955 = vand.u32 %v4862, 4294901760
      %5956 = vmatprep.mubr.f32.mxu0 %v5955
      %v5957 = vand.u32 %v4861, 4294901760
      %5958 = vmatmul.mubr.f32.gmra.mrb[0].mxu0 %v5957
      %v5959 = vpop.f32.mrb[0].mxu0
      %v5960 = vadd.f32 %v5739, %v5959
      %v5961 = vpop.f32.mrb[0].mxu0
      %v5962 = vand.u32 %v4866, 4294901760
      %5963 = vmatprep.mubr.f32.mxu0 %v5962
      %v5964 = vand.u32 %v4865, 4294901760
      %5965 = vmatmul.mubr.f32.gmra.mrb[0].mxu0 %v5964
      %v5966 = vpop.f32.mrb[0].mxu0
      %v5967 = vadd.f32 %v5750, %v5966
      %v5968 = vpop.f32.mrb[0].mxu0
      %5969 = vdwg.mxu0
      %5970 = vmatprep.subr.mxu0 0.0
      %v5971 = vand.u32 %v532, 4294901760
      %5972 = vmatpush1.msra.mxu0 %v5971
      %5973 = vmatprep.subr.mxu0 0.0
      %v5974 = vand.u32 %v533, 4294901760
      %5975 = vmatpush1.msra.mxu0 %v5974
      %5976 = vmatprep.subr.mxu0 0.0
      %v5977 = vand.u32 %v534, 4294901760
      %5978 = vmatpush1.msra.mxu0 %v5977
      %5979 = vmatprep.subr.mxu0 0.0
      %v5980 = vand.u32 %v535, 4294901760
      %5981 = vmatpush1.msra.mxu0 %v5980
      %5982 = vmatprep.subr.mxu0 0.0
      %v5983 = vand.u32 %v536, 4294901760
      %5984 = vmatpush1.msra.mxu0 %v5983
      %5985 = vmatprep.subr.mxu0 0.0
      %v5986 = vand.u32 %v537, 4294901760
      %5987 = vmatpush1.msra.mxu0 %v5986
      %5988 = vmatprep.subr.mxu0 0.0
      %v5989 = vand.u32 %v538, 4294901760
      %5990 = vmatpush1.msra.mxu0 %v5989
      %5991 = vmatprep.subr.mxu0 0.0
      %v5992 = vand.u32 %v539, 4294901760
      %5993 = vmatpush1.msra.mxu0 %v5992
      %5994 = vmatprep.subr.mxu0 0.0
      %v5995 = vand.u32 %v540, 4294901760
      %5996 = vmatpush1.msra.mxu0 %v5995
      %5997 = vmatprep.subr.mxu0 0.0
      %v5998 = vand.u32 %v541, 4294901760
      %5999 = vmatpush1.msra.mxu0 %v5998
      %6000 = vmatprep.subr.mxu0 0.0
      %v6001 = vand.u32 %v542, 4294901760
      %6002 = vmatpush1.msra.mxu0 %v6001
      %6003 = vmatprep.subr.mxu0 0.0
      %v6004 = vand.u32 %v543, 4294901760
      %6005 = vmatpush1.msra.mxu0 %v6004
      %6006 = vmatprep.subr.mxu0 0.0
      %v6007 = vand.u32 %v544, 4294901760
      %6008 = vmatpush1.msra.mxu0 %v6007
      %6009 = vmatprep.subr.mxu0 0.0
      %v6010 = vand.u32 %v545, 4294901760
      %6011 = vmatpush1.msra.mxu0 %v6010
      %6012 = vmatprep.subr.mxu0 0.0
      %v6013 = vand.u32 %v546, 4294901760
      %6014 = vmatpush1.msra.mxu0 %v6013
      %6015 = vmatprep.subr.mxu0 0.0
      %v6016 = vand.u32 %v547, 4294901760
      %6017 = vmatpush1.msra.mxu0 %v6016
      %6018 = vmatprep.subr.mxu0 0.0
      %v6019 = vand.u32 %v548, 4294901760
      %6020 = vmatpush1.msra.mxu0 %v6019
      %6021 = vmatprep.subr.mxu0 0.0
      %v6022 = vand.u32 %v549, 4294901760
      %6023 = vmatpush1.msra.mxu0 %v6022
      %6024 = vmatprep.subr.mxu0 0.0
      %v6025 = vand.u32 %v550, 4294901760
      %6026 = vmatpush1.msra.mxu0 %v6025
      %6027 = vmatprep.subr.mxu0 0.0
      %v6028 = vand.u32 %v551, 4294901760
      %6029 = vmatpush1.msra.mxu0 %v6028
      %6030 = vmatprep.subr.mxu0 0.0
      %v6031 = vand.u32 %v552, 4294901760
      %6032 = vmatpush1.msra.mxu0 %v6031
      %6033 = vmatprep.subr.mxu0 0.0
      %v6034 = vand.u32 %v553, 4294901760
      %6035 = vmatpush1.msra.mxu0 %v6034
      %6036 = vmatprep.subr.mxu0 0.0
      %v6037 = vand.u32 %v554, 4294901760
      %6038 = vmatpush1.msra.mxu0 %v6037
      %6039 = vmatprep.subr.mxu0 0.0
      %v6040 = vand.u32 %v555, 4294901760
      %6041 = vmatpush1.msra.mxu0 %v6040
      %6042 = vmatprep.subr.mxu0 0.0
      %v6043 = vand.u32 %v556, 4294901760
      %6044 = vmatpush1.msra.mxu0 %v6043
      %6045 = vmatprep.subr.mxu0 0.0
      %v6046 = vand.u32 %v557, 4294901760
      %6047 = vmatpush1.msra.mxu0 %v6046
      %6048 = vmatprep.subr.mxu0 0.0
      %v6049 = vand.u32 %v558, 4294901760
      %6050 = vmatpush1.msra.mxu0 %v6049
      %6051 = vmatprep.subr.mxu0 0.0
      %v6052 = vand.u32 %v559, 4294901760
      %6053 = vmatpush1.msra.mxu0 %v6052
      %6054 = vmatprep.subr.mxu0 0.0
      %v6055 = vand.u32 %v560, 4294901760
      %6056 = vmatpush1.msra.mxu0 %v6055
      %6057 = vmatprep.subr.mxu0 0.0
      %v6058 = vand.u32 %v561, 4294901760
      %6059 = vmatpush1.msra.mxu0 %v6058
      %6060 = vmatprep.subr.mxu0 0.0
      %v6061 = vand.u32 %v562, 4294901760
      %6062 = vmatpush1.msra.mxu0 %v6061
      %6063 = vmatprep.subr.mxu0 0.0
      %v6064 = vand.u32 %v563, 4294901760
      %6065 = vmatpush1.msra.mxu0 %v6064
      %v6066 = vand.u32 %v4838, 4294901760
      %6067 = vmatprep.mubr.f32.mxu0 %v6066
      %v6068 = vand.u32 %v4837, 4294901760
      %6069 = vmatmul.mubr.f32.gmra.mrb[0].mxu0 %v6068
      %v6070 = vpop.f32.mrb[0].mxu0
      %v6071 = vadd.f32 %v5918, %v6070
      %v6072 = vpop.f32.mrb[0].mxu0
      %v6073 = vand.u32 %v4842, 4294901760
      %6074 = vmatprep.mubr.f32.mxu0 %v6073
      %v6075 = vand.u32 %v4841, 4294901760
      %6076 = vmatmul.mubr.f32.gmra.mrb[0].mxu0 %v6075
      %v6077 = vpop.f32.mrb[0].mxu0
      %v6078 = vadd.f32 %v5925, %v6077
      %v6079 = vpop.f32.mrb[0].mxu0
      %v6080 = vand.u32 %v4846, 4294901760
      %6081 = vmatprep.mubr.f32.mxu0 %v6080
      %v6082 = vand.u32 %v4845, 4294901760
      %6083 = vmatmul.mubr.f32.gmra.mrb[0].mxu0 %v6082
      %v6084 = vpop.f32.mrb[0].mxu0
      %v6085 = vadd.f32 %v5932, %v6084
      %v6086 = vpop.f32.mrb[0].mxu0
      %v6087 = vand.u32 %v4850, 4294901760
      %6088 = vmatprep.mubr.f32.mxu0 %v6087
      %v6089 = vand.u32 %v4849, 4294901760
      %6090 = vmatmul.mubr.f32.gmra.mrb[0].mxu0 %v6089
      %v6091 = vpop.f32.mrb[0].mxu0
      %v6092 = vadd.f32 %v5939, %v6091
      %v6093 = vpop.f32.mrb[0].mxu0
      %v6094 = vand.u32 %v4854, 4294901760
      %6095 = vmatprep.mubr.f32.mxu0 %v6094
      %v6096 = vand.u32 %v4853, 4294901760
      %6097 = vmatmul.mubr.f32.gmra.mrb[0].mxu0 %v6096
      %v6098 = vpop.f32.mrb[0].mxu0
      %v6099 = vadd.f32 %v5946, %v6098
      %v6100 = vpop.f32.mrb[0].mxu0
      %v6101 = vand.u32 %v4858, 4294901760
      %6102 = vmatprep.mubr.f32.mxu0 %v6101
      %v6103 = vand.u32 %v4857, 4294901760
      %6104 = vmatmul.mubr.f32.gmra.mrb[0].mxu0 %v6103
      %v6105 = vpop.f32.mrb[0].mxu0
      %v6106 = vadd.f32 %v5953, %v6105
      %v6107 = vpop.f32.mrb[0].mxu0
      %v6108 = vand.u32 %v4862, 4294901760
      %6109 = vmatprep.mubr.f32.mxu0 %v6108
      %v6110 = vand.u32 %v4861, 4294901760
      %6111 = vmatmul.mubr.f32.gmra.mrb[0].mxu0 %v6110
      %v6112 = vpop.f32.mrb[0].mxu0
      %v6113 = vadd.f32 %v5960, %v6112
      %v6114 = vpop.f32.mrb[0].mxu0
      %v6115 = vand.u32 %v4866, 4294901760
      %6116 = vmatprep.mubr.f32.mxu0 %v6115
      %v6117 = vand.u32 %v4865, 4294901760
      %6118 = vmatmul.mubr.f32.gmra.mrb[0].mxu0 %v6117
      %v6119 = vpop.f32.mrb[0].mxu0
      %v6120 = vadd.f32 %v5967, %v6119
      %v6121 = vpop.f32.mrb[0].mxu0
      %6122 = vdwg.mxu0
      %6123 = vmatprep.subr.mxu0 0.0
      %v6124 = vand.u32 %v564, 4294901760
      %6125 = vmatpush1.msra.mxu0 %v6124
      %6126 = vmatprep.subr.mxu0 0.0
      %v6127 = vand.u32 %v565, 4294901760
      %6128 = vmatpush1.msra.mxu0 %v6127
      %6129 = vmatprep.subr.mxu0 0.0
      %v6130 = vand.u32 %v566, 4294901760
      %6131 = vmatpush1.msra.mxu0 %v6130
      %6132 = vmatprep.subr.mxu0 0.0
      %v6133 = vand.u32 %v567, 4294901760
      %6134 = vmatpush1.msra.mxu0 %v6133
      %6135 = vmatprep.subr.mxu0 0.0
      %v6136 = vand.u32 %v568, 4294901760
      %6137 = vmatpush1.msra.mxu0 %v6136
      %6138 = vmatprep.subr.mxu0 0.0
      %v6139 = vand.u32 %v569, 4294901760
      %6140 = vmatpush1.msra.mxu0 %v6139
      %6141 = vmatprep.subr.mxu0 0.0
      %v6142 = vand.u32 %v570, 4294901760
      %6143 = vmatpush1.msra.mxu0 %v6142
      %6144 = vmatprep.subr.mxu0 0.0
      %v6145 = vand.u32 %v571, 4294901760
      %6146 = vmatpush1.msra.mxu0 %v6145
      %6147 = vmatprep.subr.mxu0 0.0
      %v6148 = vand.u32 %v572, 4294901760
      %6149 = vmatpush1.msra.mxu0 %v6148
      %6150 = vmatprep.subr.mxu0 0.0
      %v6151 = vand.u32 %v573, 4294901760
      %6152 = vmatpush1.msra.mxu0 %v6151
      %6153 = vmatprep.subr.mxu0 0.0
      %v6154 = vand.u32 %v574, 4294901760
      %6155 = vmatpush1.msra.mxu0 %v6154
      %6156 = vmatprep.subr.mxu0 0.0
      %v6157 = vand.u32 %v575, 4294901760
      %6158 = vmatpush1.msra.mxu0 %v6157
      %6159 = vmatprep.subr.mxu0 0.0
      %v6160 = vand.u32 %v576, 4294901760
      %6161 = vmatpush1.msra.mxu0 %v6160
      %6162 = vmatprep.subr.mxu0 0.0
      %v6163 = vand.u32 %v577, 4294901760
      %6164 = vmatpush1.msra.mxu0 %v6163
      %6165 = vmatprep.subr.mxu0 0.0
      %v6166 = vand.u32 %v578, 4294901760
      %6167 = vmatpush1.msra.mxu0 %v6166
      %6168 = vmatprep.subr.mxu0 0.0
      %v6169 = vand.u32 %v579, 4294901760
      %6170 = vmatpush1.msra.mxu0 %v6169
      %6171 = vmatprep.subr.mxu0 0.0
      %v6172 = vand.u32 %v580, 4294901760
      %6173 = vmatpush1.msra.mxu0 %v6172
      %6174 = vmatprep.subr.mxu0 0.0
      %v6175 = vand.u32 %v581, 4294901760
      %6176 = vmatpush1.msra.mxu0 %v6175
      %6177 = vmatprep.subr.mxu0 0.0
      %v6178 = vand.u32 %v582, 4294901760
      %6179 = vmatpush1.msra.mxu0 %v6178
      %6180 = vmatprep.subr.mxu0 0.0
      %v6181 = vand.u32 %v583, 4294901760
      %6182 = vmatpush1.msra.mxu0 %v6181
      %6183 = vmatprep.subr.mxu0 0.0
      %v6184 = vand.u32 %v584, 4294901760
      %6185 = vmatpush1.msra.mxu0 %v6184
      %6186 = vmatprep.subr.mxu0 0.0
      %v6187 = vand.u32 %v585, 4294901760
      %6188 = vmatpush1.msra.mxu0 %v6187
      %6189 = vmatprep.subr.mxu0 0.0
      %v6190 = vand.u32 %v586, 4294901760
      %6191 = vmatpush1.msra.mxu0 %v6190
      %6192 = vmatprep.subr.mxu0 0.0
      %v6193 = vand.u32 %v587, 4294901760
      %6194 = vmatpush1.msra.mxu0 %v6193
      %6195 = vmatprep.subr.mxu0 0.0
      %v6196 = vand.u32 %v588, 4294901760
      %6197 = vmatpush1.msra.mxu0 %v6196
      %6198 = vmatprep.subr.mxu0 0.0
      %v6199 = vand.u32 %v589, 4294901760
      %6200 = vmatpush1.msra.mxu0 %v6199
      %6201 = vmatprep.subr.mxu0 0.0
      %v6202 = vand.u32 %v590, 4294901760
      %6203 = vmatpush1.msra.mxu0 %v6202
      %6204 = vmatprep.subr.mxu0 0.0
      %v6205 = vand.u32 %v591, 4294901760
      %6206 = vmatpush1.msra.mxu0 %v6205
      %6207 = vmatprep.subr.mxu0 0.0
      %v6208 = vand.u32 %v592, 4294901760
      %6209 = vmatpush1.msra.mxu0 %v6208
      %6210 = vmatprep.subr.mxu0 0.0
      %v6211 = vand.u32 %v593, 4294901760
      %6212 = vmatpush1.msra.mxu0 %v6211
      %6213 = vmatprep.subr.mxu0 0.0
      %v6214 = vand.u32 %v594, 4294901760
      %6215 = vmatpush1.msra.mxu0 %v6214
      %6216 = vmatprep.subr.mxu0 0.0
      %v6217 = vand.u32 %v595, 4294901760
      %6218 = vmatpush1.msra.mxu0 %v6217
      %v6219 = vand.u32 %v4840, 4294901760
      %v6220 = vsub.f32 %v4840, %v6219
      %v6221 = vand.u32 %v6220, 4294901760
      %v6222 = vsub.f32 %v6220, %v6221
      %v6223 = vand.u32 %v6222, 4294901760
      %6224 = vmatprep.mubr.f32.mxu0 %v6223
      %v6225 = vand.u32 %v4839, 4294901760
      %v6226 = vsub.f32 %v4839, %v6225
      %v6227 = vand.u32 %v6226, 4294901760
      %v6228 = vsub.f32 %v6226, %v6227
      %v6229 = vand.u32 %v6228, 4294901760
      %6230 = vmatmul.mubr.f32.gmra.mrb[0].mxu0 %v6229
      %v6231 = vpop.f32.mrb[0].mxu0
      %v6232 = vadd.f32 %v6071, %v6231
      %v6233 = vpop.f32.mrb[0].mxu0
      %v6234 = vand.u32 %v4844, 4294901760
      %v6235 = vsub.f32 %v4844, %v6234
      %v6236 = vand.u32 %v6235, 4294901760
      %v6237 = vsub.f32 %v6235, %v6236
      %v6238 = vand.u32 %v6237, 4294901760
      %6239 = vmatprep.mubr.f32.mxu0 %v6238
      %v6240 = vand.u32 %v4843, 4294901760
      %v6241 = vsub.f32 %v4843, %v6240
      %v6242 = vand.u32 %v6241, 4294901760
      %v6243 = vsub.f32 %v6241, %v6242
      %v6244 = vand.u32 %v6243, 4294901760
      %6245 = vmatmul.mubr.f32.gmra.mrb[0].mxu0 %v6244
      %v6246 = vpop.f32.mrb[0].mxu0
      %v6247 = vadd.f32 %v6078, %v6246
      %v6248 = vpop.f32.mrb[0].mxu0
      %v6249 = vand.u32 %v4848, 4294901760
      %v6250 = vsub.f32 %v4848, %v6249
      %v6251 = vand.u32 %v6250, 4294901760
      %v6252 = vsub.f32 %v6250, %v6251
      %v6253 = vand.u32 %v6252, 4294901760
      %6254 = vmatprep.mubr.f32.mxu0 %v6253
      %v6255 = vand.u32 %v4847, 4294901760
      %v6256 = vsub.f32 %v4847, %v6255
      %v6257 = vand.u32 %v6256, 4294901760
      %v6258 = vsub.f32 %v6256, %v6257
      %v6259 = vand.u32 %v6258, 4294901760
      %6260 = vmatmul.mubr.f32.gmra.mrb[0].mxu0 %v6259
      %v6261 = vpop.f32.mrb[0].mxu0
      %v6262 = vadd.f32 %v6085, %v6261
      %v6263 = vpop.f32.mrb[0].mxu0
      %v6264 = vand.u32 %v4852, 4294901760
      %v6265 = vsub.f32 %v4852, %v6264
      %v6266 = vand.u32 %v6265, 4294901760
      %v6267 = vsub.f32 %v6265, %v6266
      %v6268 = vand.u32 %v6267, 4294901760
      %6269 = vmatprep.mubr.f32.mxu0 %v6268
      %v6270 = vand.u32 %v4851, 4294901760
      %v6271 = vsub.f32 %v4851, %v6270
      %v6272 = vand.u32 %v6271, 4294901760
      %v6273 = vsub.f32 %v6271, %v6272
      %v6274 = vand.u32 %v6273, 4294901760
      %6275 = vmatmul.mubr.f32.gmra.mrb[0].mxu0 %v6274
      %v6276 = vpop.f32.mrb[0].mxu0
      %v6277 = vadd.f32 %v6092, %v6276
      %v6278 = vpop.f32.mrb[0].mxu0
      %v6279 = vand.u32 %v4856, 4294901760
      %v6280 = vsub.f32 %v4856, %v6279
      %v6281 = vand.u32 %v6280, 4294901760
      %v6282 = vsub.f32 %v6280, %v6281
      %v6283 = vand.u32 %v6282, 4294901760
      %6284 = vmatprep.mubr.f32.mxu0 %v6283
      %v6285 = vand.u32 %v4855, 4294901760
      %v6286 = vsub.f32 %v4855, %v6285
      %v6287 = vand.u32 %v6286, 4294901760
      %v6288 = vsub.f32 %v6286, %v6287
      %v6289 = vand.u32 %v6288, 4294901760
      %6290 = vmatmul.mubr.f32.gmra.mrb[0].mxu0 %v6289
      %v6291 = vpop.f32.mrb[0].mxu0
      %v6292 = vadd.f32 %v6099, %v6291
      %v6293 = vpop.f32.mrb[0].mxu0
      %v6294 = vand.u32 %v4860, 4294901760
      %v6295 = vsub.f32 %v4860, %v6294
      %v6296 = vand.u32 %v6295, 4294901760
      %v6297 = vsub.f32 %v6295, %v6296
      %v6298 = vand.u32 %v6297, 4294901760
      %6299 = vmatprep.mubr.f32.mxu0 %v6298
      %v6300 = vand.u32 %v4859, 4294901760
      %v6301 = vsub.f32 %v4859, %v6300
      %v6302 = vand.u32 %v6301, 4294901760
      %v6303 = vsub.f32 %v6301, %v6302
      %v6304 = vand.u32 %v6303, 4294901760
      %6305 = vmatmul.mubr.f32.gmra.mrb[0].mxu0 %v6304
      %v6306 = vpop.f32.mrb[0].mxu0
      %v6307 = vadd.f32 %v6106, %v6306
      %v6308 = vpop.f32.mrb[0].mxu0
      %v6309 = vand.u32 %v4864, 4294901760
      %v6310 = vsub.f32 %v4864, %v6309
      %v6311 = vand.u32 %v6310, 4294901760
      %v6312 = vsub.f32 %v6310, %v6311
      %v6313 = vand.u32 %v6312, 4294901760
      %6314 = vmatprep.mubr.f32.mxu0 %v6313
      %v6315 = vand.u32 %v4863, 4294901760
      %v6316 = vsub.f32 %v4863, %v6315
      %v6317 = vand.u32 %v6316, 4294901760
      %v6318 = vsub.f32 %v6316, %v6317
      %v6319 = vand.u32 %v6318, 4294901760
      %6320 = vmatmul.mubr.f32.gmra.mrb[0].mxu0 %v6319
      %v6321 = vpop.f32.mrb[0].mxu0
      %v6322 = vadd.f32 %v6113, %v6321
      %v6323 = vpop.f32.mrb[0].mxu0
      %v6324 = vand.u32 %v4868, 4294901760
      %v6325 = vsub.f32 %v4868, %v6324
      %v6326 = vand.u32 %v6325, 4294901760
      %v6327 = vsub.f32 %v6325, %v6326
      %v6328 = vand.u32 %v6327, 4294901760
      %6329 = vmatprep.mubr.f32.mxu0 %v6328
      %v6330 = vand.u32 %v4867, 4294901760
      %v6331 = vsub.f32 %v4867, %v6330
      %v6332 = vand.u32 %v6331, 4294901760
      %v6333 = vsub.f32 %v6331, %v6332
      %v6334 = vand.u32 %v6333, 4294901760
      %6335 = vmatmul.mubr.f32.gmra.mrb[0].mxu0 %v6334
      %v6336 = vpop.f32.mrb[0].mxu0
      %v6337 = vadd.f32 %v6120, %v6336
      %v6338 = vpop.f32.mrb[0].mxu0
      %6339 = vdwg.mxu0
      %6340 = vmatprep.subr.mxu0 0.0
      %v6341 = vand.u32 %v564, 4294901760
      %v6342 = vsub.f32 %v564, %v6341
      %v6343 = vand.u32 %v6342, 4294901760
      %v6344 = vsub.f32 %v6342, %v6343
      %v6345 = vand.u32 %v6344, 4294901760
      %6346 = vmatpush1.msra.mxu0 %v6345
      %6347 = vmatprep.subr.mxu0 0.0
      %v6348 = vand.u32 %v565, 4294901760
      %v6349 = vsub.f32 %v565, %v6348
      %v6350 = vand.u32 %v6349, 4294901760
      %v6351 = vsub.f32 %v6349, %v6350
      %v6352 = vand.u32 %v6351, 4294901760
      %6353 = vmatpush1.msra.mxu0 %v6352
      %6354 = vmatprep.subr.mxu0 0.0
      %v6355 = vand.u32 %v566, 4294901760
      %v6356 = vsub.f32 %v566, %v6355
      %v6357 = vand.u32 %v6356, 4294901760
      %v6358 = vsub.f32 %v6356, %v6357
      %v6359 = vand.u32 %v6358, 4294901760
      %6360 = vmatpush1.msra.mxu0 %v6359
      %6361 = vmatprep.subr.mxu0 0.0
      %v6362 = vand.u32 %v567, 4294901760
      %v6363 = vsub.f32 %v567, %v6362
      %v6364 = vand.u32 %v6363, 4294901760
      %v6365 = vsub.f32 %v6363, %v6364
      %v6366 = vand.u32 %v6365, 4294901760
      %6367 = vmatpush1.msra.mxu0 %v6366
      %6368 = vmatprep.subr.mxu0 0.0
      %v6369 = vand.u32 %v568, 4294901760
      %v6370 = vsub.f32 %v568, %v6369
      %v6371 = vand.u32 %v6370, 4294901760
      %v6372 = vsub.f32 %v6370, %v6371
      %v6373 = vand.u32 %v6372, 4294901760
      %6374 = vmatpush1.msra.mxu0 %v6373
      %6375 = vmatprep.subr.mxu0 0.0
      %v6376 = vand.u32 %v569, 4294901760
      %v6377 = vsub.f32 %v569, %v6376
      %v6378 = vand.u32 %v6377, 4294901760
      %v6379 = vsub.f32 %v6377, %v6378
      %v6380 = vand.u32 %v6379, 4294901760
      %6381 = vmatpush1.msra.mxu0 %v6380
      %6382 = vmatprep.subr.mxu0 0.0
      %v6383 = vand.u32 %v570, 4294901760
      %v6384 = vsub.f32 %v570, %v6383
      %v6385 = vand.u32 %v6384, 4294901760
      %v6386 = vsub.f32 %v6384, %v6385
      %v6387 = vand.u32 %v6386, 4294901760
      %6388 = vmatpush1.msra.mxu0 %v6387
      %6389 = vmatprep.subr.mxu0 0.0
      %v6390 = vand.u32 %v571, 4294901760
      %v6391 = vsub.f32 %v571, %v6390
      %v6392 = vand.u32 %v6391, 4294901760
      %v6393 = vsub.f32 %v6391, %v6392
      %v6394 = vand.u32 %v6393, 4294901760
      %6395 = vmatpush1.msra.mxu0 %v6394
      %6396 = vmatprep.subr.mxu0 0.0
      %v6397 = vand.u32 %v572, 4294901760
      %v6398 = vsub.f32 %v572, %v6397
      %v6399 = vand.u32 %v6398, 4294901760
      %v6400 = vsub.f32 %v6398, %v6399
      %v6401 = vand.u32 %v6400, 4294901760
      %6402 = vmatpush1.msra.mxu0 %v6401
      %6403 = vmatprep.subr.mxu0 0.0
      %v6404 = vand.u32 %v573, 4294901760
      %v6405 = vsub.f32 %v573, %v6404
      %v6406 = vand.u32 %v6405, 4294901760
      %v6407 = vsub.f32 %v6405, %v6406
      %v6408 = vand.u32 %v6407, 4294901760
      %6409 = vmatpush1.msra.mxu0 %v6408
      %6410 = vmatprep.subr.mxu0 0.0
      %v6411 = vand.u32 %v574, 4294901760
      %v6412 = vsub.f32 %v574, %v6411
      %v6413 = vand.u32 %v6412, 4294901760
      %v6414 = vsub.f32 %v6412, %v6413
      %v6415 = vand.u32 %v6414, 4294901760
      %6416 = vmatpush1.msra.mxu0 %v6415
      %6417 = vmatprep.subr.mxu0 0.0
      %v6418 = vand.u32 %v575, 4294901760
      %v6419 = vsub.f32 %v575, %v6418
      %v6420 = vand.u32 %v6419, 4294901760
      %v6421 = vsub.f32 %v6419, %v6420
      %v6422 = vand.u32 %v6421, 4294901760
      %6423 = vmatpush1.msra.mxu0 %v6422
      %6424 = vmatprep.subr.mxu0 0.0
      %v6425 = vand.u32 %v576, 4294901760
      %v6426 = vsub.f32 %v576, %v6425
      %v6427 = vand.u32 %v6426, 4294901760
      %v6428 = vsub.f32 %v6426, %v6427
      %v6429 = vand.u32 %v6428, 4294901760
      %6430 = vmatpush1.msra.mxu0 %v6429
      %6431 = vmatprep.subr.mxu0 0.0
      %v6432 = vand.u32 %v577, 4294901760
      %v6433 = vsub.f32 %v577, %v6432
      %v6434 = vand.u32 %v6433, 4294901760
      %v6435 = vsub.f32 %v6433, %v6434
      %v6436 = vand.u32 %v6435, 4294901760
      %6437 = vmatpush1.msra.mxu0 %v6436
      %6438 = vmatprep.subr.mxu0 0.0
      %v6439 = vand.u32 %v578, 4294901760
      %v6440 = vsub.f32 %v578, %v6439
      %v6441 = vand.u32 %v6440, 4294901760
      %v6442 = vsub.f32 %v6440, %v6441
      %v6443 = vand.u32 %v6442, 4294901760
      %6444 = vmatpush1.msra.mxu0 %v6443
      %6445 = vmatprep.subr.mxu0 0.0
      %v6446 = vand.u32 %v579, 4294901760
      %v6447 = vsub.f32 %v579, %v6446
      %v6448 = vand.u32 %v6447, 4294901760
      %v6449 = vsub.f32 %v6447, %v6448
      %v6450 = vand.u32 %v6449, 4294901760
      %6451 = vmatpush1.msra.mxu0 %v6450
      %6452 = vmatprep.subr.mxu0 0.0
      %v6453 = vand.u32 %v580, 4294901760
      %v6454 = vsub.f32 %v580, %v6453
      %v6455 = vand.u32 %v6454, 4294901760
      %v6456 = vsub.f32 %v6454, %v6455
      %v6457 = vand.u32 %v6456, 4294901760
      %6458 = vmatpush1.msra.mxu0 %v6457
      %6459 = vmatprep.subr.mxu0 0.0
      %v6460 = vand.u32 %v581, 4294901760
      %v6461 = vsub.f32 %v581, %v6460
      %v6462 = vand.u32 %v6461, 4294901760
      %v6463 = vsub.f32 %v6461, %v6462
      %v6464 = vand.u32 %v6463, 4294901760
      %6465 = vmatpush1.msra.mxu0 %v6464
      %6466 = vmatprep.subr.mxu0 0.0
      %v6467 = vand.u32 %v582, 4294901760
      %v6468 = vsub.f32 %v582, %v6467
      %v6469 = vand.u32 %v6468, 4294901760
      %v6470 = vsub.f32 %v6468, %v6469
      %v6471 = vand.u32 %v6470, 4294901760
      %6472 = vmatpush1.msra.mxu0 %v6471
      %6473 = vmatprep.subr.mxu0 0.0
      %v6474 = vand.u32 %v583, 4294901760
      %v6475 = vsub.f32 %v583, %v6474
      %v6476 = vand.u32 %v6475, 4294901760
      %v6477 = vsub.f32 %v6475, %v6476
      %v6478 = vand.u32 %v6477, 4294901760
      %6479 = vmatpush1.msra.mxu0 %v6478
      %6480 = vmatprep.subr.mxu0 0.0
      %v6481 = vand.u32 %v584, 4294901760
      %v6482 = vsub.f32 %v584, %v6481
      %v6483 = vand.u32 %v6482, 4294901760
      %v6484 = vsub.f32 %v6482, %v6483
      %v6485 = vand.u32 %v6484, 4294901760
      %6486 = vmatpush1.msra.mxu0 %v6485
      %6487 = vmatprep.subr.mxu0 0.0
      %v6488 = vand.u32 %v585, 4294901760
      %v6489 = vsub.f32 %v585, %v6488
      %v6490 = vand.u32 %v6489, 4294901760
      %v6491 = vsub.f32 %v6489, %v6490
      %v6492 = vand.u32 %v6491, 4294901760
      %6493 = vmatpush1.msra.mxu0 %v6492
      %6494 = vmatprep.subr.mxu0 0.0
      %v6495 = vand.u32 %v586, 4294901760
      %v6496 = vsub.f32 %v586, %v6495
      %v6497 = vand.u32 %v6496, 4294901760
      %v6498 = vsub.f32 %v6496, %v6497
      %v6499 = vand.u32 %v6498, 4294901760
      %6500 = vmatpush1.msra.mxu0 %v6499
      %6501 = vmatprep.subr.mxu0 0.0
      %v6502 = vand.u32 %v587, 4294901760
      %v6503 = vsub.f32 %v587, %v6502
      %v6504 = vand.u32 %v6503, 4294901760
      %v6505 = vsub.f32 %v6503, %v6504
      %v6506 = vand.u32 %v6505, 4294901760
      %6507 = vmatpush1.msra.mxu0 %v6506
      %6508 = vmatprep.subr.mxu0 0.0
      %v6509 = vand.u32 %v588, 4294901760
      %v6510 = vsub.f32 %v588, %v6509
      %v6511 = vand.u32 %v6510, 4294901760
      %v6512 = vsub.f32 %v6510, %v6511
      %v6513 = vand.u32 %v6512, 4294901760
      %6514 = vmatpush1.msra.mxu0 %v6513
      %6515 = vmatprep.subr.mxu0 0.0
      %v6516 = vand.u32 %v589, 4294901760
      %v6517 = vsub.f32 %v589, %v6516
      %v6518 = vand.u32 %v6517, 4294901760
      %v6519 = vsub.f32 %v6517, %v6518
      %v6520 = vand.u32 %v6519, 4294901760
      %6521 = vmatpush1.msra.mxu0 %v6520
      %6522 = vmatprep.subr.mxu0 0.0
      %v6523 = vand.u32 %v590, 4294901760
      %v6524 = vsub.f32 %v590, %v6523
      %v6525 = vand.u32 %v6524, 4294901760
      %v6526 = vsub.f32 %v6524, %v6525
      %v6527 = vand.u32 %v6526, 4294901760
      %6528 = vmatpush1.msra.mxu0 %v6527
      %6529 = vmatprep.subr.mxu0 0.0
      %v6530 = vand.u32 %v591, 4294901760
      %v6531 = vsub.f32 %v591, %v6530
      %v6532 = vand.u32 %v6531, 4294901760
      %v6533 = vsub.f32 %v6531, %v6532
      %v6534 = vand.u32 %v6533, 4294901760
      %6535 = vmatpush1.msra.mxu0 %v6534
      %6536 = vmatprep.subr.mxu0 0.0
      %v6537 = vand.u32 %v592, 4294901760
      %v6538 = vsub.f32 %v592, %v6537
      %v6539 = vand.u32 %v6538, 4294901760
      %v6540 = vsub.f32 %v6538, %v6539
      %v6541 = vand.u32 %v6540, 4294901760
      %6542 = vmatpush1.msra.mxu0 %v6541
      %6543 = vmatprep.subr.mxu0 0.0
      %v6544 = vand.u32 %v593, 4294901760
      %v6545 = vsub.f32 %v593, %v6544
      %v6546 = vand.u32 %v6545, 4294901760
      %v6547 = vsub.f32 %v6545, %v6546
      %v6548 = vand.u32 %v6547, 4294901760
      %6549 = vmatpush1.msra.mxu0 %v6548
      %6550 = vmatprep.subr.mxu0 0.0
      %v6551 = vand.u32 %v594, 4294901760
      %v6552 = vsub.f32 %v594, %v6551
      %v6553 = vand.u32 %v6552, 4294901760
      %v6554 = vsub.f32 %v6552, %v6553
      %v6555 = vand.u32 %v6554, 4294901760
      %6556 = vmatpush1.msra.mxu0 %v6555
      %6557 = vmatprep.subr.mxu0 0.0
      %v6558 = vand.u32 %v595, 4294901760
      %v6559 = vsub.f32 %v595, %v6558
      %v6560 = vand.u32 %v6559, 4294901760
      %v6561 = vsub.f32 %v6559, %v6560
      %v6562 = vand.u32 %v6561, 4294901760
      %6563 = vmatpush1.msra.mxu0 %v6562
      %v6564 = vand.u32 %v4840, 4294901760
      %6565 = vmatprep.mubr.f32.mxu0 %v6564
      %v6566 = vand.u32 %v4839, 4294901760
      %6567 = vmatmul.mubr.f32.gmra.mrb[0].mxu0 %v6566
      %v6568 = vpop.f32.mrb[0].mxu0
      %v6569 = vadd.f32 %v6232, %v6568
      %v6570 = vpop.f32.mrb[0].mxu0
      %v6571 = vand.u32 %v4844, 4294901760
      %6572 = vmatprep.mubr.f32.mxu0 %v6571
      %v6573 = vand.u32 %v4843, 4294901760
      %6574 = vmatmul.mubr.f32.gmra.mrb[0].mxu0 %v6573
      %v6575 = vpop.f32.mrb[0].mxu0
      %v6576 = vadd.f32 %v6247, %v6575
      %v6577 = vpop.f32.mrb[0].mxu0
      %v6578 = vand.u32 %v4848, 4294901760
      %6579 = vmatprep.mubr.f32.mxu0 %v6578
      %v6580 = vand.u32 %v4847, 4294901760
      %6581 = vmatmul.mubr.f32.gmra.mrb[0].mxu0 %v6580
      %v6582 = vpop.f32.mrb[0].mxu0
      %v6583 = vadd.f32 %v6262, %v6582
      %v6584 = vpop.f32.mrb[0].mxu0
      %v6585 = vand.u32 %v4852, 4294901760
      %6586 = vmatprep.mubr.f32.mxu0 %v6585
      %v6587 = vand.u32 %v4851, 4294901760
      %6588 = vmatmul.mubr.f32.gmra.mrb[0].mxu0 %v6587
      %v6589 = vpop.f32.mrb[0].mxu0
      %v6590 = vadd.f32 %v6277, %v6589
      %v6591 = vpop.f32.mrb[0].mxu0
      %v6592 = vand.u32 %v4856, 4294901760
      %6593 = vmatprep.mubr.f32.mxu0 %v6592
      %v6594 = vand.u32 %v4855, 4294901760
      %6595 = vmatmul.mubr.f32.gmra.mrb[0].mxu0 %v6594
      %v6596 = vpop.f32.mrb[0].mxu0
      %v6597 = vadd.f32 %v6292, %v6596
      %v6598 = vpop.f32.mrb[0].mxu0
      %v6599 = vand.u32 %v4860, 4294901760
      %6600 = vmatprep.mubr.f32.mxu0 %v6599
      %v6601 = vand.u32 %v4859, 4294901760
      %6602 = vmatmul.mubr.f32.gmra.mrb[0].mxu0 %v6601
      %v6603 = vpop.f32.mrb[0].mxu0
      %v6604 = vadd.f32 %v6307, %v6603
      %v6605 = vpop.f32.mrb[0].mxu0
      %v6606 = vand.u32 %v4864, 4294901760
      %6607 = vmatprep.mubr.f32.mxu0 %v6606
      %v6608 = vand.u32 %v4863, 4294901760
      %6609 = vmatmul.mubr.f32.gmra.mrb[0].mxu0 %v6608
      %v6610 = vpop.f32.mrb[0].mxu0
      %v6611 = vadd.f32 %v6322, %v6610
      %v6612 = vpop.f32.mrb[0].mxu0
      %v6613 = vand.u32 %v4868, 4294901760
      %6614 = vmatprep.mubr.f32.mxu0 %v6613
      %v6615 = vand.u32 %v4867, 4294901760
      %6616 = vmatmul.mubr.f32.gmra.mrb[0].mxu0 %v6615
      %v6617 = vpop.f32.mrb[0].mxu0
      %v6618 = vadd.f32 %v6337, %v6617
      %v6619 = vpop.f32.mrb[0].mxu0
      %6620 = vdwg.mxu0
      %6621 = vmatprep.subr.mxu0 0.0
      %v6622 = vand.u32 %v564, 4294901760
      %v6623 = vsub.f32 %v564, %v6622
      %6624 = vmatpush1.msra.mxu0 %v6623
      %6625 = vmatprep.subr.mxu0 0.0
      %v6626 = vand.u32 %v565, 4294901760
      %v6627 = vsub.f32 %v565, %v6626
      %6628 = vmatpush1.msra.mxu0 %v6627
      %6629 = vmatprep.subr.mxu0 0.0
      %v6630 = vand.u32 %v566, 4294901760
      %v6631 = vsub.f32 %v566, %v6630
      %6632 = vmatpush1.msra.mxu0 %v6631
      %6633 = vmatprep.subr.mxu0 0.0
      %v6634 = vand.u32 %v567, 4294901760
      %v6635 = vsub.f32 %v567, %v6634
      %6636 = vmatpush1.msra.mxu0 %v6635
      %6637 = vmatprep.subr.mxu0 0.0
      %v6638 = vand.u32 %v568, 4294901760
      %v6639 = vsub.f32 %v568, %v6638
      %6640 = vmatpush1.msra.mxu0 %v6639
      %6641 = vmatprep.subr.mxu0 0.0
      %v6642 = vand.u32 %v569, 4294901760
      %v6643 = vsub.f32 %v569, %v6642
      %6644 = vmatpush1.msra.mxu0 %v6643
      %6645 = vmatprep.subr.mxu0 0.0
      %v6646 = vand.u32 %v570, 4294901760
      %v6647 = vsub.f32 %v570, %v6646
      %6648 = vmatpush1.msra.mxu0 %v6647
      %6649 = vmatprep.subr.mxu0 0.0
      %v6650 = vand.u32 %v571, 4294901760
      %v6651 = vsub.f32 %v571, %v6650
      %6652 = vmatpush1.msra.mxu0 %v6651
      %6653 = vmatprep.subr.mxu0 0.0
      %v6654 = vand.u32 %v572, 4294901760
      %v6655 = vsub.f32 %v572, %v6654
      %6656 = vmatpush1.msra.mxu0 %v6655
      %6657 = vmatprep.subr.mxu0 0.0
      %v6658 = vand.u32 %v573, 4294901760
      %v6659 = vsub.f32 %v573, %v6658
      %6660 = vmatpush1.msra.mxu0 %v6659
      %6661 = vmatprep.subr.mxu0 0.0
      %v6662 = vand.u32 %v574, 4294901760
      %v6663 = vsub.f32 %v574, %v6662
      %6664 = vmatpush1.msra.mxu0 %v6663
      %6665 = vmatprep.subr.mxu0 0.0
      %v6666 = vand.u32 %v575, 4294901760
      %v6667 = vsub.f32 %v575, %v6666
      %6668 = vmatpush1.msra.mxu0 %v6667
      %6669 = vmatprep.subr.mxu0 0.0
      %v6670 = vand.u32 %v576, 4294901760
      %v6671 = vsub.f32 %v576, %v6670
      %6672 = vmatpush1.msra.mxu0 %v6671
      %6673 = vmatprep.subr.mxu0 0.0
      %v6674 = vand.u32 %v577, 4294901760
      %v6675 = vsub.f32 %v577, %v6674
      %6676 = vmatpush1.msra.mxu0 %v6675
      %6677 = vmatprep.subr.mxu0 0.0
      %v6678 = vand.u32 %v578, 4294901760
      %v6679 = vsub.f32 %v578, %v6678
      %6680 = vmatpush1.msra.mxu0 %v6679
      %6681 = vmatprep.subr.mxu0 0.0
      %v6682 = vand.u32 %v579, 4294901760
      %v6683 = vsub.f32 %v579, %v6682
      %6684 = vmatpush1.msra.mxu0 %v6683
      %6685 = vmatprep.subr.mxu0 0.0
      %v6686 = vand.u32 %v580, 4294901760
      %v6687 = vsub.f32 %v580, %v6686
      %6688 = vmatpush1.msra.mxu0 %v6687
      %6689 = vmatprep.subr.mxu0 0.0
      %v6690 = vand.u32 %v581, 4294901760
      %v6691 = vsub.f32 %v581, %v6690
      %6692 = vmatpush1.msra.mxu0 %v6691
      %6693 = vmatprep.subr.mxu0 0.0
      %v6694 = vand.u32 %v582, 4294901760
      %v6695 = vsub.f32 %v582, %v6694
      %6696 = vmatpush1.msra.mxu0 %v6695
      %6697 = vmatprep.subr.mxu0 0.0
      %v6698 = vand.u32 %v583, 4294901760
      %v6699 = vsub.f32 %v583, %v6698
      %6700 = vmatpush1.msra.mxu0 %v6699
      %6701 = vmatprep.subr.mxu0 0.0
      %v6702 = vand.u32 %v584, 4294901760
      %v6703 = vsub.f32 %v584, %v6702
      %6704 = vmatpush1.msra.mxu0 %v6703
      %6705 = vmatprep.subr.mxu0 0.0
      %v6706 = vand.u32 %v585, 4294901760
      %v6707 = vsub.f32 %v585, %v6706
      %6708 = vmatpush1.msra.mxu0 %v6707
      %6709 = vmatprep.subr.mxu0 0.0
      %v6710 = vand.u32 %v586, 4294901760
      %v6711 = vsub.f32 %v586, %v6710
      %6712 = vmatpush1.msra.mxu0 %v6711
      %6713 = vmatprep.subr.mxu0 0.0
      %v6714 = vand.u32 %v587, 4294901760
      %v6715 = vsub.f32 %v587, %v6714
      %6716 = vmatpush1.msra.mxu0 %v6715
      %6717 = vmatprep.subr.mxu0 0.0
      %v6718 = vand.u32 %v588, 4294901760
      %v6719 = vsub.f32 %v588, %v6718
      %6720 = vmatpush1.msra.mxu0 %v6719
      %6721 = vmatprep.subr.mxu0 0.0
      %v6722 = vand.u32 %v589, 4294901760
      %v6723 = vsub.f32 %v589, %v6722
      %6724 = vmatpush1.msra.mxu0 %v6723
      %6725 = vmatprep.subr.mxu0 0.0
      %v6726 = vand.u32 %v590, 4294901760
      %v6727 = vsub.f32 %v590, %v6726
      %6728 = vmatpush1.msra.mxu0 %v6727
      %6729 = vmatprep.subr.mxu0 0.0
      %v6730 = vand.u32 %v591, 4294901760
      %v6731 = vsub.f32 %v591, %v6730
      %6732 = vmatpush1.msra.mxu0 %v6731
      %6733 = vmatprep.subr.mxu0 0.0
      %v6734 = vand.u32 %v592, 4294901760
      %v6735 = vsub.f32 %v592, %v6734
      %6736 = vmatpush1.msra.mxu0 %v6735
      %6737 = vmatprep.subr.mxu0 0.0
      %v6738 = vand.u32 %v593, 4294901760
      %v6739 = vsub.f32 %v593, %v6738
      %6740 = vmatpush1.msra.mxu0 %v6739
      %6741 = vmatprep.subr.mxu0 0.0
      %v6742 = vand.u32 %v594, 4294901760
      %v6743 = vsub.f32 %v594, %v6742
      %6744 = vmatpush1.msra.mxu0 %v6743
      %6745 = vmatprep.subr.mxu0 0.0
      %v6746 = vand.u32 %v595, 4294901760
      %v6747 = vsub.f32 %v595, %v6746
      %6748 = vmatpush1.msra.mxu0 %v6747
      %v6749 = vand.u32 %v4840, 4294901760
      %v6750 = vsub.f32 %v4840, %v6749
      %6751 = vmatprep.mubr.f32.mxu0 %v6750
      %v6752 = vand.u32 %v4839, 4294901760
      %v6753 = vsub.f32 %v4839, %v6752
      %6754 = vmatmul.mubr.f32.gmra.mrb[0].mxu0 %v6753
      %v6755 = vpop.f32.mrb[0].mxu0
      %v6756 = vadd.f32 %v6569, %v6755
      %v6757 = vpop.f32.mrb[0].mxu0
      %v6758 = vand.u32 %v4844, 4294901760
      %v6759 = vsub.f32 %v4844, %v6758
      %6760 = vmatprep.mubr.f32.mxu0 %v6759
      %v6761 = vand.u32 %v4843, 4294901760
      %v6762 = vsub.f32 %v4843, %v6761
      %6763 = vmatmul.mubr.f32.gmra.mrb[0].mxu0 %v6762
      %v6764 = vpop.f32.mrb[0].mxu0
      %v6765 = vadd.f32 %v6576, %v6764
      %v6766 = vpop.f32.mrb[0].mxu0
      %v6767 = vand.u32 %v4848, 4294901760
      %v6768 = vsub.f32 %v4848, %v6767
      %6769 = vmatprep.mubr.f32.mxu0 %v6768
      %v6770 = vand.u32 %v4847, 4294901760
      %v6771 = vsub.f32 %v4847, %v6770
      %6772 = vmatmul.mubr.f32.gmra.mrb[0].mxu0 %v6771
      %v6773 = vpop.f32.mrb[0].mxu0
      %v6774 = vadd.f32 %v6583, %v6773
      %v6775 = vpop.f32.mrb[0].mxu0
      %v6776 = vand.u32 %v4852, 4294901760
      %v6777 = vsub.f32 %v4852, %v6776
      %6778 = vmatprep.mubr.f32.mxu0 %v6777
      %v6779 = vand.u32 %v4851, 4294901760
      %v6780 = vsub.f32 %v4851, %v6779
      %6781 = vmatmul.mubr.f32.gmra.mrb[0].mxu0 %v6780
      %v6782 = vpop.f32.mrb[0].mxu0
      %v6783 = vadd.f32 %v6590, %v6782
      %v6784 = vpop.f32.mrb[0].mxu0
      %v6785 = vand.u32 %v4856, 4294901760
      %v6786 = vsub.f32 %v4856, %v6785
      %6787 = vmatprep.mubr.f32.mxu0 %v6786
      %v6788 = vand.u32 %v4855, 4294901760
      %v6789 = vsub.f32 %v4855, %v6788
      %6790 = vmatmul.mubr.f32.gmra.mrb[0].mxu0 %v6789
      %v6791 = vpop.f32.mrb[0].mxu0
      %v6792 = vadd.f32 %v6597, %v6791
      %v6793 = vpop.f32.mrb[0].mxu0
      %v6794 = vand.u32 %v4860, 4294901760
      %v6795 = vsub.f32 %v4860, %v6794
      %6796 = vmatprep.mubr.f32.mxu0 %v6795
      %v6797 = vand.u32 %v4859, 4294901760
      %v6798 = vsub.f32 %v4859, %v6797
      %6799 = vmatmul.mubr.f32.gmra.mrb[0].mxu0 %v6798
      %v6800 = vpop.f32.mrb[0].mxu0
      %v6801 = vadd.f32 %v6604, %v6800
      %v6802 = vpop.f32.mrb[0].mxu0
      %v6803 = vand.u32 %v4864, 4294901760
      %v6804 = vsub.f32 %v4864, %v6803
      %6805 = vmatprep.mubr.f32.mxu0 %v6804
      %v6806 = vand.u32 %v4863, 4294901760
      %v6807 = vsub.f32 %v4863, %v6806
      %6808 = vmatmul.mubr.f32.gmra.mrb[0].mxu0 %v6807
      %v6809 = vpop.f32.mrb[0].mxu0
      %v6810 = vadd.f32 %v6611, %v6809
      %v6811 = vpop.f32.mrb[0].mxu0
      %v6812 = vand.u32 %v4868, 4294901760
      %v6813 = vsub.f32 %v4868, %v6812
      %6814 = vmatprep.mubr.f32.mxu0 %v6813
      %v6815 = vand.u32 %v4867, 4294901760
      %v6816 = vsub.f32 %v4867, %v6815
      %6817 = vmatmul.mubr.f32.gmra.mrb[0].mxu0 %v6816
      %v6818 = vpop.f32.mrb[0].mxu0
      %v6819 = vadd.f32 %v6618, %v6818
      %v6820 = vpop.f32.mrb[0].mxu0
      %6821 = vdwg.mxu0
      %6822 = vmatprep.subr.mxu0 0.0
      %v6823 = vand.u32 %v564, 4294901760
      %6824 = vmatpush1.msra.mxu0 %v6823
      %6825 = vmatprep.subr.mxu0 0.0
      %v6826 = vand.u32 %v565, 4294901760
      %6827 = vmatpush1.msra.mxu0 %v6826
      %6828 = vmatprep.subr.mxu0 0.0
      %v6829 = vand.u32 %v566, 4294901760
      %6830 = vmatpush1.msra.mxu0 %v6829
      %6831 = vmatprep.subr.mxu0 0.0
      %v6832 = vand.u32 %v567, 4294901760
      %6833 = vmatpush1.msra.mxu0 %v6832
      %6834 = vmatprep.subr.mxu0 0.0
      %v6835 = vand.u32 %v568, 4294901760
      %6836 = vmatpush1.msra.mxu0 %v6835
      %6837 = vmatprep.subr.mxu0 0.0
      %v6838 = vand.u32 %v569, 4294901760
      %6839 = vmatpush1.msra.mxu0 %v6838
      %6840 = vmatprep.subr.mxu0 0.0
      %v6841 = vand.u32 %v570, 4294901760
      %6842 = vmatpush1.msra.mxu0 %v6841
      %6843 = vmatprep.subr.mxu0 0.0
      %v6844 = vand.u32 %v571, 4294901760
      %6845 = vmatpush1.msra.mxu0 %v6844
      %6846 = vmatprep.subr.mxu0 0.0
      %v6847 = vand.u32 %v572, 4294901760
      %6848 = vmatpush1.msra.mxu0 %v6847
      %6849 = vmatprep.subr.mxu0 0.0
      %v6850 = vand.u32 %v573, 4294901760
      %6851 = vmatpush1.msra.mxu0 %v6850
      %6852 = vmatprep.subr.mxu0 0.0
      %v6853 = vand.u32 %v574, 4294901760
      %6854 = vmatpush1.msra.mxu0 %v6853
      %6855 = vmatprep.subr.mxu0 0.0
      %v6856 = vand.u32 %v575, 4294901760
      %6857 = vmatpush1.msra.mxu0 %v6856
      %6858 = vmatprep.subr.mxu0 0.0
      %v6859 = vand.u32 %v576, 4294901760
      %6860 = vmatpush1.msra.mxu0 %v6859
      %6861 = vmatprep.subr.mxu0 0.0
      %v6862 = vand.u32 %v577, 4294901760
      %6863 = vmatpush1.msra.mxu0 %v6862
      %6864 = vmatprep.subr.mxu0 0.0
      %v6865 = vand.u32 %v578, 4294901760
      %6866 = vmatpush1.msra.mxu0 %v6865
      %6867 = vmatprep.subr.mxu0 0.0
      %v6868 = vand.u32 %v579, 4294901760
      %6869 = vmatpush1.msra.mxu0 %v6868
      %6870 = vmatprep.subr.mxu0 0.0
      %v6871 = vand.u32 %v580, 4294901760
      %6872 = vmatpush1.msra.mxu0 %v6871
      %6873 = vmatprep.subr.mxu0 0.0
      %v6874 = vand.u32 %v581, 4294901760
      %6875 = vmatpush1.msra.mxu0 %v6874
      %6876 = vmatprep.subr.mxu0 0.0
      %v6877 = vand.u32 %v582, 4294901760
      %6878 = vmatpush1.msra.mxu0 %v6877
      %6879 = vmatprep.subr.mxu0 0.0
      %v6880 = vand.u32 %v583, 4294901760
      %6881 = vmatpush1.msra.mxu0 %v6880
      %6882 = vmatprep.subr.mxu0 0.0
      %v6883 = vand.u32 %v584, 4294901760
      %6884 = vmatpush1.msra.mxu0 %v6883
      %6885 = vmatprep.subr.mxu0 0.0
      %v6886 = vand.u32 %v585, 4294901760
      %6887 = vmatpush1.msra.mxu0 %v6886
      %6888 = vmatprep.subr.mxu0 0.0
      %v6889 = vand.u32 %v586, 4294901760
      %6890 = vmatpush1.msra.mxu0 %v6889
      %6891 = vmatprep.subr.mxu0 0.0
      %v6892 = vand.u32 %v587, 4294901760
      %6893 = vmatpush1.msra.mxu0 %v6892
      %6894 = vmatprep.subr.mxu0 0.0
      %v6895 = vand.u32 %v588, 4294901760
      %6896 = vmatpush1.msra.mxu0 %v6895
      %6897 = vmatprep.subr.mxu0 0.0
      %v6898 = vand.u32 %v589, 4294901760
      %6899 = vmatpush1.msra.mxu0 %v6898
      %6900 = vmatprep.subr.mxu0 0.0
      %v6901 = vand.u32 %v590, 4294901760
      %6902 = vmatpush1.msra.mxu0 %v6901
      %6903 = vmatprep.subr.mxu0 0.0
      %v6904 = vand.u32 %v591, 4294901760
      %6905 = vmatpush1.msra.mxu0 %v6904
      %6906 = vmatprep.subr.mxu0 0.0
      %v6907 = vand.u32 %v592, 4294901760
      %6908 = vmatpush1.msra.mxu0 %v6907
      %6909 = vmatprep.subr.mxu0 0.0
      %v6910 = vand.u32 %v593, 4294901760
      %6911 = vmatpush1.msra.mxu0 %v6910
      %6912 = vmatprep.subr.mxu0 0.0
      %v6913 = vand.u32 %v594, 4294901760
      %6914 = vmatpush1.msra.mxu0 %v6913
      %6915 = vmatprep.subr.mxu0 0.0
      %v6916 = vand.u32 %v595, 4294901760
      %6917 = vmatpush1.msra.mxu0 %v6916
      %v6918 = vand.u32 %v4840, 4294901760
      %v6919 = vsub.f32 %v4840, %v6918
      %v6920 = vand.u32 %v6919, 4294901760
      %6921 = vmatprep.mubr.f32.mxu0 %v6920
      %v6922 = vand.u32 %v4839, 4294901760
      %v6923 = vsub.f32 %v4839, %v6922
      %v6924 = vand.u32 %v6923, 4294901760
      %6925 = vmatmul.mubr.f32.gmra.mrb[0].mxu0 %v6924
      %v6926 = vpop.f32.mrb[0].mxu0
      %v6927 = vadd.f32 %v6756, %v6926
      %v6928 = vpop.f32.mrb[0].mxu0
      %v6929 = vand.u32 %v4844, 4294901760
      %v6930 = vsub.f32 %v4844, %v6929
      %v6931 = vand.u32 %v6930, 4294901760
      %6932 = vmatprep.mubr.f32.mxu0 %v6931
      %v6933 = vand.u32 %v4843, 4294901760
      %v6934 = vsub.f32 %v4843, %v6933
      %v6935 = vand.u32 %v6934, 4294901760
      %6936 = vmatmul.mubr.f32.gmra.mrb[0].mxu0 %v6935
      %v6937 = vpop.f32.mrb[0].mxu0
      %v6938 = vadd.f32 %v6765, %v6937
      %v6939 = vpop.f32.mrb[0].mxu0
      %v6940 = vand.u32 %v4848, 4294901760
      %v6941 = vsub.f32 %v4848, %v6940
      %v6942 = vand.u32 %v6941, 4294901760
      %6943 = vmatprep.mubr.f32.mxu0 %v6942
      %v6944 = vand.u32 %v4847, 4294901760
      %v6945 = vsub.f32 %v4847, %v6944
      %v6946 = vand.u32 %v6945, 4294901760
      %6947 = vmatmul.mubr.f32.gmra.mrb[0].mxu0 %v6946
      %v6948 = vpop.f32.mrb[0].mxu0
      %v6949 = vadd.f32 %v6774, %v6948
      %v6950 = vpop.f32.mrb[0].mxu0
      %v6951 = vand.u32 %v4852, 4294901760
      %v6952 = vsub.f32 %v4852, %v6951
      %v6953 = vand.u32 %v6952, 4294901760
      %6954 = vmatprep.mubr.f32.mxu0 %v6953
      %v6955 = vand.u32 %v4851, 4294901760
      %v6956 = vsub.f32 %v4851, %v6955
      %v6957 = vand.u32 %v6956, 4294901760
      %6958 = vmatmul.mubr.f32.gmra.mrb[0].mxu0 %v6957
      %v6959 = vpop.f32.mrb[0].mxu0
      %v6960 = vadd.f32 %v6783, %v6959
      %v6961 = vpop.f32.mrb[0].mxu0
      %v6962 = vand.u32 %v4856, 4294901760
      %v6963 = vsub.f32 %v4856, %v6962
      %v6964 = vand.u32 %v6963, 4294901760
      %6965 = vmatprep.mubr.f32.mxu0 %v6964
      %v6966 = vand.u32 %v4855, 4294901760
      %v6967 = vsub.f32 %v4855, %v6966
      %v6968 = vand.u32 %v6967, 4294901760
      %6969 = vmatmul.mubr.f32.gmra.mrb[0].mxu0 %v6968
      %v6970 = vpop.f32.mrb[0].mxu0
      %v6971 = vadd.f32 %v6792, %v6970
      %v6972 = vpop.f32.mrb[0].mxu0
      %v6973 = vand.u32 %v4860, 4294901760
      %v6974 = vsub.f32 %v4860, %v6973
      %v6975 = vand.u32 %v6974, 4294901760
      %6976 = vmatprep.mubr.f32.mxu0 %v6975
      %v6977 = vand.u32 %v4859, 4294901760
      %v6978 = vsub.f32 %v4859, %v6977
      %v6979 = vand.u32 %v6978, 4294901760
      %6980 = vmatmul.mubr.f32.gmra.mrb[0].mxu0 %v6979
      %v6981 = vpop.f32.mrb[0].mxu0
      %v6982 = vadd.f32 %v6801, %v6981
      %v6983 = vpop.f32.mrb[0].mxu0
      %v6984 = vand.u32 %v4864, 4294901760
      %v6985 = vsub.f32 %v4864, %v6984
      %v6986 = vand.u32 %v6985, 4294901760
      %6987 = vmatprep.mubr.f32.mxu0 %v6986
      %v6988 = vand.u32 %v4863, 4294901760
      %v6989 = vsub.f32 %v4863, %v6988
      %v6990 = vand.u32 %v6989, 4294901760
      %6991 = vmatmul.mubr.f32.gmra.mrb[0].mxu0 %v6990
      %v6992 = vpop.f32.mrb[0].mxu0
      %v6993 = vadd.f32 %v6810, %v6992
      %v6994 = vpop.f32.mrb[0].mxu0
      %v6995 = vand.u32 %v4868, 4294901760
      %v6996 = vsub.f32 %v4868, %v6995
      %v6997 = vand.u32 %v6996, 4294901760
      %6998 = vmatprep.mubr.f32.mxu0 %v6997
      %v6999 = vand.u32 %v4867, 4294901760
      %v7000 = vsub.f32 %v4867, %v6999
      %v7001 = vand.u32 %v7000, 4294901760
      %7002 = vmatmul.mubr.f32.gmra.mrb[0].mxu0 %v7001
      %v7003 = vpop.f32.mrb[0].mxu0
      %v7004 = vadd.f32 %v6819, %v7003
      %v7005 = vpop.f32.mrb[0].mxu0
      %7006 = vdwg.mxu0
      %7007 = vmatprep.subr.mxu0 0.0
      %v7008 = vand.u32 %v564, 4294901760
      %v7009 = vsub.f32 %v564, %v7008
      %v7010 = vand.u32 %v7009, 4294901760
      %7011 = vmatpush1.msra.mxu0 %v7010
      %7012 = vmatprep.subr.mxu0 0.0
      %v7013 = vand.u32 %v565, 4294901760
      %v7014 = vsub.f32 %v565, %v7013
      %v7015 = vand.u32 %v7014, 4294901760
      %7016 = vmatpush1.msra.mxu0 %v7015
      %7017 = vmatprep.subr.mxu0 0.0
      %v7018 = vand.u32 %v566, 4294901760
      %v7019 = vsub.f32 %v566, %v7018
      %v7020 = vand.u32 %v7019, 4294901760
      %7021 = vmatpush1.msra.mxu0 %v7020
      %7022 = vmatprep.subr.mxu0 0.0
      %v7023 = vand.u32 %v567, 4294901760
      %v7024 = vsub.f32 %v567, %v7023
      %v7025 = vand.u32 %v7024, 4294901760
      %7026 = vmatpush1.msra.mxu0 %v7025
      %7027 = vmatprep.subr.mxu0 0.0
      %v7028 = vand.u32 %v568, 4294901760
      %v7029 = vsub.f32 %v568, %v7028
      %v7030 = vand.u32 %v7029, 4294901760
      %7031 = vmatpush1.msra.mxu0 %v7030
      %7032 = vmatprep.subr.mxu0 0.0
      %v7033 = vand.u32 %v569, 4294901760
      %v7034 = vsub.f32 %v569, %v7033
      %v7035 = vand.u32 %v7034, 4294901760
      %7036 = vmatpush1.msra.mxu0 %v7035
      %7037 = vmatprep.subr.mxu0 0.0
      %v7038 = vand.u32 %v570, 4294901760
      %v7039 = vsub.f32 %v570, %v7038
      %v7040 = vand.u32 %v7039, 4294901760
      %7041 = vmatpush1.msra.mxu0 %v7040
      %7042 = vmatprep.subr.mxu0 0.0
      %v7043 = vand.u32 %v571, 4294901760
      %v7044 = vsub.f32 %v571, %v7043
      %v7045 = vand.u32 %v7044, 4294901760
      %7046 = vmatpush1.msra.mxu0 %v7045
      %7047 = vmatprep.subr.mxu0 0.0
      %v7048 = vand.u32 %v572, 4294901760
      %v7049 = vsub.f32 %v572, %v7048
      %v7050 = vand.u32 %v7049, 4294901760
      %7051 = vmatpush1.msra.mxu0 %v7050
      %7052 = vmatprep.subr.mxu0 0.0
      %v7053 = vand.u32 %v573, 4294901760
      %v7054 = vsub.f32 %v573, %v7053
      %v7055 = vand.u32 %v7054, 4294901760
      %7056 = vmatpush1.msra.mxu0 %v7055
      %7057 = vmatprep.subr.mxu0 0.0
      %v7058 = vand.u32 %v574, 4294901760
      %v7059 = vsub.f32 %v574, %v7058
      %v7060 = vand.u32 %v7059, 4294901760
      %7061 = vmatpush1.msra.mxu0 %v7060
      %7062 = vmatprep.subr.mxu0 0.0
      %v7063 = vand.u32 %v575, 4294901760
      %v7064 = vsub.f32 %v575, %v7063
      %v7065 = vand.u32 %v7064, 4294901760
      %7066 = vmatpush1.msra.mxu0 %v7065
      %7067 = vmatprep.subr.mxu0 0.0
      %v7068 = vand.u32 %v576, 4294901760
      %v7069 = vsub.f32 %v576, %v7068
      %v7070 = vand.u32 %v7069, 4294901760
      %7071 = vmatpush1.msra.mxu0 %v7070
      %7072 = vmatprep.subr.mxu0 0.0
      %v7073 = vand.u32 %v577, 4294901760
      %v7074 = vsub.f32 %v577, %v7073
      %v7075 = vand.u32 %v7074, 4294901760
      %7076 = vmatpush1.msra.mxu0 %v7075
      %7077 = vmatprep.subr.mxu0 0.0
      %v7078 = vand.u32 %v578, 4294901760
      %v7079 = vsub.f32 %v578, %v7078
      %v7080 = vand.u32 %v7079, 4294901760
      %7081 = vmatpush1.msra.mxu0 %v7080
      %7082 = vmatprep.subr.mxu0 0.0
      %v7083 = vand.u32 %v579, 4294901760
      %v7084 = vsub.f32 %v579, %v7083
      %v7085 = vand.u32 %v7084, 4294901760
      %7086 = vmatpush1.msra.mxu0 %v7085
      %7087 = vmatprep.subr.mxu0 0.0
      %v7088 = vand.u32 %v580, 4294901760
      %v7089 = vsub.f32 %v580, %v7088
      %v7090 = vand.u32 %v7089, 4294901760
      %7091 = vmatpush1.msra.mxu0 %v7090
      %7092 = vmatprep.subr.mxu0 0.0
      %v7093 = vand.u32 %v581, 4294901760
      %v7094 = vsub.f32 %v581, %v7093
      %v7095 = vand.u32 %v7094, 4294901760
      %7096 = vmatpush1.msra.mxu0 %v7095
      %7097 = vmatprep.subr.mxu0 0.0
      %v7098 = vand.u32 %v582, 4294901760
      %v7099 = vsub.f32 %v582, %v7098
      %v7100 = vand.u32 %v7099, 4294901760
      %7101 = vmatpush1.msra.mxu0 %v7100
      %7102 = vmatprep.subr.mxu0 0.0
      %v7103 = vand.u32 %v583, 4294901760
      %v7104 = vsub.f32 %v583, %v7103
      %v7105 = vand.u32 %v7104, 4294901760
      %7106 = vmatpush1.msra.mxu0 %v7105
      %7107 = vmatprep.subr.mxu0 0.0
      %v7108 = vand.u32 %v584, 4294901760
      %v7109 = vsub.f32 %v584, %v7108
      %v7110 = vand.u32 %v7109, 4294901760
      %7111 = vmatpush1.msra.mxu0 %v7110
      %7112 = vmatprep.subr.mxu0 0.0
      %v7113 = vand.u32 %v585, 4294901760
      %v7114 = vsub.f32 %v585, %v7113
      %v7115 = vand.u32 %v7114, 4294901760
      %7116 = vmatpush1.msra.mxu0 %v7115
      %7117 = vmatprep.subr.mxu0 0.0
      %v7118 = vand.u32 %v586, 4294901760
      %v7119 = vsub.f32 %v586, %v7118
      %v7120 = vand.u32 %v7119, 4294901760
      %7121 = vmatpush1.msra.mxu0 %v7120
      %7122 = vmatprep.subr.mxu0 0.0
      %v7123 = vand.u32 %v587, 4294901760
      %v7124 = vsub.f32 %v587, %v7123
      %v7125 = vand.u32 %v7124, 4294901760
      %7126 = vmatpush1.msra.mxu0 %v7125
      %7127 = vmatprep.subr.mxu0 0.0
      %v7128 = vand.u32 %v588, 4294901760
      %v7129 = vsub.f32 %v588, %v7128
      %v7130 = vand.u32 %v7129, 4294901760
      %7131 = vmatpush1.msra.mxu0 %v7130
      %7132 = vmatprep.subr.mxu0 0.0
      %v7133 = vand.u32 %v589, 4294901760
      %v7134 = vsub.f32 %v589, %v7133
      %v7135 = vand.u32 %v7134, 4294901760
      %7136 = vmatpush1.msra.mxu0 %v7135
      %7137 = vmatprep.subr.mxu0 0.0
      %v7138 = vand.u32 %v590, 4294901760
      %v7139 = vsub.f32 %v590, %v7138
      %v7140 = vand.u32 %v7139, 4294901760
      %7141 = vmatpush1.msra.mxu0 %v7140
      %7142 = vmatprep.subr.mxu0 0.0
      %v7143 = vand.u32 %v591, 4294901760
      %v7144 = vsub.f32 %v591, %v7143
      %v7145 = vand.u32 %v7144, 4294901760
      %7146 = vmatpush1.msra.mxu0 %v7145
      %7147 = vmatprep.subr.mxu0 0.0
      %v7148 = vand.u32 %v592, 4294901760
      %v7149 = vsub.f32 %v592, %v7148
      %v7150 = vand.u32 %v7149, 4294901760
      %7151 = vmatpush1.msra.mxu0 %v7150
      %7152 = vmatprep.subr.mxu0 0.0
      %v7153 = vand.u32 %v593, 4294901760
      %v7154 = vsub.f32 %v593, %v7153
      %v7155 = vand.u32 %v7154, 4294901760
      %7156 = vmatpush1.msra.mxu0 %v7155
      %7157 = vmatprep.subr.mxu0 0.0
      %v7158 = vand.u32 %v594, 4294901760
      %v7159 = vsub.f32 %v594, %v7158
      %v7160 = vand.u32 %v7159, 4294901760
      %7161 = vmatpush1.msra.mxu0 %v7160
      %7162 = vmatprep.subr.mxu0 0.0
      %v7163 = vand.u32 %v595, 4294901760
      %v7164 = vsub.f32 %v595, %v7163
      %v7165 = vand.u32 %v7164, 4294901760
      %7166 = vmatpush1.msra.mxu0 %v7165
      %v7167 = vand.u32 %v4840, 4294901760
      %7168 = vmatprep.mubr.f32.mxu0 %v7167
      %v7169 = vand.u32 %v4839, 4294901760
      %7170 = vmatmul.mubr.f32.gmra.mrb[0].mxu0 %v7169
      %v7171 = vpop.f32.mrb[0].mxu0
      %v7172 = vadd.f32 %v6927, %v7171
      %v7173 = vpop.f32.mrb[0].mxu0
      %v7174 = vand.u32 %v4844, 4294901760
      %7175 = vmatprep.mubr.f32.mxu0 %v7174
      %v7176 = vand.u32 %v4843, 4294901760
      %7177 = vmatmul.mubr.f32.gmra.mrb[0].mxu0 %v7176
      %v7178 = vpop.f32.mrb[0].mxu0
      %v7179 = vadd.f32 %v6938, %v7178
      %v7180 = vpop.f32.mrb[0].mxu0
      %v7181 = vand.u32 %v4848, 4294901760
      %7182 = vmatprep.mubr.f32.mxu0 %v7181
      %v7183 = vand.u32 %v4847, 4294901760
      %7184 = vmatmul.mubr.f32.gmra.mrb[0].mxu0 %v7183
      %v7185 = vpop.f32.mrb[0].mxu0
      %v7186 = vadd.f32 %v6949, %v7185
      %v7187 = vpop.f32.mrb[0].mxu0
      %v7188 = vand.u32 %v4852, 4294901760
      %7189 = vmatprep.mubr.f32.mxu0 %v7188
      %v7190 = vand.u32 %v4851, 4294901760
      %7191 = vmatmul.mubr.f32.gmra.mrb[0].mxu0 %v7190
      %v7192 = vpop.f32.mrb[0].mxu0
      %v7193 = vadd.f32 %v6960, %v7192
      %v7194 = vpop.f32.mrb[0].mxu0
      %v7195 = vand.u32 %v4856, 4294901760
      %7196 = vmatprep.mubr.f32.mxu0 %v7195
      %v7197 = vand.u32 %v4855, 4294901760
      %7198 = vmatmul.mubr.f32.gmra.mrb[0].mxu0 %v7197
      %v7199 = vpop.f32.mrb[0].mxu0
      %v7200 = vadd.f32 %v6971, %v7199
      %v7201 = vpop.f32.mrb[0].mxu0
      %v7202 = vand.u32 %v4860, 4294901760
      %7203 = vmatprep.mubr.f32.mxu0 %v7202
      %v7204 = vand.u32 %v4859, 4294901760
      %7205 = vmatmul.mubr.f32.gmra.mrb[0].mxu0 %v7204
      %v7206 = vpop.f32.mrb[0].mxu0
      %v7207 = vadd.f32 %v6982, %v7206
      %v7208 = vpop.f32.mrb[0].mxu0
      %v7209 = vand.u32 %v4864, 4294901760
      %7210 = vmatprep.mubr.f32.mxu0 %v7209
      %v7211 = vand.u32 %v4863, 4294901760
      %7212 = vmatmul.mubr.f32.gmra.mrb[0].mxu0 %v7211
      %v7213 = vpop.f32.mrb[0].mxu0
      %v7214 = vadd.f32 %v6993, %v7213
      %v7215 = vpop.f32.mrb[0].mxu0
      %v7216 = vand.u32 %v4868, 4294901760
      %7217 = vmatprep.mubr.f32.mxu0 %v7216
      %v7218 = vand.u32 %v4867, 4294901760
      %7219 = vmatmul.mubr.f32.gmra.mrb[0].mxu0 %v7218
      %v7220 = vpop.f32.mrb[0].mxu0
      %v7221 = vadd.f32 %v7004, %v7220
      %v7222 = vpop.f32.mrb[0].mxu0
      %7223 = vdwg.mxu0
      %7224 = vmatprep.subr.mxu0 0.0
      %v7225 = vand.u32 %v564, 4294901760
      %7226 = vmatpush1.msra.mxu0 %v7225
      %7227 = vmatprep.subr.mxu0 0.0
      %v7228 = vand.u32 %v565, 4294901760
      %7229 = vmatpush1.msra.mxu0 %v7228
      %7230 = vmatprep.subr.mxu0 0.0
      %v7231 = vand.u32 %v566, 4294901760
      %7232 = vmatpush1.msra.mxu0 %v7231
      %7233 = vmatprep.subr.mxu0 0.0
      %v7234 = vand.u32 %v567, 4294901760
      %7235 = vmatpush1.msra.mxu0 %v7234
      %7236 = vmatprep.subr.mxu0 0.0
      %v7237 = vand.u32 %v568, 4294901760
      %7238 = vmatpush1.msra.mxu0 %v7237
      %7239 = vmatprep.subr.mxu0 0.0
      %v7240 = vand.u32 %v569, 4294901760
      %7241 = vmatpush1.msra.mxu0 %v7240
      %7242 = vmatprep.subr.mxu0 0.0
      %v7243 = vand.u32 %v570, 4294901760
      %7244 = vmatpush1.msra.mxu0 %v7243
      %7245 = vmatprep.subr.mxu0 0.0
      %v7246 = vand.u32 %v571, 4294901760
      %7247 = vmatpush1.msra.mxu0 %v7246
      %7248 = vmatprep.subr.mxu0 0.0
      %v7249 = vand.u32 %v572, 4294901760
      %7250 = vmatpush1.msra.mxu0 %v7249
      %7251 = vmatprep.subr.mxu0 0.0
      %v7252 = vand.u32 %v573, 4294901760
      %7253 = vmatpush1.msra.mxu0 %v7252
      %7254 = vmatprep.subr.mxu0 0.0
      %v7255 = vand.u32 %v574, 4294901760
      %7256 = vmatpush1.msra.mxu0 %v7255
      %7257 = vmatprep.subr.mxu0 0.0
      %v7258 = vand.u32 %v575, 4294901760
      %7259 = vmatpush1.msra.mxu0 %v7258
      %7260 = vmatprep.subr.mxu0 0.0
      %v7261 = vand.u32 %v576, 4294901760
      %7262 = vmatpush1.msra.mxu0 %v7261
      %7263 = vmatprep.subr.mxu0 0.0
      %v7264 = vand.u32 %v577, 4294901760
      %7265 = vmatpush1.msra.mxu0 %v7264
      %7266 = vmatprep.subr.mxu0 0.0
      %v7267 = vand.u32 %v578, 4294901760
      %7268 = vmatpush1.msra.mxu0 %v7267
      %7269 = vmatprep.subr.mxu0 0.0
      %v7270 = vand.u32 %v579, 4294901760
      %7271 = vmatpush1.msra.mxu0 %v7270
      %7272 = vmatprep.subr.mxu0 0.0
      %v7273 = vand.u32 %v580, 4294901760
      %7274 = vmatpush1.msra.mxu0 %v7273
      %7275 = vmatprep.subr.mxu0 0.0
      %v7276 = vand.u32 %v581, 4294901760
      %7277 = vmatpush1.msra.mxu0 %v7276
      %7278 = vmatprep.subr.mxu0 0.0
      %v7279 = vand.u32 %v582, 4294901760
      %7280 = vmatpush1.msra.mxu0 %v7279
      %7281 = vmatprep.subr.mxu0 0.0
      %v7282 = vand.u32 %v583, 4294901760
      %7283 = vmatpush1.msra.mxu0 %v7282
      %7284 = vmatprep.subr.mxu0 0.0
      %v7285 = vand.u32 %v584, 4294901760
      %7286 = vmatpush1.msra.mxu0 %v7285
      %7287 = vmatprep.subr.mxu0 0.0
      %v7288 = vand.u32 %v585, 4294901760
      %7289 = vmatpush1.msra.mxu0 %v7288
      %7290 = vmatprep.subr.mxu0 0.0
      %v7291 = vand.u32 %v586, 4294901760
      %7292 = vmatpush1.msra.mxu0 %v7291
      %7293 = vmatprep.subr.mxu0 0.0
      %v7294 = vand.u32 %v587, 4294901760
      %7295 = vmatpush1.msra.mxu0 %v7294
      %7296 = vmatprep.subr.mxu0 0.0
      %v7297 = vand.u32 %v588, 4294901760
      %7298 = vmatpush1.msra.mxu0 %v7297
      %7299 = vmatprep.subr.mxu0 0.0
      %v7300 = vand.u32 %v589, 4294901760
      %7301 = vmatpush1.msra.mxu0 %v7300
      %7302 = vmatprep.subr.mxu0 0.0
      %v7303 = vand.u32 %v590, 4294901760
      %7304 = vmatpush1.msra.mxu0 %v7303
      %7305 = vmatprep.subr.mxu0 0.0
      %v7306 = vand.u32 %v591, 4294901760
      %7307 = vmatpush1.msra.mxu0 %v7306
      %7308 = vmatprep.subr.mxu0 0.0
      %v7309 = vand.u32 %v592, 4294901760
      %7310 = vmatpush1.msra.mxu0 %v7309
      %7311 = vmatprep.subr.mxu0 0.0
      %v7312 = vand.u32 %v593, 4294901760
      %7313 = vmatpush1.msra.mxu0 %v7312
      %7314 = vmatprep.subr.mxu0 0.0
      %v7315 = vand.u32 %v594, 4294901760
      %7316 = vmatpush1.msra.mxu0 %v7315
      %7317 = vmatprep.subr.mxu0 0.0
      %v7318 = vand.u32 %v595, 4294901760
      %7319 = vmatpush1.msra.mxu0 %v7318
      %v7320 = vand.u32 %v4840, 4294901760
      %7321 = vmatprep.mubr.f32.mxu0 %v7320
      %v7322 = vand.u32 %v4839, 4294901760
      %7323 = vmatmul.mubr.f32.gmra.mrb[0].mxu0 %v7322
      %v7324 = vpop.f32.mrb[0].mxu0
      %v7325 = vadd.f32 %v7172, %v7324
      %v7326 = vpop.f32.mrb[0].mxu0
      %v7327 = vand.u32 %v4844, 4294901760
      %7328 = vmatprep.mubr.f32.mxu0 %v7327
      %v7329 = vand.u32 %v4843, 4294901760
      %7330 = vmatmul.mubr.f32.gmra.mrb[0].mxu0 %v7329
      %v7331 = vpop.f32.mrb[0].mxu0
      %v7332 = vadd.f32 %v7179, %v7331
      %v7333 = vpop.f32.mrb[0].mxu0
      %v7334 = vand.u32 %v4848, 4294901760
      %7335 = vmatprep.mubr.f32.mxu0 %v7334
      %v7336 = vand.u32 %v4847, 4294901760
      %7337 = vmatmul.mubr.f32.gmra.mrb[0].mxu0 %v7336
      %v7338 = vpop.f32.mrb[0].mxu0
      %v7339 = vadd.f32 %v7186, %v7338
      %v7340 = vpop.f32.mrb[0].mxu0
      %v7341 = vand.u32 %v4852, 4294901760
      %7342 = vmatprep.mubr.f32.mxu0 %v7341
      %v7343 = vand.u32 %v4851, 4294901760
      %7344 = vmatmul.mubr.f32.gmra.mrb[0].mxu0 %v7343
      %v7345 = vpop.f32.mrb[0].mxu0
      %v7346 = vadd.f32 %v7193, %v7345
      %v7347 = vpop.f32.mrb[0].mxu0
      %v7348 = vand.u32 %v4856, 4294901760
      %7349 = vmatprep.mubr.f32.mxu0 %v7348
      %v7350 = vand.u32 %v4855, 4294901760
      %7351 = vmatmul.mubr.f32.gmra.mrb[0].mxu0 %v7350
      %v7352 = vpop.f32.mrb[0].mxu0
      %v7353 = vadd.f32 %v7200, %v7352
      %v7354 = vpop.f32.mrb[0].mxu0
      %v7355 = vand.u32 %v4860, 4294901760
      %7356 = vmatprep.mubr.f32.mxu0 %v7355
      %v7357 = vand.u32 %v4859, 4294901760
      %7358 = vmatmul.mubr.f32.gmra.mrb[0].mxu0 %v7357
      %v7359 = vpop.f32.mrb[0].mxu0
      %v7360 = vadd.f32 %v7207, %v7359
      %v7361 = vpop.f32.mrb[0].mxu0
      %v7362 = vand.u32 %v4864, 4294901760
      %7363 = vmatprep.mubr.f32.mxu0 %v7362
      %v7364 = vand.u32 %v4863, 4294901760
      %7365 = vmatmul.mubr.f32.gmra.mrb[0].mxu0 %v7364
      %v7366 = vpop.f32.mrb[0].mxu0
      %v7367 = vadd.f32 %v7214, %v7366
      %v7368 = vpop.f32.mrb[0].mxu0
      %v7369 = vand.u32 %v4868, 4294901760
      %7370 = vmatprep.mubr.f32.mxu0 %v7369
      %v7371 = vand.u32 %v4867, 4294901760
      %7372 = vmatmul.mubr.f32.gmra.mrb[0].mxu0 %v7371
      %v7373 = vpop.f32.mrb[0].mxu0
      %v7374 = vadd.f32 %v7221, %v7373
      %v7375 = vpop.f32.mrb[0].mxu0
      %7376 = vdwg.mxu0
      %v7377 = vrsqrt.pop %v7325
      %v7378 = vrsqrt.pop %v7332
      %v7379 = vrsqrt.pop %v7339
      %v7380 = vrsqrt.pop %v7346
      %v7381 = vrsqrt.pop %v7353
      %v7382 = vrsqrt.pop %v7360
      %v7383 = vrsqrt.pop %v7367
      %v7384 = vrsqrt.pop %v7374
      %v7386 = vsel %vm3112, %v7377, 0
      %v7389 = vsel %vm3112, %v7378, 0
      %v7392 = vsel %vm3112, %v7379, 0
      %v7395 = vsel %vm3112, %v7380, 0
      %v7398 = vsel %vm3112, %v7381, 0
      %v7401 = vsel %vm3112, %v7382, 0
      %v7404 = vsel %vm3112, %v7383, 0
      %v7407 = vsel %vm3112, %v7384, 0
      %v7409 = vand.u32 %v3105, 4294901760
      %7410 = vmatprep.subr.mxu0 %v7409
      %v7411 = vand.u32 %v3104, 4294901760
      %7412 = vmatpush1.msra.mxu0 %v7411
      %v7413 = vand.u32 %v3109, 4294901760
      %7414 = vmatprep.subr.mxu0 %v7413
      %v7415 = vand.u32 %v3108, 4294901760
      %7416 = vmatpush1.msra.mxu0 %v7415
      %7417 = vmatprep.subr.mxu0 0.0
      %7418 = vmatpush1.msra.mxu0 0.0
      %7419 = vmatprep.subr.mxu0 0.0
      %7420 = vmatpush1.msra.mxu0 0.0
      %7421 = vmatprep.subr.mxu0 0.0
      %7422 = vmatpush1.msra.mxu0 0.0
      %7423 = vmatprep.subr.mxu0 0.0
      %7424 = vmatpush1.msra.mxu0 0.0
      %7425 = vmatprep.subr.mxu0 0.0
      %7426 = vmatpush1.msra.mxu0 0.0
      %7427 = vmatprep.subr.mxu0 0.0
      %7428 = vmatpush1.msra.mxu0 0.0
      %7429 = vmatprep.subr.mxu0 0.0
      %7430 = vmatpush1.msra.mxu0 0.0
      %7431 = vmatprep.subr.mxu0 0.0
      %7432 = vmatpush1.msra.mxu0 0.0
      %7433 = vmatprep.subr.mxu0 0.0
      %7434 = vmatpush1.msra.mxu0 0.0
      %7435 = vmatprep.subr.mxu0 0.0
      %7436 = vmatpush1.msra.mxu0 0.0
      %7437 = vmatprep.subr.mxu0 0.0
      %7438 = vmatpush1.msra.mxu0 0.0
      %7439 = vmatprep.subr.mxu0 0.0
      %7440 = vmatpush1.msra.mxu0 0.0
      %7441 = vmatprep.subr.mxu0 0.0
      %7442 = vmatpush1.msra.mxu0 0.0
      %7443 = vmatprep.subr.mxu0 0.0
      %7444 = vmatpush1.msra.mxu0 0.0
      %7445 = vmatprep.subr.mxu0 0.0
      %7446 = vmatpush1.msra.mxu0 0.0
      %7447 = vmatprep.subr.mxu0 0.0
      %7448 = vmatpush1.msra.mxu0 0.0
      %7449 = vmatprep.subr.mxu0 0.0
      %7450 = vmatpush1.msra.mxu0 0.0
      %7451 = vmatprep.subr.mxu0 0.0
      %7452 = vmatpush1.msra.mxu0 0.0
      %7453 = vmatprep.subr.mxu0 0.0
      %7454 = vmatpush1.msra.mxu0 0.0
      %7455 = vmatprep.subr.mxu0 0.0
      %7456 = vmatpush1.msra.mxu0 0.0
      %7457 = vmatprep.subr.mxu0 0.0
      %7458 = vmatpush1.msra.mxu0 0.0
      %7459 = vmatprep.subr.mxu0 0.0
      %7460 = vmatpush1.msra.mxu0 0.0
      %7461 = vmatprep.subr.mxu0 0.0
      %7462 = vmatpush1.msra.mxu0 0.0
      %7463 = vmatprep.subr.mxu0 0.0
      %7464 = vmatpush1.msra.mxu0 0.0
      %7465 = vmatprep.subr.mxu0 0.0
      %7466 = vmatpush1.msra.mxu0 0.0
      %7467 = vmatprep.subr.mxu0 0.0
      %7468 = vmatpush1.msra.mxu0 0.0
      %7469 = vmatprep.subr.mxu0 0.0
      %7470 = vmatpush1.msra.mxu0 0.0
      %7471 = vmatprep.subr.mxu0 0.0
      %7472 = vmatpush1.msra.mxu0 0.0
      %7473 = vmatprep.subr.mxu0 0.0
      %7474 = vmatpush1.msra.mxu0 0.0
      %7475 = vmatprep.subr.mxu0 0.0
      %7476 = vmatpush1.msra.mxu0 0.0
      %7477 = vmatprep.mubr.f32.mxu0 0.0
      %v7478 = vand.u32 %v7386, 4294901760
      %v7479 = vsub.f32 %v7386, %v7478
      %v7480 = vand.u32 %v7479, 4294901760
      %v7481 = vsub.f32 %v7479, %v7480
      %v7482 = vand.u32 %v7481, 4294901760
      %7483 = vmatmul.mubr.f32.gmra.mrb[0].mxu0 %v7482
      %v7484 = vpop.f32.mrb[0].mxu0
      %v7485 = vadd.f32 0.0, %v7484
      %v7486 = vpop.f32.mrb[0].mxu0
      %v7487 = vadd.f32 0.0, %v7486
      %7488 = vmatprep.mubr.f32.mxu0 0.0
      %v7489 = vand.u32 %v7389, 4294901760
      %v7490 = vsub.f32 %v7389, %v7489
      %v7491 = vand.u32 %v7490, 4294901760
      %v7492 = vsub.f32 %v7490, %v7491
      %v7493 = vand.u32 %v7492, 4294901760
      %7494 = vmatmul.mubr.f32.gmra.mrb[0].mxu0 %v7493
      %v7495 = vpop.f32.mrb[0].mxu0
      %v7496 = vadd.f32 0.0, %v7495
      %v7497 = vpop.f32.mrb[0].mxu0
      %v7498 = vadd.f32 0.0, %v7497
      %7499 = vmatprep.mubr.f32.mxu0 0.0
      %v7500 = vand.u32 %v7392, 4294901760
      %v7501 = vsub.f32 %v7392, %v7500
      %v7502 = vand.u32 %v7501, 4294901760
      %v7503 = vsub.f32 %v7501, %v7502
      %v7504 = vand.u32 %v7503, 4294901760
      %7505 = vmatmul.mubr.f32.gmra.mrb[0].mxu0 %v7504
      %v7506 = vpop.f32.mrb[0].mxu0
      %v7507 = vadd.f32 0.0, %v7506
      %v7508 = vpop.f32.mrb[0].mxu0
      %v7509 = vadd.f32 0.0, %v7508
      %7510 = vmatprep.mubr.f32.mxu0 0.0
      %v7511 = vand.u32 %v7395, 4294901760
      %v7512 = vsub.f32 %v7395, %v7511
      %v7513 = vand.u32 %v7512, 4294901760
      %v7514 = vsub.f32 %v7512, %v7513
      %v7515 = vand.u32 %v7514, 4294901760
      %7516 = vmatmul.mubr.f32.gmra.mrb[0].mxu0 %v7515
      %v7517 = vpop.f32.mrb[0].mxu0
      %v7518 = vadd.f32 0.0, %v7517
      %v7519 = vpop.f32.mrb[0].mxu0
      %v7520 = vadd.f32 0.0, %v7519
      %7521 = vmatprep.mubr.f32.mxu0 0.0
      %v7522 = vand.u32 %v7398, 4294901760
      %v7523 = vsub.f32 %v7398, %v7522
      %v7524 = vand.u32 %v7523, 4294901760
      %v7525 = vsub.f32 %v7523, %v7524
      %v7526 = vand.u32 %v7525, 4294901760
      %7527 = vmatmul.mubr.f32.gmra.mrb[0].mxu0 %v7526
      %v7528 = vpop.f32.mrb[0].mxu0
      %v7529 = vadd.f32 0.0, %v7528
      %v7530 = vpop.f32.mrb[0].mxu0
      %v7531 = vadd.f32 0.0, %v7530
      %7532 = vmatprep.mubr.f32.mxu0 0.0
      %v7533 = vand.u32 %v7401, 4294901760
      %v7534 = vsub.f32 %v7401, %v7533
      %v7535 = vand.u32 %v7534, 4294901760
      %v7536 = vsub.f32 %v7534, %v7535
      %v7537 = vand.u32 %v7536, 4294901760
      %7538 = vmatmul.mubr.f32.gmra.mrb[0].mxu0 %v7537
      %v7539 = vpop.f32.mrb[0].mxu0
      %v7540 = vadd.f32 0.0, %v7539
      %v7541 = vpop.f32.mrb[0].mxu0
      %v7542 = vadd.f32 0.0, %v7541
      %7543 = vmatprep.mubr.f32.mxu0 0.0
      %v7544 = vand.u32 %v7404, 4294901760
      %v7545 = vsub.f32 %v7404, %v7544
      %v7546 = vand.u32 %v7545, 4294901760
      %v7547 = vsub.f32 %v7545, %v7546
      %v7548 = vand.u32 %v7547, 4294901760
      %7549 = vmatmul.mubr.f32.gmra.mrb[0].mxu0 %v7548
      %v7550 = vpop.f32.mrb[0].mxu0
      %v7551 = vadd.f32 0.0, %v7550
      %v7552 = vpop.f32.mrb[0].mxu0
      %v7553 = vadd.f32 0.0, %v7552
      %7554 = vmatprep.mubr.f32.mxu0 0.0
      %v7555 = vand.u32 %v7407, 4294901760
      %v7556 = vsub.f32 %v7407, %v7555
      %v7557 = vand.u32 %v7556, 4294901760
      %v7558 = vsub.f32 %v7556, %v7557
      %v7559 = vand.u32 %v7558, 4294901760
      %7560 = vmatmul.mubr.f32.gmra.mrb[0].mxu0 %v7559
      %v7561 = vpop.f32.mrb[0].mxu0
      %v7562 = vadd.f32 0.0, %v7561
      %v7563 = vpop.f32.mrb[0].mxu0
      %v7564 = vadd.f32 0.0, %v7563
      %7565 = vdwg.mxu0
      %v7566 = vand.u32 %v3105, 4294901760
      %v7567 = vsub.f32 %v3105, %v7566
      %v7568 = vand.u32 %v7567, 4294901760
      %v7569 = vsub.f32 %v7567, %v7568
      %v7570 = vand.u32 %v7569, 4294901760
      %7571 = vmatprep.subr.mxu0 %v7570
      %v7572 = vand.u32 %v3104, 4294901760
      %v7573 = vsub.f32 %v3104, %v7572
      %v7574 = vand.u32 %v7573, 4294901760
      %v7575 = vsub.f32 %v7573, %v7574
      %v7576 = vand.u32 %v7575, 4294901760
      %7577 = vmatpush1.msra.mxu0 %v7576
      %v7578 = vand.u32 %v3109, 4294901760
      %v7579 = vsub.f32 %v3109, %v7578
      %v7580 = vand.u32 %v7579, 4294901760
      %v7581 = vsub.f32 %v7579, %v7580
      %v7582 = vand.u32 %v7581, 4294901760
      %7583 = vmatprep.subr.mxu0 %v7582
      %v7584 = vand.u32 %v3108, 4294901760
      %v7585 = vsub.f32 %v3108, %v7584
      %v7586 = vand.u32 %v7585, 4294901760
      %v7587 = vsub.f32 %v7585, %v7586
      %v7588 = vand.u32 %v7587, 4294901760
      %7589 = vmatpush1.msra.mxu0 %v7588
      %7590 = vmatprep.subr.mxu0 0.0
      %7591 = vmatpush1.msra.mxu0 0.0
      %7592 = vmatprep.subr.mxu0 0.0
      %7593 = vmatpush1.msra.mxu0 0.0
      %7594 = vmatprep.subr.mxu0 0.0
      %7595 = vmatpush1.msra.mxu0 0.0
      %7596 = vmatprep.subr.mxu0 0.0
      %7597 = vmatpush1.msra.mxu0 0.0
      %7598 = vmatprep.subr.mxu0 0.0
      %7599 = vmatpush1.msra.mxu0 0.0
      %7600 = vmatprep.subr.mxu0 0.0
      %7601 = vmatpush1.msra.mxu0 0.0
      %7602 = vmatprep.subr.mxu0 0.0
      %7603 = vmatpush1.msra.mxu0 0.0
      %7604 = vmatprep.subr.mxu0 0.0
      %7605 = vmatpush1.msra.mxu0 0.0
      %7606 = vmatprep.subr.mxu0 0.0
      %7607 = vmatpush1.msra.mxu0 0.0
      %7608 = vmatprep.subr.mxu0 0.0
      %7609 = vmatpush1.msra.mxu0 0.0
      %7610 = vmatprep.subr.mxu0 0.0
      %7611 = vmatpush1.msra.mxu0 0.0
      %7612 = vmatprep.subr.mxu0 0.0
      %7613 = vmatpush1.msra.mxu0 0.0
      %7614 = vmatprep.subr.mxu0 0.0
      %7615 = vmatpush1.msra.mxu0 0.0
      %7616 = vmatprep.subr.mxu0 0.0
      %7617 = vmatpush1.msra.mxu0 0.0
      %7618 = vmatprep.subr.mxu0 0.0
      %7619 = vmatpush1.msra.mxu0 0.0
      %7620 = vmatprep.subr.mxu0 0.0
      %7621 = vmatpush1.msra.mxu0 0.0
      %7622 = vmatprep.subr.mxu0 0.0
      %7623 = vmatpush1.msra.mxu0 0.0
      %7624 = vmatprep.subr.mxu0 0.0
      %7625 = vmatpush1.msra.mxu0 0.0
      %7626 = vmatprep.subr.mxu0 0.0
      %7627 = vmatpush1.msra.mxu0 0.0
      %7628 = vmatprep.subr.mxu0 0.0
      %7629 = vmatpush1.msra.mxu0 0.0
      %7630 = vmatprep.subr.mxu0 0.0
      %7631 = vmatpush1.msra.mxu0 0.0
      %7632 = vmatprep.subr.mxu0 0.0
      %7633 = vmatpush1.msra.mxu0 0.0
      %7634 = vmatprep.subr.mxu0 0.0
      %7635 = vmatpush1.msra.mxu0 0.0
      %7636 = vmatprep.subr.mxu0 0.0
      %7637 = vmatpush1.msra.mxu0 0.0
      %7638 = vmatprep.subr.mxu0 0.0
      %7639 = vmatpush1.msra.mxu0 0.0
      %7640 = vmatprep.subr.mxu0 0.0
      %7641 = vmatpush1.msra.mxu0 0.0
      %7642 = vmatprep.subr.mxu0 0.0
      %7643 = vmatpush1.msra.mxu0 0.0
      %7644 = vmatprep.subr.mxu0 0.0
      %7645 = vmatpush1.msra.mxu0 0.0
      %7646 = vmatprep.subr.mxu0 0.0
      %7647 = vmatpush1.msra.mxu0 0.0
      %7648 = vmatprep.subr.mxu0 0.0
      %7649 = vmatpush1.msra.mxu0 0.0
      %7650 = vmatprep.mubr.f32.mxu0 0.0
      %v7651 = vand.u32 %v7386, 4294901760
      %7652 = vmatmul.mubr.f32.gmra.mrb[0].mxu0 %v7651
      %v7653 = vpop.f32.mrb[0].mxu0
      %v7654 = vadd.f32 %v7485, %v7653
      %v7655 = vpop.f32.mrb[0].mxu0
      %v7656 = vadd.f32 %v7487, %v7655
      %7657 = vmatprep.mubr.f32.mxu0 0.0
      %v7658 = vand.u32 %v7389, 4294901760
      %7659 = vmatmul.mubr.f32.gmra.mrb[0].mxu0 %v7658
      %v7660 = vpop.f32.mrb[0].mxu0
      %v7661 = vadd.f32 %v7496, %v7660
      %v7662 = vpop.f32.mrb[0].mxu0
      %v7663 = vadd.f32 %v7498, %v7662
      %7664 = vmatprep.mubr.f32.mxu0 0.0
      %v7665 = vand.u32 %v7392, 4294901760
      %7666 = vmatmul.mubr.f32.gmra.mrb[0].mxu0 %v7665
      %v7667 = vpop.f32.mrb[0].mxu0
      %v7668 = vadd.f32 %v7507, %v7667
      %v7669 = vpop.f32.mrb[0].mxu0
      %v7670 = vadd.f32 %v7509, %v7669
      %7671 = vmatprep.mubr.f32.mxu0 0.0
      %v7672 = vand.u32 %v7395, 4294901760
      %7673 = vmatmul.mubr.f32.gmra.mrb[0].mxu0 %v7672
      %v7674 = vpop.f32.mrb[0].mxu0
      %v7675 = vadd.f32 %v7518, %v7674
      %v7676 = vpop.f32.mrb[0].mxu0
      %v7677 = vadd.f32 %v7520, %v7676
      %7678 = vmatprep.mubr.f32.mxu0 0.0
      %v7679 = vand.u32 %v7398, 4294901760
      %7680 = vmatmul.mubr.f32.gmra.mrb[0].mxu0 %v7679
      %v7681 = vpop.f32.mrb[0].mxu0
      %v7682 = vadd.f32 %v7529, %v7681
      %v7683 = vpop.f32.mrb[0].mxu0
      %v7684 = vadd.f32 %v7531, %v7683
      %7685 = vmatprep.mubr.f32.mxu0 0.0
      %v7686 = vand.u32 %v7401, 4294901760
      %7687 = vmatmul.mubr.f32.gmra.mrb[0].mxu0 %v7686
      %v7688 = vpop.f32.mrb[0].mxu0
      %v7689 = vadd.f32 %v7540, %v7688
      %v7690 = vpop.f32.mrb[0].mxu0
      %v7691 = vadd.f32 %v7542, %v7690
      %7692 = vmatprep.mubr.f32.mxu0 0.0
      %v7693 = vand.u32 %v7404, 4294901760
      %7694 = vmatmul.mubr.f32.gmra.mrb[0].mxu0 %v7693
      %v7695 = vpop.f32.mrb[0].mxu0
      %v7696 = vadd.f32 %v7551, %v7695
      %v7697 = vpop.f32.mrb[0].mxu0
      %v7698 = vadd.f32 %v7553, %v7697
      %7699 = vmatprep.mubr.f32.mxu0 0.0
      %v7700 = vand.u32 %v7407, 4294901760
      %7701 = vmatmul.mubr.f32.gmra.mrb[0].mxu0 %v7700
      %v7702 = vpop.f32.mrb[0].mxu0
      %v7703 = vadd.f32 %v7562, %v7702
      %v7704 = vpop.f32.mrb[0].mxu0
      %v7705 = vadd.f32 %v7564, %v7704
      %7706 = vdwg.mxu0
      %v7707 = vand.u32 %v3105, 4294901760
      %v7708 = vsub.f32 %v3105, %v7707
      %7709 = vmatprep.subr.mxu0 %v7708
      %v7710 = vand.u32 %v3104, 4294901760
      %v7711 = vsub.f32 %v3104, %v7710
      %7712 = vmatpush1.msra.mxu0 %v7711
      %v7713 = vand.u32 %v3109, 4294901760
      %v7714 = vsub.f32 %v3109, %v7713
      %7715 = vmatprep.subr.mxu0 %v7714
      %v7716 = vand.u32 %v3108, 4294901760
      %v7717 = vsub.f32 %v3108, %v7716
      %7718 = vmatpush1.msra.mxu0 %v7717
      %7719 = vmatprep.subr.mxu0 0.0
      %7720 = vmatpush1.msra.mxu0 0.0
      %7721 = vmatprep.subr.mxu0 0.0
      %7722 = vmatpush1.msra.mxu0 0.0
      %7723 = vmatprep.subr.mxu0 0.0
      %7724 = vmatpush1.msra.mxu0 0.0
      %7725 = vmatprep.subr.mxu0 0.0
      %7726 = vmatpush1.msra.mxu0 0.0
      %7727 = vmatprep.subr.mxu0 0.0
      %7728 = vmatpush1.msra.mxu0 0.0
      %7729 = vmatprep.subr.mxu0 0.0
      %7730 = vmatpush1.msra.mxu0 0.0
      %7731 = vmatprep.subr.mxu0 0.0
      %7732 = vmatpush1.msra.mxu0 0.0
      %7733 = vmatprep.subr.mxu0 0.0
      %7734 = vmatpush1.msra.mxu0 0.0
      %7735 = vmatprep.subr.mxu0 0.0
      %7736 = vmatpush1.msra.mxu0 0.0
      %7737 = vmatprep.subr.mxu0 0.0
      %7738 = vmatpush1.msra.mxu0 0.0
      %7739 = vmatprep.subr.mxu0 0.0
      %7740 = vmatpush1.msra.mxu0 0.0
      %7741 = vmatprep.subr.mxu0 0.0
      %7742 = vmatpush1.msra.mxu0 0.0
      %7743 = vmatprep.subr.mxu0 0.0
      %7744 = vmatpush1.msra.mxu0 0.0
      %7745 = vmatprep.subr.mxu0 0.0
      %7746 = vmatpush1.msra.mxu0 0.0
      %7747 = vmatprep.subr.mxu0 0.0
      %7748 = vmatpush1.msra.mxu0 0.0
      %7749 = vmatprep.subr.mxu0 0.0
      %7750 = vmatpush1.msra.mxu0 0.0
      %7751 = vmatprep.subr.mxu0 0.0
      %7752 = vmatpush1.msra.mxu0 0.0
      %7753 = vmatprep.subr.mxu0 0.0
      %7754 = vmatpush1.msra.mxu0 0.0
      %7755 = vmatprep.subr.mxu0 0.0
      %7756 = vmatpush1.msra.mxu0 0.0
      %7757 = vmatprep.subr.mxu0 0.0
      %7758 = vmatpush1.msra.mxu0 0.0
      %7759 = vmatprep.subr.mxu0 0.0
      %7760 = vmatpush1.msra.mxu0 0.0
      %7761 = vmatprep.subr.mxu0 0.0
      %7762 = vmatpush1.msra.mxu0 0.0
      %7763 = vmatprep.subr.mxu0 0.0
      %7764 = vmatpush1.msra.mxu0 0.0
      %7765 = vmatprep.subr.mxu0 0.0
      %7766 = vmatpush1.msra.mxu0 0.0
      %7767 = vmatprep.subr.mxu0 0.0
      %7768 = vmatpush1.msra.mxu0 0.0
      %7769 = vmatprep.subr.mxu0 0.0
      %7770 = vmatpush1.msra.mxu0 0.0
      %7771 = vmatprep.subr.mxu0 0.0
      %7772 = vmatpush1.msra.mxu0 0.0
      %7773 = vmatprep.subr.mxu0 0.0
      %7774 = vmatpush1.msra.mxu0 0.0
      %7775 = vmatprep.subr.mxu0 0.0
      %7776 = vmatpush1.msra.mxu0 0.0
      %7777 = vmatprep.subr.mxu0 0.0
      %7778 = vmatpush1.msra.mxu0 0.0
      %7779 = vmatprep.mubr.f32.mxu0 0.0
      %v7780 = vand.u32 %v7386, 4294901760
      %v7781 = vsub.f32 %v7386, %v7780
      %7782 = vmatmul.mubr.f32.gmra.mrb[0].mxu0 %v7781
      %v7783 = vpop.f32.mrb[0].mxu0
      %v7784 = vadd.f32 %v7654, %v7783
      %v7785 = vpop.f32.mrb[0].mxu0
      %v7786 = vadd.f32 %v7656, %v7785
      %7787 = vmatprep.mubr.f32.mxu0 0.0
      %v7788 = vand.u32 %v7389, 4294901760
      %v7789 = vsub.f32 %v7389, %v7788
      %7790 = vmatmul.mubr.f32.gmra.mrb[0].mxu0 %v7789
      %v7791 = vpop.f32.mrb[0].mxu0
      %v7792 = vadd.f32 %v7661, %v7791
      %v7793 = vpop.f32.mrb[0].mxu0
      %v7794 = vadd.f32 %v7663, %v7793
      %7795 = vmatprep.mubr.f32.mxu0 0.0
      %v7796 = vand.u32 %v7392, 4294901760
      %v7797 = vsub.f32 %v7392, %v7796
      %7798 = vmatmul.mubr.f32.gmra.mrb[0].mxu0 %v7797
      %v7799 = vpop.f32.mrb[0].mxu0
      %v7800 = vadd.f32 %v7668, %v7799
      %v7801 = vpop.f32.mrb[0].mxu0
      %v7802 = vadd.f32 %v7670, %v7801
      %7803 = vmatprep.mubr.f32.mxu0 0.0
      %v7804 = vand.u32 %v7395, 4294901760
      %v7805 = vsub.f32 %v7395, %v7804
      %7806 = vmatmul.mubr.f32.gmra.mrb[0].mxu0 %v7805
      %v7807 = vpop.f32.mrb[0].mxu0
      %v7808 = vadd.f32 %v7675, %v7807
      %v7809 = vpop.f32.mrb[0].mxu0
      %v7810 = vadd.f32 %v7677, %v7809
      %7811 = vmatprep.mubr.f32.mxu0 0.0
      %v7812 = vand.u32 %v7398, 4294901760
      %v7813 = vsub.f32 %v7398, %v7812
      %7814 = vmatmul.mubr.f32.gmra.mrb[0].mxu0 %v7813
      %v7815 = vpop.f32.mrb[0].mxu0
      %v7816 = vadd.f32 %v7682, %v7815
      %v7817 = vpop.f32.mrb[0].mxu0
      %v7818 = vadd.f32 %v7684, %v7817
      %7819 = vmatprep.mubr.f32.mxu0 0.0
      %v7820 = vand.u32 %v7401, 4294901760
      %v7821 = vsub.f32 %v7401, %v7820
      %7822 = vmatmul.mubr.f32.gmra.mrb[0].mxu0 %v7821
      %v7823 = vpop.f32.mrb[0].mxu0
      %v7824 = vadd.f32 %v7689, %v7823
      %v7825 = vpop.f32.mrb[0].mxu0
      %v7826 = vadd.f32 %v7691, %v7825
      %7827 = vmatprep.mubr.f32.mxu0 0.0
      %v7828 = vand.u32 %v7404, 4294901760
      %v7829 = vsub.f32 %v7404, %v7828
      %7830 = vmatmul.mubr.f32.gmra.mrb[0].mxu0 %v7829
      %v7831 = vpop.f32.mrb[0].mxu0
      %v7832 = vadd.f32 %v7696, %v7831
      %v7833 = vpop.f32.mrb[0].mxu0
      %v7834 = vadd.f32 %v7698, %v7833
      %7835 = vmatprep.mubr.f32.mxu0 0.0
      %v7836 = vand.u32 %v7407, 4294901760
      %v7837 = vsub.f32 %v7407, %v7836
      %7838 = vmatmul.mubr.f32.gmra.mrb[0].mxu0 %v7837
      %v7839 = vpop.f32.mrb[0].mxu0
      %v7840 = vadd.f32 %v7703, %v7839
      %v7841 = vpop.f32.mrb[0].mxu0
      %v7842 = vadd.f32 %v7705, %v7841
      %7843 = vdwg.mxu0
      %v7844 = vand.u32 %v3105, 4294901760
      %7845 = vmatprep.subr.mxu0 %v7844
      %v7846 = vand.u32 %v3104, 4294901760
      %7847 = vmatpush1.msra.mxu0 %v7846
      %v7848 = vand.u32 %v3109, 4294901760
      %7849 = vmatprep.subr.mxu0 %v7848
      %v7850 = vand.u32 %v3108, 4294901760
      %7851 = vmatpush1.msra.mxu0 %v7850
      %7852 = vmatprep.subr.mxu0 0.0
      %7853 = vmatpush1.msra.mxu0 0.0
      %7854 = vmatprep.subr.mxu0 0.0
      %7855 = vmatpush1.msra.mxu0 0.0
      %7856 = vmatprep.subr.mxu0 0.0
      %7857 = vmatpush1.msra.mxu0 0.0
      %7858 = vmatprep.subr.mxu0 0.0
      %7859 = vmatpush1.msra.mxu0 0.0
      %7860 = vmatprep.subr.mxu0 0.0
      %7861 = vmatpush1.msra.mxu0 0.0
      %7862 = vmatprep.subr.mxu0 0.0
      %7863 = vmatpush1.msra.mxu0 0.0
      %7864 = vmatprep.subr.mxu0 0.0
      %7865 = vmatpush1.msra.mxu0 0.0
      %7866 = vmatprep.subr.mxu0 0.0
      %7867 = vmatpush1.msra.mxu0 0.0
      %7868 = vmatprep.subr.mxu0 0.0
      %7869 = vmatpush1.msra.mxu0 0.0
      %7870 = vmatprep.subr.mxu0 0.0
      %7871 = vmatpush1.msra.mxu0 0.0
      %7872 = vmatprep.subr.mxu0 0.0
      %7873 = vmatpush1.msra.mxu0 0.0
      %7874 = vmatprep.subr.mxu0 0.0
      %7875 = vmatpush1.msra.mxu0 0.0
      %7876 = vmatprep.subr.mxu0 0.0
      %7877 = vmatpush1.msra.mxu0 0.0
      %7878 = vmatprep.subr.mxu0 0.0
      %7879 = vmatpush1.msra.mxu0 0.0
      %7880 = vmatprep.subr.mxu0 0.0
      %7881 = vmatpush1.msra.mxu0 0.0
      %7882 = vmatprep.subr.mxu0 0.0
      %7883 = vmatpush1.msra.mxu0 0.0
      %7884 = vmatprep.subr.mxu0 0.0
      %7885 = vmatpush1.msra.mxu0 0.0
      %7886 = vmatprep.subr.mxu0 0.0
      %7887 = vmatpush1.msra.mxu0 0.0
      %7888 = vmatprep.subr.mxu0 0.0
      %7889 = vmatpush1.msra.mxu0 0.0
      %7890 = vmatprep.subr.mxu0 0.0
      %7891 = vmatpush1.msra.mxu0 0.0
      %7892 = vmatprep.subr.mxu0 0.0
      %7893 = vmatpush1.msra.mxu0 0.0
      %7894 = vmatprep.subr.mxu0 0.0
      %7895 = vmatpush1.msra.mxu0 0.0
      %7896 = vmatprep.subr.mxu0 0.0
      %7897 = vmatpush1.msra.mxu0 0.0
      %7898 = vmatprep.subr.mxu0 0.0
      %7899 = vmatpush1.msra.mxu0 0.0
      %7900 = vmatprep.subr.mxu0 0.0
      %7901 = vmatpush1.msra.mxu0 0.0
      %7902 = vmatprep.subr.mxu0 0.0
      %7903 = vmatpush1.msra.mxu0 0.0
      %7904 = vmatprep.subr.mxu0 0.0
      %7905 = vmatpush1.msra.mxu0 0.0
      %7906 = vmatprep.subr.mxu0 0.0
      %7907 = vmatpush1.msra.mxu0 0.0
      %7908 = vmatprep.subr.mxu0 0.0
      %7909 = vmatpush1.msra.mxu0 0.0
      %7910 = vmatprep.subr.mxu0 0.0
      %7911 = vmatpush1.msra.mxu0 0.0
      %7912 = vmatprep.mubr.f32.mxu0 0.0
      %v7913 = vand.u32 %v7386, 4294901760
      %v7914 = vsub.f32 %v7386, %v7913
      %v7915 = vand.u32 %v7914, 4294901760
      %7916 = vmatmul.mubr.f32.gmra.mrb[0].mxu0 %v7915
      %v7917 = vpop.f32.mrb[0].mxu0
      %v7918 = vadd.f32 %v7784, %v7917
      %v7919 = vpop.f32.mrb[0].mxu0
      %v7920 = vadd.f32 %v7786, %v7919
      %7921 = vmatprep.mubr.f32.mxu0 0.0
      %v7922 = vand.u32 %v7389, 4294901760
      %v7923 = vsub.f32 %v7389, %v7922
      %v7924 = vand.u32 %v7923, 4294901760
      %7925 = vmatmul.mubr.f32.gmra.mrb[0].mxu0 %v7924
      %v7926 = vpop.f32.mrb[0].mxu0
      %v7927 = vadd.f32 %v7792, %v7926
      %v7928 = vpop.f32.mrb[0].mxu0
      %v7929 = vadd.f32 %v7794, %v7928
      %7930 = vmatprep.mubr.f32.mxu0 0.0
      %v7931 = vand.u32 %v7392, 4294901760
      %v7932 = vsub.f32 %v7392, %v7931
      %v7933 = vand.u32 %v7932, 4294901760
      %7934 = vmatmul.mubr.f32.gmra.mrb[0].mxu0 %v7933
      %v7935 = vpop.f32.mrb[0].mxu0
      %v7936 = vadd.f32 %v7800, %v7935
      %v7937 = vpop.f32.mrb[0].mxu0
      %v7938 = vadd.f32 %v7802, %v7937
      %7939 = vmatprep.mubr.f32.mxu0 0.0
      %v7940 = vand.u32 %v7395, 4294901760
      %v7941 = vsub.f32 %v7395, %v7940
      %v7942 = vand.u32 %v7941, 4294901760
      %7943 = vmatmul.mubr.f32.gmra.mrb[0].mxu0 %v7942
      %v7944 = vpop.f32.mrb[0].mxu0
      %v7945 = vadd.f32 %v7808, %v7944
      %v7946 = vpop.f32.mrb[0].mxu0
      %v7947 = vadd.f32 %v7810, %v7946
      %7948 = vmatprep.mubr.f32.mxu0 0.0
      %v7949 = vand.u32 %v7398, 4294901760
      %v7950 = vsub.f32 %v7398, %v7949
      %v7951 = vand.u32 %v7950, 4294901760
      %7952 = vmatmul.mubr.f32.gmra.mrb[0].mxu0 %v7951
      %v7953 = vpop.f32.mrb[0].mxu0
      %v7954 = vadd.f32 %v7816, %v7953
      %v7955 = vpop.f32.mrb[0].mxu0
      %v7956 = vadd.f32 %v7818, %v7955
      %7957 = vmatprep.mubr.f32.mxu0 0.0
      %v7958 = vand.u32 %v7401, 4294901760
      %v7959 = vsub.f32 %v7401, %v7958
      %v7960 = vand.u32 %v7959, 4294901760
      %7961 = vmatmul.mubr.f32.gmra.mrb[0].mxu0 %v7960
      %v7962 = vpop.f32.mrb[0].mxu0
      %v7963 = vadd.f32 %v7824, %v7962
      %v7964 = vpop.f32.mrb[0].mxu0
      %v7965 = vadd.f32 %v7826, %v7964
      %7966 = vmatprep.mubr.f32.mxu0 0.0
      %v7967 = vand.u32 %v7404, 4294901760
      %v7968 = vsub.f32 %v7404, %v7967
      %v7969 = vand.u32 %v7968, 4294901760
      %7970 = vmatmul.mubr.f32.gmra.mrb[0].mxu0 %v7969
      %v7971 = vpop.f32.mrb[0].mxu0
      %v7972 = vadd.f32 %v7832, %v7971
      %v7973 = vpop.f32.mrb[0].mxu0
      %v7974 = vadd.f32 %v7834, %v7973
      %7975 = vmatprep.mubr.f32.mxu0 0.0
      %v7976 = vand.u32 %v7407, 4294901760
      %v7977 = vsub.f32 %v7407, %v7976
      %v7978 = vand.u32 %v7977, 4294901760
      %7979 = vmatmul.mubr.f32.gmra.mrb[0].mxu0 %v7978
      %v7980 = vpop.f32.mrb[0].mxu0
      %v7981 = vadd.f32 %v7840, %v7980
      %v7982 = vpop.f32.mrb[0].mxu0
      %v7983 = vadd.f32 %v7842, %v7982
      %7984 = vdwg.mxu0
      %v7985 = vand.u32 %v3105, 4294901760
      %v7986 = vsub.f32 %v3105, %v7985
      %v7987 = vand.u32 %v7986, 4294901760
      %7988 = vmatprep.subr.mxu0 %v7987
      %v7989 = vand.u32 %v3104, 4294901760
      %v7990 = vsub.f32 %v3104, %v7989
      %v7991 = vand.u32 %v7990, 4294901760
      %7992 = vmatpush1.msra.mxu0 %v7991
      %v7993 = vand.u32 %v3109, 4294901760
      %v7994 = vsub.f32 %v3109, %v7993
      %v7995 = vand.u32 %v7994, 4294901760
      %7996 = vmatprep.subr.mxu0 %v7995
      %v7997 = vand.u32 %v3108, 4294901760
      %v7998 = vsub.f32 %v3108, %v7997
      %v7999 = vand.u32 %v7998, 4294901760
      %8000 = vmatpush1.msra.mxu0 %v7999
      %8001 = vmatprep.subr.mxu0 0.0
      %8002 = vmatpush1.msra.mxu0 0.0
      %8003 = vmatprep.subr.mxu0 0.0
      %8004 = vmatpush1.msra.mxu0 0.0
      %8005 = vmatprep.subr.mxu0 0.0
      %8006 = vmatpush1.msra.mxu0 0.0
      %8007 = vmatprep.subr.mxu0 0.0
      %8008 = vmatpush1.msra.mxu0 0.0
      %8009 = vmatprep.subr.mxu0 0.0
      %8010 = vmatpush1.msra.mxu0 0.0
      %8011 = vmatprep.subr.mxu0 0.0
      %8012 = vmatpush1.msra.mxu0 0.0
      %8013 = vmatprep.subr.mxu0 0.0
      %8014 = vmatpush1.msra.mxu0 0.0
      %8015 = vmatprep.subr.mxu0 0.0
      %8016 = vmatpush1.msra.mxu0 0.0
      %8017 = vmatprep.subr.mxu0 0.0
      %8018 = vmatpush1.msra.mxu0 0.0
      %8019 = vmatprep.subr.mxu0 0.0
      %8020 = vmatpush1.msra.mxu0 0.0
      %8021 = vmatprep.subr.mxu0 0.0
      %8022 = vmatpush1.msra.mxu0 0.0
      %8023 = vmatprep.subr.mxu0 0.0
      %8024 = vmatpush1.msra.mxu0 0.0
      %8025 = vmatprep.subr.mxu0 0.0
      %8026 = vmatpush1.msra.mxu0 0.0
      %8027 = vmatprep.subr.mxu0 0.0
      %8028 = vmatpush1.msra.mxu0 0.0
      %8029 = vmatprep.subr.mxu0 0.0
      %8030 = vmatpush1.msra.mxu0 0.0
      %8031 = vmatprep.subr.mxu0 0.0
      %8032 = vmatpush1.msra.mxu0 0.0
      %8033 = vmatprep.subr.mxu0 0.0
      %8034 = vmatpush1.msra.mxu0 0.0
      %8035 = vmatprep.subr.mxu0 0.0
      %8036 = vmatpush1.msra.mxu0 0.0
      %8037 = vmatprep.subr.mxu0 0.0
      %8038 = vmatpush1.msra.mxu0 0.0
      %8039 = vmatprep.subr.mxu0 0.0
      %8040 = vmatpush1.msra.mxu0 0.0
      %8041 = vmatprep.subr.mxu0 0.0
      %8042 = vmatpush1.msra.mxu0 0.0
      %8043 = vmatprep.subr.mxu0 0.0
      %8044 = vmatpush1.msra.mxu0 0.0
      %8045 = vmatprep.subr.mxu0 0.0
      %8046 = vmatpush1.msra.mxu0 0.0
      %8047 = vmatprep.subr.mxu0 0.0
      %8048 = vmatpush1.msra.mxu0 0.0
      %8049 = vmatprep.subr.mxu0 0.0
      %8050 = vmatpush1.msra.mxu0 0.0
      %8051 = vmatprep.subr.mxu0 0.0
      %8052 = vmatpush1.msra.mxu0 0.0
      %8053 = vmatprep.subr.mxu0 0.0
      %8054 = vmatpush1.msra.mxu0 0.0
      %8055 = vmatprep.subr.mxu0 0.0
      %8056 = vmatpush1.msra.mxu0 0.0
      %8057 = vmatprep.subr.mxu0 0.0
      %8058 = vmatpush1.msra.mxu0 0.0
      %8059 = vmatprep.subr.mxu0 0.0
      %8060 = vmatpush1.msra.mxu0 0.0
      %8061 = vmatprep.mubr.f32.mxu0 0.0
      %v8062 = vand.u32 %v7386, 4294901760
      %8063 = vmatmul.mubr.f32.gmra.mrb[0].mxu0 %v8062
      %v8064 = vpop.f32.mrb[0].mxu0
      %v8065 = vadd.f32 %v7918, %v8064
      %v8066 = vpop.f32.mrb[0].mxu0
      %v8067 = vadd.f32 %v7920, %v8066
      %8068 = vmatprep.mubr.f32.mxu0 0.0
      %v8069 = vand.u32 %v7389, 4294901760
      %8070 = vmatmul.mubr.f32.gmra.mrb[0].mxu0 %v8069
      %v8071 = vpop.f32.mrb[0].mxu0
      %v8072 = vadd.f32 %v7927, %v8071
      %v8073 = vpop.f32.mrb[0].mxu0
      %v8074 = vadd.f32 %v7929, %v8073
      %8075 = vmatprep.mubr.f32.mxu0 0.0
      %v8076 = vand.u32 %v7392, 4294901760
      %8077 = vmatmul.mubr.f32.gmra.mrb[0].mxu0 %v8076
      %v8078 = vpop.f32.mrb[0].mxu0
      %v8079 = vadd.f32 %v7936, %v8078
      %v8080 = vpop.f32.mrb[0].mxu0
      %v8081 = vadd.f32 %v7938, %v8080
      %8082 = vmatprep.mubr.f32.mxu0 0.0
      %v8083 = vand.u32 %v7395, 4294901760
      %8084 = vmatmul.mubr.f32.gmra.mrb[0].mxu0 %v8083
      %v8085 = vpop.f32.mrb[0].mxu0
      %v8086 = vadd.f32 %v7945, %v8085
      %v8087 = vpop.f32.mrb[0].mxu0
      %v8088 = vadd.f32 %v7947, %v8087
      %8089 = vmatprep.mubr.f32.mxu0 0.0
      %v8090 = vand.u32 %v7398, 4294901760
      %8091 = vmatmul.mubr.f32.gmra.mrb[0].mxu0 %v8090
      %v8092 = vpop.f32.mrb[0].mxu0
      %v8093 = vadd.f32 %v7954, %v8092
      %v8094 = vpop.f32.mrb[0].mxu0
      %v8095 = vadd.f32 %v7956, %v8094
      %8096 = vmatprep.mubr.f32.mxu0 0.0
      %v8097 = vand.u32 %v7401, 4294901760
      %8098 = vmatmul.mubr.f32.gmra.mrb[0].mxu0 %v8097
      %v8099 = vpop.f32.mrb[0].mxu0
      %v8100 = vadd.f32 %v7963, %v8099
      %v8101 = vpop.f32.mrb[0].mxu0
      %v8102 = vadd.f32 %v7965, %v8101
      %8103 = vmatprep.mubr.f32.mxu0 0.0
      %v8104 = vand.u32 %v7404, 4294901760
      %8105 = vmatmul.mubr.f32.gmra.mrb[0].mxu0 %v8104
      %v8106 = vpop.f32.mrb[0].mxu0
      %v8107 = vadd.f32 %v7972, %v8106
      %v8108 = vpop.f32.mrb[0].mxu0
      %v8109 = vadd.f32 %v7974, %v8108
      %8110 = vmatprep.mubr.f32.mxu0 0.0
      %v8111 = vand.u32 %v7407, 4294901760
      %8112 = vmatmul.mubr.f32.gmra.mrb[0].mxu0 %v8111
      %v8113 = vpop.f32.mrb[0].mxu0
      %v8114 = vadd.f32 %v7981, %v8113
      %v8115 = vpop.f32.mrb[0].mxu0
      %v8116 = vadd.f32 %v7983, %v8115
      %8117 = vdwg.mxu0
      %v8118 = vand.u32 %v3105, 4294901760
      %8119 = vmatprep.subr.mxu0 %v8118
      %v8120 = vand.u32 %v3104, 4294901760
      %8121 = vmatpush1.msra.mxu0 %v8120
      %v8122 = vand.u32 %v3109, 4294901760
      %8123 = vmatprep.subr.mxu0 %v8122
      %v8124 = vand.u32 %v3108, 4294901760
      %8125 = vmatpush1.msra.mxu0 %v8124
      %8126 = vmatprep.subr.mxu0 0.0
      %8127 = vmatpush1.msra.mxu0 0.0
      %8128 = vmatprep.subr.mxu0 0.0
      %8129 = vmatpush1.msra.mxu0 0.0
      %8130 = vmatprep.subr.mxu0 0.0
      %8131 = vmatpush1.msra.mxu0 0.0
      %8132 = vmatprep.subr.mxu0 0.0
      %8133 = vmatpush1.msra.mxu0 0.0
      %8134 = vmatprep.subr.mxu0 0.0
      %8135 = vmatpush1.msra.mxu0 0.0
      %8136 = vmatprep.subr.mxu0 0.0
      %8137 = vmatpush1.msra.mxu0 0.0
      %8138 = vmatprep.subr.mxu0 0.0
      %8139 = vmatpush1.msra.mxu0 0.0
      %8140 = vmatprep.subr.mxu0 0.0
      %8141 = vmatpush1.msra.mxu0 0.0
      %8142 = vmatprep.subr.mxu0 0.0
      %8143 = vmatpush1.msra.mxu0 0.0
      %8144 = vmatprep.subr.mxu0 0.0
      %8145 = vmatpush1.msra.mxu0 0.0
      %8146 = vmatprep.subr.mxu0 0.0
      %8147 = vmatpush1.msra.mxu0 0.0
      %8148 = vmatprep.subr.mxu0 0.0
      %8149 = vmatpush1.msra.mxu0 0.0
      %8150 = vmatprep.subr.mxu0 0.0
      %8151 = vmatpush1.msra.mxu0 0.0
      %8152 = vmatprep.subr.mxu0 0.0
      %8153 = vmatpush1.msra.mxu0 0.0
      %8154 = vmatprep.subr.mxu0 0.0
      %8155 = vmatpush1.msra.mxu0 0.0
      %8156 = vmatprep.subr.mxu0 0.0
      %8157 = vmatpush1.msra.mxu0 0.0
      %8158 = vmatprep.subr.mxu0 0.0
      %8159 = vmatpush1.msra.mxu0 0.0
      %8160 = vmatprep.subr.mxu0 0.0
      %8161 = vmatpush1.msra.mxu0 0.0
      %8162 = vmatprep.subr.mxu0 0.0
      %8163 = vmatpush1.msra.mxu0 0.0
      %8164 = vmatprep.subr.mxu0 0.0
      %8165 = vmatpush1.msra.mxu0 0.0
      %8166 = vmatprep.subr.mxu0 0.0
      %8167 = vmatpush1.msra.mxu0 0.0
      %8168 = vmatprep.subr.mxu0 0.0
      %8169 = vmatpush1.msra.mxu0 0.0
      %8170 = vmatprep.subr.mxu0 0.0
      %8171 = vmatpush1.msra.mxu0 0.0
      %8172 = vmatprep.subr.mxu0 0.0
      %8173 = vmatpush1.msra.mxu0 0.0
      %8174 = vmatprep.subr.mxu0 0.0
      %8175 = vmatpush1.msra.mxu0 0.0
      %8176 = vmatprep.subr.mxu0 0.0
      %8177 = vmatpush1.msra.mxu0 0.0
      %8178 = vmatprep.subr.mxu0 0.0
      %8179 = vmatpush1.msra.mxu0 0.0
      %8180 = vmatprep.subr.mxu0 0.0
      %8181 = vmatpush1.msra.mxu0 0.0
      %8182 = vmatprep.subr.mxu0 0.0
      %8183 = vmatpush1.msra.mxu0 0.0
      %8184 = vmatprep.subr.mxu0 0.0
      %8185 = vmatpush1.msra.mxu0 0.0
      %8186 = vmatprep.mubr.f32.mxu0 0.0
      %v8187 = vand.u32 %v7386, 4294901760
      %8188 = vmatmul.mubr.f32.gmra.mrb[0].mxu0 %v8187
      %v8189 = vpop.f32.mrb[0].mxu0
      %v8190 = vadd.f32 %v8065, %v8189
      %v8191 = vpop.f32.mrb[0].mxu0
      %v8192 = vadd.f32 %v8067, %v8191
      %8193 = vmatprep.mubr.f32.mxu0 0.0
      %v8194 = vand.u32 %v7389, 4294901760
      %8195 = vmatmul.mubr.f32.gmra.mrb[0].mxu0 %v8194
      %v8196 = vpop.f32.mrb[0].mxu0
      %v8197 = vadd.f32 %v8072, %v8196
      %v8198 = vpop.f32.mrb[0].mxu0
      %v8199 = vadd.f32 %v8074, %v8198
      %8200 = vmatprep.mubr.f32.mxu0 0.0
      %v8201 = vand.u32 %v7392, 4294901760
      %8202 = vmatmul.mubr.f32.gmra.mrb[0].mxu0 %v8201
      %v8203 = vpop.f32.mrb[0].mxu0
      %v8204 = vadd.f32 %v8079, %v8203
      %v8205 = vpop.f32.mrb[0].mxu0
      %v8206 = vadd.f32 %v8081, %v8205
      %8207 = vmatprep.mubr.f32.mxu0 0.0
      %v8208 = vand.u32 %v7395, 4294901760
      %8209 = vmatmul.mubr.f32.gmra.mrb[0].mxu0 %v8208
      %v8210 = vpop.f32.mrb[0].mxu0
      %v8211 = vadd.f32 %v8086, %v8210
      %v8212 = vpop.f32.mrb[0].mxu0
      %v8213 = vadd.f32 %v8088, %v8212
      %8214 = vmatprep.mubr.f32.mxu0 0.0
      %v8215 = vand.u32 %v7398, 4294901760
      %8216 = vmatmul.mubr.f32.gmra.mrb[0].mxu0 %v8215
      %v8217 = vpop.f32.mrb[0].mxu0
      %v8218 = vadd.f32 %v8093, %v8217
      %v8219 = vpop.f32.mrb[0].mxu0
      %v8220 = vadd.f32 %v8095, %v8219
      %8221 = vmatprep.mubr.f32.mxu0 0.0
      %v8222 = vand.u32 %v7401, 4294901760
      %8223 = vmatmul.mubr.f32.gmra.mrb[0].mxu0 %v8222
      %v8224 = vpop.f32.mrb[0].mxu0
      %v8225 = vadd.f32 %v8100, %v8224
      %v8226 = vpop.f32.mrb[0].mxu0
      %v8227 = vadd.f32 %v8102, %v8226
      %8228 = vmatprep.mubr.f32.mxu0 0.0
      %v8229 = vand.u32 %v7404, 4294901760
      %8230 = vmatmul.mubr.f32.gmra.mrb[0].mxu0 %v8229
      %v8231 = vpop.f32.mrb[0].mxu0
      %v8232 = vadd.f32 %v8107, %v8231
      %v8233 = vpop.f32.mrb[0].mxu0
      %v8234 = vadd.f32 %v8109, %v8233
      %8235 = vmatprep.mubr.f32.mxu0 0.0
      %v8236 = vand.u32 %v7407, 4294901760
      %8237 = vmatmul.mubr.f32.gmra.mrb[0].mxu0 %v8236
      %v8238 = vpop.f32.mrb[0].mxu0
      %v8239 = vadd.f32 %v8114, %v8238
      %v8240 = vpop.f32.mrb[0].mxu0
      %v8241 = vadd.f32 %v8116, %v8240
      %8242 = vdwg.mxu0
      %v8243 = vand.u32 %v3107, 4294901760
      %8244 = vmatprep.subr.mxu0 %v8243
      %v8245 = vand.u32 %v3106, 4294901760
      %8246 = vmatpush1.msra.mxu0 %v8245
      %v8247 = vand.u32 %v3111, 4294901760
      %8248 = vmatprep.subr.mxu0 %v8247
      %v8249 = vand.u32 %v3110, 4294901760
      %8250 = vmatpush1.msra.mxu0 %v8249
      %8251 = vmatprep.subr.mxu0 0.0
      %8252 = vmatpush1.msra.mxu0 0.0
      %8253 = vmatprep.subr.mxu0 0.0
      %8254 = vmatpush1.msra.mxu0 0.0
      %8255 = vmatprep.subr.mxu0 0.0
      %8256 = vmatpush1.msra.mxu0 0.0
      %8257 = vmatprep.subr.mxu0 0.0
      %8258 = vmatpush1.msra.mxu0 0.0
      %8259 = vmatprep.subr.mxu0 0.0
      %8260 = vmatpush1.msra.mxu0 0.0
      %8261 = vmatprep.subr.mxu0 0.0
      %8262 = vmatpush1.msra.mxu0 0.0
      %8263 = vmatprep.subr.mxu0 0.0
      %8264 = vmatpush1.msra.mxu0 0.0
      %8265 = vmatprep.subr.mxu0 0.0
      %8266 = vmatpush1.msra.mxu0 0.0
      %8267 = vmatprep.subr.mxu0 0.0
      %8268 = vmatpush1.msra.mxu0 0.0
      %8269 = vmatprep.subr.mxu0 0.0
      %8270 = vmatpush1.msra.mxu0 0.0
      %8271 = vmatprep.subr.mxu0 0.0
      %8272 = vmatpush1.msra.mxu0 0.0
      %8273 = vmatprep.subr.mxu0 0.0
      %8274 = vmatpush1.msra.mxu0 0.0
      %8275 = vmatprep.subr.mxu0 0.0
      %8276 = vmatpush1.msra.mxu0 0.0
      %8277 = vmatprep.subr.mxu0 0.0
      %8278 = vmatpush1.msra.mxu0 0.0
      %8279 = vmatprep.subr.mxu0 0.0
      %8280 = vmatpush1.msra.mxu0 0.0
      %8281 = vmatprep.subr.mxu0 0.0
      %8282 = vmatpush1.msra.mxu0 0.0
      %8283 = vmatprep.subr.mxu0 0.0
      %8284 = vmatpush1.msra.mxu0 0.0
      %8285 = vmatprep.subr.mxu0 0.0
      %8286 = vmatpush1.msra.mxu0 0.0
      %8287 = vmatprep.subr.mxu0 0.0
      %8288 = vmatpush1.msra.mxu0 0.0
      %8289 = vmatprep.subr.mxu0 0.0
      %8290 = vmatpush1.msra.mxu0 0.0
      %8291 = vmatprep.subr.mxu0 0.0
      %8292 = vmatpush1.msra.mxu0 0.0
      %8293 = vmatprep.subr.mxu0 0.0
      %8294 = vmatpush1.msra.mxu0 0.0
      %8295 = vmatprep.subr.mxu0 0.0
      %8296 = vmatpush1.msra.mxu0 0.0
      %8297 = vmatprep.subr.mxu0 0.0
      %8298 = vmatpush1.msra.mxu0 0.0
      %8299 = vmatprep.subr.mxu0 0.0
      %8300 = vmatpush1.msra.mxu0 0.0
      %8301 = vmatprep.subr.mxu0 0.0
      %8302 = vmatpush1.msra.mxu0 0.0
      %8303 = vmatprep.subr.mxu0 0.0
      %8304 = vmatpush1.msra.mxu0 0.0
      %8305 = vmatprep.subr.mxu0 0.0
      %8306 = vmatpush1.msra.mxu0 0.0
      %8307 = vmatprep.subr.mxu0 0.0
      %8308 = vmatpush1.msra.mxu0 0.0
      %8309 = vmatprep.subr.mxu0 0.0
      %8310 = vmatpush1.msra.mxu0 0.0
      %8311 = vmatprep.mubr.f32.mxu0 0.0
      %v8312 = vand.u32 %v7386, 4294901760
      %v8313 = vsub.f32 %v7386, %v8312
      %v8314 = vand.u32 %v8313, 4294901760
      %v8315 = vsub.f32 %v8313, %v8314
      %v8316 = vand.u32 %v8315, 4294901760
      %8317 = vmatmul.mubr.f32.gmra.mrb[0].mxu0 %v8316
      %v8318 = vpop.f32.mrb[0].mxu0
      %v8319 = vadd.f32 0.0, %v8318
      %v8320 = vpop.f32.mrb[0].mxu0
      %v8321 = vadd.f32 0.0, %v8320
      %8322 = vmatprep.mubr.f32.mxu0 0.0
      %v8323 = vand.u32 %v7389, 4294901760
      %v8324 = vsub.f32 %v7389, %v8323
      %v8325 = vand.u32 %v8324, 4294901760
      %v8326 = vsub.f32 %v8324, %v8325
      %v8327 = vand.u32 %v8326, 4294901760
      %8328 = vmatmul.mubr.f32.gmra.mrb[0].mxu0 %v8327
      %v8329 = vpop.f32.mrb[0].mxu0
      %v8330 = vadd.f32 0.0, %v8329
      %v8331 = vpop.f32.mrb[0].mxu0
      %v8332 = vadd.f32 0.0, %v8331
      %8333 = vmatprep.mubr.f32.mxu0 0.0
      %v8334 = vand.u32 %v7392, 4294901760
      %v8335 = vsub.f32 %v7392, %v8334
      %v8336 = vand.u32 %v8335, 4294901760
      %v8337 = vsub.f32 %v8335, %v8336
      %v8338 = vand.u32 %v8337, 4294901760
      %8339 = vmatmul.mubr.f32.gmra.mrb[0].mxu0 %v8338
      %v8340 = vpop.f32.mrb[0].mxu0
      %v8341 = vadd.f32 0.0, %v8340
      %v8342 = vpop.f32.mrb[0].mxu0
      %v8343 = vadd.f32 0.0, %v8342
      %8344 = vmatprep.mubr.f32.mxu0 0.0
      %v8345 = vand.u32 %v7395, 4294901760
      %v8346 = vsub.f32 %v7395, %v8345
      %v8347 = vand.u32 %v8346, 4294901760
      %v8348 = vsub.f32 %v8346, %v8347
      %v8349 = vand.u32 %v8348, 4294901760
      %8350 = vmatmul.mubr.f32.gmra.mrb[0].mxu0 %v8349
      %v8351 = vpop.f32.mrb[0].mxu0
      %v8352 = vadd.f32 0.0, %v8351
      %v8353 = vpop.f32.mrb[0].mxu0
      %v8354 = vadd.f32 0.0, %v8353
      %8355 = vmatprep.mubr.f32.mxu0 0.0
      %v8356 = vand.u32 %v7398, 4294901760
      %v8357 = vsub.f32 %v7398, %v8356
      %v8358 = vand.u32 %v8357, 4294901760
      %v8359 = vsub.f32 %v8357, %v8358
      %v8360 = vand.u32 %v8359, 4294901760
      %8361 = vmatmul.mubr.f32.gmra.mrb[0].mxu0 %v8360
      %v8362 = vpop.f32.mrb[0].mxu0
      %v8363 = vadd.f32 0.0, %v8362
      %v8364 = vpop.f32.mrb[0].mxu0
      %v8365 = vadd.f32 0.0, %v8364
      %8366 = vmatprep.mubr.f32.mxu0 0.0
      %v8367 = vand.u32 %v7401, 4294901760
      %v8368 = vsub.f32 %v7401, %v8367
      %v8369 = vand.u32 %v8368, 4294901760
      %v8370 = vsub.f32 %v8368, %v8369
      %v8371 = vand.u32 %v8370, 4294901760
      %8372 = vmatmul.mubr.f32.gmra.mrb[0].mxu0 %v8371
      %v8373 = vpop.f32.mrb[0].mxu0
      %v8374 = vadd.f32 0.0, %v8373
      %v8375 = vpop.f32.mrb[0].mxu0
      %v8376 = vadd.f32 0.0, %v8375
      %8377 = vmatprep.mubr.f32.mxu0 0.0
      %v8378 = vand.u32 %v7404, 4294901760
      %v8379 = vsub.f32 %v7404, %v8378
      %v8380 = vand.u32 %v8379, 4294901760
      %v8381 = vsub.f32 %v8379, %v8380
      %v8382 = vand.u32 %v8381, 4294901760
      %8383 = vmatmul.mubr.f32.gmra.mrb[0].mxu0 %v8382
      %v8384 = vpop.f32.mrb[0].mxu0
      %v8385 = vadd.f32 0.0, %v8384
      %v8386 = vpop.f32.mrb[0].mxu0
      %v8387 = vadd.f32 0.0, %v8386
      %8388 = vmatprep.mubr.f32.mxu0 0.0
      %v8389 = vand.u32 %v7407, 4294901760
      %v8390 = vsub.f32 %v7407, %v8389
      %v8391 = vand.u32 %v8390, 4294901760
      %v8392 = vsub.f32 %v8390, %v8391
      %v8393 = vand.u32 %v8392, 4294901760
      %8394 = vmatmul.mubr.f32.gmra.mrb[0].mxu0 %v8393
      %v8395 = vpop.f32.mrb[0].mxu0
      %v8396 = vadd.f32 0.0, %v8395
      %v8397 = vpop.f32.mrb[0].mxu0
      %v8398 = vadd.f32 0.0, %v8397
      %8399 = vdwg.mxu0
      %v8400 = vand.u32 %v3107, 4294901760
      %v8401 = vsub.f32 %v3107, %v8400
      %v8402 = vand.u32 %v8401, 4294901760
      %v8403 = vsub.f32 %v8401, %v8402
      %v8404 = vand.u32 %v8403, 4294901760
      %8405 = vmatprep.subr.mxu0 %v8404
      %v8406 = vand.u32 %v3106, 4294901760
      %v8407 = vsub.f32 %v3106, %v8406
      %v8408 = vand.u32 %v8407, 4294901760
      %v8409 = vsub.f32 %v8407, %v8408
      %v8410 = vand.u32 %v8409, 4294901760
      %8411 = vmatpush1.msra.mxu0 %v8410
      %v8412 = vand.u32 %v3111, 4294901760
      %v8413 = vsub.f32 %v3111, %v8412
      %v8414 = vand.u32 %v8413, 4294901760
      %v8415 = vsub.f32 %v8413, %v8414
      %v8416 = vand.u32 %v8415, 4294901760
      %8417 = vmatprep.subr.mxu0 %v8416
      %v8418 = vand.u32 %v3110, 4294901760
      %v8419 = vsub.f32 %v3110, %v8418
      %v8420 = vand.u32 %v8419, 4294901760
      %v8421 = vsub.f32 %v8419, %v8420
      %v8422 = vand.u32 %v8421, 4294901760
      %8423 = vmatpush1.msra.mxu0 %v8422
      %8424 = vmatprep.subr.mxu0 0.0
      %8425 = vmatpush1.msra.mxu0 0.0
      %8426 = vmatprep.subr.mxu0 0.0
      %8427 = vmatpush1.msra.mxu0 0.0
      %8428 = vmatprep.subr.mxu0 0.0
      %8429 = vmatpush1.msra.mxu0 0.0
      %8430 = vmatprep.subr.mxu0 0.0
      %8431 = vmatpush1.msra.mxu0 0.0
      %8432 = vmatprep.subr.mxu0 0.0
      %8433 = vmatpush1.msra.mxu0 0.0
      %8434 = vmatprep.subr.mxu0 0.0
      %8435 = vmatpush1.msra.mxu0 0.0
      %8436 = vmatprep.subr.mxu0 0.0
      %8437 = vmatpush1.msra.mxu0 0.0
      %8438 = vmatprep.subr.mxu0 0.0
      %8439 = vmatpush1.msra.mxu0 0.0
      %8440 = vmatprep.subr.mxu0 0.0
      %8441 = vmatpush1.msra.mxu0 0.0
      %8442 = vmatprep.subr.mxu0 0.0
      %8443 = vmatpush1.msra.mxu0 0.0
      %8444 = vmatprep.subr.mxu0 0.0
      %8445 = vmatpush1.msra.mxu0 0.0
      %8446 = vmatprep.subr.mxu0 0.0
      %8447 = vmatpush1.msra.mxu0 0.0
      %8448 = vmatprep.subr.mxu0 0.0
      %8449 = vmatpush1.msra.mxu0 0.0
      %8450 = vmatprep.subr.mxu0 0.0
      %8451 = vmatpush1.msra.mxu0 0.0
      %8452 = vmatprep.subr.mxu0 0.0
      %8453 = vmatpush1.msra.mxu0 0.0
      %8454 = vmatprep.subr.mxu0 0.0
      %8455 = vmatpush1.msra.mxu0 0.0
      %8456 = vmatprep.subr.mxu0 0.0
      %8457 = vmatpush1.msra.mxu0 0.0
      %8458 = vmatprep.subr.mxu0 0.0
      %8459 = vmatpush1.msra.mxu0 0.0
      %8460 = vmatprep.subr.mxu0 0.0
      %8461 = vmatpush1.msra.mxu0 0.0
      %8462 = vmatprep.subr.mxu0 0.0
      %8463 = vmatpush1.msra.mxu0 0.0
      %8464 = vmatprep.subr.mxu0 0.0
      %8465 = vmatpush1.msra.mxu0 0.0
      %8466 = vmatprep.subr.mxu0 0.0
      %8467 = vmatpush1.msra.mxu0 0.0
      %8468 = vmatprep.subr.mxu0 0.0
      %8469 = vmatpush1.msra.mxu0 0.0
      %8470 = vmatprep.subr.mxu0 0.0
      %8471 = vmatpush1.msra.mxu0 0.0
      %8472 = vmatprep.subr.mxu0 0.0
      %8473 = vmatpush1.msra.mxu0 0.0
      %8474 = vmatprep.subr.mxu0 0.0
      %8475 = vmatpush1.msra.mxu0 0.0
      %8476 = vmatprep.subr.mxu0 0.0
      %8477 = vmatpush1.msra.mxu0 0.0
      %8478 = vmatprep.subr.mxu0 0.0
      %8479 = vmatpush1.msra.mxu0 0.0
      %8480 = vmatprep.subr.mxu0 0.0
      %8481 = vmatpush1.msra.mxu0 0.0
      %8482 = vmatprep.subr.mxu0 0.0
      %8483 = vmatpush1.msra.mxu0 0.0
      %8484 = vmatprep.mubr.f32.mxu0 0.0
      %v8485 = vand.u32 %v7386, 4294901760
      %8486 = vmatmul.mubr.f32.gmra.mrb[0].mxu0 %v8485
      %v8487 = vpop.f32.mrb[0].mxu0
      %v8488 = vadd.f32 %v8319, %v8487
      %v8489 = vpop.f32.mrb[0].mxu0
      %v8490 = vadd.f32 %v8321, %v8489
      %8491 = vmatprep.mubr.f32.mxu0 0.0
      %v8492 = vand.u32 %v7389, 4294901760
      %8493 = vmatmul.mubr.f32.gmra.mrb[0].mxu0 %v8492
      %v8494 = vpop.f32.mrb[0].mxu0
      %v8495 = vadd.f32 %v8330, %v8494
      %v8496 = vpop.f32.mrb[0].mxu0
      %v8497 = vadd.f32 %v8332, %v8496
      %8498 = vmatprep.mubr.f32.mxu0 0.0
      %v8499 = vand.u32 %v7392, 4294901760
      %8500 = vmatmul.mubr.f32.gmra.mrb[0].mxu0 %v8499
      %v8501 = vpop.f32.mrb[0].mxu0
      %v8502 = vadd.f32 %v8341, %v8501
      %v8503 = vpop.f32.mrb[0].mxu0
      %v8504 = vadd.f32 %v8343, %v8503
      %8505 = vmatprep.mubr.f32.mxu0 0.0
      %v8506 = vand.u32 %v7395, 4294901760
      %8507 = vmatmul.mubr.f32.gmra.mrb[0].mxu0 %v8506
      %v8508 = vpop.f32.mrb[0].mxu0
      %v8509 = vadd.f32 %v8352, %v8508
      %v8510 = vpop.f32.mrb[0].mxu0
      %v8511 = vadd.f32 %v8354, %v8510
      %8512 = vmatprep.mubr.f32.mxu0 0.0
      %v8513 = vand.u32 %v7398, 4294901760
      %8514 = vmatmul.mubr.f32.gmra.mrb[0].mxu0 %v8513
      %v8515 = vpop.f32.mrb[0].mxu0
      %v8516 = vadd.f32 %v8363, %v8515
      %v8517 = vpop.f32.mrb[0].mxu0
      %v8518 = vadd.f32 %v8365, %v8517
      %8519 = vmatprep.mubr.f32.mxu0 0.0
      %v8520 = vand.u32 %v7401, 4294901760
      %8521 = vmatmul.mubr.f32.gmra.mrb[0].mxu0 %v8520
      %v8522 = vpop.f32.mrb[0].mxu0
      %v8523 = vadd.f32 %v8374, %v8522
      %v8524 = vpop.f32.mrb[0].mxu0
      %v8525 = vadd.f32 %v8376, %v8524
      %8526 = vmatprep.mubr.f32.mxu0 0.0
      %v8527 = vand.u32 %v7404, 4294901760
      %8528 = vmatmul.mubr.f32.gmra.mrb[0].mxu0 %v8527
      %v8529 = vpop.f32.mrb[0].mxu0
      %v8530 = vadd.f32 %v8385, %v8529
      %v8531 = vpop.f32.mrb[0].mxu0
      %v8532 = vadd.f32 %v8387, %v8531
      %8533 = vmatprep.mubr.f32.mxu0 0.0
      %v8534 = vand.u32 %v7407, 4294901760
      %8535 = vmatmul.mubr.f32.gmra.mrb[0].mxu0 %v8534
      %v8536 = vpop.f32.mrb[0].mxu0
      %v8537 = vadd.f32 %v8396, %v8536
      %v8538 = vpop.f32.mrb[0].mxu0
      %v8539 = vadd.f32 %v8398, %v8538
      %8540 = vdwg.mxu0
      %v8541 = vand.u32 %v3107, 4294901760
      %v8542 = vsub.f32 %v3107, %v8541
      %8543 = vmatprep.subr.mxu0 %v8542
      %v8544 = vand.u32 %v3106, 4294901760
      %v8545 = vsub.f32 %v3106, %v8544
      %8546 = vmatpush1.msra.mxu0 %v8545
      %v8547 = vand.u32 %v3111, 4294901760
      %v8548 = vsub.f32 %v3111, %v8547
      %8549 = vmatprep.subr.mxu0 %v8548
      %v8550 = vand.u32 %v3110, 4294901760
      %v8551 = vsub.f32 %v3110, %v8550
      %8552 = vmatpush1.msra.mxu0 %v8551
      %8553 = vmatprep.subr.mxu0 0.0
      %8554 = vmatpush1.msra.mxu0 0.0
      %8555 = vmatprep.subr.mxu0 0.0
      %8556 = vmatpush1.msra.mxu0 0.0
      %8557 = vmatprep.subr.mxu0 0.0
      %8558 = vmatpush1.msra.mxu0 0.0
      %8559 = vmatprep.subr.mxu0 0.0
      %8560 = vmatpush1.msra.mxu0 0.0
      %8561 = vmatprep.subr.mxu0 0.0
      %8562 = vmatpush1.msra.mxu0 0.0
      %8563 = vmatprep.subr.mxu0 0.0
      %8564 = vmatpush1.msra.mxu0 0.0
      %8565 = vmatprep.subr.mxu0 0.0
      %8566 = vmatpush1.msra.mxu0 0.0
      %8567 = vmatprep.subr.mxu0 0.0
      %8568 = vmatpush1.msra.mxu0 0.0
      %8569 = vmatprep.subr.mxu0 0.0
      %8570 = vmatpush1.msra.mxu0 0.0
      %8571 = vmatprep.subr.mxu0 0.0
      %8572 = vmatpush1.msra.mxu0 0.0
      %8573 = vmatprep.subr.mxu0 0.0
      %8574 = vmatpush1.msra.mxu0 0.0
      %8575 = vmatprep.subr.mxu0 0.0
      %8576 = vmatpush1.msra.mxu0 0.0
      %8577 = vmatprep.subr.mxu0 0.0
      %8578 = vmatpush1.msra.mxu0 0.0
      %8579 = vmatprep.subr.mxu0 0.0
      %8580 = vmatpush1.msra.mxu0 0.0
      %8581 = vmatprep.subr.mxu0 0.0
      %8582 = vmatpush1.msra.mxu0 0.0
      %8583 = vmatprep.subr.mxu0 0.0
      %8584 = vmatpush1.msra.mxu0 0.0
      %8585 = vmatprep.subr.mxu0 0.0
      %8586 = vmatpush1.msra.mxu0 0.0
      %8587 = vmatprep.subr.mxu0 0.0
      %8588 = vmatpush1.msra.mxu0 0.0
      %8589 = vmatprep.subr.mxu0 0.0
      %8590 = vmatpush1.msra.mxu0 0.0
      %8591 = vmatprep.subr.mxu0 0.0
      %8592 = vmatpush1.msra.mxu0 0.0
      %8593 = vmatprep.subr.mxu0 0.0
      %8594 = vmatpush1.msra.mxu0 0.0
      %8595 = vmatprep.subr.mxu0 0.0
      %8596 = vmatpush1.msra.mxu0 0.0
      %8597 = vmatprep.subr.mxu0 0.0
      %8598 = vmatpush1.msra.mxu0 0.0
      %8599 = vmatprep.subr.mxu0 0.0
      %8600 = vmatpush1.msra.mxu0 0.0
      %8601 = vmatprep.subr.mxu0 0.0
      %8602 = vmatpush1.msra.mxu0 0.0
      %8603 = vmatprep.subr.mxu0 0.0
      %8604 = vmatpush1.msra.mxu0 0.0
      %8605 = vmatprep.subr.mxu0 0.0
      %8606 = vmatpush1.msra.mxu0 0.0
      %8607 = vmatprep.subr.mxu0 0.0
      %8608 = vmatpush1.msra.mxu0 0.0
      %8609 = vmatprep.subr.mxu0 0.0
      %8610 = vmatpush1.msra.mxu0 0.0
      %8611 = vmatprep.subr.mxu0 0.0
      %8612 = vmatpush1.msra.mxu0 0.0
      %8613 = vmatprep.mubr.f32.mxu0 0.0
      %v8614 = vand.u32 %v7386, 4294901760
      %v8615 = vsub.f32 %v7386, %v8614
      %8616 = vmatmul.mubr.f32.gmra.mrb[0].mxu0 %v8615
      %v8617 = vpop.f32.mrb[0].mxu0
      %v8618 = vadd.f32 %v8488, %v8617
      %v8619 = vpop.f32.mrb[0].mxu0
      %v8620 = vadd.f32 %v8490, %v8619
      %8621 = vmatprep.mubr.f32.mxu0 0.0
      %v8622 = vand.u32 %v7389, 4294901760
      %v8623 = vsub.f32 %v7389, %v8622
      %8624 = vmatmul.mubr.f32.gmra.mrb[0].mxu0 %v8623
      %v8625 = vpop.f32.mrb[0].mxu0
      %v8626 = vadd.f32 %v8495, %v8625
      %v8627 = vpop.f32.mrb[0].mxu0
      %v8628 = vadd.f32 %v8497, %v8627
      %8629 = vmatprep.mubr.f32.mxu0 0.0
      %v8630 = vand.u32 %v7392, 4294901760
      %v8631 = vsub.f32 %v7392, %v8630
      %8632 = vmatmul.mubr.f32.gmra.mrb[0].mxu0 %v8631
      %v8633 = vpop.f32.mrb[0].mxu0
      %v8634 = vadd.f32 %v8502, %v8633
      %v8635 = vpop.f32.mrb[0].mxu0
      %v8636 = vadd.f32 %v8504, %v8635
      %8637 = vmatprep.mubr.f32.mxu0 0.0
      %v8638 = vand.u32 %v7395, 4294901760
      %v8639 = vsub.f32 %v7395, %v8638
      %8640 = vmatmul.mubr.f32.gmra.mrb[0].mxu0 %v8639
      %v8641 = vpop.f32.mrb[0].mxu0
      %v8642 = vadd.f32 %v8509, %v8641
      %v8643 = vpop.f32.mrb[0].mxu0
      %v8644 = vadd.f32 %v8511, %v8643
      %8645 = vmatprep.mubr.f32.mxu0 0.0
      %v8646 = vand.u32 %v7398, 4294901760
      %v8647 = vsub.f32 %v7398, %v8646
      %8648 = vmatmul.mubr.f32.gmra.mrb[0].mxu0 %v8647
      %v8649 = vpop.f32.mrb[0].mxu0
      %v8650 = vadd.f32 %v8516, %v8649
      %v8651 = vpop.f32.mrb[0].mxu0
      %v8652 = vadd.f32 %v8518, %v8651
      %8653 = vmatprep.mubr.f32.mxu0 0.0
      %v8654 = vand.u32 %v7401, 4294901760
      %v8655 = vsub.f32 %v7401, %v8654
      %8656 = vmatmul.mubr.f32.gmra.mrb[0].mxu0 %v8655
      %v8657 = vpop.f32.mrb[0].mxu0
      %v8658 = vadd.f32 %v8523, %v8657
      %v8659 = vpop.f32.mrb[0].mxu0
      %v8660 = vadd.f32 %v8525, %v8659
      %8661 = vmatprep.mubr.f32.mxu0 0.0
      %v8662 = vand.u32 %v7404, 4294901760
      %v8663 = vsub.f32 %v7404, %v8662
      %8664 = vmatmul.mubr.f32.gmra.mrb[0].mxu0 %v8663
      %v8665 = vpop.f32.mrb[0].mxu0
      %v8666 = vadd.f32 %v8530, %v8665
      %v8667 = vpop.f32.mrb[0].mxu0
      %v8668 = vadd.f32 %v8532, %v8667
      %8669 = vmatprep.mubr.f32.mxu0 0.0
      %v8670 = vand.u32 %v7407, 4294901760
      %v8671 = vsub.f32 %v7407, %v8670
      %8672 = vmatmul.mubr.f32.gmra.mrb[0].mxu0 %v8671
      %v8673 = vpop.f32.mrb[0].mxu0
      %v8674 = vadd.f32 %v8537, %v8673
      %v8675 = vpop.f32.mrb[0].mxu0
      %v8676 = vadd.f32 %v8539, %v8675
      %8677 = vdwg.mxu0
      %v8678 = vand.u32 %v3107, 4294901760
      %8679 = vmatprep.subr.mxu0 %v8678
      %v8680 = vand.u32 %v3106, 4294901760
      %8681 = vmatpush1.msra.mxu0 %v8680
      %v8682 = vand.u32 %v3111, 4294901760
      %8683 = vmatprep.subr.mxu0 %v8682
      %v8684 = vand.u32 %v3110, 4294901760
      %8685 = vmatpush1.msra.mxu0 %v8684
      %8686 = vmatprep.subr.mxu0 0.0
      %8687 = vmatpush1.msra.mxu0 0.0
      %8688 = vmatprep.subr.mxu0 0.0
      %8689 = vmatpush1.msra.mxu0 0.0
      %8690 = vmatprep.subr.mxu0 0.0
      %8691 = vmatpush1.msra.mxu0 0.0
      %8692 = vmatprep.subr.mxu0 0.0
      %8693 = vmatpush1.msra.mxu0 0.0
      %8694 = vmatprep.subr.mxu0 0.0
      %8695 = vmatpush1.msra.mxu0 0.0
      %8696 = vmatprep.subr.mxu0 0.0
      %8697 = vmatpush1.msra.mxu0 0.0
      %8698 = vmatprep.subr.mxu0 0.0
      %8699 = vmatpush1.msra.mxu0 0.0
      %8700 = vmatprep.subr.mxu0 0.0
      %8701 = vmatpush1.msra.mxu0 0.0
      %8702 = vmatprep.subr.mxu0 0.0
      %8703 = vmatpush1.msra.mxu0 0.0
      %8704 = vmatprep.subr.mxu0 0.0
      %8705 = vmatpush1.msra.mxu0 0.0
      %8706 = vmatprep.subr.mxu0 0.0
      %8707 = vmatpush1.msra.mxu0 0.0
      %8708 = vmatprep.subr.mxu0 0.0
      %8709 = vmatpush1.msra.mxu0 0.0
      %8710 = vmatprep.subr.mxu0 0.0
      %8711 = vmatpush1.msra.mxu0 0.0
      %8712 = vmatprep.subr.mxu0 0.0
      %8713 = vmatpush1.msra.mxu0 0.0
      %8714 = vmatprep.subr.mxu0 0.0
      %8715 = vmatpush1.msra.mxu0 0.0
      %8716 = vmatprep.subr.mxu0 0.0
      %8717 = vmatpush1.msra.mxu0 0.0
      %8718 = vmatprep.subr.mxu0 0.0
      %8719 = vmatpush1.msra.mxu0 0.0
      %8720 = vmatprep.subr.mxu0 0.0
      %8721 = vmatpush1.msra.mxu0 0.0
      %8722 = vmatprep.subr.mxu0 0.0
      %8723 = vmatpush1.msra.mxu0 0.0
      %8724 = vmatprep.subr.mxu0 0.0
      %8725 = vmatpush1.msra.mxu0 0.0
      %8726 = vmatprep.subr.mxu0 0.0
      %8727 = vmatpush1.msra.mxu0 0.0
      %8728 = vmatprep.subr.mxu0 0.0
      %8729 = vmatpush1.msra.mxu0 0.0
      %8730 = vmatprep.subr.mxu0 0.0
      %8731 = vmatpush1.msra.mxu0 0.0
      %8732 = vmatprep.subr.mxu0 0.0
      %8733 = vmatpush1.msra.mxu0 0.0
      %8734 = vmatprep.subr.mxu0 0.0
      %8735 = vmatpush1.msra.mxu0 0.0
      %8736 = vmatprep.subr.mxu0 0.0
      %8737 = vmatpush1.msra.mxu0 0.0
      %8738 = vmatprep.subr.mxu0 0.0
      %8739 = vmatpush1.msra.mxu0 0.0
      %8740 = vmatprep.subr.mxu0 0.0
      %8741 = vmatpush1.msra.mxu0 0.0
      %8742 = vmatprep.subr.mxu0 0.0
      %8743 = vmatpush1.msra.mxu0 0.0
      %8744 = vmatprep.subr.mxu0 0.0
      %8745 = vmatpush1.msra.mxu0 0.0
      %8746 = vmatprep.mubr.f32.mxu0 0.0
      %v8747 = vand.u32 %v7386, 4294901760
      %v8748 = vsub.f32 %v7386, %v8747
      %v8749 = vand.u32 %v8748, 4294901760
      %8750 = vmatmul.mubr.f32.gmra.mrb[0].mxu0 %v8749
      %v8751 = vpop.f32.mrb[0].mxu0
      %v8752 = vadd.f32 %v8618, %v8751
      %v8753 = vpop.f32.mrb[0].mxu0
      %v8754 = vadd.f32 %v8620, %v8753
      %8755 = vmatprep.mubr.f32.mxu0 0.0
      %v8756 = vand.u32 %v7389, 4294901760
      %v8757 = vsub.f32 %v7389, %v8756
      %v8758 = vand.u32 %v8757, 4294901760
      %8759 = vmatmul.mubr.f32.gmra.mrb[0].mxu0 %v8758
      %v8760 = vpop.f32.mrb[0].mxu0
      %v8761 = vadd.f32 %v8626, %v8760
      %v8762 = vpop.f32.mrb[0].mxu0
      %v8763 = vadd.f32 %v8628, %v8762
      %8764 = vmatprep.mubr.f32.mxu0 0.0
      %v8765 = vand.u32 %v7392, 4294901760
      %v8766 = vsub.f32 %v7392, %v8765
      %v8767 = vand.u32 %v8766, 4294901760
      %8768 = vmatmul.mubr.f32.gmra.mrb[0].mxu0 %v8767
      %v8769 = vpop.f32.mrb[0].mxu0
      %v8770 = vadd.f32 %v8634, %v8769
      %v8771 = vpop.f32.mrb[0].mxu0
      %v8772 = vadd.f32 %v8636, %v8771
      %8773 = vmatprep.mubr.f32.mxu0 0.0
      %v8774 = vand.u32 %v7395, 4294901760
      %v8775 = vsub.f32 %v7395, %v8774
      %v8776 = vand.u32 %v8775, 4294901760
      %8777 = vmatmul.mubr.f32.gmra.mrb[0].mxu0 %v8776
      %v8778 = vpop.f32.mrb[0].mxu0
      %v8779 = vadd.f32 %v8642, %v8778
      %v8780 = vpop.f32.mrb[0].mxu0
      %v8781 = vadd.f32 %v8644, %v8780
      %8782 = vmatprep.mubr.f32.mxu0 0.0
      %v8783 = vand.u32 %v7398, 4294901760
      %v8784 = vsub.f32 %v7398, %v8783
      %v8785 = vand.u32 %v8784, 4294901760
      %8786 = vmatmul.mubr.f32.gmra.mrb[0].mxu0 %v8785
      %v8787 = vpop.f32.mrb[0].mxu0
      %v8788 = vadd.f32 %v8650, %v8787
      %v8789 = vpop.f32.mrb[0].mxu0
      %v8790 = vadd.f32 %v8652, %v8789
      %8791 = vmatprep.mubr.f32.mxu0 0.0
      %v8792 = vand.u32 %v7401, 4294901760
      %v8793 = vsub.f32 %v7401, %v8792
      %v8794 = vand.u32 %v8793, 4294901760
      %8795 = vmatmul.mubr.f32.gmra.mrb[0].mxu0 %v8794
      %v8796 = vpop.f32.mrb[0].mxu0
      %v8797 = vadd.f32 %v8658, %v8796
      %v8798 = vpop.f32.mrb[0].mxu0
      %v8799 = vadd.f32 %v8660, %v8798
      %8800 = vmatprep.mubr.f32.mxu0 0.0
      %v8801 = vand.u32 %v7404, 4294901760
      %v8802 = vsub.f32 %v7404, %v8801
      %v8803 = vand.u32 %v8802, 4294901760
      %8804 = vmatmul.mubr.f32.gmra.mrb[0].mxu0 %v8803
      %v8805 = vpop.f32.mrb[0].mxu0
      %v8806 = vadd.f32 %v8666, %v8805
      %v8807 = vpop.f32.mrb[0].mxu0
      %v8808 = vadd.f32 %v8668, %v8807
      %8809 = vmatprep.mubr.f32.mxu0 0.0
      %v8810 = vand.u32 %v7407, 4294901760
      %v8811 = vsub.f32 %v7407, %v8810
      %v8812 = vand.u32 %v8811, 4294901760
      %8813 = vmatmul.mubr.f32.gmra.mrb[0].mxu0 %v8812
      %v8814 = vpop.f32.mrb[0].mxu0
      %v8815 = vadd.f32 %v8674, %v8814
      %v8816 = vpop.f32.mrb[0].mxu0
      %v8817 = vadd.f32 %v8676, %v8816
      %8818 = vdwg.mxu0
      %v8819 = vand.u32 %v3107, 4294901760
      %v8820 = vsub.f32 %v3107, %v8819
      %v8821 = vand.u32 %v8820, 4294901760
      %8822 = vmatprep.subr.mxu0 %v8821
      %v8823 = vand.u32 %v3106, 4294901760
      %v8824 = vsub.f32 %v3106, %v8823
      %v8825 = vand.u32 %v8824, 4294901760
      %8826 = vmatpush1.msra.mxu0 %v8825
      %v8827 = vand.u32 %v3111, 4294901760
      %v8828 = vsub.f32 %v3111, %v8827
      %v8829 = vand.u32 %v8828, 4294901760
      %8830 = vmatprep.subr.mxu0 %v8829
      %v8831 = vand.u32 %v3110, 4294901760
      %v8832 = vsub.f32 %v3110, %v8831
      %v8833 = vand.u32 %v8832, 4294901760
      %8834 = vmatpush1.msra.mxu0 %v8833
      %8835 = vmatprep.subr.mxu0 0.0
      %8836 = vmatpush1.msra.mxu0 0.0
      %8837 = vmatprep.subr.mxu0 0.0
      %8838 = vmatpush1.msra.mxu0 0.0
      %8839 = vmatprep.subr.mxu0 0.0
      %8840 = vmatpush1.msra.mxu0 0.0
      %8841 = vmatprep.subr.mxu0 0.0
      %8842 = vmatpush1.msra.mxu0 0.0
      %8843 = vmatprep.subr.mxu0 0.0
      %8844 = vmatpush1.msra.mxu0 0.0
      %8845 = vmatprep.subr.mxu0 0.0
      %8846 = vmatpush1.msra.mxu0 0.0
      %8847 = vmatprep.subr.mxu0 0.0
      %8848 = vmatpush1.msra.mxu0 0.0
      %8849 = vmatprep.subr.mxu0 0.0
      %8850 = vmatpush1.msra.mxu0 0.0
      %8851 = vmatprep.subr.mxu0 0.0
      %8852 = vmatpush1.msra.mxu0 0.0
      %8853 = vmatprep.subr.mxu0 0.0
      %8854 = vmatpush1.msra.mxu0 0.0
      %8855 = vmatprep.subr.mxu0 0.0
      %8856 = vmatpush1.msra.mxu0 0.0
      %8857 = vmatprep.subr.mxu0 0.0
      %8858 = vmatpush1.msra.mxu0 0.0
      %8859 = vmatprep.subr.mxu0 0.0
      %8860 = vmatpush1.msra.mxu0 0.0
      %8861 = vmatprep.subr.mxu0 0.0
      %8862 = vmatpush1.msra.mxu0 0.0
      %8863 = vmatprep.subr.mxu0 0.0
      %8864 = vmatpush1.msra.mxu0 0.0
      %8865 = vmatprep.subr.mxu0 0.0
      %8866 = vmatpush1.msra.mxu0 0.0
      %8867 = vmatprep.subr.mxu0 0.0
      %8868 = vmatpush1.msra.mxu0 0.0
      %8869 = vmatprep.subr.mxu0 0.0
      %8870 = vmatpush1.msra.mxu0 0.0
      %8871 = vmatprep.subr.mxu0 0.0
      %8872 = vmatpush1.msra.mxu0 0.0
      %8873 = vmatprep.subr.mxu0 0.0
      %8874 = vmatpush1.msra.mxu0 0.0
      %8875 = vmatprep.subr.mxu0 0.0
      %8876 = vmatpush1.msra.mxu0 0.0
      %8877 = vmatprep.subr.mxu0 0.0
      %8878 = vmatpush1.msra.mxu0 0.0
      %8879 = vmatprep.subr.mxu0 0.0
      %8880 = vmatpush1.msra.mxu0 0.0
      %8881 = vmatprep.subr.mxu0 0.0
      %8882 = vmatpush1.msra.mxu0 0.0
      %8883 = vmatprep.subr.mxu0 0.0
      %8884 = vmatpush1.msra.mxu0 0.0
      %8885 = vmatprep.subr.mxu0 0.0
      %8886 = vmatpush1.msra.mxu0 0.0
      %8887 = vmatprep.subr.mxu0 0.0
      %8888 = vmatpush1.msra.mxu0 0.0
      %8889 = vmatprep.subr.mxu0 0.0
      %8890 = vmatpush1.msra.mxu0 0.0
      %8891 = vmatprep.subr.mxu0 0.0
      %8892 = vmatpush1.msra.mxu0 0.0
      %8893 = vmatprep.subr.mxu0 0.0
      %8894 = vmatpush1.msra.mxu0 0.0
      %8895 = vmatprep.mubr.f32.mxu0 0.0
      %v8896 = vand.u32 %v7386, 4294901760
      %8897 = vmatmul.mubr.f32.gmra.mrb[0].mxu0 %v8896
      %v8898 = vpop.f32.mrb[0].mxu0
      %v8899 = vadd.f32 %v8752, %v8898
      %v8900 = vpop.f32.mrb[0].mxu0
      %v8901 = vadd.f32 %v8754, %v8900
      %8902 = vmatprep.mubr.f32.mxu0 0.0
      %v8903 = vand.u32 %v7389, 4294901760
      %8904 = vmatmul.mubr.f32.gmra.mrb[0].mxu0 %v8903
      %v8905 = vpop.f32.mrb[0].mxu0
      %v8906 = vadd.f32 %v8761, %v8905
      %v8907 = vpop.f32.mrb[0].mxu0
      %v8908 = vadd.f32 %v8763, %v8907
      %8909 = vmatprep.mubr.f32.mxu0 0.0
      %v8910 = vand.u32 %v7392, 4294901760
      %8911 = vmatmul.mubr.f32.gmra.mrb[0].mxu0 %v8910
      %v8912 = vpop.f32.mrb[0].mxu0
      %v8913 = vadd.f32 %v8770, %v8912
      %v8914 = vpop.f32.mrb[0].mxu0
      %v8915 = vadd.f32 %v8772, %v8914
      %8916 = vmatprep.mubr.f32.mxu0 0.0
      %v8917 = vand.u32 %v7395, 4294901760
      %8918 = vmatmul.mubr.f32.gmra.mrb[0].mxu0 %v8917
      %v8919 = vpop.f32.mrb[0].mxu0
      %v8920 = vadd.f32 %v8779, %v8919
      %v8921 = vpop.f32.mrb[0].mxu0
      %v8922 = vadd.f32 %v8781, %v8921
      %8923 = vmatprep.mubr.f32.mxu0 0.0
      %v8924 = vand.u32 %v7398, 4294901760
      %8925 = vmatmul.mubr.f32.gmra.mrb[0].mxu0 %v8924
      %v8926 = vpop.f32.mrb[0].mxu0
      %v8927 = vadd.f32 %v8788, %v8926
      %v8928 = vpop.f32.mrb[0].mxu0
      %v8929 = vadd.f32 %v8790, %v8928
      %8930 = vmatprep.mubr.f32.mxu0 0.0
      %v8931 = vand.u32 %v7401, 4294901760
      %8932 = vmatmul.mubr.f32.gmra.mrb[0].mxu0 %v8931
      %v8933 = vpop.f32.mrb[0].mxu0
      %v8934 = vadd.f32 %v8797, %v8933
      %v8935 = vpop.f32.mrb[0].mxu0
      %v8936 = vadd.f32 %v8799, %v8935
      %8937 = vmatprep.mubr.f32.mxu0 0.0
      %v8938 = vand.u32 %v7404, 4294901760
      %8939 = vmatmul.mubr.f32.gmra.mrb[0].mxu0 %v8938
      %v8940 = vpop.f32.mrb[0].mxu0
      %v8941 = vadd.f32 %v8806, %v8940
      %v8942 = vpop.f32.mrb[0].mxu0
      %v8943 = vadd.f32 %v8808, %v8942
      %8944 = vmatprep.mubr.f32.mxu0 0.0
      %v8945 = vand.u32 %v7407, 4294901760
      %8946 = vmatmul.mubr.f32.gmra.mrb[0].mxu0 %v8945
      %v8947 = vpop.f32.mrb[0].mxu0
      %v8948 = vadd.f32 %v8815, %v8947
      %v8949 = vpop.f32.mrb[0].mxu0
      %v8950 = vadd.f32 %v8817, %v8949
      %8951 = vdwg.mxu0
      %v8952 = vand.u32 %v3107, 4294901760
      %8953 = vmatprep.subr.mxu0 %v8952
      %v8954 = vand.u32 %v3106, 4294901760
      %8955 = vmatpush1.msra.mxu0 %v8954
      %v8956 = vand.u32 %v3111, 4294901760
      %8957 = vmatprep.subr.mxu0 %v8956
      %v8958 = vand.u32 %v3110, 4294901760
      %8959 = vmatpush1.msra.mxu0 %v8958
      %8960 = vmatprep.subr.mxu0 0.0
      %8961 = vmatpush1.msra.mxu0 0.0
      %8962 = vmatprep.subr.mxu0 0.0
      %8963 = vmatpush1.msra.mxu0 0.0
      %8964 = vmatprep.subr.mxu0 0.0
      %8965 = vmatpush1.msra.mxu0 0.0
      %8966 = vmatprep.subr.mxu0 0.0
      %8967 = vmatpush1.msra.mxu0 0.0
      %8968 = vmatprep.subr.mxu0 0.0
      %8969 = vmatpush1.msra.mxu0 0.0
      %8970 = vmatprep.subr.mxu0 0.0
      %8971 = vmatpush1.msra.mxu0 0.0
      %8972 = vmatprep.subr.mxu0 0.0
      %8973 = vmatpush1.msra.mxu0 0.0
      %8974 = vmatprep.subr.mxu0 0.0
      %8975 = vmatpush1.msra.mxu0 0.0
      %8976 = vmatprep.subr.mxu0 0.0
      %8977 = vmatpush1.msra.mxu0 0.0
      %8978 = vmatprep.subr.mxu0 0.0
      %8979 = vmatpush1.msra.mxu0 0.0
      %8980 = vmatprep.subr.mxu0 0.0
      %8981 = vmatpush1.msra.mxu0 0.0
      %8982 = vmatprep.subr.mxu0 0.0
      %8983 = vmatpush1.msra.mxu0 0.0
      %8984 = vmatprep.subr.mxu0 0.0
      %8985 = vmatpush1.msra.mxu0 0.0
      %8986 = vmatprep.subr.mxu0 0.0
      %8987 = vmatpush1.msra.mxu0 0.0
      %8988 = vmatprep.subr.mxu0 0.0
      %8989 = vmatpush1.msra.mxu0 0.0
      %8990 = vmatprep.subr.mxu0 0.0
      %8991 = vmatpush1.msra.mxu0 0.0
      %8992 = vmatprep.subr.mxu0 0.0
      %8993 = vmatpush1.msra.mxu0 0.0
      %8994 = vmatprep.subr.mxu0 0.0
      %8995 = vmatpush1.msra.mxu0 0.0
      %8996 = vmatprep.subr.mxu0 0.0
      %8997 = vmatpush1.msra.mxu0 0.0
      %8998 = vmatprep.subr.mxu0 0.0
      %8999 = vmatpush1.msra.mxu0 0.0
      %9000 = vmatprep.subr.mxu0 0.0
      %9001 = vmatpush1.msra.mxu0 0.0
      %9002 = vmatprep.subr.mxu0 0.0
      %9003 = vmatpush1.msra.mxu0 0.0
      %9004 = vmatprep.subr.mxu0 0.0
      %9005 = vmatpush1.msra.mxu0 0.0
      %9006 = vmatprep.subr.mxu0 0.0
      %9007 = vmatpush1.msra.mxu0 0.0
      %9008 = vmatprep.subr.mxu0 0.0
      %9009 = vmatpush1.msra.mxu0 0.0
      %9010 = vmatprep.subr.mxu0 0.0
      %9011 = vmatpush1.msra.mxu0 0.0
      %9012 = vmatprep.subr.mxu0 0.0
      %9013 = vmatpush1.msra.mxu0 0.0
      %9014 = vmatprep.subr.mxu0 0.0
      %9015 = vmatpush1.msra.mxu0 0.0
      %9016 = vmatprep.subr.mxu0 0.0
      %9017 = vmatpush1.msra.mxu0 0.0
      %9018 = vmatprep.subr.mxu0 0.0
      %9019 = vmatpush1.msra.mxu0 0.0
      %9020 = vmatprep.mubr.f32.mxu0 0.0
      %v9021 = vand.u32 %v7386, 4294901760
      %9022 = vmatmul.mubr.f32.gmra.mrb[0].mxu0 %v9021
      %v9023 = vpop.f32.mrb[0].mxu0
      %v9024 = vadd.f32 %v8899, %v9023
      %v9025 = vpop.f32.mrb[0].mxu0
      %v9026 = vadd.f32 %v8901, %v9025
      %9027 = vmatprep.mubr.f32.mxu0 0.0
      %v9028 = vand.u32 %v7389, 4294901760
      %9029 = vmatmul.mubr.f32.gmra.mrb[0].mxu0 %v9028
      %v9030 = vpop.f32.mrb[0].mxu0
      %v9031 = vadd.f32 %v8906, %v9030
      %v9032 = vpop.f32.mrb[0].mxu0
      %v9033 = vadd.f32 %v8908, %v9032
      %9034 = vmatprep.mubr.f32.mxu0 0.0
      %v9035 = vand.u32 %v7392, 4294901760
      %9036 = vmatmul.mubr.f32.gmra.mrb[0].mxu0 %v9035
      %v9037 = vpop.f32.mrb[0].mxu0
      %v9038 = vadd.f32 %v8913, %v9037
      %v9039 = vpop.f32.mrb[0].mxu0
      %v9040 = vadd.f32 %v8915, %v9039
      %9041 = vmatprep.mubr.f32.mxu0 0.0
      %v9042 = vand.u32 %v7395, 4294901760
      %9043 = vmatmul.mubr.f32.gmra.mrb[0].mxu0 %v9042
      %v9044 = vpop.f32.mrb[0].mxu0
      %v9045 = vadd.f32 %v8920, %v9044
      %v9046 = vpop.f32.mrb[0].mxu0
      %v9047 = vadd.f32 %v8922, %v9046
      %9048 = vmatprep.mubr.f32.mxu0 0.0
      %v9049 = vand.u32 %v7398, 4294901760
      %9050 = vmatmul.mubr.f32.gmra.mrb[0].mxu0 %v9049
      %v9051 = vpop.f32.mrb[0].mxu0
      %v9052 = vadd.f32 %v8927, %v9051
      %v9053 = vpop.f32.mrb[0].mxu0
      %v9054 = vadd.f32 %v8929, %v9053
      %9055 = vmatprep.mubr.f32.mxu0 0.0
      %v9056 = vand.u32 %v7401, 4294901760
      %9057 = vmatmul.mubr.f32.gmra.mrb[0].mxu0 %v9056
      %v9058 = vpop.f32.mrb[0].mxu0
      %v9059 = vadd.f32 %v8934, %v9058
      %v9060 = vpop.f32.mrb[0].mxu0
      %v9061 = vadd.f32 %v8936, %v9060
      %9062 = vmatprep.mubr.f32.mxu0 0.0
      %v9063 = vand.u32 %v7404, 4294901760
      %9064 = vmatmul.mubr.f32.gmra.mrb[0].mxu0 %v9063
      %v9065 = vpop.f32.mrb[0].mxu0
      %v9066 = vadd.f32 %v8941, %v9065
      %v9067 = vpop.f32.mrb[0].mxu0
      %v9068 = vadd.f32 %v8943, %v9067
      %9069 = vmatprep.mubr.f32.mxu0 0.0
      %v9070 = vand.u32 %v7407, 4294901760
      %9071 = vmatmul.mubr.f32.gmra.mrb[0].mxu0 %v9070
      %v9072 = vpop.f32.mrb[0].mxu0
      %v9073 = vadd.f32 %v8948, %v9072
      %v9074 = vpop.f32.mrb[0].mxu0
      %v9075 = vadd.f32 %v8950, %v9074
      %9076 = vdwg.mxu0
      %v9077 = vmul.f32 %v4805, %v8190
      %v9078 = vmul.f32 %v4806, %v8192
      %v9079 = vmul.f32 %v4807, %v9024
      %v9080 = vmul.f32 %v4808, %v9026
      %v9081 = vmul.f32 %v4809, %v8197
      %v9082 = vmul.f32 %v4810, %v8199
      %v9083 = vmul.f32 %v4811, %v9031
      %v9084 = vmul.f32 %v4812, %v9033
      %v9085 = vmul.f32 %v4813, %v8204
      %v9086 = vmul.f32 %v4814, %v8206
      %v9087 = vmul.f32 %v4815, %v9038
      %v9088 = vmul.f32 %v4816, %v9040
      %v9089 = vmul.f32 %v4817, %v8211
      %v9090 = vmul.f32 %v4818, %v8213
      %v9091 = vmul.f32 %v4819, %v9045
      %v9092 = vmul.f32 %v4820, %v9047
      %v9093 = vmul.f32 %v4821, %v8218
      %v9094 = vmul.f32 %v4822, %v8220
      %v9095 = vmul.f32 %v4823, %v9052
      %v9096 = vmul.f32 %v4824, %v9054
      %v9097 = vmul.f32 %v4825, %v8225
      %v9098 = vmul.f32 %v4826, %v8227
      %v9099 = vmul.f32 %v4827, %v9059
      %v9100 = vmul.f32 %v4828, %v9061
      %v9101 = vmul.f32 %v4829, %v8232
      %v9102 = vmul.f32 %v4830, %v8234
      %v9103 = vmul.f32 %v4831, %v9066
      %v9104 = vmul.f32 %v4832, %v9068
      %v9105 = vmul.f32 %v4833, %v8239
      %v9106 = vmul.f32 %v4834, %v8241
      %v9107 = vmul.f32 %v4835, %v9073
      %v9108 = vmul.f32 %v4836, %v9075
      %v9109 = vld [vmem:[%s2] sm:$0xf]
      %v9111 = vlaneseq
      %v9112 = vshrl.u32 %v9111, 7
      %v9113 = vsub.s32 0, %v9112
      %v9114 = vrot.slane %v9109, %v9113
      %v9115 = vlaneseq
      %v9116 = vshrl.u32 %v9115, 7
      %v9117 = vsub.s32 1, %v9116
      %v9118 = vrot.slane %v9109, %v9117
      %v9119 = vlaneseq
      %v9120 = vshrl.u32 %v9119, 7
      %v9121 = vsub.s32 2, %v9120
      %v9122 = vrot.slane %v9109, %v9121
      %v9123 = vlaneseq
      %v9124 = vshrl.u32 %v9123, 7
      %v9125 = vsub.s32 3, %v9124
      %v9126 = vrot.slane %v9109, %v9125
      %v9131 = vmul.f32 %v9077, %v9114
      %v9132 = vmul.f32 %v9078, %v9118
      %v9133 = vmul.f32 %v9079, %v9122
      %v9134 = vmul.f32 %v9080, %v9126
      %v9135 = vmul.f32 %v9081, %v9114
      %v9136 = vmul.f32 %v9082, %v9118
      %v9137 = vmul.f32 %v9083, %v9122
      %v9138 = vmul.f32 %v9084, %v9126
      %v9139 = vmul.f32 %v9085, %v9114
      %v9140 = vmul.f32 %v9086, %v9118
      %v9141 = vmul.f32 %v9087, %v9122
      %v9142 = vmul.f32 %v9088, %v9126
      %v9143 = vmul.f32 %v9089, %v9114
      %v9144 = vmul.f32 %v9090, %v9118
      %v9145 = vmul.f32 %v9091, %v9122
      %v9146 = vmul.f32 %v9092, %v9126
      %v9147 = vmul.f32 %v9093, %v9114
      %v9148 = vmul.f32 %v9094, %v9118
      %v9149 = vmul.f32 %v9095, %v9122
      %v9150 = vmul.f32 %v9096, %v9126
      %v9151 = vmul.f32 %v9097, %v9114
      %v9152 = vmul.f32 %v9098, %v9118
      %v9153 = vmul.f32 %v9099, %v9122
      %v9154 = vmul.f32 %v9100, %v9126
      %v9155 = vmul.f32 %v9101, %v9114
      %v9156 = vmul.f32 %v9102, %v9118
      %v9157 = vmul.f32 %v9103, %v9122
      %v9158 = vmul.f32 %v9104, %v9126
      %v9159 = vmul.f32 %v9105, %v9114
      %v9160 = vmul.f32 %v9106, %v9118
      %v9161 = vmul.f32 %v9107, %v9122
      %v9162 = vmul.f32 %v9108, %v9126
      %v9163 = vld [vmem:[%s3] sm:$0xf]
      %v9165 = vlaneseq
      %v9166 = vshrl.u32 %v9165, 7
      %v9167 = vsub.s32 0, %v9166
      %v9168 = vrot.slane %v9163, %v9167
      %v9169 = vlaneseq
      %v9170 = vshrl.u32 %v9169, 7
      %v9171 = vsub.s32 1, %v9170
      %v9172 = vrot.slane %v9163, %v9171
      %v9173 = vlaneseq
      %v9174 = vshrl.u32 %v9173, 7
      %v9175 = vsub.s32 2, %v9174
      %v9176 = vrot.slane %v9163, %v9175
      %v9177 = vlaneseq
      %v9178 = vshrl.u32 %v9177, 7
      %v9179 = vsub.s32 3, %v9178
      %v9180 = vrot.slane %v9163, %v9179
      %v9185 = vadd.f32 %v9131, %v9168
      %v9186 = vadd.f32 %v9132, %v9172
      %v9187 = vadd.f32 %v9133, %v9176
      %v9188 = vadd.f32 %v9134, %v9180
      %v9189 = vadd.f32 %v9135, %v9168
      %v9190 = vadd.f32 %v9136, %v9172
      %v9191 = vadd.f32 %v9137, %v9176
      %v9192 = vadd.f32 %v9138, %v9180
      %v9193 = vadd.f32 %v9139, %v9168
      %v9194 = vadd.f32 %v9140, %v9172
      %v9195 = vadd.f32 %v9141, %v9176
      %v9196 = vadd.f32 %v9142, %v9180
      %v9197 = vadd.f32 %v9143, %v9168
      %v9198 = vadd.f32 %v9144, %v9172
      %v9199 = vadd.f32 %v9145, %v9176
      %v9200 = vadd.f32 %v9146, %v9180
      %v9201 = vadd.f32 %v9147, %v9168
      %v9202 = vadd.f32 %v9148, %v9172
      %v9203 = vadd.f32 %v9149, %v9176
      %v9204 = vadd.f32 %v9150, %v9180
      %v9205 = vadd.f32 %v9151, %v9168
      %v9206 = vadd.f32 %v9152, %v9172
      %v9207 = vadd.f32 %v9153, %v9176
      %v9208 = vadd.f32 %v9154, %v9180
      %v9209 = vadd.f32 %v9155, %v9168
      %v9210 = vadd.f32 %v9156, %v9172
      %v9211 = vadd.f32 %v9157, %v9176
      %v9212 = vadd.f32 %v9158, %v9180
      %v9213 = vadd.f32 %v9159, %v9168
      %v9214 = vadd.f32 %v9160, %v9172
      %v9215 = vadd.f32 %v9161, %v9176
      %v9216 = vadd.f32 %v9162, %v9180
      %9217 = vst [vmem:[%s255] sm:$0xff] %v9185
      %9218 = vst [vmem:[%s255 + $0x20] sm:$0xff] %v9189
      %9219 = vst [vmem:[%s255 + $0x40] sm:$0xff] %v9193
      %9220 = vst [vmem:[%s255 + $0x60] sm:$0xff] %v9197
      %9221 = vst [vmem:[%s255 + $0x80] sm:$0xff] %v9201
      %9222 = vst [vmem:[%s255 + $0xa0] sm:$0xff] %v9205
      %9223 = vst [vmem:[%s255 + $0xc0] sm:$0xff] %v9209
      %9224 = vst [vmem:[%s255 + $0xe0] sm:$0xff] %v9213
      %s9225 = scalar_lea.vmem %s255, 8
      %9226 = vst [vmem:[%s9225] sm:$0xff] %v9186
      %9227 = vst [vmem:[%s9225 + $0x20] sm:$0xff] %v9190
      %9228 = vst [vmem:[%s9225 + $0x40] sm:$0xff] %v9194
      %9229 = vst [vmem:[%s9225 + $0x60] sm:$0xff] %v9198
      %9230 = vst [vmem:[%s9225 + $0x80] sm:$0xff] %v9202
      %9231 = vst [vmem:[%s9225 + $0xa0] sm:$0xff] %v9206
      %9232 = vst [vmem:[%s9225 + $0xc0] sm:$0xff] %v9210
      %9233 = vst [vmem:[%s9225 + $0xe0] sm:$0xff] %v9214
      %s9234 = scalar_lea.vmem %s255, 16
      %9235 = vst [vmem:[%s9234] sm:$0xff] %v9187
      %9236 = vst [vmem:[%s9234 + $0x20] sm:$0xff] %v9191
      %9237 = vst [vmem:[%s9234 + $0x40] sm:$0xff] %v9195
      %9238 = vst [vmem:[%s9234 + $0x60] sm:$0xff] %v9199
      %9239 = vst [vmem:[%s9234 + $0x80] sm:$0xff] %v9203
      %9240 = vst [vmem:[%s9234 + $0xa0] sm:$0xff] %v9207
      %9241 = vst [vmem:[%s9234 + $0xc0] sm:$0xff] %v9211
      %9242 = vst [vmem:[%s9234 + $0xe0] sm:$0xff] %v9215
      %s9243 = scalar_lea.vmem %s255, 24
      %9244 = vst [vmem:[%s9243] sm:$0xff] %v9188
      %9245 = vst [vmem:[%s9243 + $0x20] sm:$0xff] %v9192
      %9246 = vst [vmem:[%s9243 + $0x40] sm:$0xff] %v9196
      %9247 = vst [vmem:[%s9243 + $0x60] sm:$0xff] %v9200
      %9248 = vst [vmem:[%s9243 + $0x80] sm:$0xff] %v9204
      %9249 = vst [vmem:[%s9243 + $0xa0] sm:$0xff] %v9208
      %9250 = vst [vmem:[%s9243 + $0xc0] sm:$0xff] %v9212
      %9251 = vst [vmem:[%s9243 + $0xe0] sm:$0xff] %v9216
      %s9252 = smul.u32 8, %s17
      %p9253 = scmp.lt.s32.totalorder %s9252, 15
      %s9254 = scalar_select %p9253, %s9252, 15
      %s9255 = smul.addr %s9254, 4
      %s9256 = smul.addr %s9255, 8
      %s9257 = scalar_lea.vmem %s6, %s9256
      // Predicated region
      $region45: #{final_patch_expanding.1} parent=43 // pred_check
        %p9258 = pneg %p166
      $region46: #{final_patch_expanding.1} parent=43 // pred_check_branch
        %9260 = sbr.rel (%p9258) target = $region48
      $region47: #{final_patch_expanding.1} parent=43 // pred_region
        %s9261 = smul.u32 8, %s17
      $region48: #{final_patch_expanding.1} parent=43 // pred_fallthru
        _
    $region44: #{final_patch_expanding.1} parent=5 // pred_fallthru
      _
    %p9262 = scmp.le.s32.totalorder 2, %s12
    // Predicated region
    $region49: #{final_patch_expanding.1} parent=5 // pred_check
      %p9263 = pneg %p9262
    $region50: #{final_patch_expanding.1} parent=5 // pred_check_branch
      %9265 = sbr.rel (%p9263) target = $region52
    $region51: #{final_patch_expanding.1} parent=5 // pred_region
      %s9266 = ssub.s32 %s12, 2
      // Predicated region
      $region53: #{final_patch_expanding.1} parent=51 // pred_check
        %p9267 = pneg %p172
      $region54: #{final_patch_expanding.1} parent=51 // pred_check_branch
        %9269 = sbr.rel (%p9267) target = $region56
      $region55: #{final_patch_expanding.1} parent=51 // pred_region
        %s9270 = smul.u32 8, %s18
        %p9271 = scmp.lt.s32.totalorder %s9270, 15
        %s9272 = scalar_select %p9271, %s9270, 15
        %s9273 = smul.addr %s9272, 4
        %s9274 = smul.addr %s9273, 8
        %s9275 = scalar_lea.vmem %s6, %s9274
      $region56: #{final_patch_expanding.1} parent=51 // pred_fallthru
        _
    $region52: #{final_patch_expanding.1} parent=5 // pred_fallthru
      _
  $region6: #{final_patch_expanding.1} parent=0 // loop_footer
    %s16 = sadd.s32 1, %s12
  $region7: #{final_patch_expanding.1} parent=0 // loop_footer_branch
    %11 = sbr.rel target = $region3
  $region8: #{final_patch_expanding.1} parent=0 // loop_exit
    _

</llo_original>
